<compile_context>
chip_gen: v7x
topology: tpu7x:2x2x1
jax: 0.10.0
libtpu: 0.0.40
codegen_flags: <defaults>
</compile_context>

<pallas_src>
from functools import partial

import numpy as np
import jax
import jax.numpy as jnp
from jax import lax
from jax.experimental import pallas as pl
from jax.experimental.pallas import tpu as pltpu


def _round_up(n, m):
    return ((n + m - 1) // m) * m


# ----------------------------------------------------------------------------
# Wrapper-side constant: stacked even/odd pooling block-Toeplitz conv LHS.
# ----------------------------------------------------------------------------
def _pooling_toeplitz(w, in_w_pad, out_stride, wp):
    """Build the (2*cout*out_stride, k*cin*in_w_pad) MXU LHS for one conv layer.

    For an input row-slab  s[dh*cin*in_w_pad + ci*in_w_pad + x, b] = in[ci, r+dh, x, b]:
        (T @ s)[co*out_stride + j]                       = conv[co, r, 2*j]
        (T @ s)[cout*out_stride + co*out_stride + j]     = conv[co, r, 2*j+1]
    (no bias).  Rows with j >= wp are identically zero (alignment padding).
    """
    cout, cin, k, _ = w.shape
    K = k * cin * in_w_pad
    M = cout * out_stride
    co, ci, dh, dw, j = np.meshgrid(np.arange(cout), np.arange(cin), np.arange(k),
                                    np.arange(k), np.arange(wp), indexing="ij")
    rows = (co * out_stride + j).reshape(-1)
    vals = w[co.reshape(-1), ci.reshape(-1), dh.reshape(-1),
             dw.reshape(-1)].astype(jnp.float32)
    halves = []
    for p in (0, 1):                      # even / odd pooled output column
        cols = (dh * (cin * in_w_pad) + ci * in_w_pad + 2 * j + p + dw).reshape(-1)
        halves.append(jnp.zeros((M, K), jnp.float32).at[rows, cols].set(vals))
    return jnp.concatenate(halves, axis=0)


# ----------------------------------------------------------------------------
# Fused CNN2D forward kernel (one grid step = one 128-image batch tile)
# ----------------------------------------------------------------------------
def cnn2d_kernel(x_ref, t1_ref, b1_ref, t2_ref, b2_ref,
                 fw1_ref, fb1_ref, fw2_ref, fb2_ref,
                 out_ref, a1_ref, f_ref, *, dims):
    """x_ref : (H*xrow, bt)        input images, row = h*xrow + w, batch in lanes
       t1/t2 : stacked even/odd block-Toeplitz conv weights (MXU LHS)
       b1/b2 : per-channel conv biases, lane-broadcast, matching output row layout
       fw1   : (32, hp2*blk2)      fc1 weights, columns permuted to the f layout
       fw2   : (ncp, 32)           fc2 weights (rows >= n_classes are zero)
       fb2   : (ncp, bt)           fc2 bias (-1e9 in padded class rows)
       a1_ref: (hp1*blk1, bt)      scratch: conv-block-1 output, row = i*blk1+co*s1+w
       f_ref : (hp2*blk2, bt)      scratch: conv-block-2 output / flattened features
    """
    xrow, k1, hp1, blk1, k2, hp2, blk2 = dims
    K1 = k1 * xrow
    K2 = k2 * blk1

    # --- block 1: Conv2d(1->3,k1) -> Sigmoid -> MaxPool(2,2) (Dropout = id, eval)
    # max-pool commutes with the per-channel bias add and with sigmoid (monotone),
    # so pooling the raw conv output first is exactly PyTorch's ordering.
    t1 = t1_ref[...]                                           # (2*blk1, K1)
    b1 = b1_ref[...]                                           # (blk1, bt)
    for i in range(hp1):                                       # fully unrolled
        s0 = x_ref[pl.ds((2 * i) * xrow, K1), :]               # conv row 2i slab
        s1 = x_ref[pl.ds((2 * i + 1) * xrow, K1), :]           # conv row 2i+1 slab
        r = jnp.maximum(jnp.dot(t1, s0, preferred_element_type=jnp.float32),
                        jnp.dot(t1, s1, preferred_element_type=jnp.float32))
        pre = jnp.maximum(r[:blk1], r[blk1:])                  # 2x2 max-pool
        a1_ref[pl.ds(i * blk1, blk1), :] = jax.nn.sigmoid(pre + b1)

    # --- block 2: Conv2d(3->6,k2) -> Sigmoid -> MaxPool(2,2) --------------------
    t2 = t2_ref[...]                                           # (2*blk2, K2)
    b2 = b2_ref[...]                                           # (blk2, bt)
    for i in range(hp2):
        s0 = a1_ref[pl.ds((2 * i) * blk1, K2), :]
        s1 = a1_ref[pl.ds((2 * i + 1) * blk1, K2), :]
        r = jnp.maximum(jnp.dot(t2, s0, preferred_element_type=jnp.float32),
                        jnp.dot(t2, s1, preferred_element_type=jnp.float32))
        pre = jnp.maximum(r[:blk2], r[blk2:])
        f_ref[pl.ds(i * blk2, blk2), :] = jax.nn.sigmoid(pre + b2)

    # --- FC head: Linear -> Sigmoid -> Linear -> Softmax (classes in sublanes) ---
    feats = f_ref[...]                                         # (hp2*blk2, bt)
    h = jax.nn.sigmoid(jnp.dot(fw1_ref[...], feats,
                               preferred_element_type=jnp.float32) + fb1_ref[...])
    logits = jnp.dot(fw2_ref[...], h,
                     preferred_element_type=jnp.float32) + fb2_ref[...]
    m = jnp.max(logits, axis=0, keepdims=True)
    e = jnp.exp(logits - m)                                    # padded classes -> 0
    out_ref[...] = e / jnp.sum(e, axis=0, keepdims=True)       # exact softmax


# ----------------------------------------------------------------------------
# Wrapper: layout prep (batch -> lanes, Toeplitz weights) + pallas_call
# ----------------------------------------------------------------------------
def cnn2d_forward(x, params, *, batch_tile=128):
    """x: (B, 1, H, W) float32 (NCHW, like PyTorch). Returns (B, n_classes)."""
    B, cin, H, W = x.shape
    assert cin == 1, "CNN2D takes single-channel images"
    w1 = params["conv1_w"]
    w2 = params["conv2_w"]
    cout1, _, k1, _ = w1.shape
    cout2, _, k2, _ = w2.shape
    hidden = params["fc1_w"].shape[0]
    n_classes = params["fc2_w"].shape[0]

    ho1, wo1 = H - k1 + 1, W - k1 + 1
    hp1, wp1 = ho1 // 2, wo1 // 2
    ho2, wo2 = hp1 - k2 + 1, wp1 - k2 + 1
    hp2, wp2 = ho2 // 2, wo2 // 2

    bt = batch_tile
    b_pad = _round_up(B, bt)
    xrow = _round_up(W, 8)          # sublanes per input image row
    s1 = _round_up(wp1, 8)          # per-channel row stride inside an a1 row-block
    s2 = _round_up(wp2, 8)          # per-channel row stride inside an f  row-block
    blk1 = cout1 * s1               # a1 rows per pooled output row
    blk2 = cout2 * s2               # f  rows per pooled output row
    ncp = _round_up(n_classes, 8)

    # Batch-in-lanes input slab (H*xrow, b_pad); zero-pad width and batch.
    xs = x.astype(jnp.float32).reshape(B, H, W)
    xs = jnp.pad(xs, ((0, b_pad - B), (0, 0), (0, xrow - W)))
    xs = xs.reshape(b_pad, H * xrow).T                           # (H*xrow, b_pad)

    # Conv weights as stacked even/odd block-Toeplitz MXU matrices.
    t1 = _pooling_toeplitz(w1, xrow, s1, wp1)                    # (2*blk1, k1*xrow)
    t2 = _pooling_toeplitz(w2, s1, s2, wp2)                      # (2*blk2, k2*blk1)
    b1t = jnp.broadcast_to(
        jnp.repeat(params["conv1_b"].astype(jnp.float32), s1)[:, None], (blk1, bt))
    b2t = jnp.broadcast_to(
        jnp.repeat(params["conv2_b"].astype(jnp.float32), s2)[:, None], (blk2, bt))

    # fc1 with columns permuted + zero-padded to the kernel's (h, co, w) f layout.
    co, h, j = np.meshgrid(np.arange(cout2), np.arange(hp2), np.arange(wp2),
                           indexing="ij")
    src = ((co * hp2 + h) * wp2 + j).reshape(-1)       # torch.flatten(x, 1) order
    dst = (h * blk2 + co * s2 + j).reshape(-1)         # kernel feature-row layout
    fw1 = jnp.zeros((hidden, hp2 * blk2), jnp.float32).at[:, dst].set(
        params["fc1_w"].astype(jnp.float32)[:, src])
    fb1 = jnp.broadcast_to(params["fc1_b"].astype(jnp.float32)[:, None], (hidden, bt))

    # fc2 padded to a multiple of 8 classes; padded logits pinned to -1e9 so the
    # softmax ignores them (exp underflows to 0).
    fw2 = jnp.zeros((ncp, hidden), jnp.float32).at[:n_classes, :].set(
        params["fc2_w"].astype(jnp.float32))
    fb2 = jnp.full((ncp,), -1e9, jnp.float32).at[:n_classes].set(
        params["fc2_b"].astype(jnp.float32))
    fb2 = jnp.broadcast_to(fb2[:, None], (ncp, bt))

    dims = (xrow, k1, hp1, blk1, k2, hp2, blk2)

    def const_spec(a):          # small weight: whole array resident every grid step
        return pl.BlockSpec(a.shape, lambda i: (0, 0))

    out = pl.pallas_call(
        partial(cnn2d_kernel, dims=dims),
        out_shape=jax.ShapeDtypeStruct((ncp, b_pad), jnp.float32),
        grid=(b_pad // bt,),
        in_specs=[
            pl.BlockSpec((H * xrow, bt), lambda i: (0, i)),
            const_spec(t1), const_spec(b1t), const_spec(t2), const_spec(b2t),
            const_spec(fw1), const_spec(fb1), const_spec(fw2), const_spec(fb2),
        ],
        out_specs=pl.BlockSpec((ncp, bt), lambda i: (0, i)),
        scratch_shapes=[
            pltpu.VMEM((hp1 * blk1, bt), jnp.float32),   # a1: conv-block-1 output
            pltpu.VMEM((hp2 * blk2, bt), jnp.float32),   # f : flattened features
        ],
        compiler_params=pltpu.CompilerParams(
            dimension_semantics=("parallel",)),
    )(xs, t1, b1t, t2, b2t, fw1, fb1, fw2, fb2)

    return out[:n_classes, :B].T                                 # (B, n_classes)


# ----------------------------------------------------------------------------
# Pure-JAX reference (eval mode) for a correctness self-check
# ----------------------------------------------------------------------------
def cnn2d_reference(x, params):
    prec = lax.Precision.HIGHEST

    def block(a, w, b):
        y = lax.conv_general_dilated(a, w.astype(jnp.float32), (1, 1), "VALID",
                                     dimension_numbers=("NCHW", "OIHW", "NCHW"),
                                     precision=prec)
        y = jax.nn.sigmoid(y + b.astype(jnp.float32)[None, :, None, None])
        return lax.reduce_window(y, -jnp.inf, lax.max,
                                 (1, 1, 2, 2), (1, 1, 2, 2), "VALID")

    a = block(x.astype(jnp.float32), params["conv1_w"], params["conv1_b"])
    a = block(a, params["conv2_w"], params["conv2_b"])
    flat = a.reshape(a.shape[0], -1)
    h = jax.nn.sigmoid(jnp.dot(flat, params["fc1_w"].astype(jnp.float32).T,
                               precision=prec) + params["fc1_b"])
    logits = jnp.dot(h, params["fc2_w"].astype(jnp.float32).T,
                     precision=prec) + params["fc2_b"]
    return jax.nn.softmax(logits, axis=1)


# ----------------------------------------------------------------------------
# Parameter init (mirrors CNN2D.__init__ / get_cnn_image_dimensions)
# ----------------------------------------------------------------------------
def init_params(key, image_h, image_w, n_classes, kernel_size=3):
    h1 = ((image_h - kernel_size) + 1) // 2
    w1 = ((image_w - kernel_size) + 1) // 2
    h2 = ((h1 - 5) + 1) // 2
    w2 = ((w1 - 5) + 1) // 2
    flat_dim = 6 * h2 * w2
    ks = jax.random.split(key, 8)
    p = {
        "conv1_w": 0.1 * jax.random.normal(ks[0], (3, 1, kernel_size, kernel_size), jnp.float32),
        "conv1_b": 0.1 * jax.random.normal(ks[1], (3,), jnp.float32),
        "conv2_w": 0.1 * jax.random.normal(ks[2], (6, 3, 5, 5), jnp.float32),
        "conv2_b": 0.1 * jax.random.normal(ks[3], (6,), jnp.float32),
        # torch.nn.Linear stores weight as (out_features, in_features); kept as-is.
        "fc1_w": 0.1 * jax.random.normal(ks[4], (32, flat_dim), jnp.float32),
        "fc1_b": 0.1 * jax.random.normal(ks[5], (32,), jnp.float32),
        "fc2_w": 0.1 * jax.random.normal(ks[6], (n_classes, 32), jnp.float32),
        "fc2_b": 0.1 * jax.random.normal(ks[7], (n_classes,), jnp.float32),
    }
    return p, flat_dim


if __name__ == "__main__":
    key = jax.random.PRNGKey(0)
    kx, kp = jax.random.split(key)

    B, IMG_H, IMG_W, N_CLASSES = 2, 32, 32, 4
    params, flat_dim = init_params(kp, IMG_H, IMG_W, N_CLASSES, kernel_size=3)
    assert flat_dim == 6 * 5 * 5

    x = jax.random.normal(kx, (B, 1, IMG_H, IMG_W), jnp.float32)   # NCHW, 1 channel

    fwd = jax.jit(cnn2d_forward)
    out = jax.block_until_ready(fwd(x, params))

    assert out.shape == (B, N_CLASSES)
    assert bool(jnp.all(jnp.isfinite(out)))
    assert bool(jnp.allclose(jnp.sum(out, axis=1), 1.0, atol=1e-4))

    ref = jax.block_until_ready(jax.jit(cnn2d_reference)(x, params))
    max_err = float(jnp.max(jnp.abs(out - ref)))
    assert max_err < 5e-3, f"kernel/reference mismatch, max abs err {max_err}"

    print("KERNEL_OK")
</pallas_src>

<mosaic_0001>
module attributes {stable_mosaic.version = 11 : i64} {
  func.func @cnn2d_kernel(%arg0: i32, %arg1: memref<1024x128xf32, #tpu.memory_space<vmem>>, %arg2: memref<96x96xf32, #tpu.memory_space<vmem>>, %arg3: memref<48x128xf32, #tpu.memory_space<vmem>>, %arg4: memref<96x240xf32, #tpu.memory_space<vmem>>, %arg5: memref<48x128xf32, #tpu.memory_space<vmem>>, %arg6: memref<32x240xf32, #tpu.memory_space<vmem>>, %arg7: memref<32x128xf32, #tpu.memory_space<vmem>>, %arg8: memref<8x32xf32, #tpu.memory_space<vmem>>, %arg9: memref<8x128xf32, #tpu.memory_space<vmem>>, %arg10: memref<8x128xf32, #tpu.memory_space<vmem>>, %arg11: memref<720x128xf32, #tpu.memory_space<vmem>>, %arg12: memref<240x128xf32, #tpu.memory_space<vmem>>) attributes {dimension_semantics = [#tpu.dimension_semantics<parallel>], iteration_bounds = array<i64: 1>, scalar_prefetch = 0 : i64, scratch_operands = 2 : i64, tpu.core_type = #tpu.core_type<tc>, window_params = [{transform_indices = @transform_0, window_bounds = array<i64: 1024, 128>}, {pipeline_mode = #tpu.pipeline_mode<synchronous>, transform_indices = @transform_1, window_bounds = array<i64: 96, 96>}, {pipeline_mode = #tpu.pipeline_mode<synchronous>, transform_indices = @transform_2, window_bounds = array<i64: 48, 128>}, {pipeline_mode = #tpu.pipeline_mode<synchronous>, transform_indices = @transform_3, window_bounds = array<i64: 96, 240>}, {pipeline_mode = #tpu.pipeline_mode<synchronous>, transform_indices = @transform_4, window_bounds = array<i64: 48, 128>}, {pipeline_mode = #tpu.pipeline_mode<synchronous>, transform_indices = @transform_5, window_bounds = array<i64: 32, 240>}, {pipeline_mode = #tpu.pipeline_mode<synchronous>, transform_indices = @transform_6, window_bounds = array<i64: 32, 128>}, {pipeline_mode = #tpu.pipeline_mode<synchronous>, transform_indices = @transform_7, window_bounds = array<i64: 8, 32>}, {pipeline_mode = #tpu.pipeline_mode<synchronous>, transform_indices = @transform_8, window_bounds = array<i64: 8, 128>}, {transform_indices = @transform_9, window_bounds = array<i64: 8, 128>}]} {
    %c0 = arith.constant 0 : index
    %c0_0 = arith.constant 0 : index
    %0 = vector.load %arg2[%c0, %c0_0] : memref<96x96xf32, #tpu.memory_space<vmem>>, vector<96x96xf32>
    %c0_1 = arith.constant 0 : index
    %c0_2 = arith.constant 0 : index
    %1 = vector.load %arg3[%c0_1, %c0_2] : memref<48x128xf32, #tpu.memory_space<vmem>>, vector<48x128xf32>
    %c0_3 = arith.constant 0 : index
    %c0_4 = arith.constant 0 : index
    %2 = vector.load %arg1[%c0_3, %c0_4] : memref<1024x128xf32, #tpu.memory_space<vmem>>, vector<96x128xf32>
    %c32 = arith.constant 32 : index
    %c0_5 = arith.constant 0 : index
    %3 = vector.load %arg1[%c32, %c0_5] : memref<1024x128xf32, #tpu.memory_space<vmem>>, vector<96x128xf32>
    %cst = arith.constant dense<0.000000e+00> : vector<96x128xf32>
    %4 = tpu.matmul %0, %2, %cst {dimension_numbers = #tpu.dot_dimension_numbers<[1], [0], [0], [1], [0, 0, 1, 1], [], []>} : vector<96x96xf32>, vector<96x128xf32>, vector<96x128xf32> -> vector<96x128xf32>
    %cst_6 = arith.constant dense<0.000000e+00> : vector<96x128xf32>
    %5 = tpu.matmul %0, %3, %cst_6 {dimension_numbers = #tpu.dot_dimension_numbers<[1], [0], [0], [1], [0, 0, 1, 1], [], []>} : vector<96x96xf32>, vector<96x128xf32>, vector<96x128xf32> -> vector<96x128xf32>
    %6 = arith.maximumf %4, %5 : vector<96x128xf32>
    %7 = vector.extract_strided_slice %6 {offsets = [0, 0], sizes = [48, 128], strides = [1, 1]} : vector<96x128xf32> to vector<48x128xf32>
    %8 = vector.extract_strided_slice %6 {offsets = [48, 0], sizes = [48, 128], strides = [1, 1]} : vector<96x128xf32> to vector<48x128xf32>
    %9 = arith.maximumf %7, %8 : vector<48x128xf32>
    %10 = arith.addf %9, %1 : vector<48x128xf32>
    %11 = arith.negf %10 : vector<48x128xf32>
    %12 = math.exp %11 : vector<48x128xf32>
    %cst_7 = arith.constant 1.000000e+00 : f32
    %13 = vector.broadcast %cst_7 : f32 to vector<48x128xf32>
    %14 = arith.addf %13, %12 : vector<48x128xf32>
    %15 = arith.divf %13, %14 : vector<48x128xf32>
    %c0_8 = arith.constant 0 : index
    %c0_9 = arith.constant 0 : index
    %16 = vector.load %arg11[%c0_8, %c0_9] : memref<720x128xf32, #tpu.memory_space<vmem>>, vector<48x128xf32>
    tpu.vector_store %arg11[%c0_8, %c0_9], %15 {strides = array<i32>} : memref<720x128xf32, #tpu.memory_space<vmem>>, vector<48x128xf32>,
    %c64 = arith.constant 64 : index
    %c0_10 = arith.constant 0 : index
    %17 = vector.load %arg1[%c64, %c0_10] : memref<1024x128xf32, #tpu.memory_space<vmem>>, vector<96x128xf32>
    %c96 = arith.constant 96 : index
    %c0_11 = arith.constant 0 : index
    %18 = vector.load %arg1[%c96, %c0_11] : memref<1024x128xf32, #tpu.memory_space<vmem>>, vector<96x128xf32>
    %cst_12 = arith.constant dense<0.000000e+00> : vector<96x128xf32>
    %19 = tpu.matmul %0, %17, %cst_12 {dimension_numbers = #tpu.dot_dimension_numbers<[1], [0], [0], [1], [0, 0, 1, 1], [], []>} : vector<96x96xf32>, vector<96x128xf32>, vector<96x128xf32> -> vector<96x128xf32>
    %cst_13 = arith.constant dense<0.000000e+00> : vector<96x128xf32>
    %20 = tpu.matmul %0, %18, %cst_13 {dimension_numbers = #tpu.dot_dimension_numbers<[1], [0], [0], [1], [0, 0, 1, 1], [], []>} : vector<96x96xf32>, vector<96x128xf32>, vector<96x128xf32> -> vector<96x128xf32>
    %21 = arith.maximumf %19, %20 : vector<96x128xf32>
    %22 = vector.extract_strided_slice %21 {offsets = [0, 0], sizes = [48, 128], strides = [1, 1]} : vector<96x128xf32> to vector<48x128xf32>
    %23 = vector.extract_strided_slice %21 {offsets = [48, 0], sizes = [48, 128], strides = [1, 1]} : vector<96x128xf32> to vector<48x128xf32>
    %24 = arith.maximumf %22, %23 : vector<48x128xf32>
    %25 = arith.addf %24, %1 : vector<48x128xf32>
    %26 = arith.negf %25 : vector<48x128xf32>
    %27 = math.exp %26 : vector<48x128xf32>
    %cst_14 = arith.constant 1.000000e+00 : f32
    %28 = vector.broadcast %cst_14 : f32 to vector<48x128xf32>
    %29 = arith.addf %28, %27 : vector<48x128xf32>
    %30 = arith.divf %28, %29 : vector<48x128xf32>
    %c48 = arith.constant 48 : index
    %c0_15 = arith.constant 0 : index
    %31 = vector.load %arg11[%c48, %c0_15] : memref<720x128xf32, #tpu.memory_space<vmem>>, vector<48x128xf32>
    tpu.vector_store %arg11[%c48, %c0_15], %30 {strides = array<i32>} : memref<720x128xf32, #tpu.memory_space<vmem>>, vector<48x128xf32>,
    %c128 = arith.constant 128 : index
    %c0_16 = arith.constant 0 : index
    %32 = vector.load %arg1[%c128, %c0_16] : memref<1024x128xf32, #tpu.memory_space<vmem>>, vector<96x128xf32>
    %c160 = arith.constant 160 : index
    %c0_17 = arith.constant 0 : index
    %33 = vector.load %arg1[%c160, %c0_17] : memref<1024x128xf32, #tpu.memory_space<vmem>>, vector<96x128xf32>
    %cst_18 = arith.constant dense<0.000000e+00> : vector<96x128xf32>
    %34 = tpu.matmul %0, %32, %cst_18 {dimension_numbers = #tpu.dot_dimension_numbers<[1], [0], [0], [1], [0, 0, 1, 1], [], []>} : vector<96x96xf32>, vector<96x128xf32>, vector<96x128xf32> -> vector<96x128xf32>
    %cst_19 = arith.constant dense<0.000000e+00> : vector<96x128xf32>
    %35 = tpu.matmul %0, %33, %cst_19 {dimension_numbers = #tpu.dot_dimension_numbers<[1], [0], [0], [1], [0, 0, 1, 1], [], []>} : vector<96x96xf32>, vector<96x128xf32>, vector<96x128xf32> -> vector<96x128xf32>
    %36 = arith.maximumf %34, %35 : vector<96x128xf32>
    %37 = vector.extract_strided_slice %36 {offsets = [0, 0], sizes = [48, 128], strides = [1, 1]} : vector<96x128xf32> to vector<48x128xf32>
    %38 = vector.extract_strided_slice %36 {offsets = [48, 0], sizes = [48, 128], strides = [1, 1]} : vector<96x128xf32> to vector<48x128xf32>
    %39 = arith.maximumf %37, %38 : vector<48x128xf32>
    %40 = arith.addf %39, %1 : vector<48x128xf32>
    %41 = arith.negf %40 : vector<48x128xf32>
    %42 = math.exp %41 : vector<48x128xf32>
    %cst_20 = arith.constant 1.000000e+00 : f32
    %43 = vector.broadcast %cst_20 : f32 to vector<48x128xf32>
    %44 = arith.addf %43, %42 : vector<48x128xf32>
    %45 = arith.divf %43, %44 : vector<48x128xf32>
    %c96_21 = arith.constant 96 : index
    %c0_22 = arith.constant 0 : index
    %46 = vector.load %arg11[%c96_21, %c0_22] : memref<720x128xf32, #tpu.memory_space<vmem>>, vector<48x128xf32>
    tpu.vector_store %arg11[%c96_21, %c0_22], %45 {strides = array<i32>} : memref<720x128xf32, #tpu.memory_space<vmem>>, vector<48x128xf32>,
    %c192 = arith.constant 192 : index
    %c0_23 = arith.constant 0 : index
    %47 = vector.load %arg1[%c192, %c0_23] : memref<1024x128xf32, #tpu.memory_space<vmem>>, vector<96x128xf32>
    %c224 = arith.constant 224 : index
    %c0_24 = arith.constant 0 : index
    %48 = vector.load %arg1[%c224, %c0_24] : memref<1024x128xf32, #tpu.memory_space<vmem>>, vector<96x128xf32>
    %cst_25 = arith.constant dense<0.000000e+00> : vector<96x128xf32>
    %49 = tpu.matmul %0, %47, %cst_25 {dimension_numbers = #tpu.dot_dimension_numbers<[1], [0], [0], [1], [0, 0, 1, 1], [], []>} : vector<96x96xf32>, vector<96x128xf32>, vector<96x128xf32> -> vector<96x128xf32>
    %cst_26 = arith.constant dense<0.000000e+00> : vector<96x128xf32>
    %50 = tpu.matmul %0, %48, %cst_26 {dimension_numbers = #tpu.dot_dimension_numbers<[1], [0], [0], [1], [0, 0, 1, 1], [], []>} : vector<96x96xf32>, vector<96x128xf32>, vector<96x128xf32> -> vector<96x128xf32>
    %51 = arith.maximumf %49, %50 : vector<96x128xf32>
    %52 = vector.extract_strided_slice %51 {offsets = [0, 0], sizes = [48, 128], strides = [1, 1]} : vector<96x128xf32> to vector<48x128xf32>
    %53 = vector.extract_strided_slice %51 {offsets = [48, 0], sizes = [48, 128], strides = [1, 1]} : vector<96x128xf32> to vector<48x128xf32>
    %54 = arith.maximumf %52, %53 : vector<48x128xf32>
    %55 = arith.addf %54, %1 : vector<48x128xf32>
    %56 = arith.negf %55 : vector<48x128xf32>
    %57 = math.exp %56 : vector<48x128xf32>
    %cst_27 = arith.constant 1.000000e+00 : f32
    %58 = vector.broadcast %cst_27 : f32 to vector<48x128xf32>
    %59 = arith.addf %58, %57 : vector<48x128xf32>
    %60 = arith.divf %58, %59 : vector<48x128xf32>
    %c144 = arith.constant 144 : index
    %c0_28 = arith.constant 0 : index
    %61 = vector.load %arg11[%c144, %c0_28] : memref<720x128xf32, #tpu.memory_space<vmem>>, vector<48x128xf32>
    tpu.vector_store %arg11[%c144, %c0_28], %60 {strides = array<i32>} : memref<720x128xf32, #tpu.memory_space<vmem>>, vector<48x128xf32>,
    %c256 = arith.constant 256 : index
    %c0_29 = arith.constant 0 : index
    %62 = vector.load %arg1[%c256, %c0_29] : memref<1024x128xf32, #tpu.memory_space<vmem>>, vector<96x128xf32>
    %c288 = arith.constant 288 : index
    %c0_30 = arith.constant 0 : index
    %63 = vector.load %arg1[%c288, %c0_30] : memref<1024x128xf32, #tpu.memory_space<vmem>>, vector<96x128xf32>
    %cst_31 = arith.constant dense<0.000000e+00> : vector<96x128xf32>
    %64 = tpu.matmul %0, %62, %cst_31 {dimension_numbers = #tpu.dot_dimension_numbers<[1], [0], [0], [1], [0, 0, 1, 1], [], []>} : vector<96x96xf32>, vector<96x128xf32>, vector<96x128xf32> -> vector<96x128xf32>
    %cst_32 = arith.constant dense<0.000000e+00> : vector<96x128xf32>
    %65 = tpu.matmul %0, %63, %cst_32 {dimension_numbers = #tpu.dot_dimension_numbers<[1], [0], [0], [1], [0, 0, 1, 1], [], []>} : vector<96x96xf32>, vector<96x128xf32>, vector<96x128xf32> -> vector<96x128xf32>
    %66 = arith.maximumf %64, %65 : vector<96x128xf32>
    %67 = vector.extract_strided_slice %66 {offsets = [0, 0], sizes = [48, 128], strides = [1, 1]} : vector<96x128xf32> to vector<48x128xf32>
    %68 = vector.extract_strided_slice %66 {offsets = [48, 0], sizes = [48, 128], strides = [1, 1]} : vector<96x128xf32> to vector<48x128xf32>
    %69 = arith.maximumf %67, %68 : vector<48x128xf32>
    %70 = arith.addf %69, %1 : vector<48x128xf32>
    %71 = arith.negf %70 : vector<48x128xf32>
    %72 = math.exp %71 : vector<48x128xf32>
    %cst_33 = arith.constant 1.000000e+00 : f32
    %73 = vector.broadcast %cst_33 : f32 to vector<48x128xf32>
    %74 = arith.addf %73, %72 : vector<48x128xf32>
    %75 = arith.divf %73, %74 : vector<48x128xf32>
    %c192_34 = arith.constant 192 : index
    %c0_35 = arith.constant 0 : index
    %76 = vector.load %arg11[%c192_34, %c0_35] : memref<720x128xf32, #tpu.memory_space<vmem>>, vector<48x128xf32>
    tpu.vector_store %arg11[%c192_34, %c0_35], %75 {strides = array<i32>} : memref<720x128xf32, #tpu.memory_space<vmem>>, vector<48x128xf32>,
    %c320 = arith.constant 320 : index
    %c0_36 = arith.constant 0 : index
    %77 = vector.load %arg1[%c320, %c0_36] : memref<1024x128xf32, #tpu.memory_space<vmem>>, vector<96x128xf32>
    %c352 = arith.constant 352 : index
    %c0_37 = arith.constant 0 : index
    %78 = vector.load %arg1[%c352, %c0_37] : memref<1024x128xf32, #tpu.memory_space<vmem>>, vector<96x128xf32>
    %cst_38 = arith.constant dense<0.000000e+00> : vector<96x128xf32>
    %79 = tpu.matmul %0, %77, %cst_38 {dimension_numbers = #tpu.dot_dimension_numbers<[1], [0], [0], [1], [0, 0, 1, 1], [], []>} : vector<96x96xf32>, vector<96x128xf32>, vector<96x128xf32> -> vector<96x128xf32>
    %cst_39 = arith.constant dense<0.000000e+00> : vector<96x128xf32>
    %80 = tpu.matmul %0, %78, %cst_39 {dimension_numbers = #tpu.dot_dimension_numbers<[1], [0], [0], [1], [0, 0, 1, 1], [], []>} : vector<96x96xf32>, vector<96x128xf32>, vector<96x128xf32> -> vector<96x128xf32>
    %81 = arith.maximumf %79, %80 : vector<96x128xf32>
    %82 = vector.extract_strided_slice %81 {offsets = [0, 0], sizes = [48, 128], strides = [1, 1]} : vector<96x128xf32> to vector<48x128xf32>
    %83 = vector.extract_strided_slice %81 {offsets = [48, 0], sizes = [48, 128], strides = [1, 1]} : vector<96x128xf32> to vector<48x128xf32>
    %84 = arith.maximumf %82, %83 : vector<48x128xf32>
    %85 = arith.addf %84, %1 : vector<48x128xf32>
    %86 = arith.negf %85 : vector<48x128xf32>
    %87 = math.exp %86 : vector<48x128xf32>
    %cst_40 = arith.constant 1.000000e+00 : f32
    %88 = vector.broadcast %cst_40 : f32 to vector<48x128xf32>
    %89 = arith.addf %88, %87 : vector<48x128xf32>
    %90 = arith.divf %88, %89 : vector<48x128xf32>
    %c240 = arith.constant 240 : index
    %c0_41 = arith.constant 0 : index
    %91 = vector.load %arg11[%c240, %c0_41] : memref<720x128xf32, #tpu.memory_space<vmem>>, vector<48x128xf32>
    tpu.vector_store %arg11[%c240, %c0_41], %90 {strides = array<i32>} : memref<720x128xf32, #tpu.memory_space<vmem>>, vector<48x128xf32>,
    %c384 = arith.constant 384 : index
    %c0_42 = arith.constant 0 : index
    %92 = vector.load %arg1[%c384, %c0_42] : memref<1024x128xf32, #tpu.memory_space<vmem>>, vector<96x128xf32>
    %c416 = arith.constant 416 : index
    %c0_43 = arith.constant 0 : index
    %93 = vector.load %arg1[%c416, %c0_43] : memref<1024x128xf32, #tpu.memory_space<vmem>>, vector<96x128xf32>
    %cst_44 = arith.constant dense<0.000000e+00> : vector<96x128xf32>
    %94 = tpu.matmul %0, %92, %cst_44 {dimension_numbers = #tpu.dot_dimension_numbers<[1], [0], [0], [1], [0, 0, 1, 1], [], []>} : vector<96x96xf32>, vector<96x128xf32>, vector<96x128xf32> -> vector<96x128xf32>
    %cst_45 = arith.constant dense<0.000000e+00> : vector<96x128xf32>
    %95 = tpu.matmul %0, %93, %cst_45 {dimension_numbers = #tpu.dot_dimension_numbers<[1], [0], [0], [1], [0, 0, 1, 1], [], []>} : vector<96x96xf32>, vector<96x128xf32>, vector<96x128xf32> -> vector<96x128xf32>
    %96 = arith.maximumf %94, %95 : vector<96x128xf32>
    %97 = vector.extract_strided_slice %96 {offsets = [0, 0], sizes = [48, 128], strides = [1, 1]} : vector<96x128xf32> to vector<48x128xf32>
    %98 = vector.extract_strided_slice %96 {offsets = [48, 0], sizes = [48, 128], strides = [1, 1]} : vector<96x128xf32> to vector<48x128xf32>
    %99 = arith.maximumf %97, %98 : vector<48x128xf32>
    %100 = arith.addf %99, %1 : vector<48x128xf32>
    %101 = arith.negf %100 : vector<48x128xf32>
    %102 = math.exp %101 : vector<48x128xf32>
    %cst_46 = arith.constant 1.000000e+00 : f32
    %103 = vector.broadcast %cst_46 : f32 to vector<48x128xf32>
    %104 = arith.addf %103, %102 : vector<48x128xf32>
    %105 = arith.divf %103, %104 : vector<48x128xf32>
    %c288_47 = arith.constant 288 : index
    %c0_48 = arith.constant 0 : index
    %106 = vector.load %arg11[%c288_47, %c0_48] : memref<720x128xf32, #tpu.memory_space<vmem>>, vector<48x128xf32>
    tpu.vector_store %arg11[%c288_47, %c0_48], %105 {strides = array<i32>} : memref<720x128xf32, #tpu.memory_space<vmem>>, vector<48x128xf32>,
    %c448 = arith.constant 448 : index
    %c0_49 = arith.constant 0 : index
    %107 = vector.load %arg1[%c448, %c0_49] : memref<1024x128xf32, #tpu.memory_space<vmem>>, vector<96x128xf32>
    %c480 = arith.constant 480 : index
    %c0_50 = arith.constant 0 : index
    %108 = vector.load %arg1[%c480, %c0_50] : memref<1024x128xf32, #tpu.memory_space<vmem>>, vector<96x128xf32>
    %cst_51 = arith.constant dense<0.000000e+00> : vector<96x128xf32>
    %109 = tpu.matmul %0, %107, %cst_51 {dimension_numbers = #tpu.dot_dimension_numbers<[1], [0], [0], [1], [0, 0, 1, 1], [], []>} : vector<96x96xf32>, vector<96x128xf32>, vector<96x128xf32> -> vector<96x128xf32>
    %cst_52 = arith.constant dense<0.000000e+00> : vector<96x128xf32>
    %110 = tpu.matmul %0, %108, %cst_52 {dimension_numbers = #tpu.dot_dimension_numbers<[1], [0], [0], [1], [0, 0, 1, 1], [], []>} : vector<96x96xf32>, vector<96x128xf32>, vector<96x128xf32> -> vector<96x128xf32>
    %111 = arith.maximumf %109, %110 : vector<96x128xf32>
    %112 = vector.extract_strided_slice %111 {offsets = [0, 0], sizes = [48, 128], strides = [1, 1]} : vector<96x128xf32> to vector<48x128xf32>
    %113 = vector.extract_strided_slice %111 {offsets = [48, 0], sizes = [48, 128], strides = [1, 1]} : vector<96x128xf32> to vector<48x128xf32>
    %114 = arith.maximumf %112, %113 : vector<48x128xf32>
    %115 = arith.addf %114, %1 : vector<48x128xf32>
    %116 = arith.negf %115 : vector<48x128xf32>
    %117 = math.exp %116 : vector<48x128xf32>
    %cst_53 = arith.constant 1.000000e+00 : f32
    %118 = vector.broadcast %cst_53 : f32 to vector<48x128xf32>
    %119 = arith.addf %118, %117 : vector<48x128xf32>
    %120 = arith.divf %118, %119 : vector<48x128xf32>
    %c336 = arith.constant 336 : index
    %c0_54 = arith.constant 0 : index
    %121 = vector.load %arg11[%c336, %c0_54] : memref<720x128xf32, #tpu.memory_space<vmem>>, vector<48x128xf32>
    tpu.vector_store %arg11[%c336, %c0_54], %120 {strides = array<i32>} : memref<720x128xf32, #tpu.memory_space<vmem>>, vector<48x128xf32>,
    %c512 = arith.constant 512 : index
    %c0_55 = arith.constant 0 : index
    %122 = vector.load %arg1[%c512, %c0_55] : memref<1024x128xf32, #tpu.memory_space<vmem>>, vector<96x128xf32>
    %c544 = arith.constant 544 : index
    %c0_56 = arith.constant 0 : index
    %123 = vector.load %arg1[%c544, %c0_56] : memref<1024x128xf32, #tpu.memory_space<vmem>>, vector<96x128xf32>
    %cst_57 = arith.constant dense<0.000000e+00> : vector<96x128xf32>
    %124 = tpu.matmul %0, %122, %cst_57 {dimension_numbers = #tpu.dot_dimension_numbers<[1], [0], [0], [1], [0, 0, 1, 1], [], []>} : vector<96x96xf32>, vector<96x128xf32>, vector<96x128xf32> -> vector<96x128xf32>
    %cst_58 = arith.constant dense<0.000000e+00> : vector<96x128xf32>
    %125 = tpu.matmul %0, %123, %cst_58 {dimension_numbers = #tpu.dot_dimension_numbers<[1], [0], [0], [1], [0, 0, 1, 1], [], []>} : vector<96x96xf32>, vector<96x128xf32>, vector<96x128xf32> -> vector<96x128xf32>
    %126 = arith.maximumf %124, %125 : vector<96x128xf32>
    %127 = vector.extract_strided_slice %126 {offsets = [0, 0], sizes = [48, 128], strides = [1, 1]} : vector<96x128xf32> to vector<48x128xf32>
    %128 = vector.extract_strided_slice %126 {offsets = [48, 0], sizes = [48, 128], strides = [1, 1]} : vector<96x128xf32> to vector<48x128xf32>
    %129 = arith.maximumf %127, %128 : vector<48x128xf32>
    %130 = arith.addf %129, %1 : vector<48x128xf32>
    %131 = arith.negf %130 : vector<48x128xf32>
    %132 = math.exp %131 : vector<48x128xf32>
    %cst_59 = arith.constant 1.000000e+00 : f32
    %133 = vector.broadcast %cst_59 : f32 to vector<48x128xf32>
    %134 = arith.addf %133, %132 : vector<48x128xf32>
    %135 = arith.divf %133, %134 : vector<48x128xf32>
    %c384_60 = arith.constant 384 : index
    %c0_61 = arith.constant 0 : index
    %136 = vector.load %arg11[%c384_60, %c0_61] : memref<720x128xf32, #tpu.memory_space<vmem>>, vector<48x128xf32>
    tpu.vector_store %arg11[%c384_60, %c0_61], %135 {strides = array<i32>} : memref<720x128xf32, #tpu.memory_space<vmem>>, vector<48x128xf32>,
    %c576 = arith.constant 576 : index
    %c0_62 = arith.constant 0 : index
    %137 = vector.load %arg1[%c576, %c0_62] : memref<1024x128xf32, #tpu.memory_space<vmem>>, vector<96x128xf32>
    %c608 = arith.constant 608 : index
    %c0_63 = arith.constant 0 : index
    %138 = vector.load %arg1[%c608, %c0_63] : memref<1024x128xf32, #tpu.memory_space<vmem>>, vector<96x128xf32>
    %cst_64 = arith.constant dense<0.000000e+00> : vector<96x128xf32>
    %139 = tpu.matmul %0, %137, %cst_64 {dimension_numbers = #tpu.dot_dimension_numbers<[1], [0], [0], [1], [0, 0, 1, 1], [], []>} : vector<96x96xf32>, vector<96x128xf32>, vector<96x128xf32> -> vector<96x128xf32>
    %cst_65 = arith.constant dense<0.000000e+00> : vector<96x128xf32>
    %140 = tpu.matmul %0, %138, %cst_65 {dimension_numbers = #tpu.dot_dimension_numbers<[1], [0], [0], [1], [0, 0, 1, 1], [], []>} : vector<96x96xf32>, vector<96x128xf32>, vector<96x128xf32> -> vector<96x128xf32>
    %141 = arith.maximumf %139, %140 : vector<96x128xf32>
    %142 = vector.extract_strided_slice %141 {offsets = [0, 0], sizes = [48, 128], strides = [1, 1]} : vector<96x128xf32> to vector<48x128xf32>
    %143 = vector.extract_strided_slice %141 {offsets = [48, 0], sizes = [48, 128], strides = [1, 1]} : vector<96x128xf32> to vector<48x128xf32>
    %144 = arith.maximumf %142, %143 : vector<48x128xf32>
    %145 = arith.addf %144, %1 : vector<48x128xf32>
    %146 = arith.negf %145 : vector<48x128xf32>
    %147 = math.exp %146 : vector<48x128xf32>
    %cst_66 = arith.constant 1.000000e+00 : f32
    %148 = vector.broadcast %cst_66 : f32 to vector<48x128xf32>
    %149 = arith.addf %148, %147 : vector<48x128xf32>
    %150 = arith.divf %148, %149 : vector<48x128xf32>
    %c432 = arith.constant 432 : index
    %c0_67 = arith.constant 0 : index
    %151 = vector.load %arg11[%c432, %c0_67] : memref<720x128xf32, #tpu.memory_space<vmem>>, vector<48x128xf32>
    tpu.vector_store %arg11[%c432, %c0_67], %150 {strides = array<i32>} : memref<720x128xf32, #tpu.memory_space<vmem>>, vector<48x128xf32>,
    %c640 = arith.constant 640 : index
    %c0_68 = arith.constant 0 : index
    %152 = vector.load %arg1[%c640, %c0_68] : memref<1024x128xf32, #tpu.memory_space<vmem>>, vector<96x128xf32>
    %c672 = arith.constant 672 : index
    %c0_69 = arith.constant 0 : index
    %153 = vector.load %arg1[%c672, %c0_69] : memref<1024x128xf32, #tpu.memory_space<vmem>>, vector<96x128xf32>
    %cst_70 = arith.constant dense<0.000000e+00> : vector<96x128xf32>
    %154 = tpu.matmul %0, %152, %cst_70 {dimension_numbers = #tpu.dot_dimension_numbers<[1], [0], [0], [1], [0, 0, 1, 1], [], []>} : vector<96x96xf32>, vector<96x128xf32>, vector<96x128xf32> -> vector<96x128xf32>
    %cst_71 = arith.constant dense<0.000000e+00> : vector<96x128xf32>
    %155 = tpu.matmul %0, %153, %cst_71 {dimension_numbers = #tpu.dot_dimension_numbers<[1], [0], [0], [1], [0, 0, 1, 1], [], []>} : vector<96x96xf32>, vector<96x128xf32>, vector<96x128xf32> -> vector<96x128xf32>
    %156 = arith.maximumf %154, %155 : vector<96x128xf32>
    %157 = vector.extract_strided_slice %156 {offsets = [0, 0], sizes = [48, 128], strides = [1, 1]} : vector<96x128xf32> to vector<48x128xf32>
    %158 = vector.extract_strided_slice %156 {offsets = [48, 0], sizes = [48, 128], strides = [1, 1]} : vector<96x128xf32> to vector<48x128xf32>
    %159 = arith.maximumf %157, %158 : vector<48x128xf32>
    %160 = arith.addf %159, %1 : vector<48x128xf32>
    %161 = arith.negf %160 : vector<48x128xf32>
    %162 = math.exp %161 : vector<48x128xf32>
    %cst_72 = arith.constant 1.000000e+00 : f32
    %163 = vector.broadcast %cst_72 : f32 to vector<48x128xf32>
    %164 = arith.addf %163, %162 : vector<48x128xf32>
    %165 = arith.divf %163, %164 : vector<48x128xf32>
    %c480_73 = arith.constant 480 : index
    %c0_74 = arith.constant 0 : index
    %166 = vector.load %arg11[%c480_73, %c0_74] : memref<720x128xf32, #tpu.memory_space<vmem>>, vector<48x128xf32>
    tpu.vector_store %arg11[%c480_73, %c0_74], %165 {strides = array<i32>} : memref<720x128xf32, #tpu.memory_space<vmem>>, vector<48x128xf32>,
    %c704 = arith.constant 704 : index
    %c0_75 = arith.constant 0 : index
    %167 = vector.load %arg1[%c704, %c0_75] : memref<1024x128xf32, #tpu.memory_space<vmem>>, vector<96x128xf32>
    %c736 = arith.constant 736 : index
    %c0_76 = arith.constant 0 : index
    %168 = vector.load %arg1[%c736, %c0_76] : memref<1024x128xf32, #tpu.memory_space<vmem>>, vector<96x128xf32>
    %cst_77 = arith.constant dense<0.000000e+00> : vector<96x128xf32>
    %169 = tpu.matmul %0, %167, %cst_77 {dimension_numbers = #tpu.dot_dimension_numbers<[1], [0], [0], [1], [0, 0, 1, 1], [], []>} : vector<96x96xf32>, vector<96x128xf32>, vector<96x128xf32> -> vector<96x128xf32>
    %cst_78 = arith.constant dense<0.000000e+00> : vector<96x128xf32>
    %170 = tpu.matmul %0, %168, %cst_78 {dimension_numbers = #tpu.dot_dimension_numbers<[1], [0], [0], [1], [0, 0, 1, 1], [], []>} : vector<96x96xf32>, vector<96x128xf32>, vector<96x128xf32> -> vector<96x128xf32>
    %171 = arith.maximumf %169, %170 : vector<96x128xf32>
    %172 = vector.extract_strided_slice %171 {offsets = [0, 0], sizes = [48, 128], strides = [1, 1]} : vector<96x128xf32> to vector<48x128xf32>
    %173 = vector.extract_strided_slice %171 {offsets = [48, 0], sizes = [48, 128], strides = [1, 1]} : vector<96x128xf32> to vector<48x128xf32>
    %174 = arith.maximumf %172, %173 : vector<48x128xf32>
    %175 = arith.addf %174, %1 : vector<48x128xf32>
    %176 = arith.negf %175 : vector<48x128xf32>
    %177 = math.exp %176 : vector<48x128xf32>
    %cst_79 = arith.constant 1.000000e+00 : f32
    %178 = vector.broadcast %cst_79 : f32 to vector<48x128xf32>
    %179 = arith.addf %178, %177 : vector<48x128xf32>
    %180 = arith.divf %178, %179 : vector<48x128xf32>
    %c528 = arith.constant 528 : index
    %c0_80 = arith.constant 0 : index
    %181 = vector.load %arg11[%c528, %c0_80] : memref<720x128xf32, #tpu.memory_space<vmem>>, vector<48x128xf32>
    tpu.vector_store %arg11[%c528, %c0_80], %180 {strides = array<i32>} : memref<720x128xf32, #tpu.memory_space<vmem>>, vector<48x128xf32>,
    %c768 = arith.constant 768 : index
    %c0_81 = arith.constant 0 : index
    %182 = vector.load %arg1[%c768, %c0_81] : memref<1024x128xf32, #tpu.memory_space<vmem>>, vector<96x128xf32>
    %c800 = arith.constant 800 : index
    %c0_82 = arith.constant 0 : index
    %183 = vector.load %arg1[%c800, %c0_82] : memref<1024x128xf32, #tpu.memory_space<vmem>>, vector<96x128xf32>
    %cst_83 = arith.constant dense<0.000000e+00> : vector<96x128xf32>
    %184 = tpu.matmul %0, %182, %cst_83 {dimension_numbers = #tpu.dot_dimension_numbers<[1], [0], [0], [1], [0, 0, 1, 1], [], []>} : vector<96x96xf32>, vector<96x128xf32>, vector<96x128xf32> -> vector<96x128xf32>
    %cst_84 = arith.constant dense<0.000000e+00> : vector<96x128xf32>
    %185 = tpu.matmul %0, %183, %cst_84 {dimension_numbers = #tpu.dot_dimension_numbers<[1], [0], [0], [1], [0, 0, 1, 1], [], []>} : vector<96x96xf32>, vector<96x128xf32>, vector<96x128xf32> -> vector<96x128xf32>
    %186 = arith.maximumf %184, %185 : vector<96x128xf32>
    %187 = vector.extract_strided_slice %186 {offsets = [0, 0], sizes = [48, 128], strides = [1, 1]} : vector<96x128xf32> to vector<48x128xf32>
    %188 = vector.extract_strided_slice %186 {offsets = [48, 0], sizes = [48, 128], strides = [1, 1]} : vector<96x128xf32> to vector<48x128xf32>
    %189 = arith.maximumf %187, %188 : vector<48x128xf32>
    %190 = arith.addf %189, %1 : vector<48x128xf32>
    %191 = arith.negf %190 : vector<48x128xf32>
    %192 = math.exp %191 : vector<48x128xf32>
    %cst_85 = arith.constant 1.000000e+00 : f32
    %193 = vector.broadcast %cst_85 : f32 to vector<48x128xf32>
    %194 = arith.addf %193, %192 : vector<48x128xf32>
    %195 = arith.divf %193, %194 : vector<48x128xf32>
    %c576_86 = arith.constant 576 : index
    %c0_87 = arith.constant 0 : index
    %196 = vector.load %arg11[%c576_86, %c0_87] : memref<720x128xf32, #tpu.memory_space<vmem>>, vector<48x128xf32>
    tpu.vector_store %arg11[%c576_86, %c0_87], %195 {strides = array<i32>} : memref<720x128xf32, #tpu.memory_space<vmem>>, vector<48x128xf32>,
    %c832 = arith.constant 832 : index
    %c0_88 = arith.constant 0 : index
    %197 = vector.load %arg1[%c832, %c0_88] : memref<1024x128xf32, #tpu.memory_space<vmem>>, vector<96x128xf32>
    %c864 = arith.constant 864 : index
    %c0_89 = arith.constant 0 : index
    %198 = vector.load %arg1[%c864, %c0_89] : memref<1024x128xf32, #tpu.memory_space<vmem>>, vector<96x128xf32>
    %cst_90 = arith.constant dense<0.000000e+00> : vector<96x128xf32>
    %199 = tpu.matmul %0, %197, %cst_90 {dimension_numbers = #tpu.dot_dimension_numbers<[1], [0], [0], [1], [0, 0, 1, 1], [], []>} : vector<96x96xf32>, vector<96x128xf32>, vector<96x128xf32> -> vector<96x128xf32>
    %cst_91 = arith.constant dense<0.000000e+00> : vector<96x128xf32>
    %200 = tpu.matmul %0, %198, %cst_91 {dimension_numbers = #tpu.dot_dimension_numbers<[1], [0], [0], [1], [0, 0, 1, 1], [], []>} : vector<96x96xf32>, vector<96x128xf32>, vector<96x128xf32> -> vector<96x128xf32>
    %201 = arith.maximumf %199, %200 : vector<96x128xf32>
    %202 = vector.extract_strided_slice %201 {offsets = [0, 0], sizes = [48, 128], strides = [1, 1]} : vector<96x128xf32> to vector<48x128xf32>
    %203 = vector.extract_strided_slice %201 {offsets = [48, 0], sizes = [48, 128], strides = [1, 1]} : vector<96x128xf32> to vector<48x128xf32>
    %204 = arith.maximumf %202, %203 : vector<48x128xf32>
    %205 = arith.addf %204, %1 : vector<48x128xf32>
    %206 = arith.negf %205 : vector<48x128xf32>
    %207 = math.exp %206 : vector<48x128xf32>
    %cst_92 = arith.constant 1.000000e+00 : f32
    %208 = vector.broadcast %cst_92 : f32 to vector<48x128xf32>
    %209 = arith.addf %208, %207 : vector<48x128xf32>
    %210 = arith.divf %208, %209 : vector<48x128xf32>
    %c624 = arith.constant 624 : index
    %c0_93 = arith.constant 0 : index
    %211 = vector.load %arg11[%c624, %c0_93] : memref<720x128xf32, #tpu.memory_space<vmem>>, vector<48x128xf32>
    tpu.vector_store %arg11[%c624, %c0_93], %210 {strides = array<i32>} : memref<720x128xf32, #tpu.memory_space<vmem>>, vector<48x128xf32>,
    %c896 = arith.constant 896 : index
    %c0_94 = arith.constant 0 : index
    %212 = vector.load %arg1[%c896, %c0_94] : memref<1024x128xf32, #tpu.memory_space<vmem>>, vector<96x128xf32>
    %c928 = arith.constant 928 : index
    %c0_95 = arith.constant 0 : index
    %213 = vector.load %arg1[%c928, %c0_95] : memref<1024x128xf32, #tpu.memory_space<vmem>>, vector<96x128xf32>
    %cst_96 = arith.constant dense<0.000000e+00> : vector<96x128xf32>
    %214 = tpu.matmul %0, %212, %cst_96 {dimension_numbers = #tpu.dot_dimension_numbers<[1], [0], [0], [1], [0, 0, 1, 1], [], []>} : vector<96x96xf32>, vector<96x128xf32>, vector<96x128xf32> -> vector<96x128xf32>
    %cst_97 = arith.constant dense<0.000000e+00> : vector<96x128xf32>
    %215 = tpu.matmul %0, %213, %cst_97 {dimension_numbers = #tpu.dot_dimension_numbers<[1], [0], [0], [1], [0, 0, 1, 1], [], []>} : vector<96x96xf32>, vector<96x128xf32>, vector<96x128xf32> -> vector<96x128xf32>
    %216 = arith.maximumf %214, %215 : vector<96x128xf32>
    %217 = vector.extract_strided_slice %216 {offsets = [0, 0], sizes = [48, 128], strides = [1, 1]} : vector<96x128xf32> to vector<48x128xf32>
    %218 = vector.extract_strided_slice %216 {offsets = [48, 0], sizes = [48, 128], strides = [1, 1]} : vector<96x128xf32> to vector<48x128xf32>
    %219 = arith.maximumf %217, %218 : vector<48x128xf32>
    %220 = arith.addf %219, %1 : vector<48x128xf32>
    %221 = arith.negf %220 : vector<48x128xf32>
    %222 = math.exp %221 : vector<48x128xf32>
    %cst_98 = arith.constant 1.000000e+00 : f32
    %223 = vector.broadcast %cst_98 : f32 to vector<48x128xf32>
    %224 = arith.addf %223, %222 : vector<48x128xf32>
    %225 = arith.divf %223, %224 : vector<48x128xf32>
    %c672_99 = arith.constant 672 : index
    %c0_100 = arith.constant 0 : index
    %226 = vector.load %arg11[%c672_99, %c0_100] : memref<720x128xf32, #tpu.memory_space<vmem>>, vector<48x128xf32>
    tpu.vector_store %arg11[%c672_99, %c0_100], %225 {strides = array<i32>} : memref<720x128xf32, #tpu.memory_space<vmem>>, vector<48x128xf32>,
    %c0_101 = arith.constant 0 : index
    %c0_102 = arith.constant 0 : index
    %227 = vector.load %arg4[%c0_101, %c0_102] : memref<96x240xf32, #tpu.memory_space<vmem>>, vector<96x240xf32>
    %c0_103 = arith.constant 0 : index
    %c0_104 = arith.constant 0 : index
    %228 = vector.load %arg5[%c0_103, %c0_104] : memref<48x128xf32, #tpu.memory_space<vmem>>, vector<48x128xf32>
    %c0_105 = arith.constant 0 : index
    %c0_106 = arith.constant 0 : index
    %229 = vector.load %arg11[%c0_105, %c0_106] : memref<720x128xf32, #tpu.memory_space<vmem>>, vector<240x128xf32>
    %c48_107 = arith.constant 48 : index
    %c0_108 = arith.constant 0 : index
    %230 = vector.load %arg11[%c48_107, %c0_108] : memref<720x128xf32, #tpu.memory_space<vmem>>, vector<240x128xf32>
    %cst_109 = arith.constant dense<0.000000e+00> : vector<96x128xf32>
    %231 = tpu.matmul %227, %229, %cst_109 {dimension_numbers = #tpu.dot_dimension_numbers<[1], [0], [0], [1], [0, 0, 1, 1], [], []>} : vector<96x240xf32>, vector<240x128xf32>, vector<96x128xf32> -> vector<96x128xf32>
    %cst_110 = arith.constant dense<0.000000e+00> : vector<96x128xf32>
    %232 = tpu.matmul %227, %230, %cst_110 {dimension_numbers = #tpu.dot_dimension_numbers<[1], [0], [0], [1], [0, 0, 1, 1], [], []>} : vector<96x240xf32>, vector<240x128xf32>, vector<96x128xf32> -> vector<96x128xf32>
    %233 = arith.maximumf %231, %232 : vector<96x128xf32>
    %234 = vector.extract_strided_slice %233 {offsets = [0, 0], sizes = [48, 128], strides = [1, 1]} : vector<96x128xf32> to vector<48x128xf32>
    %235 = vector.extract_strided_slice %233 {offsets = [48, 0], sizes = [48, 128], strides = [1, 1]} : vector<96x128xf32> to vector<48x128xf32>
    %236 = arith.maximumf %234, %235 : vector<48x128xf32>
    %237 = arith.addf %236, %228 : vector<48x128xf32>
    %238 = arith.negf %237 : vector<48x128xf32>
    %239 = math.exp %238 : vector<48x128xf32>
    %cst_111 = arith.constant 1.000000e+00 : f32
    %240 = vector.broadcast %cst_111 : f32 to vector<48x128xf32>
    %241 = arith.addf %240, %239 : vector<48x128xf32>
    %242 = arith.divf %240, %241 : vector<48x128xf32>
    %c0_112 = arith.constant 0 : index
    %c0_113 = arith.constant 0 : index
    %243 = vector.load %arg12[%c0_112, %c0_113] : memref<240x128xf32, #tpu.memory_space<vmem>>, vector<48x128xf32>
    tpu.vector_store %arg12[%c0_112, %c0_113], %242 {strides = array<i32>} : memref<240x128xf32, #tpu.memory_space<vmem>>, vector<48x128xf32>,
    %c96_114 = arith.constant 96 : index
    %c0_115 = arith.constant 0 : index
    %244 = vector.load %arg11[%c96_114, %c0_115] : memref<720x128xf32, #tpu.memory_space<vmem>>, vector<240x128xf32>
    %c144_116 = arith.constant 144 : index
    %c0_117 = arith.constant 0 : index
    %245 = vector.load %arg11[%c144_116, %c0_117] : memref<720x128xf32, #tpu.memory_space<vmem>>, vector<240x128xf32>
    %cst_118 = arith.constant dense<0.000000e+00> : vector<96x128xf32>
    %246 = tpu.matmul %227, %244, %cst_118 {dimension_numbers = #tpu.dot_dimension_numbers<[1], [0], [0], [1], [0, 0, 1, 1], [], []>} : vector<96x240xf32>, vector<240x128xf32>, vector<96x128xf32> -> vector<96x128xf32>
    %cst_119 = arith.constant dense<0.000000e+00> : vector<96x128xf32>
    %247 = tpu.matmul %227, %245, %cst_119 {dimension_numbers = #tpu.dot_dimension_numbers<[1], [0], [0], [1], [0, 0, 1, 1], [], []>} : vector<96x240xf32>, vector<240x128xf32>, vector<96x128xf32> -> vector<96x128xf32>
    %248 = arith.maximumf %246, %247 : vector<96x128xf32>
    %249 = vector.extract_strided_slice %248 {offsets = [0, 0], sizes = [48, 128], strides = [1, 1]} : vector<96x128xf32> to vector<48x128xf32>
    %250 = vector.extract_strided_slice %248 {offsets = [48, 0], sizes = [48, 128], strides = [1, 1]} : vector<96x128xf32> to vector<48x128xf32>
    %251 = arith.maximumf %249, %250 : vector<48x128xf32>
    %252 = arith.addf %251, %228 : vector<48x128xf32>
    %253 = arith.negf %252 : vector<48x128xf32>
    %254 = math.exp %253 : vector<48x128xf32>
    %cst_120 = arith.constant 1.000000e+00 : f32
    %255 = vector.broadcast %cst_120 : f32 to vector<48x128xf32>
    %256 = arith.addf %255, %254 : vector<48x128xf32>
    %257 = arith.divf %255, %256 : vector<48x128xf32>
    %c48_121 = arith.constant 48 : index
    %c0_122 = arith.constant 0 : index
    %258 = vector.load %arg12[%c48_121, %c0_122] : memref<240x128xf32, #tpu.memory_space<vmem>>, vector<48x128xf32>
    tpu.vector_store %arg12[%c48_121, %c0_122], %257 {strides = array<i32>} : memref<240x128xf32, #tpu.memory_space<vmem>>, vector<48x128xf32>,
    %c192_123 = arith.constant 192 : index
    %c0_124 = arith.constant 0 : index
    %259 = vector.load %arg11[%c192_123, %c0_124] : memref<720x128xf32, #tpu.memory_space<vmem>>, vector<240x128xf32>
    %c240_125 = arith.constant 240 : index
    %c0_126 = arith.constant 0 : index
    %260 = vector.load %arg11[%c240_125, %c0_126] : memref<720x128xf32, #tpu.memory_space<vmem>>, vector<240x128xf32>
    %cst_127 = arith.constant dense<0.000000e+00> : vector<96x128xf32>
    %261 = tpu.matmul %227, %259, %cst_127 {dimension_numbers = #tpu.dot_dimension_numbers<[1], [0], [0], [1], [0, 0, 1, 1], [], []>} : vector<96x240xf32>, vector<240x128xf32>, vector<96x128xf32> -> vector<96x128xf32>
    %cst_128 = arith.constant dense<0.000000e+00> : vector<96x128xf32>
    %262 = tpu.matmul %227, %260, %cst_128 {dimension_numbers = #tpu.dot_dimension_numbers<[1], [0], [0], [1], [0, 0, 1, 1], [], []>} : vector<96x240xf32>, vector<240x128xf32>, vector<96x128xf32> -> vector<96x128xf32>
    %263 = arith.maximumf %261, %262 : vector<96x128xf32>
    %264 = vector.extract_strided_slice %263 {offsets = [0, 0], sizes = [48, 128], strides = [1, 1]} : vector<96x128xf32> to vector<48x128xf32>
    %265 = vector.extract_strided_slice %263 {offsets = [48, 0], sizes = [48, 128], strides = [1, 1]} : vector<96x128xf32> to vector<48x128xf32>
    %266 = arith.maximumf %264, %265 : vector<48x128xf32>
    %267 = arith.addf %266, %228 : vector<48x128xf32>
    %268 = arith.negf %267 : vector<48x128xf32>
    %269 = math.exp %268 : vector<48x128xf32>
    %cst_129 = arith.constant 1.000000e+00 : f32
    %270 = vector.broadcast %cst_129 : f32 to vector<48x128xf32>
    %271 = arith.addf %270, %269 : vector<48x128xf32>
    %272 = arith.divf %270, %271 : vector<48x128xf32>
    %c96_130 = arith.constant 96 : index
    %c0_131 = arith.constant 0 : index
    %273 = vector.load %arg12[%c96_130, %c0_131] : memref<240x128xf32, #tpu.memory_space<vmem>>, vector<48x128xf32>
    tpu.vector_store %arg12[%c96_130, %c0_131], %272 {strides = array<i32>} : memref<240x128xf32, #tpu.memory_space<vmem>>, vector<48x128xf32>,
    %c288_132 = arith.constant 288 : index
    %c0_133 = arith.constant 0 : index
    %274 = vector.load %arg11[%c288_132, %c0_133] : memref<720x128xf32, #tpu.memory_space<vmem>>, vector<240x128xf32>
    %c336_134 = arith.constant 336 : index
    %c0_135 = arith.constant 0 : index
    %275 = vector.load %arg11[%c336_134, %c0_135] : memref<720x128xf32, #tpu.memory_space<vmem>>, vector<240x128xf32>
    %cst_136 = arith.constant dense<0.000000e+00> : vector<96x128xf32>
    %276 = tpu.matmul %227, %274, %cst_136 {dimension_numbers = #tpu.dot_dimension_numbers<[1], [0], [0], [1], [0, 0, 1, 1], [], []>} : vector<96x240xf32>, vector<240x128xf32>, vector<96x128xf32> -> vector<96x128xf32>
    %cst_137 = arith.constant dense<0.000000e+00> : vector<96x128xf32>
    %277 = tpu.matmul %227, %275, %cst_137 {dimension_numbers = #tpu.dot_dimension_numbers<[1], [0], [0], [1], [0, 0, 1, 1], [], []>} : vector<96x240xf32>, vector<240x128xf32>, vector<96x128xf32> -> vector<96x128xf32>
    %278 = arith.maximumf %276, %277 : vector<96x128xf32>
    %279 = vector.extract_strided_slice %278 {offsets = [0, 0], sizes = [48, 128], strides = [1, 1]} : vector<96x128xf32> to vector<48x128xf32>
    %280 = vector.extract_strided_slice %278 {offsets = [48, 0], sizes = [48, 128], strides = [1, 1]} : vector<96x128xf32> to vector<48x128xf32>
    %281 = arith.maximumf %279, %280 : vector<48x128xf32>
    %282 = arith.addf %281, %228 : vector<48x128xf32>
    %283 = arith.negf %282 : vector<48x128xf32>
    %284 = math.exp %283 : vector<48x128xf32>
    %cst_138 = arith.constant 1.000000e+00 : f32
    %285 = vector.broadcast %cst_138 : f32 to vector<48x128xf32>
    %286 = arith.addf %285, %284 : vector<48x128xf32>
    %287 = arith.divf %285, %286 : vector<48x128xf32>
    %c144_139 = arith.constant 144 : index
    %c0_140 = arith.constant 0 : index
    %288 = vector.load %arg12[%c144_139, %c0_140] : memref<240x128xf32, #tpu.memory_space<vmem>>, vector<48x128xf32>
    tpu.vector_store %arg12[%c144_139, %c0_140], %287 {strides = array<i32>} : memref<240x128xf32, #tpu.memory_space<vmem>>, vector<48x128xf32>,
    %c384_141 = arith.constant 384 : index
    %c0_142 = arith.constant 0 : index
    %289 = vector.load %arg11[%c384_141, %c0_142] : memref<720x128xf32, #tpu.memory_space<vmem>>, vector<240x128xf32>
    %c432_143 = arith.constant 432 : index
    %c0_144 = arith.constant 0 : index
    %290 = vector.load %arg11[%c432_143, %c0_144] : memref<720x128xf32, #tpu.memory_space<vmem>>, vector<240x128xf32>
    %cst_145 = arith.constant dense<0.000000e+00> : vector<96x128xf32>
    %291 = tpu.matmul %227, %289, %cst_145 {dimension_numbers = #tpu.dot_dimension_numbers<[1], [0], [0], [1], [0, 0, 1, 1], [], []>} : vector<96x240xf32>, vector<240x128xf32>, vector<96x128xf32> -> vector<96x128xf32>
    %cst_146 = arith.constant dense<0.000000e+00> : vector<96x128xf32>
    %292 = tpu.matmul %227, %290, %cst_146 {dimension_numbers = #tpu.dot_dimension_numbers<[1], [0], [0], [1], [0, 0, 1, 1], [], []>} : vector<96x240xf32>, vector<240x128xf32>, vector<96x128xf32> -> vector<96x128xf32>
    %293 = arith.maximumf %291, %292 : vector<96x128xf32>
    %294 = vector.extract_strided_slice %293 {offsets = [0, 0], sizes = [48, 128], strides = [1, 1]} : vector<96x128xf32> to vector<48x128xf32>
    %295 = vector.extract_strided_slice %293 {offsets = [48, 0], sizes = [48, 128], strides = [1, 1]} : vector<96x128xf32> to vector<48x128xf32>
    %296 = arith.maximumf %294, %295 : vector<48x128xf32>
    %297 = arith.addf %296, %228 : vector<48x128xf32>
    %298 = arith.negf %297 : vector<48x128xf32>
    %299 = math.exp %298 : vector<48x128xf32>
    %cst_147 = arith.constant 1.000000e+00 : f32
    %300 = vector.broadcast %cst_147 : f32 to vector<48x128xf32>
    %301 = arith.addf %300, %299 : vector<48x128xf32>
    %302 = arith.divf %300, %301 : vector<48x128xf32>
    %c192_148 = arith.constant 192 : index
    %c0_149 = arith.constant 0 : index
    %303 = vector.load %arg12[%c192_148, %c0_149] : memref<240x128xf32, #tpu.memory_space<vmem>>, vector<48x128xf32>
    tpu.vector_store %arg12[%c192_148, %c0_149], %302 {strides = array<i32>} : memref<240x128xf32, #tpu.memory_space<vmem>>, vector<48x128xf32>,
    %c0_150 = arith.constant 0 : index
    %c0_151 = arith.constant 0 : index
    %304 = vector.load %arg12[%c0_150, %c0_151] : memref<240x128xf32, #tpu.memory_space<vmem>>, vector<240x128xf32>
    %c0_152 = arith.constant 0 : index
    %c0_153 = arith.constant 0 : index
    %305 = vector.load %arg6[%c0_152, %c0_153] : memref<32x240xf32, #tpu.memory_space<vmem>>, vector<32x240xf32>
    %cst_154 = arith.constant dense<0.000000e+00> : vector<32x128xf32>
    %306 = tpu.matmul %305, %304, %cst_154 {dimension_numbers = #tpu.dot_dimension_numbers<[1], [0], [0], [1], [0, 0, 1, 1], [], []>} : vector<32x240xf32>, vector<240x128xf32>, vector<32x128xf32> -> vector<32x128xf32>
    %c0_155 = arith.constant 0 : index
    %c0_156 = arith.constant 0 : index
    %307 = vector.load %arg7[%c0_155, %c0_156] : memref<32x128xf32, #tpu.memory_space<vmem>>, vector<32x128xf32>
    %308 = arith.addf %306, %307 : vector<32x128xf32>
    %309 = arith.negf %308 : vector<32x128xf32>
    %310 = math.exp %309 : vector<32x128xf32>
    %cst_157 = arith.constant 1.000000e+00 : f32
    %311 = vector.broadcast %cst_157 : f32 to vector<32x128xf32>
    %312 = arith.addf %311, %310 : vector<32x128xf32>
    %313 = arith.divf %311, %312 : vector<32x128xf32>
    %c0_158 = arith.constant 0 : index
    %c0_159 = arith.constant 0 : index
    %314 = vector.load %arg8[%c0_158, %c0_159] : memref<8x32xf32, #tpu.memory_space<vmem>>, vector<8x32xf32>
    %cst_160 = arith.constant dense<0.000000e+00> : vector<8x128xf32>
    %315 = tpu.matmul %314, %313, %cst_160 {dimension_numbers = #tpu.dot_dimension_numbers<[1], [0], [0], [1], [0, 0, 1, 1], [], []>} : vector<8x32xf32>, vector<32x128xf32>, vector<8x128xf32> -> vector<8x128xf32>
    %c0_161 = arith.constant 0 : index
    %c0_162 = arith.constant 0 : index
    %316 = vector.load %arg9[%c0_161, %c0_162] : memref<8x128xf32, #tpu.memory_space<vmem>>, vector<8x128xf32>
    %317 = arith.addf %315, %316 : vector<8x128xf32>
    %cst_163 = arith.constant dense<0xFF800000> : vector<128xf32>
    %318 = vector.multi_reduction <maximumf>, %317, %cst_163 [0] : vector<8x128xf32> to vector<128xf32>
    %319 = vector.shape_cast %318 : vector<128xf32> to vector<1x128xf32>
    %320 = vector.broadcast %319 : vector<1x128xf32> to vector<8x128xf32>
    %321 = arith.subf %317, %320 : vector<8x128xf32>
    %322 = math.exp %321 : vector<8x128xf32>
    %cst_164 = arith.constant dense<0.000000e+00> : vector<128xf32>
    %323 = vector.multi_reduction <add>, %322, %cst_164 [0] : vector<8x128xf32> to vector<128xf32>
    %324 = vector.shape_cast %323 : vector<128xf32> to vector<1x128xf32>
    %325 = vector.broadcast %324 : vector<1x128xf32> to vector<8x128xf32>
    %326 = arith.divf %322, %325 : vector<8x128xf32>
    %c0_165 = arith.constant 0 : index
    %c0_166 = arith.constant 0 : index
    %327 = vector.load %arg10[%c0_165, %c0_166] : memref<8x128xf32, #tpu.memory_space<vmem>>, vector<8x128xf32>
    tpu.vector_store %arg10[%c0_165, %c0_166], %326 {strides = array<i32>} : memref<8x128xf32, #tpu.memory_space<vmem>>, vector<8x128xf32>,
    return
  }
  func.func @transform_0(%arg0: i32) -> (i32, i32) {
    %c0_i32 = arith.constant 0 : i32
    %c0_i32_0 = arith.constant 0 : i32
    return %c0_i32, %arg0 : i32, i32
  }
  func.func @transform_1(%arg0: i32) -> (i32, i32) {
    %c0_i32 = arith.constant 0 : i32
    %c0_i32_0 = arith.constant 0 : i32
    %c0_i32_1 = arith.constant 0 : i32
    return %c0_i32, %c0_i32_0 : i32, i32
  }
  func.func @transform_2(%arg0: i32) -> (i32, i32) {
    %c0_i32 = arith.constant 0 : i32
    %c0_i32_0 = arith.constant 0 : i32
    %c0_i32_1 = arith.constant 0 : i32
    return %c0_i32, %c0_i32_0 : i32, i32
  }
  func.func @transform_3(%arg0: i32) -> (i32, i32) {
    %c0_i32 = arith.constant 0 : i32
    %c0_i32_0 = arith.constant 0 : i32
    %c0_i32_1 = arith.constant 0 : i32
    return %c0_i32, %c0_i32_0 : i32, i32
  }
  func.func @transform_4(%arg0: i32) -> (i32, i32) {
    %c0_i32 = arith.constant 0 : i32
    %c0_i32_0 = arith.constant 0 : i32
    %c0_i32_1 = arith.constant 0 : i32
    return %c0_i32, %c0_i32_0 : i32, i32
  }
  func.func @transform_5(%arg0: i32) -> (i32, i32) {
    %c0_i32 = arith.constant 0 : i32
    %c0_i32_0 = arith.constant 0 : i32
    %c0_i32_1 = arith.constant 0 : i32
    return %c0_i32, %c0_i32_0 : i32, i32
  }
  func.func @transform_6(%arg0: i32) -> (i32, i32) {
    %c0_i32 = arith.constant 0 : i32
    %c0_i32_0 = arith.constant 0 : i32
    %c0_i32_1 = arith.constant 0 : i32
    return %c0_i32, %c0_i32_0 : i32, i32
  }
  func.func @transform_7(%arg0: i32) -> (i32, i32) {
    %c0_i32 = arith.constant 0 : i32
    %c0_i32_0 = arith.constant 0 : i32
    %c0_i32_1 = arith.constant 0 : i32
    return %c0_i32, %c0_i32_0 : i32, i32
  }
  func.func @transform_8(%arg0: i32) -> (i32, i32) {
    %c0_i32 = arith.constant 0 : i32
    %c0_i32_0 = arith.constant 0 : i32
    %c0_i32_1 = arith.constant 0 : i32
    return %c0_i32, %c0_i32_0 : i32, i32
  }
  func.func @transform_9(%arg0: i32) -> (i32, i32) {
    %c0_i32 = arith.constant 0 : i32
    %c0_i32_0 = arith.constant 0 : i32
    return %c0_i32, %arg0 : i32, i32
  }
}

</mosaic_0001>

<llo_original>
// kernel: cnn2d_forward.1
$region0: #{cnn2d_forward.1}
  #allocation0 [shape = 'u32[]', space=smem, size = 0x4, offset = 0x4, fixed_abs, tag = 'smem constant byte address 0x4 - core index']
  #allocation1 [shape = 'u32[144,128]{1,0:T(1,128)}', space=vmem, size = 0x12000, scoped, tag = 'internal scratch']
  #allocation2 [shape = 'f32[720,128]{1,0:T(8,128)}', space=vmem, size = 0x5a000, scoped, tag = 'scratch operand']
  #allocation3 [shape = 'f32[240,128]{1,0:T(8,128)}', space=vmem, size = 0x1e000, scoped, tag = 'scratch operand']
  %s0 = inlined_call_operand.vmem [shape: f32[1024,128], index: 0, kind: input, shape index: {}]
  %s1 = inlined_call_operand.vmem [shape: f32[96,96], index: 1, kind: input, shape index: {}]
  %s2 = inlined_call_operand.vmem [shape: f32[48,128], index: 2, kind: input, shape index: {}]
  %s3 = inlined_call_operand.vmem [shape: f32[96,240], index: 3, kind: input, shape index: {}]
  %s4 = inlined_call_operand.vmem [shape: f32[48,128], index: 4, kind: input, shape index: {}]
  %s5 = inlined_call_operand.vmem [shape: f32[32,240], index: 5, kind: input, shape index: {}]
  %s6 = inlined_call_operand.vmem [shape: f32[32,128], index: 6, kind: input, shape index: {}]
  %s7 = inlined_call_operand.vmem [shape: f32[8,32], index: 7, kind: input, shape index: {}]
  %s8 = inlined_call_operand.vmem [shape: f32[8,128], index: 8, kind: input, shape index: {}]
  %s9 = inlined_call_operand.vmem [shape: f32[8,128], index: 9, kind: output, shape index: {}]
  %s10 = sld [smem:[#allocation0]]
  $region46: #{cnn2d_forward.1} parent=0
    _
  %s12 = ssub.s32 1, %s10
  %s13 = scalar_select 0, %s12, %s10
  // Predicated region
  $region2: #{cnn2d_forward.1} parent=0 // pred_check
    _
  $region3: #{cnn2d_forward.1} parent=0 // pred_check_branch
    %15 = sbr.rel (0) target = $region5
  $region4: #{cnn2d_forward.1} parent=0 // pred_region
    _
  $region5: #{cnn2d_forward.1} parent=0 // pred_fallthru
    _
  // Predicated region
  $region6: #{cnn2d_forward.1} parent=0 // pred_check
    _
  $region7: #{cnn2d_forward.1} parent=0 // pred_check_branch
    %17 = sbr.rel (0) target = $region9
  $region8: #{cnn2d_forward.1} parent=0 // pred_region
    _
  $region9: #{cnn2d_forward.1} parent=0 // pred_fallthru
    _
  // Predicated region
  $region10: #{cnn2d_forward.1} parent=0 // pred_check
    _
  $region11: #{cnn2d_forward.1} parent=0 // pred_check_branch
    %19 = sbr.rel (0) target = $region13
  $region12: #{cnn2d_forward.1} parent=0 // pred_region
    _
  $region13: #{cnn2d_forward.1} parent=0 // pred_fallthru
    _
  // Predicated region
  $region14: #{cnn2d_forward.1} parent=0 // pred_check
    _
  $region15: #{cnn2d_forward.1} parent=0 // pred_check_branch
    %21 = sbr.rel (0) target = $region17
  $region16: #{cnn2d_forward.1} parent=0 // pred_region
    _
  $region17: #{cnn2d_forward.1} parent=0 // pred_fallthru
    _
  // Predicated region
  $region18: #{cnn2d_forward.1} parent=0 // pred_check
    _
  $region19: #{cnn2d_forward.1} parent=0 // pred_check_branch
    %23 = sbr.rel (0) target = $region21
  $region20: #{cnn2d_forward.1} parent=0 // pred_region
    _
  $region21: #{cnn2d_forward.1} parent=0 // pred_fallthru
    _
  // Predicated region
  $region22: #{cnn2d_forward.1} parent=0 // pred_check
    _
  $region23: #{cnn2d_forward.1} parent=0 // pred_check_branch
    %25 = sbr.rel (0) target = $region25
  $region24: #{cnn2d_forward.1} parent=0 // pred_region
    _
  $region25: #{cnn2d_forward.1} parent=0 // pred_fallthru
    _
  // Predicated region
  $region26: #{cnn2d_forward.1} parent=0 // pred_check
    _
  $region27: #{cnn2d_forward.1} parent=0 // pred_check_branch
    %27 = sbr.rel (0) target = $region29
  $region28: #{cnn2d_forward.1} parent=0 // pred_region
    _
  $region29: #{cnn2d_forward.1} parent=0 // pred_fallthru
    _
  // Predicated region
  $region30: #{cnn2d_forward.1} parent=0 // pred_check
    _
  $region31: #{cnn2d_forward.1} parent=0 // pred_check_branch
    %29 = sbr.rel (0) target = $region33
  $region32: #{cnn2d_forward.1} parent=0 // pred_region
    _
  $region33: #{cnn2d_forward.1} parent=0 // pred_fallthru
    _
  // Predicated region
  $region34: #{cnn2d_forward.1} parent=0 // pred_check
    _
  $region35: #{cnn2d_forward.1} parent=0 // pred_check_branch
    %31 = sbr.rel (0) target = $region37
  $region36: #{cnn2d_forward.1} parent=0 // pred_region
    _
  $region37: #{cnn2d_forward.1} parent=0 // pred_fallthru
    _
  %v32 = vld [vmem:[%s1] sm:$0xff]
  %v33 = vld [vmem:[%s1 + $0x8] sm:$0xff]
  %v34 = vld [vmem:[%s1 + $0x10] sm:$0xff]
  %v35 = vld [vmem:[%s1 + $0x18] sm:$0xff]
  %v36 = vld [vmem:[%s1 + $0x20] sm:$0xff]
  %v37 = vld [vmem:[%s1 + $0x28] sm:$0xff]
  %v38 = vld [vmem:[%s1 + $0x30] sm:$0xff]
  %v39 = vld [vmem:[%s1 + $0x38] sm:$0xff]
  %v40 = vld [vmem:[%s1 + $0x40] sm:$0xff]
  %v41 = vld [vmem:[%s1 + $0x48] sm:$0xff]
  %v42 = vld [vmem:[%s1 + $0x50] sm:$0xff]
  %v43 = vld [vmem:[%s1 + $0x58] sm:$0xff]
  %v44 = vld [vmem:[%s2] sm:$0xff]
  %v45 = vld [vmem:[%s2 + $0x8] sm:$0xff]
  %v46 = vld [vmem:[%s2 + $0x10] sm:$0xff]
  %v47 = vld [vmem:[%s2 + $0x18] sm:$0xff]
  %v48 = vld [vmem:[%s2 + $0x20] sm:$0xff]
  %v49 = vld [vmem:[%s2 + $0x28] sm:$0xff]
  %v50 = vld [vmem:[%s0] sm:$0xff]
  %v51 = vld [vmem:[%s0 + $0x8] sm:$0xff]
  %v52 = vld [vmem:[%s0 + $0x10] sm:$0xff]
  %v53 = vld [vmem:[%s0 + $0x18] sm:$0xff]
  %v54 = vld [vmem:[%s0 + $0x20] sm:$0xff]
  %v55 = vld [vmem:[%s0 + $0x28] sm:$0xff]
  %v56 = vld [vmem:[%s0 + $0x30] sm:$0xff]
  %v57 = vld [vmem:[%s0 + $0x38] sm:$0xff]
  %v58 = vld [vmem:[%s0 + $0x40] sm:$0xff]
  %v59 = vld [vmem:[%s0 + $0x48] sm:$0xff]
  %v60 = vld [vmem:[%s0 + $0x50] sm:$0xff]
  %v61 = vld [vmem:[%s0 + $0x58] sm:$0xff]
  %v62 = vld [vmem:[%s0 + $0x60] sm:$0xff]
  %v63 = vld [vmem:[%s0 + $0x68] sm:$0xff]
  %v64 = vld [vmem:[%s0 + $0x70] sm:$0xff]
  %v65 = vld [vmem:[%s0 + $0x78] sm:$0xff]
  %vm66 = vcmask 785408
  %v68 = vsel %vm66, %v32, 0
  %v71 = vsel %vm66, %v33, 0
  %v74 = vsel %vm66, %v34, 0
  %v77 = vsel %vm66, %v35, 0
  %v80 = vsel %vm66, %v36, 0
  %v83 = vsel %vm66, %v37, 0
  %v86 = vsel %vm66, %v38, 0
  %v89 = vsel %vm66, %v39, 0
  %v92 = vsel %vm66, %v40, 0
  %v95 = vsel %vm66, %v41, 0
  %v98 = vsel %vm66, %v42, 0
  %v101 = vsel %vm66, %v43, 0
  %103 = vmatprep.subr.mxu0 0.0
  %104 = vmatpush1.msra.mxu0 %v50
  %105 = vmatprep.subr.mxu0 0.0
  %106 = vmatpush1.msra.mxu0 %v51
  %107 = vmatprep.subr.mxu0 0.0
  %108 = vmatpush1.msra.mxu0 %v52
  %109 = vmatprep.subr.mxu0 0.0
  %110 = vmatpush1.msra.mxu0 %v53
  %111 = vmatprep.subr.mxu0 0.0
  %112 = vmatpush1.msra.mxu0 %v54
  %113 = vmatprep.subr.mxu0 0.0
  %114 = vmatpush1.msra.mxu0 %v55
  %115 = vmatprep.subr.mxu0 0.0
  %116 = vmatpush1.msra.mxu0 %v56
  %117 = vmatprep.subr.mxu0 0.0
  %118 = vmatpush1.msra.mxu0 %v57
  %119 = vmatprep.subr.mxu0 0.0
  %120 = vmatpush1.msra.mxu0 %v58
  %121 = vmatprep.subr.mxu0 0.0
  %122 = vmatpush1.msra.mxu0 %v59
  %123 = vmatprep.subr.mxu0 0.0
  %124 = vmatpush1.msra.mxu0 %v60
  %125 = vmatprep.subr.mxu0 0.0
  %126 = vmatpush1.msra.mxu0 %v61
  %127 = vmatprep.subr.mxu0 0.0
  %128 = vmatpush1.msra.mxu0 0.0
  %129 = vmatprep.subr.mxu0 0.0
  %130 = vmatpush1.msra.mxu0 0.0
  %131 = vmatprep.subr.mxu0 0.0
  %132 = vmatpush1.msra.mxu0 0.0
  %133 = vmatprep.subr.mxu0 0.0
  %134 = vmatpush1.msra.mxu0 0.0
  %135 = vmatprep.subr.mxu0 0.0
  %136 = vmatpush1.msra.mxu0 0.0
  %137 = vmatprep.subr.mxu0 0.0
  %138 = vmatpush1.msra.mxu0 0.0
  %139 = vmatprep.subr.mxu0 0.0
  %140 = vmatpush1.msra.mxu0 0.0
  %141 = vmatprep.subr.mxu0 0.0
  %142 = vmatpush1.msra.mxu0 0.0
  %143 = vmatprep.subr.mxu0 0.0
  %144 = vmatpush1.msra.mxu0 0.0
  %145 = vmatprep.subr.mxu0 0.0
  %146 = vmatpush1.msra.mxu0 0.0
  %147 = vmatprep.subr.mxu0 0.0
  %148 = vmatpush1.msra.mxu0 0.0
  %149 = vmatprep.subr.mxu0 0.0
  %150 = vmatpush1.msra.mxu0 0.0
  %151 = vmatprep.subr.mxu0 0.0
  %152 = vmatpush1.msra.mxu0 0.0
  %153 = vmatprep.subr.mxu0 0.0
  %154 = vmatpush1.msra.mxu0 0.0
  %155 = vmatprep.subr.mxu0 0.0
  %156 = vmatpush1.msra.mxu0 0.0
  %157 = vmatprep.subr.mxu0 0.0
  %158 = vmatpush1.msra.mxu0 0.0
  %159 = vmatprep.subr.mxu0 0.0
  %160 = vmatpush1.msra.mxu0 0.0
  %161 = vmatprep.subr.mxu0 0.0
  %162 = vmatpush1.msra.mxu0 0.0
  %163 = vmatprep.subr.mxu0 0.0
  %164 = vmatpush1.msra.mxu0 0.0
  %165 = vmatprep.subr.mxu0 0.0
  %166 = vmatpush1.msra.mxu0 0.0
  %167 = vmatprep.mubr.f32.mxu0 0.0
  %168 = vmatmul.mubr.f32.gmra.mrb[0].mxu0 %v68
  %v169 = vpop.f32.mrb[0].mxu0
  %v170 = vadd.f32 0.0, %v169
  %v171 = vpop.f32.mrb[0].mxu0
  %172 = vmatprep.mubr.f32.mxu0 0.0
  %173 = vmatmul.mubr.f32.gmra.mrb[0].mxu0 %v71
  %v174 = vpop.f32.mrb[0].mxu0
  %v175 = vadd.f32 0.0, %v174
  %v176 = vpop.f32.mrb[0].mxu0
  %177 = vmatprep.mubr.f32.mxu0 0.0
  %178 = vmatmul.mubr.f32.gmra.mrb[0].mxu0 %v74
  %v179 = vpop.f32.mrb[0].mxu0
  %v180 = vadd.f32 0.0, %v179
  %v181 = vpop.f32.mrb[0].mxu0
  %182 = vmatprep.mubr.f32.mxu0 0.0
  %183 = vmatmul.mubr.f32.gmra.mrb[0].mxu0 %v77
  %v184 = vpop.f32.mrb[0].mxu0
  %v185 = vadd.f32 0.0, %v184
  %v186 = vpop.f32.mrb[0].mxu0
  %187 = vmatprep.mubr.f32.mxu0 0.0
  %188 = vmatmul.mubr.f32.gmra.mrb[0].mxu0 %v80
  %v189 = vpop.f32.mrb[0].mxu0
  %v190 = vadd.f32 0.0, %v189
  %v191 = vpop.f32.mrb[0].mxu0
  %192 = vmatprep.mubr.f32.mxu0 0.0
  %193 = vmatmul.mubr.f32.gmra.mrb[0].mxu0 %v83
  %v194 = vpop.f32.mrb[0].mxu0
  %v195 = vadd.f32 0.0, %v194
  %v196 = vpop.f32.mrb[0].mxu0
  %197 = vmatprep.mubr.f32.mxu0 0.0
  %198 = vmatmul.mubr.f32.gmra.mrb[0].mxu0 %v86
  %v199 = vpop.f32.mrb[0].mxu0
  %v200 = vadd.f32 0.0, %v199
  %v201 = vpop.f32.mrb[0].mxu0
  %202 = vmatprep.mubr.f32.mxu0 0.0
  %203 = vmatmul.mubr.f32.gmra.mrb[0].mxu0 %v89
  %v204 = vpop.f32.mrb[0].mxu0
  %v205 = vadd.f32 0.0, %v204
  %v206 = vpop.f32.mrb[0].mxu0
  %207 = vmatprep.mubr.f32.mxu0 0.0
  %208 = vmatmul.mubr.f32.gmra.mrb[0].mxu0 %v92
  %v209 = vpop.f32.mrb[0].mxu0
  %v210 = vadd.f32 0.0, %v209
  %v211 = vpop.f32.mrb[0].mxu0
  %212 = vmatprep.mubr.f32.mxu0 0.0
  %213 = vmatmul.mubr.f32.gmra.mrb[0].mxu0 %v95
  %v214 = vpop.f32.mrb[0].mxu0
  %v215 = vadd.f32 0.0, %v214
  %v216 = vpop.f32.mrb[0].mxu0
  %217 = vmatprep.mubr.f32.mxu0 0.0
  %218 = vmatmul.mubr.f32.gmra.mrb[0].mxu0 %v98
  %v219 = vpop.f32.mrb[0].mxu0
  %v220 = vadd.f32 0.0, %v219
  %v221 = vpop.f32.mrb[0].mxu0
  %222 = vmatprep.mubr.f32.mxu0 0.0
  %223 = vmatmul.mubr.f32.gmra.mrb[0].mxu0 %v101
  %v224 = vpop.f32.mrb[0].mxu0
  %v225 = vadd.f32 0.0, %v224
  %v226 = vpop.f32.mrb[0].mxu0
  %227 = vdwg.mxu0
  %228 = vmatprep.subr.mxu0 0.0
  %229 = vmatpush1.msra.mxu0 %v54
  %230 = vmatprep.subr.mxu0 0.0
  %231 = vmatpush1.msra.mxu0 %v55
  %232 = vmatprep.subr.mxu0 0.0
  %233 = vmatpush1.msra.mxu0 %v56
  %234 = vmatprep.subr.mxu0 0.0
  %235 = vmatpush1.msra.mxu0 %v57
  %236 = vmatprep.subr.mxu0 0.0
  %237 = vmatpush1.msra.mxu0 %v58
  %238 = vmatprep.subr.mxu0 0.0
  %239 = vmatpush1.msra.mxu0 %v59
  %240 = vmatprep.subr.mxu0 0.0
  %241 = vmatpush1.msra.mxu0 %v60
  %242 = vmatprep.subr.mxu0 0.0
  %243 = vmatpush1.msra.mxu0 %v61
  %244 = vmatprep.subr.mxu0 0.0
  %245 = vmatpush1.msra.mxu0 %v62
  %246 = vmatprep.subr.mxu0 0.0
  %247 = vmatpush1.msra.mxu0 %v63
  %248 = vmatprep.subr.mxu0 0.0
  %249 = vmatpush1.msra.mxu0 %v64
  %250 = vmatprep.subr.mxu0 0.0
  %251 = vmatpush1.msra.mxu0 %v65
  %252 = vmatprep.subr.mxu0 0.0
  %253 = vmatpush1.msra.mxu0 0.0
  %254 = vmatprep.subr.mxu0 0.0
  %255 = vmatpush1.msra.mxu0 0.0
  %256 = vmatprep.subr.mxu0 0.0
  %257 = vmatpush1.msra.mxu0 0.0
  %258 = vmatprep.subr.mxu0 0.0
  %259 = vmatpush1.msra.mxu0 0.0
  %260 = vmatprep.subr.mxu0 0.0
  %261 = vmatpush1.msra.mxu0 0.0
  %262 = vmatprep.subr.mxu0 0.0
  %263 = vmatpush1.msra.mxu0 0.0
  %264 = vmatprep.subr.mxu0 0.0
  %265 = vmatpush1.msra.mxu0 0.0
  %266 = vmatprep.subr.mxu0 0.0
  %267 = vmatpush1.msra.mxu0 0.0
  %268 = vmatprep.subr.mxu0 0.0
  %269 = vmatpush1.msra.mxu0 0.0
  %270 = vmatprep.subr.mxu0 0.0
  %271 = vmatpush1.msra.mxu0 0.0
  %272 = vmatprep.subr.mxu0 0.0
  %273 = vmatpush1.msra.mxu0 0.0
  %274 = vmatprep.subr.mxu0 0.0
  %275 = vmatpush1.msra.mxu0 0.0
  %276 = vmatprep.subr.mxu0 0.0
  %277 = vmatpush1.msra.mxu0 0.0
  %278 = vmatprep.subr.mxu0 0.0
  %279 = vmatpush1.msra.mxu0 0.0
  %280 = vmatprep.subr.mxu0 0.0
  %281 = vmatpush1.msra.mxu0 0.0
  %282 = vmatprep.subr.mxu0 0.0
  %283 = vmatpush1.msra.mxu0 0.0
  %284 = vmatprep.subr.mxu0 0.0
  %285 = vmatpush1.msra.mxu0 0.0
  %286 = vmatprep.subr.mxu0 0.0
  %287 = vmatpush1.msra.mxu0 0.0
  %288 = vmatprep.subr.mxu0 0.0
  %289 = vmatpush1.msra.mxu0 0.0
  %290 = vmatprep.subr.mxu0 0.0
  %291 = vmatpush1.msra.mxu0 0.0
  %292 = vmatprep.mubr.f32.mxu0 0.0
  %293 = vmatmul.mubr.f32.gmra.mrb[0].mxu0 %v68
  %v294 = vpop.f32.mrb[0].mxu0
  %v295 = vadd.f32 0.0, %v294
  %v296 = vpop.f32.mrb[0].mxu0
  %297 = vmatprep.mubr.f32.mxu0 0.0
  %298 = vmatmul.mubr.f32.gmra.mrb[0].mxu0 %v71
  %v299 = vpop.f32.mrb[0].mxu0
  %v300 = vadd.f32 0.0, %v299
  %v301 = vpop.f32.mrb[0].mxu0
  %302 = vmatprep.mubr.f32.mxu0 0.0
  %303 = vmatmul.mubr.f32.gmra.mrb[0].mxu0 %v74
  %v304 = vpop.f32.mrb[0].mxu0
  %v305 = vadd.f32 0.0, %v304
  %v306 = vpop.f32.mrb[0].mxu0
  %307 = vmatprep.mubr.f32.mxu0 0.0
  %308 = vmatmul.mubr.f32.gmra.mrb[0].mxu0 %v77
  %v309 = vpop.f32.mrb[0].mxu0
  %v310 = vadd.f32 0.0, %v309
  %v311 = vpop.f32.mrb[0].mxu0
  %312 = vmatprep.mubr.f32.mxu0 0.0
  %313 = vmatmul.mubr.f32.gmra.mrb[0].mxu0 %v80
  %v314 = vpop.f32.mrb[0].mxu0
  %v315 = vadd.f32 0.0, %v314
  %v316 = vpop.f32.mrb[0].mxu0
  %317 = vmatprep.mubr.f32.mxu0 0.0
  %318 = vmatmul.mubr.f32.gmra.mrb[0].mxu0 %v83
  %v319 = vpop.f32.mrb[0].mxu0
  %v320 = vadd.f32 0.0, %v319
  %v321 = vpop.f32.mrb[0].mxu0
  %322 = vmatprep.mubr.f32.mxu0 0.0
  %323 = vmatmul.mubr.f32.gmra.mrb[0].mxu0 %v86
  %v324 = vpop.f32.mrb[0].mxu0
  %v325 = vadd.f32 0.0, %v324
  %v326 = vpop.f32.mrb[0].mxu0
  %327 = vmatprep.mubr.f32.mxu0 0.0
  %328 = vmatmul.mubr.f32.gmra.mrb[0].mxu0 %v89
  %v329 = vpop.f32.mrb[0].mxu0
  %v330 = vadd.f32 0.0, %v329
  %v331 = vpop.f32.mrb[0].mxu0
  %332 = vmatprep.mubr.f32.mxu0 0.0
  %333 = vmatmul.mubr.f32.gmra.mrb[0].mxu0 %v92
  %v334 = vpop.f32.mrb[0].mxu0
  %v335 = vadd.f32 0.0, %v334
  %v336 = vpop.f32.mrb[0].mxu0
  %337 = vmatprep.mubr.f32.mxu0 0.0
  %338 = vmatmul.mubr.f32.gmra.mrb[0].mxu0 %v95
  %v339 = vpop.f32.mrb[0].mxu0
  %v340 = vadd.f32 0.0, %v339
  %v341 = vpop.f32.mrb[0].mxu0
  %342 = vmatprep.mubr.f32.mxu0 0.0
  %343 = vmatmul.mubr.f32.gmra.mrb[0].mxu0 %v98
  %v344 = vpop.f32.mrb[0].mxu0
  %v345 = vadd.f32 0.0, %v344
  %v346 = vpop.f32.mrb[0].mxu0
  %347 = vmatprep.mubr.f32.mxu0 0.0
  %348 = vmatmul.mubr.f32.gmra.mrb[0].mxu0 %v101
  %v349 = vpop.f32.mrb[0].mxu0
  %v350 = vadd.f32 0.0, %v349
  %v351 = vpop.f32.mrb[0].mxu0
  %352 = vdwg.mxu0
  %v353 = vmax.f32 %v170, %v295
  %v354 = vmax.f32 %v175, %v300
  %v355 = vmax.f32 %v180, %v305
  %v356 = vmax.f32 %v185, %v310
  %v357 = vmax.f32 %v190, %v315
  %v358 = vmax.f32 %v195, %v320
  %v359 = vmax.f32 %v200, %v325
  %v360 = vmax.f32 %v205, %v330
  %v361 = vmax.f32 %v210, %v335
  %v362 = vmax.f32 %v215, %v340
  %v363 = vmax.f32 %v220, %v345
  %v364 = vmax.f32 %v225, %v350
  %v365 = vmax.f32 %v353, %v359
  %v366 = vmax.f32 %v354, %v360
  %v367 = vmax.f32 %v355, %v361
  %v368 = vmax.f32 %v356, %v362
  %v369 = vmax.f32 %v357, %v363
  %v370 = vmax.f32 %v358, %v364
  %v371 = vadd.f32 %v365, %v44
  %v372 = vadd.f32 %v366, %v45
  %v373 = vadd.f32 %v367, %v46
  %v374 = vadd.f32 %v368, %v47
  %v375 = vadd.f32 %v369, %v48
  %v376 = vadd.f32 %v370, %v49
  %v377 = vxor.u32 %v371, 2147483648
  %v378 = vxor.u32 %v372, 2147483648
  %v379 = vxor.u32 %v373, 2147483648
  %v380 = vxor.u32 %v374, 2147483648
  %v381 = vxor.u32 %v375, 2147483648
  %v382 = vxor.u32 %v376, 2147483648
  %v383 = vmul.f32 %v377, 1.442695
  %v384 = vpow.pop %v383
  %v385 = vmul.f32 %v378, 1.442695
  %v386 = vpow.pop %v385
  %v387 = vmul.f32 %v379, 1.442695
  %v388 = vpow.pop %v387
  %v389 = vmul.f32 %v380, 1.442695
  %v390 = vpow.pop %v389
  %v391 = vmul.f32 %v381, 1.442695
  %v392 = vpow.pop %v391
  %v393 = vmul.f32 %v382, 1.442695
  %v394 = vpow.pop %v393
  %v395 = vadd.f32 %v384, 1.0
  %v396 = vadd.f32 %v386, 1.0
  %v397 = vadd.f32 %v388, 1.0
  %v398 = vadd.f32 %v390, 1.0
  %v399 = vadd.f32 %v392, 1.0
  %v400 = vadd.f32 %v394, 1.0
  %v401 = vrcp.pop %v395
  %v402 = vmul.f32 1.0, %v401
  %v403 = vrcp.pop %v396
  %v404 = vmul.f32 1.0, %v403
  %v405 = vrcp.pop %v397
  %v406 = vmul.f32 1.0, %v405
  %v407 = vrcp.pop %v398
  %v408 = vmul.f32 1.0, %v407
  %v409 = vrcp.pop %v399
  %v410 = vmul.f32 1.0, %v409
  %v411 = vrcp.pop %v400
  %v412 = vmul.f32 1.0, %v411
  %413 = vst [vmem:[#allocation2] sm:$0xff] %v402
  %414 = vst [vmem:[#allocation2 + $0x8] sm:$0xff] %v404
  %415 = vst [vmem:[#allocation2 + $0x10] sm:$0xff] %v406
  %416 = vst [vmem:[#allocation2 + $0x18] sm:$0xff] %v408
  %417 = vst [vmem:[#allocation2 + $0x20] sm:$0xff] %v410
  %418 = vst [vmem:[#allocation2 + $0x28] sm:$0xff] %v412
  %v419 = vld [vmem:[%s0 + $0x40] sm:$0xff]
  %v420 = vld [vmem:[%s0 + $0x48] sm:$0xff]
  %v421 = vld [vmem:[%s0 + $0x50] sm:$0xff]
  %v422 = vld [vmem:[%s0 + $0x58] sm:$0xff]
  %v423 = vld [vmem:[%s0 + $0x60] sm:$0xff]
  %v424 = vld [vmem:[%s0 + $0x68] sm:$0xff]
  %v425 = vld [vmem:[%s0 + $0x70] sm:$0xff]
  %v426 = vld [vmem:[%s0 + $0x78] sm:$0xff]
  %v427 = vld [vmem:[%s0 + $0x80] sm:$0xff]
  %v428 = vld [vmem:[%s0 + $0x88] sm:$0xff]
  %v429 = vld [vmem:[%s0 + $0x90] sm:$0xff]
  %v430 = vld [vmem:[%s0 + $0x98] sm:$0xff]
  %v431 = vld [vmem:[%s0 + $0xa0] sm:$0xff]
  %v432 = vld [vmem:[%s0 + $0xa8] sm:$0xff]
  %v433 = vld [vmem:[%s0 + $0xb0] sm:$0xff]
  %v434 = vld [vmem:[%s0 + $0xb8] sm:$0xff]
  %435 = vmatprep.subr.mxu0 0.0
  %436 = vmatpush1.msra.mxu0 %v419
  %437 = vmatprep.subr.mxu0 0.0
  %438 = vmatpush1.msra.mxu0 %v420
  %439 = vmatprep.subr.mxu0 0.0
  %440 = vmatpush1.msra.mxu0 %v421
  %441 = vmatprep.subr.mxu0 0.0
  %442 = vmatpush1.msra.mxu0 %v422
  %443 = vmatprep.subr.mxu0 0.0
  %444 = vmatpush1.msra.mxu0 %v423
  %445 = vmatprep.subr.mxu0 0.0
  %446 = vmatpush1.msra.mxu0 %v424
  %447 = vmatprep.subr.mxu0 0.0
  %448 = vmatpush1.msra.mxu0 %v425
  %449 = vmatprep.subr.mxu0 0.0
  %450 = vmatpush1.msra.mxu0 %v426
  %451 = vmatprep.subr.mxu0 0.0
  %452 = vmatpush1.msra.mxu0 %v427
  %453 = vmatprep.subr.mxu0 0.0
  %454 = vmatpush1.msra.mxu0 %v428
  %455 = vmatprep.subr.mxu0 0.0
  %456 = vmatpush1.msra.mxu0 %v429
  %457 = vmatprep.subr.mxu0 0.0
  %458 = vmatpush1.msra.mxu0 %v430
  %459 = vmatprep.subr.mxu0 0.0
  %460 = vmatpush1.msra.mxu0 0.0
  %461 = vmatprep.subr.mxu0 0.0
  %462 = vmatpush1.msra.mxu0 0.0
  %463 = vmatprep.subr.mxu0 0.0
  %464 = vmatpush1.msra.mxu0 0.0
  %465 = vmatprep.subr.mxu0 0.0
  %466 = vmatpush1.msra.mxu0 0.0
  %467 = vmatprep.subr.mxu0 0.0
  %468 = vmatpush1.msra.mxu0 0.0
  %469 = vmatprep.subr.mxu0 0.0
  %470 = vmatpush1.msra.mxu0 0.0
  %471 = vmatprep.subr.mxu0 0.0
  %472 = vmatpush1.msra.mxu0 0.0
  %473 = vmatprep.subr.mxu0 0.0
  %474 = vmatpush1.msra.mxu0 0.0
  %475 = vmatprep.subr.mxu0 0.0
  %476 = vmatpush1.msra.mxu0 0.0
  %477 = vmatprep.subr.mxu0 0.0
  %478 = vmatpush1.msra.mxu0 0.0
  %479 = vmatprep.subr.mxu0 0.0
  %480 = vmatpush1.msra.mxu0 0.0
  %481 = vmatprep.subr.mxu0 0.0
  %482 = vmatpush1.msra.mxu0 0.0
  %483 = vmatprep.subr.mxu0 0.0
  %484 = vmatpush1.msra.mxu0 0.0
  %485 = vmatprep.subr.mxu0 0.0
  %486 = vmatpush1.msra.mxu0 0.0
  %487 = vmatprep.subr.mxu0 0.0
  %488 = vmatpush1.msra.mxu0 0.0
  %489 = vmatprep.subr.mxu0 0.0
  %490 = vmatpush1.msra.mxu0 0.0
  %491 = vmatprep.subr.mxu0 0.0
  %492 = vmatpush1.msra.mxu0 0.0
  %493 = vmatprep.subr.mxu0 0.0
  %494 = vmatpush1.msra.mxu0 0.0
  %495 = vmatprep.subr.mxu0 0.0
  %496 = vmatpush1.msra.mxu0 0.0
  %497 = vmatprep.subr.mxu0 0.0
  %498 = vmatpush1.msra.mxu0 0.0
  %499 = vmatprep.mubr.f32.mxu0 0.0
  %500 = vmatmul.mubr.f32.gmra.mrb[0].mxu0 %v68
  %v501 = vpop.f32.mrb[0].mxu0
  %v502 = vadd.f32 0.0, %v501
  %v503 = vpop.f32.mrb[0].mxu0
  %504 = vmatprep.mubr.f32.mxu0 0.0
  %505 = vmatmul.mubr.f32.gmra.mrb[0].mxu0 %v71
  %v506 = vpop.f32.mrb[0].mxu0
  %v507 = vadd.f32 0.0, %v506
  %v508 = vpop.f32.mrb[0].mxu0
  %509 = vmatprep.mubr.f32.mxu0 0.0
  %510 = vmatmul.mubr.f32.gmra.mrb[0].mxu0 %v74
  %v511 = vpop.f32.mrb[0].mxu0
  %v512 = vadd.f32 0.0, %v511
  %v513 = vpop.f32.mrb[0].mxu0
  %514 = vmatprep.mubr.f32.mxu0 0.0
  %515 = vmatmul.mubr.f32.gmra.mrb[0].mxu0 %v77
  %v516 = vpop.f32.mrb[0].mxu0
  %v517 = vadd.f32 0.0, %v516
  %v518 = vpop.f32.mrb[0].mxu0
  %519 = vmatprep.mubr.f32.mxu0 0.0
  %520 = vmatmul.mubr.f32.gmra.mrb[0].mxu0 %v80
  %v521 = vpop.f32.mrb[0].mxu0
  %v522 = vadd.f32 0.0, %v521
  %v523 = vpop.f32.mrb[0].mxu0
  %524 = vmatprep.mubr.f32.mxu0 0.0
  %525 = vmatmul.mubr.f32.gmra.mrb[0].mxu0 %v83
  %v526 = vpop.f32.mrb[0].mxu0
  %v527 = vadd.f32 0.0, %v526
  %v528 = vpop.f32.mrb[0].mxu0
  %529 = vmatprep.mubr.f32.mxu0 0.0
  %530 = vmatmul.mubr.f32.gmra.mrb[0].mxu0 %v86
  %v531 = vpop.f32.mrb[0].mxu0
  %v532 = vadd.f32 0.0, %v531
  %v533 = vpop.f32.mrb[0].mxu0
  %534 = vmatprep.mubr.f32.mxu0 0.0
  %535 = vmatmul.mubr.f32.gmra.mrb[0].mxu0 %v89
  %v536 = vpop.f32.mrb[0].mxu0
  %v537 = vadd.f32 0.0, %v536
  %v538 = vpop.f32.mrb[0].mxu0
  %539 = vmatprep.mubr.f32.mxu0 0.0
  %540 = vmatmul.mubr.f32.gmra.mrb[0].mxu0 %v92
  %v541 = vpop.f32.mrb[0].mxu0
  %v542 = vadd.f32 0.0, %v541
  %v543 = vpop.f32.mrb[0].mxu0
  %544 = vmatprep.mubr.f32.mxu0 0.0
  %545 = vmatmul.mubr.f32.gmra.mrb[0].mxu0 %v95
  %v546 = vpop.f32.mrb[0].mxu0
  %v547 = vadd.f32 0.0, %v546
  %v548 = vpop.f32.mrb[0].mxu0
  %549 = vmatprep.mubr.f32.mxu0 0.0
  %550 = vmatmul.mubr.f32.gmra.mrb[0].mxu0 %v98
  %v551 = vpop.f32.mrb[0].mxu0
  %v552 = vadd.f32 0.0, %v551
  %v553 = vpop.f32.mrb[0].mxu0
  %554 = vmatprep.mubr.f32.mxu0 0.0
  %555 = vmatmul.mubr.f32.gmra.mrb[0].mxu0 %v101
  %v556 = vpop.f32.mrb[0].mxu0
  %v557 = vadd.f32 0.0, %v556
  %v558 = vpop.f32.mrb[0].mxu0
  %559 = vdwg.mxu0
  %560 = vmatprep.subr.mxu0 0.0
  %561 = vmatpush1.msra.mxu0 %v423
  %562 = vmatprep.subr.mxu0 0.0
  %563 = vmatpush1.msra.mxu0 %v424
  %564 = vmatprep.subr.mxu0 0.0
  %565 = vmatpush1.msra.mxu0 %v425
  %566 = vmatprep.subr.mxu0 0.0
  %567 = vmatpush1.msra.mxu0 %v426
  %568 = vmatprep.subr.mxu0 0.0
  %569 = vmatpush1.msra.mxu0 %v427
  %570 = vmatprep.subr.mxu0 0.0
  %571 = vmatpush1.msra.mxu0 %v428
  %572 = vmatprep.subr.mxu0 0.0
  %573 = vmatpush1.msra.mxu0 %v429
  %574 = vmatprep.subr.mxu0 0.0
  %575 = vmatpush1.msra.mxu0 %v430
  %576 = vmatprep.subr.mxu0 0.0
  %577 = vmatpush1.msra.mxu0 %v431
  %578 = vmatprep.subr.mxu0 0.0
  %579 = vmatpush1.msra.mxu0 %v432
  %580 = vmatprep.subr.mxu0 0.0
  %581 = vmatpush1.msra.mxu0 %v433
  %582 = vmatprep.subr.mxu0 0.0
  %583 = vmatpush1.msra.mxu0 %v434
  %584 = vmatprep.subr.mxu0 0.0
  %585 = vmatpush1.msra.mxu0 0.0
  %586 = vmatprep.subr.mxu0 0.0
  %587 = vmatpush1.msra.mxu0 0.0
  %588 = vmatprep.subr.mxu0 0.0
  %589 = vmatpush1.msra.mxu0 0.0
  %590 = vmatprep.subr.mxu0 0.0
  %591 = vmatpush1.msra.mxu0 0.0
  %592 = vmatprep.subr.mxu0 0.0
  %593 = vmatpush1.msra.mxu0 0.0
  %594 = vmatprep.subr.mxu0 0.0
  %595 = vmatpush1.msra.mxu0 0.0
  %596 = vmatprep.subr.mxu0 0.0
  %597 = vmatpush1.msra.mxu0 0.0
  %598 = vmatprep.subr.mxu0 0.0
  %599 = vmatpush1.msra.mxu0 0.0
  %600 = vmatprep.subr.mxu0 0.0
  %601 = vmatpush1.msra.mxu0 0.0
  %602 = vmatprep.subr.mxu0 0.0
  %603 = vmatpush1.msra.mxu0 0.0
  %604 = vmatprep.subr.mxu0 0.0
  %605 = vmatpush1.msra.mxu0 0.0
  %606 = vmatprep.subr.mxu0 0.0
  %607 = vmatpush1.msra.mxu0 0.0
  %608 = vmatprep.subr.mxu0 0.0
  %609 = vmatpush1.msra.mxu0 0.0
  %610 = vmatprep.subr.mxu0 0.0
  %611 = vmatpush1.msra.mxu0 0.0
  %612 = vmatprep.subr.mxu0 0.0
  %613 = vmatpush1.msra.mxu0 0.0
  %614 = vmatprep.subr.mxu0 0.0
  %615 = vmatpush1.msra.mxu0 0.0
  %616 = vmatprep.subr.mxu0 0.0
  %617 = vmatpush1.msra.mxu0 0.0
  %618 = vmatprep.subr.mxu0 0.0
  %619 = vmatpush1.msra.mxu0 0.0
  %620 = vmatprep.subr.mxu0 0.0
  %621 = vmatpush1.msra.mxu0 0.0
  %622 = vmatprep.subr.mxu0 0.0
  %623 = vmatpush1.msra.mxu0 0.0
  %624 = vmatprep.mubr.f32.mxu0 0.0
  %625 = vmatmul.mubr.f32.gmra.mrb[0].mxu0 %v68
  %v626 = vpop.f32.mrb[0].mxu0
  %v627 = vadd.f32 0.0, %v626
  %v628 = vpop.f32.mrb[0].mxu0
  %629 = vmatprep.mubr.f32.mxu0 0.0
  %630 = vmatmul.mubr.f32.gmra.mrb[0].mxu0 %v71
  %v631 = vpop.f32.mrb[0].mxu0
  %v632 = vadd.f32 0.0, %v631
  %v633 = vpop.f32.mrb[0].mxu0
  %634 = vmatprep.mubr.f32.mxu0 0.0
  %635 = vmatmul.mubr.f32.gmra.mrb[0].mxu0 %v74
  %v636 = vpop.f32.mrb[0].mxu0
  %v637 = vadd.f32 0.0, %v636
  %v638 = vpop.f32.mrb[0].mxu0
  %639 = vmatprep.mubr.f32.mxu0 0.0
  %640 = vmatmul.mubr.f32.gmra.mrb[0].mxu0 %v77
  %v641 = vpop.f32.mrb[0].mxu0
  %v642 = vadd.f32 0.0, %v641
  %v643 = vpop.f32.mrb[0].mxu0
  %644 = vmatprep.mubr.f32.mxu0 0.0
  %645 = vmatmul.mubr.f32.gmra.mrb[0].mxu0 %v80
  %v646 = vpop.f32.mrb[0].mxu0
  %v647 = vadd.f32 0.0, %v646
  %v648 = vpop.f32.mrb[0].mxu0
  %649 = vmatprep.mubr.f32.mxu0 0.0
  %650 = vmatmul.mubr.f32.gmra.mrb[0].mxu0 %v83
  %v651 = vpop.f32.mrb[0].mxu0
  %v652 = vadd.f32 0.0, %v651
  %v653 = vpop.f32.mrb[0].mxu0
  %654 = vmatprep.mubr.f32.mxu0 0.0
  %655 = vmatmul.mubr.f32.gmra.mrb[0].mxu0 %v86
  %v656 = vpop.f32.mrb[0].mxu0
  %v657 = vadd.f32 0.0, %v656
  %v658 = vpop.f32.mrb[0].mxu0
  %659 = vmatprep.mubr.f32.mxu0 0.0
  %660 = vmatmul.mubr.f32.gmra.mrb[0].mxu0 %v89
  %v661 = vpop.f32.mrb[0].mxu0
  %v662 = vadd.f32 0.0, %v661
  %v663 = vpop.f32.mrb[0].mxu0
  %664 = vmatprep.mubr.f32.mxu0 0.0
  %665 = vmatmul.mubr.f32.gmra.mrb[0].mxu0 %v92
  %v666 = vpop.f32.mrb[0].mxu0
  %v667 = vadd.f32 0.0, %v666
  %v668 = vpop.f32.mrb[0].mxu0
  %669 = vmatprep.mubr.f32.mxu0 0.0
  %670 = vmatmul.mubr.f32.gmra.mrb[0].mxu0 %v95
  %v671 = vpop.f32.mrb[0].mxu0
  %v672 = vadd.f32 0.0, %v671
  %v673 = vpop.f32.mrb[0].mxu0
  %674 = vmatprep.mubr.f32.mxu0 0.0
  %675 = vmatmul.mubr.f32.gmra.mrb[0].mxu0 %v98
  %v676 = vpop.f32.mrb[0].mxu0
  %v677 = vadd.f32 0.0, %v676
  %v678 = vpop.f32.mrb[0].mxu0
  %679 = vmatprep.mubr.f32.mxu0 0.0
  %680 = vmatmul.mubr.f32.gmra.mrb[0].mxu0 %v101
  %v681 = vpop.f32.mrb[0].mxu0
  %v682 = vadd.f32 0.0, %v681
  %v683 = vpop.f32.mrb[0].mxu0
  %684 = vdwg.mxu0
  %v685 = vmax.f32 %v502, %v627
  %v686 = vmax.f32 %v507, %v632
  %v687 = vmax.f32 %v512, %v637
  %v688 = vmax.f32 %v517, %v642
  %v689 = vmax.f32 %v522, %v647
  %v690 = vmax.f32 %v527, %v652
  %v691 = vmax.f32 %v532, %v657
  %v692 = vmax.f32 %v537, %v662
  %v693 = vmax.f32 %v542, %v667
  %v694 = vmax.f32 %v547, %v672
  %v695 = vmax.f32 %v552, %v677
  %v696 = vmax.f32 %v557, %v682
  %v697 = vmax.f32 %v685, %v691
  %v698 = vmax.f32 %v686, %v692
  %v699 = vmax.f32 %v687, %v693
  %v700 = vmax.f32 %v688, %v694
  %v701 = vmax.f32 %v689, %v695
  %v702 = vmax.f32 %v690, %v696
  %v703 = vadd.f32 %v697, %v44
  %v704 = vadd.f32 %v698, %v45
  %v705 = vadd.f32 %v699, %v46
  %v706 = vadd.f32 %v700, %v47
  %v707 = vadd.f32 %v701, %v48
  %v708 = vadd.f32 %v702, %v49
  %v709 = vxor.u32 %v703, 2147483648
  %v710 = vxor.u32 %v704, 2147483648
  %v711 = vxor.u32 %v705, 2147483648
  %v712 = vxor.u32 %v706, 2147483648
  %v713 = vxor.u32 %v707, 2147483648
  %v714 = vxor.u32 %v708, 2147483648
  %v715 = vmul.f32 %v709, 1.442695
  %v716 = vpow.pop %v715
  %v717 = vmul.f32 %v710, 1.442695
  %v718 = vpow.pop %v717
  %v719 = vmul.f32 %v711, 1.442695
  %v720 = vpow.pop %v719
  %v721 = vmul.f32 %v712, 1.442695
  %v722 = vpow.pop %v721
  %v723 = vmul.f32 %v713, 1.442695
  %v724 = vpow.pop %v723
  %v725 = vmul.f32 %v714, 1.442695
  %v726 = vpow.pop %v725
  %v727 = vadd.f32 %v716, 1.0
  %v728 = vadd.f32 %v718, 1.0
  %v729 = vadd.f32 %v720, 1.0
  %v730 = vadd.f32 %v722, 1.0
  %v731 = vadd.f32 %v724, 1.0
  %v732 = vadd.f32 %v726, 1.0
  %v733 = vrcp.pop %v727
  %v734 = vmul.f32 1.0, %v733
  %v735 = vrcp.pop %v728
  %v736 = vmul.f32 1.0, %v735
  %v737 = vrcp.pop %v729
  %v738 = vmul.f32 1.0, %v737
  %v739 = vrcp.pop %v730
  %v740 = vmul.f32 1.0, %v739
  %v741 = vrcp.pop %v731
  %v742 = vmul.f32 1.0, %v741
  %v743 = vrcp.pop %v732
  %v744 = vmul.f32 1.0, %v743
  %745 = vst [vmem:[#allocation2 + $0x30] sm:$0xff] %v734
  %746 = vst [vmem:[#allocation2 + $0x38] sm:$0xff] %v736
  %747 = vst [vmem:[#allocation2 + $0x40] sm:$0xff] %v738
  %748 = vst [vmem:[#allocation2 + $0x48] sm:$0xff] %v740
  %749 = vst [vmem:[#allocation2 + $0x50] sm:$0xff] %v742
  %750 = vst [vmem:[#allocation2 + $0x58] sm:$0xff] %v744
  %v751 = vld [vmem:[%s0 + $0x80] sm:$0xff]
  %v752 = vld [vmem:[%s0 + $0x88] sm:$0xff]
  %v753 = vld [vmem:[%s0 + $0x90] sm:$0xff]
  %v754 = vld [vmem:[%s0 + $0x98] sm:$0xff]
  %v755 = vld [vmem:[%s0 + $0xa0] sm:$0xff]
  %v756 = vld [vmem:[%s0 + $0xa8] sm:$0xff]
  %v757 = vld [vmem:[%s0 + $0xb0] sm:$0xff]
  %v758 = vld [vmem:[%s0 + $0xb8] sm:$0xff]
  %v759 = vld [vmem:[%s0 + $0xc0] sm:$0xff]
  %v760 = vld [vmem:[%s0 + $0xc8] sm:$0xff]
  %v761 = vld [vmem:[%s0 + $0xd0] sm:$0xff]
  %v762 = vld [vmem:[%s0 + $0xd8] sm:$0xff]
  %v763 = vld [vmem:[%s0 + $0xe0] sm:$0xff]
  %v764 = vld [vmem:[%s0 + $0xe8] sm:$0xff]
  %v765 = vld [vmem:[%s0 + $0xf0] sm:$0xff]
  %v766 = vld [vmem:[%s0 + $0xf8] sm:$0xff]
  %767 = vmatprep.subr.mxu0 0.0
  %768 = vmatpush1.msra.mxu0 %v751
  %769 = vmatprep.subr.mxu0 0.0
  %770 = vmatpush1.msra.mxu0 %v752
  %771 = vmatprep.subr.mxu0 0.0
  %772 = vmatpush1.msra.mxu0 %v753
  %773 = vmatprep.subr.mxu0 0.0
  %774 = vmatpush1.msra.mxu0 %v754
  %775 = vmatprep.subr.mxu0 0.0
  %776 = vmatpush1.msra.mxu0 %v755
  %777 = vmatprep.subr.mxu0 0.0
  %778 = vmatpush1.msra.mxu0 %v756
  %779 = vmatprep.subr.mxu0 0.0
  %780 = vmatpush1.msra.mxu0 %v757
  %781 = vmatprep.subr.mxu0 0.0
  %782 = vmatpush1.msra.mxu0 %v758
  %783 = vmatprep.subr.mxu0 0.0
  %784 = vmatpush1.msra.mxu0 %v759
  %785 = vmatprep.subr.mxu0 0.0
  %786 = vmatpush1.msra.mxu0 %v760
  %787 = vmatprep.subr.mxu0 0.0
  %788 = vmatpush1.msra.mxu0 %v761
  %789 = vmatprep.subr.mxu0 0.0
  %790 = vmatpush1.msra.mxu0 %v762
  %791 = vmatprep.subr.mxu0 0.0
  %792 = vmatpush1.msra.mxu0 0.0
  %793 = vmatprep.subr.mxu0 0.0
  %794 = vmatpush1.msra.mxu0 0.0
  %795 = vmatprep.subr.mxu0 0.0
  %796 = vmatpush1.msra.mxu0 0.0
  %797 = vmatprep.subr.mxu0 0.0
  %798 = vmatpush1.msra.mxu0 0.0
  %799 = vmatprep.subr.mxu0 0.0
  %800 = vmatpush1.msra.mxu0 0.0
  %801 = vmatprep.subr.mxu0 0.0
  %802 = vmatpush1.msra.mxu0 0.0
  %803 = vmatprep.subr.mxu0 0.0
  %804 = vmatpush1.msra.mxu0 0.0
  %805 = vmatprep.subr.mxu0 0.0
  %806 = vmatpush1.msra.mxu0 0.0
  %807 = vmatprep.subr.mxu0 0.0
  %808 = vmatpush1.msra.mxu0 0.0
  %809 = vmatprep.subr.mxu0 0.0
  %810 = vmatpush1.msra.mxu0 0.0
  %811 = vmatprep.subr.mxu0 0.0
  %812 = vmatpush1.msra.mxu0 0.0
  %813 = vmatprep.subr.mxu0 0.0
  %814 = vmatpush1.msra.mxu0 0.0
  %815 = vmatprep.subr.mxu0 0.0
  %816 = vmatpush1.msra.mxu0 0.0
  %817 = vmatprep.subr.mxu0 0.0
  %818 = vmatpush1.msra.mxu0 0.0
  %819 = vmatprep.subr.mxu0 0.0
  %820 = vmatpush1.msra.mxu0 0.0
  %821 = vmatprep.subr.mxu0 0.0
  %822 = vmatpush1.msra.mxu0 0.0
  %823 = vmatprep.subr.mxu0 0.0
  %824 = vmatpush1.msra.mxu0 0.0
  %825 = vmatprep.subr.mxu0 0.0
  %826 = vmatpush1.msra.mxu0 0.0
  %827 = vmatprep.subr.mxu0 0.0
  %828 = vmatpush1.msra.mxu0 0.0
  %829 = vmatprep.subr.mxu0 0.0
  %830 = vmatpush1.msra.mxu0 0.0
  %831 = vmatprep.mubr.f32.mxu0 0.0
  %832 = vmatmul.mubr.f32.gmra.mrb[0].mxu0 %v68
  %v833 = vpop.f32.mrb[0].mxu0
  %v834 = vadd.f32 0.0, %v833
  %v835 = vpop.f32.mrb[0].mxu0
  %836 = vmatprep.mubr.f32.mxu0 0.0
  %837 = vmatmul.mubr.f32.gmra.mrb[0].mxu0 %v71
  %v838 = vpop.f32.mrb[0].mxu0
  %v839 = vadd.f32 0.0, %v838
  %v840 = vpop.f32.mrb[0].mxu0
  %841 = vmatprep.mubr.f32.mxu0 0.0
  %842 = vmatmul.mubr.f32.gmra.mrb[0].mxu0 %v74
  %v843 = vpop.f32.mrb[0].mxu0
  %v844 = vadd.f32 0.0, %v843
  %v845 = vpop.f32.mrb[0].mxu0
  %846 = vmatprep.mubr.f32.mxu0 0.0
  %847 = vmatmul.mubr.f32.gmra.mrb[0].mxu0 %v77
  %v848 = vpop.f32.mrb[0].mxu0
  %v849 = vadd.f32 0.0, %v848
  %v850 = vpop.f32.mrb[0].mxu0
  %851 = vmatprep.mubr.f32.mxu0 0.0
  %852 = vmatmul.mubr.f32.gmra.mrb[0].mxu0 %v80
  %v853 = vpop.f32.mrb[0].mxu0
  %v854 = vadd.f32 0.0, %v853
  %v855 = vpop.f32.mrb[0].mxu0
  %856 = vmatprep.mubr.f32.mxu0 0.0
  %857 = vmatmul.mubr.f32.gmra.mrb[0].mxu0 %v83
  %v858 = vpop.f32.mrb[0].mxu0
  %v859 = vadd.f32 0.0, %v858
  %v860 = vpop.f32.mrb[0].mxu0
  %861 = vmatprep.mubr.f32.mxu0 0.0
  %862 = vmatmul.mubr.f32.gmra.mrb[0].mxu0 %v86
  %v863 = vpop.f32.mrb[0].mxu0
  %v864 = vadd.f32 0.0, %v863
  %v865 = vpop.f32.mrb[0].mxu0
  %866 = vmatprep.mubr.f32.mxu0 0.0
  %867 = vmatmul.mubr.f32.gmra.mrb[0].mxu0 %v89
  %v868 = vpop.f32.mrb[0].mxu0
  %v869 = vadd.f32 0.0, %v868
  %v870 = vpop.f32.mrb[0].mxu0
  %871 = vmatprep.mubr.f32.mxu0 0.0
  %872 = vmatmul.mubr.f32.gmra.mrb[0].mxu0 %v92
  %v873 = vpop.f32.mrb[0].mxu0
  %v874 = vadd.f32 0.0, %v873
  %v875 = vpop.f32.mrb[0].mxu0
  %876 = vmatprep.mubr.f32.mxu0 0.0
  %877 = vmatmul.mubr.f32.gmra.mrb[0].mxu0 %v95
  %v878 = vpop.f32.mrb[0].mxu0
  %v879 = vadd.f32 0.0, %v878
  %v880 = vpop.f32.mrb[0].mxu0
  %881 = vmatprep.mubr.f32.mxu0 0.0
  %882 = vmatmul.mubr.f32.gmra.mrb[0].mxu0 %v98
  %v883 = vpop.f32.mrb[0].mxu0
  %v884 = vadd.f32 0.0, %v883
  %v885 = vpop.f32.mrb[0].mxu0
  %886 = vmatprep.mubr.f32.mxu0 0.0
  %887 = vmatmul.mubr.f32.gmra.mrb[0].mxu0 %v101
  %v888 = vpop.f32.mrb[0].mxu0
  %v889 = vadd.f32 0.0, %v888
  %v890 = vpop.f32.mrb[0].mxu0
  %891 = vdwg.mxu0
  %892 = vmatprep.subr.mxu0 0.0
  %893 = vmatpush1.msra.mxu0 %v755
  %894 = vmatprep.subr.mxu0 0.0
  %895 = vmatpush1.msra.mxu0 %v756
  %896 = vmatprep.subr.mxu0 0.0
  %897 = vmatpush1.msra.mxu0 %v757
  %898 = vmatprep.subr.mxu0 0.0
  %899 = vmatpush1.msra.mxu0 %v758
  %900 = vmatprep.subr.mxu0 0.0
  %901 = vmatpush1.msra.mxu0 %v759
  %902 = vmatprep.subr.mxu0 0.0
  %903 = vmatpush1.msra.mxu0 %v760
  %904 = vmatprep.subr.mxu0 0.0
  %905 = vmatpush1.msra.mxu0 %v761
  %906 = vmatprep.subr.mxu0 0.0
  %907 = vmatpush1.msra.mxu0 %v762
  %908 = vmatprep.subr.mxu0 0.0
  %909 = vmatpush1.msra.mxu0 %v763
  %910 = vmatprep.subr.mxu0 0.0
  %911 = vmatpush1.msra.mxu0 %v764
  %912 = vmatprep.subr.mxu0 0.0
  %913 = vmatpush1.msra.mxu0 %v765
  %914 = vmatprep.subr.mxu0 0.0
  %915 = vmatpush1.msra.mxu0 %v766
  %916 = vmatprep.subr.mxu0 0.0
  %917 = vmatpush1.msra.mxu0 0.0
  %918 = vmatprep.subr.mxu0 0.0
  %919 = vmatpush1.msra.mxu0 0.0
  %920 = vmatprep.subr.mxu0 0.0
  %921 = vmatpush1.msra.mxu0 0.0
  %922 = vmatprep.subr.mxu0 0.0
  %923 = vmatpush1.msra.mxu0 0.0
  %924 = vmatprep.subr.mxu0 0.0
  %925 = vmatpush1.msra.mxu0 0.0
  %926 = vmatprep.subr.mxu0 0.0
  %927 = vmatpush1.msra.mxu0 0.0
  %928 = vmatprep.subr.mxu0 0.0
  %929 = vmatpush1.msra.mxu0 0.0
  %930 = vmatprep.subr.mxu0 0.0
  %931 = vmatpush1.msra.mxu0 0.0
  %932 = vmatprep.subr.mxu0 0.0
  %933 = vmatpush1.msra.mxu0 0.0
  %934 = vmatprep.subr.mxu0 0.0
  %935 = vmatpush1.msra.mxu0 0.0
  %936 = vmatprep.subr.mxu0 0.0
  %937 = vmatpush1.msra.mxu0 0.0
  %938 = vmatprep.subr.mxu0 0.0
  %939 = vmatpush1.msra.mxu0 0.0
  %940 = vmatprep.subr.mxu0 0.0
  %941 = vmatpush1.msra.mxu0 0.0
  %942 = vmatprep.subr.mxu0 0.0
  %943 = vmatpush1.msra.mxu0 0.0
  %944 = vmatprep.subr.mxu0 0.0
  %945 = vmatpush1.msra.mxu0 0.0
  %946 = vmatprep.subr.mxu0 0.0
  %947 = vmatpush1.msra.mxu0 0.0
  %948 = vmatprep.subr.mxu0 0.0
  %949 = vmatpush1.msra.mxu0 0.0
  %950 = vmatprep.subr.mxu0 0.0
  %951 = vmatpush1.msra.mxu0 0.0
  %952 = vmatprep.subr.mxu0 0.0
  %953 = vmatpush1.msra.mxu0 0.0
  %954 = vmatprep.subr.mxu0 0.0
  %955 = vmatpush1.msra.mxu0 0.0
  %956 = vmatprep.mubr.f32.mxu0 0.0
  %957 = vmatmul.mubr.f32.gmra.mrb[0].mxu0 %v68
  %v958 = vpop.f32.mrb[0].mxu0
  %v959 = vadd.f32 0.0, %v958
  %v960 = vpop.f32.mrb[0].mxu0
  %961 = vmatprep.mubr.f32.mxu0 0.0
  %962 = vmatmul.mubr.f32.gmra.mrb[0].mxu0 %v71
  %v963 = vpop.f32.mrb[0].mxu0
  %v964 = vadd.f32 0.0, %v963
  %v965 = vpop.f32.mrb[0].mxu0
  %966 = vmatprep.mubr.f32.mxu0 0.0
  %967 = vmatmul.mubr.f32.gmra.mrb[0].mxu0 %v74
  %v968 = vpop.f32.mrb[0].mxu0
  %v969 = vadd.f32 0.0, %v968
  %v970 = vpop.f32.mrb[0].mxu0
  %971 = vmatprep.mubr.f32.mxu0 0.0
  %972 = vmatmul.mubr.f32.gmra.mrb[0].mxu0 %v77
  %v973 = vpop.f32.mrb[0].mxu0
  %v974 = vadd.f32 0.0, %v973
  %v975 = vpop.f32.mrb[0].mxu0
  %976 = vmatprep.mubr.f32.mxu0 0.0
  %977 = vmatmul.mubr.f32.gmra.mrb[0].mxu0 %v80
  %v978 = vpop.f32.mrb[0].mxu0
  %v979 = vadd.f32 0.0, %v978
  %v980 = vpop.f32.mrb[0].mxu0
  %981 = vmatprep.mubr.f32.mxu0 0.0
  %982 = vmatmul.mubr.f32.gmra.mrb[0].mxu0 %v83
  %v983 = vpop.f32.mrb[0].mxu0
  %v984 = vadd.f32 0.0, %v983
  %v985 = vpop.f32.mrb[0].mxu0
  %986 = vmatprep.mubr.f32.mxu0 0.0
  %987 = vmatmul.mubr.f32.gmra.mrb[0].mxu0 %v86
  %v988 = vpop.f32.mrb[0].mxu0
  %v989 = vadd.f32 0.0, %v988
  %v990 = vpop.f32.mrb[0].mxu0
  %991 = vmatprep.mubr.f32.mxu0 0.0
  %992 = vmatmul.mubr.f32.gmra.mrb[0].mxu0 %v89
  %v993 = vpop.f32.mrb[0].mxu0
  %v994 = vadd.f32 0.0, %v993
  %v995 = vpop.f32.mrb[0].mxu0
  %996 = vmatprep.mubr.f32.mxu0 0.0
  %997 = vmatmul.mubr.f32.gmra.mrb[0].mxu0 %v92
  %v998 = vpop.f32.mrb[0].mxu0
  %v999 = vadd.f32 0.0, %v998
  %v1000 = vpop.f32.mrb[0].mxu0
  %1001 = vmatprep.mubr.f32.mxu0 0.0
  %1002 = vmatmul.mubr.f32.gmra.mrb[0].mxu0 %v95
  %v1003 = vpop.f32.mrb[0].mxu0
  %v1004 = vadd.f32 0.0, %v1003
  %v1005 = vpop.f32.mrb[0].mxu0
  %1006 = vmatprep.mubr.f32.mxu0 0.0
  %1007 = vmatmul.mubr.f32.gmra.mrb[0].mxu0 %v98
  %v1008 = vpop.f32.mrb[0].mxu0
  %v1009 = vadd.f32 0.0, %v1008
  %v1010 = vpop.f32.mrb[0].mxu0
  %1011 = vmatprep.mubr.f32.mxu0 0.0
  %1012 = vmatmul.mubr.f32.gmra.mrb[0].mxu0 %v101
  %v1013 = vpop.f32.mrb[0].mxu0
  %v1014 = vadd.f32 0.0, %v1013
  %v1015 = vpop.f32.mrb[0].mxu0
  %1016 = vdwg.mxu0
  %v1017 = vmax.f32 %v834, %v959
  %v1018 = vmax.f32 %v839, %v964
  %v1019 = vmax.f32 %v844, %v969
  %v1020 = vmax.f32 %v849, %v974
  %v1021 = vmax.f32 %v854, %v979
  %v1022 = vmax.f32 %v859, %v984
  %v1023 = vmax.f32 %v864, %v989
  %v1024 = vmax.f32 %v869, %v994
  %v1025 = vmax.f32 %v874, %v999
  %v1026 = vmax.f32 %v879, %v1004
  %v1027 = vmax.f32 %v884, %v1009
  %v1028 = vmax.f32 %v889, %v1014
  %v1029 = vmax.f32 %v1017, %v1023
  %v1030 = vmax.f32 %v1018, %v1024
  %v1031 = vmax.f32 %v1019, %v1025
  %v1032 = vmax.f32 %v1020, %v1026
  %v1033 = vmax.f32 %v1021, %v1027
  %v1034 = vmax.f32 %v1022, %v1028
  %v1035 = vadd.f32 %v1029, %v44
  %v1036 = vadd.f32 %v1030, %v45
  %v1037 = vadd.f32 %v1031, %v46
  %v1038 = vadd.f32 %v1032, %v47
  %v1039 = vadd.f32 %v1033, %v48
  %v1040 = vadd.f32 %v1034, %v49
  %v1041 = vxor.u32 %v1035, 2147483648
  %v1042 = vxor.u32 %v1036, 2147483648
  %v1043 = vxor.u32 %v1037, 2147483648
  %v1044 = vxor.u32 %v1038, 2147483648
  %v1045 = vxor.u32 %v1039, 2147483648
  %v1046 = vxor.u32 %v1040, 2147483648
  %v1047 = vmul.f32 %v1041, 1.442695
  %v1048 = vpow.pop %v1047
  %v1049 = vmul.f32 %v1042, 1.442695
  %v1050 = vpow.pop %v1049
  %v1051 = vmul.f32 %v1043, 1.442695
  %v1052 = vpow.pop %v1051
  %v1053 = vmul.f32 %v1044, 1.442695
  %v1054 = vpow.pop %v1053
  %v1055 = vmul.f32 %v1045, 1.442695
  %v1056 = vpow.pop %v1055
  %v1057 = vmul.f32 %v1046, 1.442695
  %v1058 = vpow.pop %v1057
  %v1059 = vadd.f32 %v1048, 1.0
  %v1060 = vadd.f32 %v1050, 1.0
  %v1061 = vadd.f32 %v1052, 1.0
  %v1062 = vadd.f32 %v1054, 1.0
  %v1063 = vadd.f32 %v1056, 1.0
  %v1064 = vadd.f32 %v1058, 1.0
  %v1065 = vrcp.pop %v1059
  %v1066 = vmul.f32 1.0, %v1065
  %v1067 = vrcp.pop %v1060
  %v1068 = vmul.f32 1.0, %v1067
  %v1069 = vrcp.pop %v1061
  %v1070 = vmul.f32 1.0, %v1069
  %v1071 = vrcp.pop %v1062
  %v1072 = vmul.f32 1.0, %v1071
  %v1073 = vrcp.pop %v1063
  %v1074 = vmul.f32 1.0, %v1073
  %v1075 = vrcp.pop %v1064
  %v1076 = vmul.f32 1.0, %v1075
  %1077 = vst [vmem:[#allocation2 + $0x60] sm:$0xff] %v1066
  %1078 = vst [vmem:[#allocation2 + $0x68] sm:$0xff] %v1068
  %1079 = vst [vmem:[#allocation2 + $0x70] sm:$0xff] %v1070
  %1080 = vst [vmem:[#allocation2 + $0x78] sm:$0xff] %v1072
  %1081 = vst [vmem:[#allocation2 + $0x80] sm:$0xff] %v1074
  %1082 = vst [vmem:[#allocation2 + $0x88] sm:$0xff] %v1076
  %v1083 = vld [vmem:[%s0 + $0xc0] sm:$0xff]
  %v1084 = vld [vmem:[%s0 + $0xc8] sm:$0xff]
  %v1085 = vld [vmem:[%s0 + $0xd0] sm:$0xff]
  %v1086 = vld [vmem:[%s0 + $0xd8] sm:$0xff]
  %v1087 = vld [vmem:[%s0 + $0xe0] sm:$0xff]
  %v1088 = vld [vmem:[%s0 + $0xe8] sm:$0xff]
  %v1089 = vld [vmem:[%s0 + $0xf0] sm:$0xff]
  %v1090 = vld [vmem:[%s0 + $0xf8] sm:$0xff]
  %v1091 = vld [vmem:[%s0 + $0x100] sm:$0xff]
  %v1092 = vld [vmem:[%s0 + $0x108] sm:$0xff]
  %v1093 = vld [vmem:[%s0 + $0x110] sm:$0xff]
  %v1094 = vld [vmem:[%s0 + $0x118] sm:$0xff]
  %v1095 = vld [vmem:[%s0 + $0x120] sm:$0xff]
  %v1096 = vld [vmem:[%s0 + $0x128] sm:$0xff]
  %v1097 = vld [vmem:[%s0 + $0x130] sm:$0xff]
  %v1098 = vld [vmem:[%s0 + $0x138] sm:$0xff]
  %1099 = vmatprep.subr.mxu0 0.0
  %1100 = vmatpush1.msra.mxu0 %v1083
  %1101 = vmatprep.subr.mxu0 0.0
  %1102 = vmatpush1.msra.mxu0 %v1084
  %1103 = vmatprep.subr.mxu0 0.0
  %1104 = vmatpush1.msra.mxu0 %v1085
  %1105 = vmatprep.subr.mxu0 0.0
  %1106 = vmatpush1.msra.mxu0 %v1086
  %1107 = vmatprep.subr.mxu0 0.0
  %1108 = vmatpush1.msra.mxu0 %v1087
  %1109 = vmatprep.subr.mxu0 0.0
  %1110 = vmatpush1.msra.mxu0 %v1088
  %1111 = vmatprep.subr.mxu0 0.0
  %1112 = vmatpush1.msra.mxu0 %v1089
  %1113 = vmatprep.subr.mxu0 0.0
  %1114 = vmatpush1.msra.mxu0 %v1090
  %1115 = vmatprep.subr.mxu0 0.0
  %1116 = vmatpush1.msra.mxu0 %v1091
  %1117 = vmatprep.subr.mxu0 0.0
  %1118 = vmatpush1.msra.mxu0 %v1092
  %1119 = vmatprep.subr.mxu0 0.0
  %1120 = vmatpush1.msra.mxu0 %v1093
  %1121 = vmatprep.subr.mxu0 0.0
  %1122 = vmatpush1.msra.mxu0 %v1094
  %1123 = vmatprep.subr.mxu0 0.0
  %1124 = vmatpush1.msra.mxu0 0.0
  %1125 = vmatprep.subr.mxu0 0.0
  %1126 = vmatpush1.msra.mxu0 0.0
  %1127 = vmatprep.subr.mxu0 0.0
  %1128 = vmatpush1.msra.mxu0 0.0
  %1129 = vmatprep.subr.mxu0 0.0
  %1130 = vmatpush1.msra.mxu0 0.0
  %1131 = vmatprep.subr.mxu0 0.0
  %1132 = vmatpush1.msra.mxu0 0.0
  %1133 = vmatprep.subr.mxu0 0.0
  %1134 = vmatpush1.msra.mxu0 0.0
  %1135 = vmatprep.subr.mxu0 0.0
  %1136 = vmatpush1.msra.mxu0 0.0
  %1137 = vmatprep.subr.mxu0 0.0
  %1138 = vmatpush1.msra.mxu0 0.0
  %1139 = vmatprep.subr.mxu0 0.0
  %1140 = vmatpush1.msra.mxu0 0.0
  %1141 = vmatprep.subr.mxu0 0.0
  %1142 = vmatpush1.msra.mxu0 0.0
  %1143 = vmatprep.subr.mxu0 0.0
  %1144 = vmatpush1.msra.mxu0 0.0
  %1145 = vmatprep.subr.mxu0 0.0
  %1146 = vmatpush1.msra.mxu0 0.0
  %1147 = vmatprep.subr.mxu0 0.0
  %1148 = vmatpush1.msra.mxu0 0.0
  %1149 = vmatprep.subr.mxu0 0.0
  %1150 = vmatpush1.msra.mxu0 0.0
  %1151 = vmatprep.subr.mxu0 0.0
  %1152 = vmatpush1.msra.mxu0 0.0
  %1153 = vmatprep.subr.mxu0 0.0
  %1154 = vmatpush1.msra.mxu0 0.0
  %1155 = vmatprep.subr.mxu0 0.0
  %1156 = vmatpush1.msra.mxu0 0.0
  %1157 = vmatprep.subr.mxu0 0.0
  %1158 = vmatpush1.msra.mxu0 0.0
  %1159 = vmatprep.subr.mxu0 0.0
  %1160 = vmatpush1.msra.mxu0 0.0
  %1161 = vmatprep.subr.mxu0 0.0
  %1162 = vmatpush1.msra.mxu0 0.0
  %1163 = vmatprep.mubr.f32.mxu0 0.0
  %1164 = vmatmul.mubr.f32.gmra.mrb[0].mxu0 %v68
  %v1165 = vpop.f32.mrb[0].mxu0
  %v1166 = vadd.f32 0.0, %v1165
  %v1167 = vpop.f32.mrb[0].mxu0
  %1168 = vmatprep.mubr.f32.mxu0 0.0
  %1169 = vmatmul.mubr.f32.gmra.mrb[0].mxu0 %v71
  %v1170 = vpop.f32.mrb[0].mxu0
  %v1171 = vadd.f32 0.0, %v1170
  %v1172 = vpop.f32.mrb[0].mxu0
  %1173 = vmatprep.mubr.f32.mxu0 0.0
  %1174 = vmatmul.mubr.f32.gmra.mrb[0].mxu0 %v74
  %v1175 = vpop.f32.mrb[0].mxu0
  %v1176 = vadd.f32 0.0, %v1175
  %v1177 = vpop.f32.mrb[0].mxu0
  %1178 = vmatprep.mubr.f32.mxu0 0.0
  %1179 = vmatmul.mubr.f32.gmra.mrb[0].mxu0 %v77
  %v1180 = vpop.f32.mrb[0].mxu0
  %v1181 = vadd.f32 0.0, %v1180
  %v1182 = vpop.f32.mrb[0].mxu0
  %1183 = vmatprep.mubr.f32.mxu0 0.0
  %1184 = vmatmul.mubr.f32.gmra.mrb[0].mxu0 %v80
  %v1185 = vpop.f32.mrb[0].mxu0
  %v1186 = vadd.f32 0.0, %v1185
  %v1187 = vpop.f32.mrb[0].mxu0
  %1188 = vmatprep.mubr.f32.mxu0 0.0
  %1189 = vmatmul.mubr.f32.gmra.mrb[0].mxu0 %v83
  %v1190 = vpop.f32.mrb[0].mxu0
  %v1191 = vadd.f32 0.0, %v1190
  %v1192 = vpop.f32.mrb[0].mxu0
  %1193 = vmatprep.mubr.f32.mxu0 0.0
  %1194 = vmatmul.mubr.f32.gmra.mrb[0].mxu0 %v86
  %v1195 = vpop.f32.mrb[0].mxu0
  %v1196 = vadd.f32 0.0, %v1195
  %v1197 = vpop.f32.mrb[0].mxu0
  %1198 = vmatprep.mubr.f32.mxu0 0.0
  %1199 = vmatmul.mubr.f32.gmra.mrb[0].mxu0 %v89
  %v1200 = vpop.f32.mrb[0].mxu0
  %v1201 = vadd.f32 0.0, %v1200
  %v1202 = vpop.f32.mrb[0].mxu0
  %1203 = vmatprep.mubr.f32.mxu0 0.0
  %1204 = vmatmul.mubr.f32.gmra.mrb[0].mxu0 %v92
  %v1205 = vpop.f32.mrb[0].mxu0
  %v1206 = vadd.f32 0.0, %v1205
  %v1207 = vpop.f32.mrb[0].mxu0
  %1208 = vmatprep.mubr.f32.mxu0 0.0
  %1209 = vmatmul.mubr.f32.gmra.mrb[0].mxu0 %v95
  %v1210 = vpop.f32.mrb[0].mxu0
  %v1211 = vadd.f32 0.0, %v1210
  %v1212 = vpop.f32.mrb[0].mxu0
  %1213 = vmatprep.mubr.f32.mxu0 0.0
  %1214 = vmatmul.mubr.f32.gmra.mrb[0].mxu0 %v98
  %v1215 = vpop.f32.mrb[0].mxu0
  %v1216 = vadd.f32 0.0, %v1215
  %v1217 = vpop.f32.mrb[0].mxu0
  %1218 = vmatprep.mubr.f32.mxu0 0.0
  %1219 = vmatmul.mubr.f32.gmra.mrb[0].mxu0 %v101
  %v1220 = vpop.f32.mrb[0].mxu0
  %v1221 = vadd.f32 0.0, %v1220
  %v1222 = vpop.f32.mrb[0].mxu0
  %1223 = vdwg.mxu0
  %1224 = vmatprep.subr.mxu0 0.0
  %1225 = vmatpush1.msra.mxu0 %v1087
  %1226 = vmatprep.subr.mxu0 0.0
  %1227 = vmatpush1.msra.mxu0 %v1088
  %1228 = vmatprep.subr.mxu0 0.0
  %1229 = vmatpush1.msra.mxu0 %v1089
  %1230 = vmatprep.subr.mxu0 0.0
  %1231 = vmatpush1.msra.mxu0 %v1090
  %1232 = vmatprep.subr.mxu0 0.0
  %1233 = vmatpush1.msra.mxu0 %v1091
  %1234 = vmatprep.subr.mxu0 0.0
  %1235 = vmatpush1.msra.mxu0 %v1092
  %1236 = vmatprep.subr.mxu0 0.0
  %1237 = vmatpush1.msra.mxu0 %v1093
  %1238 = vmatprep.subr.mxu0 0.0
  %1239 = vmatpush1.msra.mxu0 %v1094
  %1240 = vmatprep.subr.mxu0 0.0
  %1241 = vmatpush1.msra.mxu0 %v1095
  %1242 = vmatprep.subr.mxu0 0.0
  %1243 = vmatpush1.msra.mxu0 %v1096
  %1244 = vmatprep.subr.mxu0 0.0
  %1245 = vmatpush1.msra.mxu0 %v1097
  %1246 = vmatprep.subr.mxu0 0.0
  %1247 = vmatpush1.msra.mxu0 %v1098
  %1248 = vmatprep.subr.mxu0 0.0
  %1249 = vmatpush1.msra.mxu0 0.0
  %1250 = vmatprep.subr.mxu0 0.0
  %1251 = vmatpush1.msra.mxu0 0.0
  %1252 = vmatprep.subr.mxu0 0.0
  %1253 = vmatpush1.msra.mxu0 0.0
  %1254 = vmatprep.subr.mxu0 0.0
  %1255 = vmatpush1.msra.mxu0 0.0
  %1256 = vmatprep.subr.mxu0 0.0
  %1257 = vmatpush1.msra.mxu0 0.0
  %1258 = vmatprep.subr.mxu0 0.0
  %1259 = vmatpush1.msra.mxu0 0.0
  %1260 = vmatprep.subr.mxu0 0.0
  %1261 = vmatpush1.msra.mxu0 0.0
  %1262 = vmatprep.subr.mxu0 0.0
  %1263 = vmatpush1.msra.mxu0 0.0
  %1264 = vmatprep.subr.mxu0 0.0
  %1265 = vmatpush1.msra.mxu0 0.0
  %1266 = vmatprep.subr.mxu0 0.0
  %1267 = vmatpush1.msra.mxu0 0.0
  %1268 = vmatprep.subr.mxu0 0.0
  %1269 = vmatpush1.msra.mxu0 0.0
  %1270 = vmatprep.subr.mxu0 0.0
  %1271 = vmatpush1.msra.mxu0 0.0
  %1272 = vmatprep.subr.mxu0 0.0
  %1273 = vmatpush1.msra.mxu0 0.0
  %1274 = vmatprep.subr.mxu0 0.0
  %1275 = vmatpush1.msra.mxu0 0.0
  %1276 = vmatprep.subr.mxu0 0.0
  %1277 = vmatpush1.msra.mxu0 0.0
  %1278 = vmatprep.subr.mxu0 0.0
  %1279 = vmatpush1.msra.mxu0 0.0
  %1280 = vmatprep.subr.mxu0 0.0
  %1281 = vmatpush1.msra.mxu0 0.0
  %1282 = vmatprep.subr.mxu0 0.0
  %1283 = vmatpush1.msra.mxu0 0.0
  %1284 = vmatprep.subr.mxu0 0.0
  %1285 = vmatpush1.msra.mxu0 0.0
  %1286 = vmatprep.subr.mxu0 0.0
  %1287 = vmatpush1.msra.mxu0 0.0
  %1288 = vmatprep.mubr.f32.mxu0 0.0
  %1289 = vmatmul.mubr.f32.gmra.mrb[0].mxu0 %v68
  %v1290 = vpop.f32.mrb[0].mxu0
  %v1291 = vadd.f32 0.0, %v1290
  %v1292 = vpop.f32.mrb[0].mxu0
  %1293 = vmatprep.mubr.f32.mxu0 0.0
  %1294 = vmatmul.mubr.f32.gmra.mrb[0].mxu0 %v71
  %v1295 = vpop.f32.mrb[0].mxu0
  %v1296 = vadd.f32 0.0, %v1295
  %v1297 = vpop.f32.mrb[0].mxu0
  %1298 = vmatprep.mubr.f32.mxu0 0.0
  %1299 = vmatmul.mubr.f32.gmra.mrb[0].mxu0 %v74
  %v1300 = vpop.f32.mrb[0].mxu0
  %v1301 = vadd.f32 0.0, %v1300
  %v1302 = vpop.f32.mrb[0].mxu0
  %1303 = vmatprep.mubr.f32.mxu0 0.0
  %1304 = vmatmul.mubr.f32.gmra.mrb[0].mxu0 %v77
  %v1305 = vpop.f32.mrb[0].mxu0
  %v1306 = vadd.f32 0.0, %v1305
  %v1307 = vpop.f32.mrb[0].mxu0
  %1308 = vmatprep.mubr.f32.mxu0 0.0
  %1309 = vmatmul.mubr.f32.gmra.mrb[0].mxu0 %v80
  %v1310 = vpop.f32.mrb[0].mxu0
  %v1311 = vadd.f32 0.0, %v1310
  %v1312 = vpop.f32.mrb[0].mxu0
  %1313 = vmatprep.mubr.f32.mxu0 0.0
  %1314 = vmatmul.mubr.f32.gmra.mrb[0].mxu0 %v83
  %v1315 = vpop.f32.mrb[0].mxu0
  %v1316 = vadd.f32 0.0, %v1315
  %v1317 = vpop.f32.mrb[0].mxu0
  %1318 = vmatprep.mubr.f32.mxu0 0.0
  %1319 = vmatmul.mubr.f32.gmra.mrb[0].mxu0 %v86
  %v1320 = vpop.f32.mrb[0].mxu0
  %v1321 = vadd.f32 0.0, %v1320
  %v1322 = vpop.f32.mrb[0].mxu0
  %1323 = vmatprep.mubr.f32.mxu0 0.0
  %1324 = vmatmul.mubr.f32.gmra.mrb[0].mxu0 %v89
  %v1325 = vpop.f32.mrb[0].mxu0
  %v1326 = vadd.f32 0.0, %v1325
  %v1327 = vpop.f32.mrb[0].mxu0
  %1328 = vmatprep.mubr.f32.mxu0 0.0
  %1329 = vmatmul.mubr.f32.gmra.mrb[0].mxu0 %v92
  %v1330 = vpop.f32.mrb[0].mxu0
  %v1331 = vadd.f32 0.0, %v1330
  %v1332 = vpop.f32.mrb[0].mxu0
  %1333 = vmatprep.mubr.f32.mxu0 0.0
  %1334 = vmatmul.mubr.f32.gmra.mrb[0].mxu0 %v95
  %v1335 = vpop.f32.mrb[0].mxu0
  %v1336 = vadd.f32 0.0, %v1335
  %v1337 = vpop.f32.mrb[0].mxu0
  %1338 = vmatprep.mubr.f32.mxu0 0.0
  %1339 = vmatmul.mubr.f32.gmra.mrb[0].mxu0 %v98
  %v1340 = vpop.f32.mrb[0].mxu0
  %v1341 = vadd.f32 0.0, %v1340
  %v1342 = vpop.f32.mrb[0].mxu0
  %1343 = vmatprep.mubr.f32.mxu0 0.0
  %1344 = vmatmul.mubr.f32.gmra.mrb[0].mxu0 %v101
  %v1345 = vpop.f32.mrb[0].mxu0
  %v1346 = vadd.f32 0.0, %v1345
  %v1347 = vpop.f32.mrb[0].mxu0
  %1348 = vdwg.mxu0
  %v1349 = vmax.f32 %v1166, %v1291
  %v1350 = vmax.f32 %v1171, %v1296
  %v1351 = vmax.f32 %v1176, %v1301
  %v1352 = vmax.f32 %v1181, %v1306
  %v1353 = vmax.f32 %v1186, %v1311
  %v1354 = vmax.f32 %v1191, %v1316
  %v1355 = vmax.f32 %v1196, %v1321
  %v1356 = vmax.f32 %v1201, %v1326
  %v1357 = vmax.f32 %v1206, %v1331
  %v1358 = vmax.f32 %v1211, %v1336
  %v1359 = vmax.f32 %v1216, %v1341
  %v1360 = vmax.f32 %v1221, %v1346
  %v1361 = vmax.f32 %v1349, %v1355
  %v1362 = vmax.f32 %v1350, %v1356
  %v1363 = vmax.f32 %v1351, %v1357
  %v1364 = vmax.f32 %v1352, %v1358
  %v1365 = vmax.f32 %v1353, %v1359
  %v1366 = vmax.f32 %v1354, %v1360
  %v1367 = vadd.f32 %v1361, %v44
  %v1368 = vadd.f32 %v1362, %v45
  %v1369 = vadd.f32 %v1363, %v46
  %v1370 = vadd.f32 %v1364, %v47
  %v1371 = vadd.f32 %v1365, %v48
  %v1372 = vadd.f32 %v1366, %v49
  %v1373 = vxor.u32 %v1367, 2147483648
  %v1374 = vxor.u32 %v1368, 2147483648
  %v1375 = vxor.u32 %v1369, 2147483648
  %v1376 = vxor.u32 %v1370, 2147483648
  %v1377 = vxor.u32 %v1371, 2147483648
  %v1378 = vxor.u32 %v1372, 2147483648
  %v1379 = vmul.f32 %v1373, 1.442695
  %v1380 = vpow.pop %v1379
  %v1381 = vmul.f32 %v1374, 1.442695
  %v1382 = vpow.pop %v1381
  %v1383 = vmul.f32 %v1375, 1.442695
  %v1384 = vpow.pop %v1383
  %v1385 = vmul.f32 %v1376, 1.442695
  %v1386 = vpow.pop %v1385
  %v1387 = vmul.f32 %v1377, 1.442695
  %v1388 = vpow.pop %v1387
  %v1389 = vmul.f32 %v1378, 1.442695
  %v1390 = vpow.pop %v1389
  %v1391 = vadd.f32 %v1380, 1.0
  %v1392 = vadd.f32 %v1382, 1.0
  %v1393 = vadd.f32 %v1384, 1.0
  %v1394 = vadd.f32 %v1386, 1.0
  %v1395 = vadd.f32 %v1388, 1.0
  %v1396 = vadd.f32 %v1390, 1.0
  %v1397 = vrcp.pop %v1391
  %v1398 = vmul.f32 1.0, %v1397
  %v1399 = vrcp.pop %v1392
  %v1400 = vmul.f32 1.0, %v1399
  %v1401 = vrcp.pop %v1393
  %v1402 = vmul.f32 1.0, %v1401
  %v1403 = vrcp.pop %v1394
  %v1404 = vmul.f32 1.0, %v1403
  %v1405 = vrcp.pop %v1395
  %v1406 = vmul.f32 1.0, %v1405
  %v1407 = vrcp.pop %v1396
  %v1408 = vmul.f32 1.0, %v1407
  %1409 = vst [vmem:[#allocation2 + $0x90] sm:$0xff] %v1398
  %1410 = vst [vmem:[#allocation2 + $0x98] sm:$0xff] %v1400
  %1411 = vst [vmem:[#allocation2 + $0xa0] sm:$0xff] %v1402
  %1412 = vst [vmem:[#allocation2 + $0xa8] sm:$0xff] %v1404
  %1413 = vst [vmem:[#allocation2 + $0xb0] sm:$0xff] %v1406
  %1414 = vst [vmem:[#allocation2 + $0xb8] sm:$0xff] %v1408
  %v1415 = vld [vmem:[%s0 + $0x100] sm:$0xff]
  %v1416 = vld [vmem:[%s0 + $0x108] sm:$0xff]
  %v1417 = vld [vmem:[%s0 + $0x110] sm:$0xff]
  %v1418 = vld [vmem:[%s0 + $0x118] sm:$0xff]
  %v1419 = vld [vmem:[%s0 + $0x120] sm:$0xff]
  %v1420 = vld [vmem:[%s0 + $0x128] sm:$0xff]
  %v1421 = vld [vmem:[%s0 + $0x130] sm:$0xff]
  %v1422 = vld [vmem:[%s0 + $0x138] sm:$0xff]
  %v1423 = vld [vmem:[%s0 + $0x140] sm:$0xff]
  %v1424 = vld [vmem:[%s0 + $0x148] sm:$0xff]
  %v1425 = vld [vmem:[%s0 + $0x150] sm:$0xff]
  %v1426 = vld [vmem:[%s0 + $0x158] sm:$0xff]
  %v1427 = vld [vmem:[%s0 + $0x160] sm:$0xff]
  %v1428 = vld [vmem:[%s0 + $0x168] sm:$0xff]
  %v1429 = vld [vmem:[%s0 + $0x170] sm:$0xff]
  %v1430 = vld [vmem:[%s0 + $0x178] sm:$0xff]
  %1431 = vmatprep.subr.mxu0 0.0
  %1432 = vmatpush1.msra.mxu0 %v1415
  %1433 = vmatprep.subr.mxu0 0.0
  %1434 = vmatpush1.msra.mxu0 %v1416
  %1435 = vmatprep.subr.mxu0 0.0
  %1436 = vmatpush1.msra.mxu0 %v1417
  %1437 = vmatprep.subr.mxu0 0.0
  %1438 = vmatpush1.msra.mxu0 %v1418
  %1439 = vmatprep.subr.mxu0 0.0
  %1440 = vmatpush1.msra.mxu0 %v1419
  %1441 = vmatprep.subr.mxu0 0.0
  %1442 = vmatpush1.msra.mxu0 %v1420
  %1443 = vmatprep.subr.mxu0 0.0
  %1444 = vmatpush1.msra.mxu0 %v1421
  %1445 = vmatprep.subr.mxu0 0.0
  %1446 = vmatpush1.msra.mxu0 %v1422
  %1447 = vmatprep.subr.mxu0 0.0
  %1448 = vmatpush1.msra.mxu0 %v1423
  %1449 = vmatprep.subr.mxu0 0.0
  %1450 = vmatpush1.msra.mxu0 %v1424
  %1451 = vmatprep.subr.mxu0 0.0
  %1452 = vmatpush1.msra.mxu0 %v1425
  %1453 = vmatprep.subr.mxu0 0.0
  %1454 = vmatpush1.msra.mxu0 %v1426
  %1455 = vmatprep.subr.mxu0 0.0
  %1456 = vmatpush1.msra.mxu0 0.0
  %1457 = vmatprep.subr.mxu0 0.0
  %1458 = vmatpush1.msra.mxu0 0.0
  %1459 = vmatprep.subr.mxu0 0.0
  %1460 = vmatpush1.msra.mxu0 0.0
  %1461 = vmatprep.subr.mxu0 0.0
  %1462 = vmatpush1.msra.mxu0 0.0
  %1463 = vmatprep.subr.mxu0 0.0
  %1464 = vmatpush1.msra.mxu0 0.0
  %1465 = vmatprep.subr.mxu0 0.0
  %1466 = vmatpush1.msra.mxu0 0.0
  %1467 = vmatprep.subr.mxu0 0.0
  %1468 = vmatpush1.msra.mxu0 0.0
  %1469 = vmatprep.subr.mxu0 0.0
  %1470 = vmatpush1.msra.mxu0 0.0
  %1471 = vmatprep.subr.mxu0 0.0
  %1472 = vmatpush1.msra.mxu0 0.0
  %1473 = vmatprep.subr.mxu0 0.0
  %1474 = vmatpush1.msra.mxu0 0.0
  %1475 = vmatprep.subr.mxu0 0.0
  %1476 = vmatpush1.msra.mxu0 0.0
  %1477 = vmatprep.subr.mxu0 0.0
  %1478 = vmatpush1.msra.mxu0 0.0
  %1479 = vmatprep.subr.mxu0 0.0
  %1480 = vmatpush1.msra.mxu0 0.0
  %1481 = vmatprep.subr.mxu0 0.0
  %1482 = vmatpush1.msra.mxu0 0.0
  %1483 = vmatprep.subr.mxu0 0.0
  %1484 = vmatpush1.msra.mxu0 0.0
  %1485 = vmatprep.subr.mxu0 0.0
  %1486 = vmatpush1.msra.mxu0 0.0
  %1487 = vmatprep.subr.mxu0 0.0
  %1488 = vmatpush1.msra.mxu0 0.0
  %1489 = vmatprep.subr.mxu0 0.0
  %1490 = vmatpush1.msra.mxu0 0.0
  %1491 = vmatprep.subr.mxu0 0.0
  %1492 = vmatpush1.msra.mxu0 0.0
  %1493 = vmatprep.subr.mxu0 0.0
  %1494 = vmatpush1.msra.mxu0 0.0
  %1495 = vmatprep.mubr.f32.mxu0 0.0
  %1496 = vmatmul.mubr.f32.gmra.mrb[0].mxu0 %v68
  %v1497 = vpop.f32.mrb[0].mxu0
  %v1498 = vadd.f32 0.0, %v1497
  %v1499 = vpop.f32.mrb[0].mxu0
  %1500 = vmatprep.mubr.f32.mxu0 0.0
  %1501 = vmatmul.mubr.f32.gmra.mrb[0].mxu0 %v71
  %v1502 = vpop.f32.mrb[0].mxu0
  %v1503 = vadd.f32 0.0, %v1502
  %v1504 = vpop.f32.mrb[0].mxu0
  %1505 = vmatprep.mubr.f32.mxu0 0.0
  %1506 = vmatmul.mubr.f32.gmra.mrb[0].mxu0 %v74
  %v1507 = vpop.f32.mrb[0].mxu0
  %v1508 = vadd.f32 0.0, %v1507
  %v1509 = vpop.f32.mrb[0].mxu0
  %1510 = vmatprep.mubr.f32.mxu0 0.0
  %1511 = vmatmul.mubr.f32.gmra.mrb[0].mxu0 %v77
  %v1512 = vpop.f32.mrb[0].mxu0
  %v1513 = vadd.f32 0.0, %v1512
  %v1514 = vpop.f32.mrb[0].mxu0
  %1515 = vmatprep.mubr.f32.mxu0 0.0
  %1516 = vmatmul.mubr.f32.gmra.mrb[0].mxu0 %v80
  %v1517 = vpop.f32.mrb[0].mxu0
  %v1518 = vadd.f32 0.0, %v1517
  %v1519 = vpop.f32.mrb[0].mxu0
  %1520 = vmatprep.mubr.f32.mxu0 0.0
  %1521 = vmatmul.mubr.f32.gmra.mrb[0].mxu0 %v83
  %v1522 = vpop.f32.mrb[0].mxu0
  %v1523 = vadd.f32 0.0, %v1522
  %v1524 = vpop.f32.mrb[0].mxu0
  %1525 = vmatprep.mubr.f32.mxu0 0.0
  %1526 = vmatmul.mubr.f32.gmra.mrb[0].mxu0 %v86
  %v1527 = vpop.f32.mrb[0].mxu0
  %v1528 = vadd.f32 0.0, %v1527
  %v1529 = vpop.f32.mrb[0].mxu0
  %1530 = vmatprep.mubr.f32.mxu0 0.0
  %1531 = vmatmul.mubr.f32.gmra.mrb[0].mxu0 %v89
  %v1532 = vpop.f32.mrb[0].mxu0
  %v1533 = vadd.f32 0.0, %v1532
  %v1534 = vpop.f32.mrb[0].mxu0
  %1535 = vmatprep.mubr.f32.mxu0 0.0
  %1536 = vmatmul.mubr.f32.gmra.mrb[0].mxu0 %v92
  %v1537 = vpop.f32.mrb[0].mxu0
  %v1538 = vadd.f32 0.0, %v1537
  %v1539 = vpop.f32.mrb[0].mxu0
  %1540 = vmatprep.mubr.f32.mxu0 0.0
  %1541 = vmatmul.mubr.f32.gmra.mrb[0].mxu0 %v95
  %v1542 = vpop.f32.mrb[0].mxu0
  %v1543 = vadd.f32 0.0, %v1542
  %v1544 = vpop.f32.mrb[0].mxu0
  %1545 = vmatprep.mubr.f32.mxu0 0.0
  %1546 = vmatmul.mubr.f32.gmra.mrb[0].mxu0 %v98
  %v1547 = vpop.f32.mrb[0].mxu0
  %v1548 = vadd.f32 0.0, %v1547
  %v1549 = vpop.f32.mrb[0].mxu0
  %1550 = vmatprep.mubr.f32.mxu0 0.0
  %1551 = vmatmul.mubr.f32.gmra.mrb[0].mxu0 %v101
  %v1552 = vpop.f32.mrb[0].mxu0
  %v1553 = vadd.f32 0.0, %v1552
  %v1554 = vpop.f32.mrb[0].mxu0
  %1555 = vdwg.mxu0
  %1556 = vmatprep.subr.mxu0 0.0
  %1557 = vmatpush1.msra.mxu0 %v1419
  %1558 = vmatprep.subr.mxu0 0.0
  %1559 = vmatpush1.msra.mxu0 %v1420
  %1560 = vmatprep.subr.mxu0 0.0
  %1561 = vmatpush1.msra.mxu0 %v1421
  %1562 = vmatprep.subr.mxu0 0.0
  %1563 = vmatpush1.msra.mxu0 %v1422
  %1564 = vmatprep.subr.mxu0 0.0
  %1565 = vmatpush1.msra.mxu0 %v1423
  %1566 = vmatprep.subr.mxu0 0.0
  %1567 = vmatpush1.msra.mxu0 %v1424
  %1568 = vmatprep.subr.mxu0 0.0
  %1569 = vmatpush1.msra.mxu0 %v1425
  %1570 = vmatprep.subr.mxu0 0.0
  %1571 = vmatpush1.msra.mxu0 %v1426
  %1572 = vmatprep.subr.mxu0 0.0
  %1573 = vmatpush1.msra.mxu0 %v1427
  %1574 = vmatprep.subr.mxu0 0.0
  %1575 = vmatpush1.msra.mxu0 %v1428
  %1576 = vmatprep.subr.mxu0 0.0
  %1577 = vmatpush1.msra.mxu0 %v1429
  %1578 = vmatprep.subr.mxu0 0.0
  %1579 = vmatpush1.msra.mxu0 %v1430
  %1580 = vmatprep.subr.mxu0 0.0
  %1581 = vmatpush1.msra.mxu0 0.0
  %1582 = vmatprep.subr.mxu0 0.0
  %1583 = vmatpush1.msra.mxu0 0.0
  %1584 = vmatprep.subr.mxu0 0.0
  %1585 = vmatpush1.msra.mxu0 0.0
  %1586 = vmatprep.subr.mxu0 0.0
  %1587 = vmatpush1.msra.mxu0 0.0
  %1588 = vmatprep.subr.mxu0 0.0
  %1589 = vmatpush1.msra.mxu0 0.0
  %1590 = vmatprep.subr.mxu0 0.0
  %1591 = vmatpush1.msra.mxu0 0.0
  %1592 = vmatprep.subr.mxu0 0.0
  %1593 = vmatpush1.msra.mxu0 0.0
  %1594 = vmatprep.subr.mxu0 0.0
  %1595 = vmatpush1.msra.mxu0 0.0
  %1596 = vmatprep.subr.mxu0 0.0
  %1597 = vmatpush1.msra.mxu0 0.0
  %1598 = vmatprep.subr.mxu0 0.0
  %1599 = vmatpush1.msra.mxu0 0.0
  %1600 = vmatprep.subr.mxu0 0.0
  %1601 = vmatpush1.msra.mxu0 0.0
  %1602 = vmatprep.subr.mxu0 0.0
  %1603 = vmatpush1.msra.mxu0 0.0
  %1604 = vmatprep.subr.mxu0 0.0
  %1605 = vmatpush1.msra.mxu0 0.0
  %1606 = vmatprep.subr.mxu0 0.0
  %1607 = vmatpush1.msra.mxu0 0.0
  %1608 = vmatprep.subr.mxu0 0.0
  %1609 = vmatpush1.msra.mxu0 0.0
  %1610 = vmatprep.subr.mxu0 0.0
  %1611 = vmatpush1.msra.mxu0 0.0
  %1612 = vmatprep.subr.mxu0 0.0
  %1613 = vmatpush1.msra.mxu0 0.0
  %1614 = vmatprep.subr.mxu0 0.0
  %1615 = vmatpush1.msra.mxu0 0.0
  %1616 = vmatprep.subr.mxu0 0.0
  %1617 = vmatpush1.msra.mxu0 0.0
  %1618 = vmatprep.subr.mxu0 0.0
  %1619 = vmatpush1.msra.mxu0 0.0
  %1620 = vmatprep.mubr.f32.mxu0 0.0
  %1621 = vmatmul.mubr.f32.gmra.mrb[0].mxu0 %v68
  %v1622 = vpop.f32.mrb[0].mxu0
  %v1623 = vadd.f32 0.0, %v1622
  %v1624 = vpop.f32.mrb[0].mxu0
  %1625 = vmatprep.mubr.f32.mxu0 0.0
  %1626 = vmatmul.mubr.f32.gmra.mrb[0].mxu0 %v71
  %v1627 = vpop.f32.mrb[0].mxu0
  %v1628 = vadd.f32 0.0, %v1627
  %v1629 = vpop.f32.mrb[0].mxu0
  %1630 = vmatprep.mubr.f32.mxu0 0.0
  %1631 = vmatmul.mubr.f32.gmra.mrb[0].mxu0 %v74
  %v1632 = vpop.f32.mrb[0].mxu0
  %v1633 = vadd.f32 0.0, %v1632
  %v1634 = vpop.f32.mrb[0].mxu0
  %1635 = vmatprep.mubr.f32.mxu0 0.0
  %1636 = vmatmul.mubr.f32.gmra.mrb[0].mxu0 %v77
  %v1637 = vpop.f32.mrb[0].mxu0
  %v1638 = vadd.f32 0.0, %v1637
  %v1639 = vpop.f32.mrb[0].mxu0
  %1640 = vmatprep.mubr.f32.mxu0 0.0
  %1641 = vmatmul.mubr.f32.gmra.mrb[0].mxu0 %v80
  %v1642 = vpop.f32.mrb[0].mxu0
  %v1643 = vadd.f32 0.0, %v1642
  %v1644 = vpop.f32.mrb[0].mxu0
  %1645 = vmatprep.mubr.f32.mxu0 0.0
  %1646 = vmatmul.mubr.f32.gmra.mrb[0].mxu0 %v83
  %v1647 = vpop.f32.mrb[0].mxu0
  %v1648 = vadd.f32 0.0, %v1647
  %v1649 = vpop.f32.mrb[0].mxu0
  %1650 = vmatprep.mubr.f32.mxu0 0.0
  %1651 = vmatmul.mubr.f32.gmra.mrb[0].mxu0 %v86
  %v1652 = vpop.f32.mrb[0].mxu0
  %v1653 = vadd.f32 0.0, %v1652
  %v1654 = vpop.f32.mrb[0].mxu0
  %1655 = vmatprep.mubr.f32.mxu0 0.0
  %1656 = vmatmul.mubr.f32.gmra.mrb[0].mxu0 %v89
  %v1657 = vpop.f32.mrb[0].mxu0
  %v1658 = vadd.f32 0.0, %v1657
  %v1659 = vpop.f32.mrb[0].mxu0
  %1660 = vmatprep.mubr.f32.mxu0 0.0
  %1661 = vmatmul.mubr.f32.gmra.mrb[0].mxu0 %v92
  %v1662 = vpop.f32.mrb[0].mxu0
  %v1663 = vadd.f32 0.0, %v1662
  %v1664 = vpop.f32.mrb[0].mxu0
  %1665 = vmatprep.mubr.f32.mxu0 0.0
  %1666 = vmatmul.mubr.f32.gmra.mrb[0].mxu0 %v95
  %v1667 = vpop.f32.mrb[0].mxu0
  %v1668 = vadd.f32 0.0, %v1667
  %v1669 = vpop.f32.mrb[0].mxu0
  %1670 = vmatprep.mubr.f32.mxu0 0.0
  %1671 = vmatmul.mubr.f32.gmra.mrb[0].mxu0 %v98
  %v1672 = vpop.f32.mrb[0].mxu0
  %v1673 = vadd.f32 0.0, %v1672
  %v1674 = vpop.f32.mrb[0].mxu0
  %1675 = vmatprep.mubr.f32.mxu0 0.0
  %1676 = vmatmul.mubr.f32.gmra.mrb[0].mxu0 %v101
  %v1677 = vpop.f32.mrb[0].mxu0
  %v1678 = vadd.f32 0.0, %v1677
  %v1679 = vpop.f32.mrb[0].mxu0
  %1680 = vdwg.mxu0
  %v1681 = vmax.f32 %v1498, %v1623
  %v1682 = vmax.f32 %v1503, %v1628
  %v1683 = vmax.f32 %v1508, %v1633
  %v1684 = vmax.f32 %v1513, %v1638
  %v1685 = vmax.f32 %v1518, %v1643
  %v1686 = vmax.f32 %v1523, %v1648
  %v1687 = vmax.f32 %v1528, %v1653
  %v1688 = vmax.f32 %v1533, %v1658
  %v1689 = vmax.f32 %v1538, %v1663
  %v1690 = vmax.f32 %v1543, %v1668
  %v1691 = vmax.f32 %v1548, %v1673
  %v1692 = vmax.f32 %v1553, %v1678
  %v1693 = vmax.f32 %v1681, %v1687
  %v1694 = vmax.f32 %v1682, %v1688
  %v1695 = vmax.f32 %v1683, %v1689
  %v1696 = vmax.f32 %v1684, %v1690
  %v1697 = vmax.f32 %v1685, %v1691
  %v1698 = vmax.f32 %v1686, %v1692
  %v1699 = vadd.f32 %v1693, %v44
  %v1700 = vadd.f32 %v1694, %v45
  %v1701 = vadd.f32 %v1695, %v46
  %v1702 = vadd.f32 %v1696, %v47
  %v1703 = vadd.f32 %v1697, %v48
  %v1704 = vadd.f32 %v1698, %v49
  %v1705 = vxor.u32 %v1699, 2147483648
  %v1706 = vxor.u32 %v1700, 2147483648
  %v1707 = vxor.u32 %v1701, 2147483648
  %v1708 = vxor.u32 %v1702, 2147483648
  %v1709 = vxor.u32 %v1703, 2147483648
  %v1710 = vxor.u32 %v1704, 2147483648
  %v1711 = vmul.f32 %v1705, 1.442695
  %v1712 = vpow.pop %v1711
  %v1713 = vmul.f32 %v1706, 1.442695
  %v1714 = vpow.pop %v1713
  %v1715 = vmul.f32 %v1707, 1.442695
  %v1716 = vpow.pop %v1715
  %v1717 = vmul.f32 %v1708, 1.442695
  %v1718 = vpow.pop %v1717
  %v1719 = vmul.f32 %v1709, 1.442695
  %v1720 = vpow.pop %v1719
  %v1721 = vmul.f32 %v1710, 1.442695
  %v1722 = vpow.pop %v1721
  %v1723 = vadd.f32 %v1712, 1.0
  %v1724 = vadd.f32 %v1714, 1.0
  %v1725 = vadd.f32 %v1716, 1.0
  %v1726 = vadd.f32 %v1718, 1.0
  %v1727 = vadd.f32 %v1720, 1.0
  %v1728 = vadd.f32 %v1722, 1.0
  %v1729 = vrcp.pop %v1723
  %v1730 = vmul.f32 1.0, %v1729
  %v1731 = vrcp.pop %v1724
  %v1732 = vmul.f32 1.0, %v1731
  %v1733 = vrcp.pop %v1725
  %v1734 = vmul.f32 1.0, %v1733
  %v1735 = vrcp.pop %v1726
  %v1736 = vmul.f32 1.0, %v1735
  %v1737 = vrcp.pop %v1727
  %v1738 = vmul.f32 1.0, %v1737
  %v1739 = vrcp.pop %v1728
  %v1740 = vmul.f32 1.0, %v1739
  %1741 = vst [vmem:[#allocation2 + $0xc0] sm:$0xff] %v1730
  %1742 = vst [vmem:[#allocation2 + $0xc8] sm:$0xff] %v1732
  %1743 = vst [vmem:[#allocation2 + $0xd0] sm:$0xff] %v1734
  %1744 = vst [vmem:[#allocation2 + $0xd8] sm:$0xff] %v1736
  %1745 = vst [vmem:[#allocation2 + $0xe0] sm:$0xff] %v1738
  %1746 = vst [vmem:[#allocation2 + $0xe8] sm:$0xff] %v1740
  %v1747 = vld [vmem:[%s0 + $0x140] sm:$0xff]
  %v1748 = vld [vmem:[%s0 + $0x148] sm:$0xff]
  %v1749 = vld [vmem:[%s0 + $0x150] sm:$0xff]
  %v1750 = vld [vmem:[%s0 + $0x158] sm:$0xff]
  %v1751 = vld [vmem:[%s0 + $0x160] sm:$0xff]
  %v1752 = vld [vmem:[%s0 + $0x168] sm:$0xff]
  %v1753 = vld [vmem:[%s0 + $0x170] sm:$0xff]
  %v1754 = vld [vmem:[%s0 + $0x178] sm:$0xff]
  %v1755 = vld [vmem:[%s0 + $0x180] sm:$0xff]
  %v1756 = vld [vmem:[%s0 + $0x188] sm:$0xff]
  %v1757 = vld [vmem:[%s0 + $0x190] sm:$0xff]
  %v1758 = vld [vmem:[%s0 + $0x198] sm:$0xff]
  %v1759 = vld [vmem:[%s0 + $0x1a0] sm:$0xff]
  %v1760 = vld [vmem:[%s0 + $0x1a8] sm:$0xff]
  %v1761 = vld [vmem:[%s0 + $0x1b0] sm:$0xff]
  %v1762 = vld [vmem:[%s0 + $0x1b8] sm:$0xff]
  %1763 = vmatprep.subr.mxu0 0.0
  %1764 = vmatpush1.msra.mxu0 %v1747
  %1765 = vmatprep.subr.mxu0 0.0
  %1766 = vmatpush1.msra.mxu0 %v1748
  %1767 = vmatprep.subr.mxu0 0.0
  %1768 = vmatpush1.msra.mxu0 %v1749
  %1769 = vmatprep.subr.mxu0 0.0
  %1770 = vmatpush1.msra.mxu0 %v1750
  %1771 = vmatprep.subr.mxu0 0.0
  %1772 = vmatpush1.msra.mxu0 %v1751
  %1773 = vmatprep.subr.mxu0 0.0
  %1774 = vmatpush1.msra.mxu0 %v1752
  %1775 = vmatprep.subr.mxu0 0.0
  %1776 = vmatpush1.msra.mxu0 %v1753
  %1777 = vmatprep.subr.mxu0 0.0
  %1778 = vmatpush1.msra.mxu0 %v1754
  %1779 = vmatprep.subr.mxu0 0.0
  %1780 = vmatpush1.msra.mxu0 %v1755
  %1781 = vmatprep.subr.mxu0 0.0
  %1782 = vmatpush1.msra.mxu0 %v1756
  %1783 = vmatprep.subr.mxu0 0.0
  %1784 = vmatpush1.msra.mxu0 %v1757
  %1785 = vmatprep.subr.mxu0 0.0
  %1786 = vmatpush1.msra.mxu0 %v1758
  %1787 = vmatprep.subr.mxu0 0.0
  %1788 = vmatpush1.msra.mxu0 0.0
  %1789 = vmatprep.subr.mxu0 0.0
  %1790 = vmatpush1.msra.mxu0 0.0
  %1791 = vmatprep.subr.mxu0 0.0
  %1792 = vmatpush1.msra.mxu0 0.0
  %1793 = vmatprep.subr.mxu0 0.0
  %1794 = vmatpush1.msra.mxu0 0.0
  %1795 = vmatprep.subr.mxu0 0.0
  %1796 = vmatpush1.msra.mxu0 0.0
  %1797 = vmatprep.subr.mxu0 0.0
  %1798 = vmatpush1.msra.mxu0 0.0
  %1799 = vmatprep.subr.mxu0 0.0
  %1800 = vmatpush1.msra.mxu0 0.0
  %1801 = vmatprep.subr.mxu0 0.0
  %1802 = vmatpush1.msra.mxu0 0.0
  %1803 = vmatprep.subr.mxu0 0.0
  %1804 = vmatpush1.msra.mxu0 0.0
  %1805 = vmatprep.subr.mxu0 0.0
  %1806 = vmatpush1.msra.mxu0 0.0
  %1807 = vmatprep.subr.mxu0 0.0
  %1808 = vmatpush1.msra.mxu0 0.0
  %1809 = vmatprep.subr.mxu0 0.0
  %1810 = vmatpush1.msra.mxu0 0.0
  %1811 = vmatprep.subr.mxu0 0.0
  %1812 = vmatpush1.msra.mxu0 0.0
  %1813 = vmatprep.subr.mxu0 0.0
  %1814 = vmatpush1.msra.mxu0 0.0
  %1815 = vmatprep.subr.mxu0 0.0
  %1816 = vmatpush1.msra.mxu0 0.0
  %1817 = vmatprep.subr.mxu0 0.0
  %1818 = vmatpush1.msra.mxu0 0.0
  %1819 = vmatprep.subr.mxu0 0.0
  %1820 = vmatpush1.msra.mxu0 0.0
  %1821 = vmatprep.subr.mxu0 0.0
  %1822 = vmatpush1.msra.mxu0 0.0
  %1823 = vmatprep.subr.mxu0 0.0
  %1824 = vmatpush1.msra.mxu0 0.0
  %1825 = vmatprep.subr.mxu0 0.0
  %1826 = vmatpush1.msra.mxu0 0.0
  %1827 = vmatprep.mubr.f32.mxu0 0.0
  %1828 = vmatmul.mubr.f32.gmra.mrb[0].mxu0 %v68
  %v1829 = vpop.f32.mrb[0].mxu0
  %v1830 = vadd.f32 0.0, %v1829
  %v1831 = vpop.f32.mrb[0].mxu0
  %1832 = vmatprep.mubr.f32.mxu0 0.0
  %1833 = vmatmul.mubr.f32.gmra.mrb[0].mxu0 %v71
  %v1834 = vpop.f32.mrb[0].mxu0
  %v1835 = vadd.f32 0.0, %v1834
  %v1836 = vpop.f32.mrb[0].mxu0
  %1837 = vmatprep.mubr.f32.mxu0 0.0
  %1838 = vmatmul.mubr.f32.gmra.mrb[0].mxu0 %v74
  %v1839 = vpop.f32.mrb[0].mxu0
  %v1840 = vadd.f32 0.0, %v1839
  %v1841 = vpop.f32.mrb[0].mxu0
  %1842 = vmatprep.mubr.f32.mxu0 0.0
  %1843 = vmatmul.mubr.f32.gmra.mrb[0].mxu0 %v77
  %v1844 = vpop.f32.mrb[0].mxu0
  %v1845 = vadd.f32 0.0, %v1844
  %v1846 = vpop.f32.mrb[0].mxu0
  %1847 = vmatprep.mubr.f32.mxu0 0.0
  %1848 = vmatmul.mubr.f32.gmra.mrb[0].mxu0 %v80
  %v1849 = vpop.f32.mrb[0].mxu0
  %v1850 = vadd.f32 0.0, %v1849
  %v1851 = vpop.f32.mrb[0].mxu0
  %1852 = vmatprep.mubr.f32.mxu0 0.0
  %1853 = vmatmul.mubr.f32.gmra.mrb[0].mxu0 %v83
  %v1854 = vpop.f32.mrb[0].mxu0
  %v1855 = vadd.f32 0.0, %v1854
  %v1856 = vpop.f32.mrb[0].mxu0
  %1857 = vmatprep.mubr.f32.mxu0 0.0
  %1858 = vmatmul.mubr.f32.gmra.mrb[0].mxu0 %v86
  %v1859 = vpop.f32.mrb[0].mxu0
  %v1860 = vadd.f32 0.0, %v1859
  %v1861 = vpop.f32.mrb[0].mxu0
  %1862 = vmatprep.mubr.f32.mxu0 0.0
  %1863 = vmatmul.mubr.f32.gmra.mrb[0].mxu0 %v89
  %v1864 = vpop.f32.mrb[0].mxu0
  %v1865 = vadd.f32 0.0, %v1864
  %v1866 = vpop.f32.mrb[0].mxu0
  %1867 = vmatprep.mubr.f32.mxu0 0.0
  %1868 = vmatmul.mubr.f32.gmra.mrb[0].mxu0 %v92
  %v1869 = vpop.f32.mrb[0].mxu0
  %v1870 = vadd.f32 0.0, %v1869
  %v1871 = vpop.f32.mrb[0].mxu0
  %1872 = vmatprep.mubr.f32.mxu0 0.0
  %1873 = vmatmul.mubr.f32.gmra.mrb[0].mxu0 %v95
  %v1874 = vpop.f32.mrb[0].mxu0
  %v1875 = vadd.f32 0.0, %v1874
  %v1876 = vpop.f32.mrb[0].mxu0
  %1877 = vmatprep.mubr.f32.mxu0 0.0
  %1878 = vmatmul.mubr.f32.gmra.mrb[0].mxu0 %v98
  %v1879 = vpop.f32.mrb[0].mxu0
  %v1880 = vadd.f32 0.0, %v1879
  %v1881 = vpop.f32.mrb[0].mxu0
  %1882 = vmatprep.mubr.f32.mxu0 0.0
  %1883 = vmatmul.mubr.f32.gmra.mrb[0].mxu0 %v101
  %v1884 = vpop.f32.mrb[0].mxu0
  %v1885 = vadd.f32 0.0, %v1884
  %v1886 = vpop.f32.mrb[0].mxu0
  %1887 = vdwg.mxu0
  %1888 = vmatprep.subr.mxu0 0.0
  %1889 = vmatpush1.msra.mxu0 %v1751
  %1890 = vmatprep.subr.mxu0 0.0
  %1891 = vmatpush1.msra.mxu0 %v1752
  %1892 = vmatprep.subr.mxu0 0.0
  %1893 = vmatpush1.msra.mxu0 %v1753
  %1894 = vmatprep.subr.mxu0 0.0
  %1895 = vmatpush1.msra.mxu0 %v1754
  %1896 = vmatprep.subr.mxu0 0.0
  %1897 = vmatpush1.msra.mxu0 %v1755
  %1898 = vmatprep.subr.mxu0 0.0
  %1899 = vmatpush1.msra.mxu0 %v1756
  %1900 = vmatprep.subr.mxu0 0.0
  %1901 = vmatpush1.msra.mxu0 %v1757
  %1902 = vmatprep.subr.mxu0 0.0
  %1903 = vmatpush1.msra.mxu0 %v1758
  %1904 = vmatprep.subr.mxu0 0.0
  %1905 = vmatpush1.msra.mxu0 %v1759
  %1906 = vmatprep.subr.mxu0 0.0
  %1907 = vmatpush1.msra.mxu0 %v1760
  %1908 = vmatprep.subr.mxu0 0.0
  %1909 = vmatpush1.msra.mxu0 %v1761
  %1910 = vmatprep.subr.mxu0 0.0
  %1911 = vmatpush1.msra.mxu0 %v1762
  %1912 = vmatprep.subr.mxu0 0.0
  %1913 = vmatpush1.msra.mxu0 0.0
  %1914 = vmatprep.subr.mxu0 0.0
  %1915 = vmatpush1.msra.mxu0 0.0
  %1916 = vmatprep.subr.mxu0 0.0
  %1917 = vmatpush1.msra.mxu0 0.0
  %1918 = vmatprep.subr.mxu0 0.0
  %1919 = vmatpush1.msra.mxu0 0.0
  %1920 = vmatprep.subr.mxu0 0.0
  %1921 = vmatpush1.msra.mxu0 0.0
  %1922 = vmatprep.subr.mxu0 0.0
  %1923 = vmatpush1.msra.mxu0 0.0
  %1924 = vmatprep.subr.mxu0 0.0
  %1925 = vmatpush1.msra.mxu0 0.0
  %1926 = vmatprep.subr.mxu0 0.0
  %1927 = vmatpush1.msra.mxu0 0.0
  %1928 = vmatprep.subr.mxu0 0.0
  %1929 = vmatpush1.msra.mxu0 0.0
  %1930 = vmatprep.subr.mxu0 0.0
  %1931 = vmatpush1.msra.mxu0 0.0
  %1932 = vmatprep.subr.mxu0 0.0
  %1933 = vmatpush1.msra.mxu0 0.0
  %1934 = vmatprep.subr.mxu0 0.0
  %1935 = vmatpush1.msra.mxu0 0.0
  %1936 = vmatprep.subr.mxu0 0.0
  %1937 = vmatpush1.msra.mxu0 0.0
  %1938 = vmatprep.subr.mxu0 0.0
  %1939 = vmatpush1.msra.mxu0 0.0
  %1940 = vmatprep.subr.mxu0 0.0
  %1941 = vmatpush1.msra.mxu0 0.0
  %1942 = vmatprep.subr.mxu0 0.0
  %1943 = vmatpush1.msra.mxu0 0.0
  %1944 = vmatprep.subr.mxu0 0.0
  %1945 = vmatpush1.msra.mxu0 0.0
  %1946 = vmatprep.subr.mxu0 0.0
  %1947 = vmatpush1.msra.mxu0 0.0
  %1948 = vmatprep.subr.mxu0 0.0
  %1949 = vmatpush1.msra.mxu0 0.0
  %1950 = vmatprep.subr.mxu0 0.0
  %1951 = vmatpush1.msra.mxu0 0.0
  %1952 = vmatprep.mubr.f32.mxu0 0.0
  %1953 = vmatmul.mubr.f32.gmra.mrb[0].mxu0 %v68
  %v1954 = vpop.f32.mrb[0].mxu0
  %v1955 = vadd.f32 0.0, %v1954
  %v1956 = vpop.f32.mrb[0].mxu0
  %1957 = vmatprep.mubr.f32.mxu0 0.0
  %1958 = vmatmul.mubr.f32.gmra.mrb[0].mxu0 %v71
  %v1959 = vpop.f32.mrb[0].mxu0
  %v1960 = vadd.f32 0.0, %v1959
  %v1961 = vpop.f32.mrb[0].mxu0
  %1962 = vmatprep.mubr.f32.mxu0 0.0
  %1963 = vmatmul.mubr.f32.gmra.mrb[0].mxu0 %v74
  %v1964 = vpop.f32.mrb[0].mxu0
  %v1965 = vadd.f32 0.0, %v1964
  %v1966 = vpop.f32.mrb[0].mxu0
  %1967 = vmatprep.mubr.f32.mxu0 0.0
  %1968 = vmatmul.mubr.f32.gmra.mrb[0].mxu0 %v77
  %v1969 = vpop.f32.mrb[0].mxu0
  %v1970 = vadd.f32 0.0, %v1969
  %v1971 = vpop.f32.mrb[0].mxu0
  %1972 = vmatprep.mubr.f32.mxu0 0.0
  %1973 = vmatmul.mubr.f32.gmra.mrb[0].mxu0 %v80
  %v1974 = vpop.f32.mrb[0].mxu0
  %v1975 = vadd.f32 0.0, %v1974
  %v1976 = vpop.f32.mrb[0].mxu0
  %1977 = vmatprep.mubr.f32.mxu0 0.0
  %1978 = vmatmul.mubr.f32.gmra.mrb[0].mxu0 %v83
  %v1979 = vpop.f32.mrb[0].mxu0
  %v1980 = vadd.f32 0.0, %v1979
  %v1981 = vpop.f32.mrb[0].mxu0
  %1982 = vmatprep.mubr.f32.mxu0 0.0
  %1983 = vmatmul.mubr.f32.gmra.mrb[0].mxu0 %v86
  %v1984 = vpop.f32.mrb[0].mxu0
  %v1985 = vadd.f32 0.0, %v1984
  %v1986 = vpop.f32.mrb[0].mxu0
  %1987 = vmatprep.mubr.f32.mxu0 0.0
  %1988 = vmatmul.mubr.f32.gmra.mrb[0].mxu0 %v89
  %v1989 = vpop.f32.mrb[0].mxu0
  %v1990 = vadd.f32 0.0, %v1989
  %v1991 = vpop.f32.mrb[0].mxu0
  %1992 = vmatprep.mubr.f32.mxu0 0.0
  %1993 = vmatmul.mubr.f32.gmra.mrb[0].mxu0 %v92
  %v1994 = vpop.f32.mrb[0].mxu0
  %v1995 = vadd.f32 0.0, %v1994
  %v1996 = vpop.f32.mrb[0].mxu0
  %1997 = vmatprep.mubr.f32.mxu0 0.0
  %1998 = vmatmul.mubr.f32.gmra.mrb[0].mxu0 %v95
  %v1999 = vpop.f32.mrb[0].mxu0
  %v2000 = vadd.f32 0.0, %v1999
  %v2001 = vpop.f32.mrb[0].mxu0
  %2002 = vmatprep.mubr.f32.mxu0 0.0
  %2003 = vmatmul.mubr.f32.gmra.mrb[0].mxu0 %v98
  %v2004 = vpop.f32.mrb[0].mxu0
  %v2005 = vadd.f32 0.0, %v2004
  %v2006 = vpop.f32.mrb[0].mxu0
  %2007 = vmatprep.mubr.f32.mxu0 0.0
  %2008 = vmatmul.mubr.f32.gmra.mrb[0].mxu0 %v101
  %v2009 = vpop.f32.mrb[0].mxu0
  %v2010 = vadd.f32 0.0, %v2009
  %v2011 = vpop.f32.mrb[0].mxu0
  %2012 = vdwg.mxu0
  %v2013 = vmax.f32 %v1830, %v1955
  %v2014 = vmax.f32 %v1835, %v1960
  %v2015 = vmax.f32 %v1840, %v1965
  %v2016 = vmax.f32 %v1845, %v1970
  %v2017 = vmax.f32 %v1850, %v1975
  %v2018 = vmax.f32 %v1855, %v1980
  %v2019 = vmax.f32 %v1860, %v1985
  %v2020 = vmax.f32 %v1865, %v1990
  %v2021 = vmax.f32 %v1870, %v1995
  %v2022 = vmax.f32 %v1875, %v2000
  %v2023 = vmax.f32 %v1880, %v2005
  %v2024 = vmax.f32 %v1885, %v2010
  %v2025 = vmax.f32 %v2013, %v2019
  %v2026 = vmax.f32 %v2014, %v2020
  %v2027 = vmax.f32 %v2015, %v2021
  %v2028 = vmax.f32 %v2016, %v2022
  %v2029 = vmax.f32 %v2017, %v2023
  %v2030 = vmax.f32 %v2018, %v2024
  %v2031 = vadd.f32 %v2025, %v44
  %v2032 = vadd.f32 %v2026, %v45
  %v2033 = vadd.f32 %v2027, %v46
  %v2034 = vadd.f32 %v2028, %v47
  %v2035 = vadd.f32 %v2029, %v48
  %v2036 = vadd.f32 %v2030, %v49
  %v2037 = vxor.u32 %v2031, 2147483648
  %v2038 = vxor.u32 %v2032, 2147483648
  %v2039 = vxor.u32 %v2033, 2147483648
  %v2040 = vxor.u32 %v2034, 2147483648
  %v2041 = vxor.u32 %v2035, 2147483648
  %v2042 = vxor.u32 %v2036, 2147483648
  %v2043 = vmul.f32 %v2037, 1.442695
  %v2044 = vpow.pop %v2043
  %v2045 = vmul.f32 %v2038, 1.442695
  %v2046 = vpow.pop %v2045
  %v2047 = vmul.f32 %v2039, 1.442695
  %v2048 = vpow.pop %v2047
  %v2049 = vmul.f32 %v2040, 1.442695
  %v2050 = vpow.pop %v2049
  %v2051 = vmul.f32 %v2041, 1.442695
  %v2052 = vpow.pop %v2051
  %v2053 = vmul.f32 %v2042, 1.442695
  %v2054 = vpow.pop %v2053
  %v2055 = vadd.f32 %v2044, 1.0
  %v2056 = vadd.f32 %v2046, 1.0
  %v2057 = vadd.f32 %v2048, 1.0
  %v2058 = vadd.f32 %v2050, 1.0
  %v2059 = vadd.f32 %v2052, 1.0
  %v2060 = vadd.f32 %v2054, 1.0
  %v2061 = vrcp.pop %v2055
  %v2062 = vmul.f32 1.0, %v2061
  %v2063 = vrcp.pop %v2056
  %v2064 = vmul.f32 1.0, %v2063
  %v2065 = vrcp.pop %v2057
  %v2066 = vmul.f32 1.0, %v2065
  %v2067 = vrcp.pop %v2058
  %v2068 = vmul.f32 1.0, %v2067
  %v2069 = vrcp.pop %v2059
  %v2070 = vmul.f32 1.0, %v2069
  %v2071 = vrcp.pop %v2060
  %v2072 = vmul.f32 1.0, %v2071
  %2073 = vst [vmem:[#allocation2 + $0xf0] sm:$0xff] %v2062
  %2074 = vst [vmem:[#allocation2 + $0xf8] sm:$0xff] %v2064
  %2075 = vst [vmem:[#allocation2 + $0x100] sm:$0xff] %v2066
  %2076 = vst [vmem:[#allocation2 + $0x108] sm:$0xff] %v2068
  %2077 = vst [vmem:[#allocation2 + $0x110] sm:$0xff] %v2070
  %2078 = vst [vmem:[#allocation2 + $0x118] sm:$0xff] %v2072
  %v2079 = vld [vmem:[%s0 + $0x180] sm:$0xff]
  %v2080 = vld [vmem:[%s0 + $0x188] sm:$0xff]
  %v2081 = vld [vmem:[%s0 + $0x190] sm:$0xff]
  %v2082 = vld [vmem:[%s0 + $0x198] sm:$0xff]
  %v2083 = vld [vmem:[%s0 + $0x1a0] sm:$0xff]
  %v2084 = vld [vmem:[%s0 + $0x1a8] sm:$0xff]
  %v2085 = vld [vmem:[%s0 + $0x1b0] sm:$0xff]
  %v2086 = vld [vmem:[%s0 + $0x1b8] sm:$0xff]
  %v2087 = vld [vmem:[%s0 + $0x1c0] sm:$0xff]
  %v2088 = vld [vmem:[%s0 + $0x1c8] sm:$0xff]
  %v2089 = vld [vmem:[%s0 + $0x1d0] sm:$0xff]
  %v2090 = vld [vmem:[%s0 + $0x1d8] sm:$0xff]
  %v2091 = vld [vmem:[%s0 + $0x1e0] sm:$0xff]
  %v2092 = vld [vmem:[%s0 + $0x1e8] sm:$0xff]
  %v2093 = vld [vmem:[%s0 + $0x1f0] sm:$0xff]
  %v2094 = vld [vmem:[%s0 + $0x1f8] sm:$0xff]
  %2095 = vmatprep.subr.mxu0 0.0
  %2096 = vmatpush1.msra.mxu0 %v2079
  %2097 = vmatprep.subr.mxu0 0.0
  %2098 = vmatpush1.msra.mxu0 %v2080
  %2099 = vmatprep.subr.mxu0 0.0
  %2100 = vmatpush1.msra.mxu0 %v2081
  %2101 = vmatprep.subr.mxu0 0.0
  %2102 = vmatpush1.msra.mxu0 %v2082
  %2103 = vmatprep.subr.mxu0 0.0
  %2104 = vmatpush1.msra.mxu0 %v2083
  %2105 = vmatprep.subr.mxu0 0.0
  %2106 = vmatpush1.msra.mxu0 %v2084
  %2107 = vmatprep.subr.mxu0 0.0
  %2108 = vmatpush1.msra.mxu0 %v2085
  %2109 = vmatprep.subr.mxu0 0.0
  %2110 = vmatpush1.msra.mxu0 %v2086
  %2111 = vmatprep.subr.mxu0 0.0
  %2112 = vmatpush1.msra.mxu0 %v2087
  %2113 = vmatprep.subr.mxu0 0.0
  %2114 = vmatpush1.msra.mxu0 %v2088
  %2115 = vmatprep.subr.mxu0 0.0
  %2116 = vmatpush1.msra.mxu0 %v2089
  %2117 = vmatprep.subr.mxu0 0.0
  %2118 = vmatpush1.msra.mxu0 %v2090
  %2119 = vmatprep.subr.mxu0 0.0
  %2120 = vmatpush1.msra.mxu0 0.0
  %2121 = vmatprep.subr.mxu0 0.0
  %2122 = vmatpush1.msra.mxu0 0.0
  %2123 = vmatprep.subr.mxu0 0.0
  %2124 = vmatpush1.msra.mxu0 0.0
  %2125 = vmatprep.subr.mxu0 0.0
  %2126 = vmatpush1.msra.mxu0 0.0
  %2127 = vmatprep.subr.mxu0 0.0
  %2128 = vmatpush1.msra.mxu0 0.0
  %2129 = vmatprep.subr.mxu0 0.0
  %2130 = vmatpush1.msra.mxu0 0.0
  %2131 = vmatprep.subr.mxu0 0.0
  %2132 = vmatpush1.msra.mxu0 0.0
  %2133 = vmatprep.subr.mxu0 0.0
  %2134 = vmatpush1.msra.mxu0 0.0
  %2135 = vmatprep.subr.mxu0 0.0
  %2136 = vmatpush1.msra.mxu0 0.0
  %2137 = vmatprep.subr.mxu0 0.0
  %2138 = vmatpush1.msra.mxu0 0.0
  %2139 = vmatprep.subr.mxu0 0.0
  %2140 = vmatpush1.msra.mxu0 0.0
  %2141 = vmatprep.subr.mxu0 0.0
  %2142 = vmatpush1.msra.mxu0 0.0
  %2143 = vmatprep.subr.mxu0 0.0
  %2144 = vmatpush1.msra.mxu0 0.0
  %2145 = vmatprep.subr.mxu0 0.0
  %2146 = vmatpush1.msra.mxu0 0.0
  %2147 = vmatprep.subr.mxu0 0.0
  %2148 = vmatpush1.msra.mxu0 0.0
  %2149 = vmatprep.subr.mxu0 0.0
  %2150 = vmatpush1.msra.mxu0 0.0
  %2151 = vmatprep.subr.mxu0 0.0
  %2152 = vmatpush1.msra.mxu0 0.0
  %2153 = vmatprep.subr.mxu0 0.0
  %2154 = vmatpush1.msra.mxu0 0.0
  %2155 = vmatprep.subr.mxu0 0.0
  %2156 = vmatpush1.msra.mxu0 0.0
  %2157 = vmatprep.subr.mxu0 0.0
  %2158 = vmatpush1.msra.mxu0 0.0
  %2159 = vmatprep.mubr.f32.mxu0 0.0
  %2160 = vmatmul.mubr.f32.gmra.mrb[0].mxu0 %v68
  %v2161 = vpop.f32.mrb[0].mxu0
  %v2162 = vadd.f32 0.0, %v2161
  %v2163 = vpop.f32.mrb[0].mxu0
  %2164 = vmatprep.mubr.f32.mxu0 0.0
  %2165 = vmatmul.mubr.f32.gmra.mrb[0].mxu0 %v71
  %v2166 = vpop.f32.mrb[0].mxu0
  %v2167 = vadd.f32 0.0, %v2166
  %v2168 = vpop.f32.mrb[0].mxu0
  %2169 = vmatprep.mubr.f32.mxu0 0.0
  %2170 = vmatmul.mubr.f32.gmra.mrb[0].mxu0 %v74
  %v2171 = vpop.f32.mrb[0].mxu0
  %v2172 = vadd.f32 0.0, %v2171
  %v2173 = vpop.f32.mrb[0].mxu0
  %2174 = vmatprep.mubr.f32.mxu0 0.0
  %2175 = vmatmul.mubr.f32.gmra.mrb[0].mxu0 %v77
  %v2176 = vpop.f32.mrb[0].mxu0
  %v2177 = vadd.f32 0.0, %v2176
  %v2178 = vpop.f32.mrb[0].mxu0
  %2179 = vmatprep.mubr.f32.mxu0 0.0
  %2180 = vmatmul.mubr.f32.gmra.mrb[0].mxu0 %v80
  %v2181 = vpop.f32.mrb[0].mxu0
  %v2182 = vadd.f32 0.0, %v2181
  %v2183 = vpop.f32.mrb[0].mxu0
  %2184 = vmatprep.mubr.f32.mxu0 0.0
  %2185 = vmatmul.mubr.f32.gmra.mrb[0].mxu0 %v83
  %v2186 = vpop.f32.mrb[0].mxu0
  %v2187 = vadd.f32 0.0, %v2186
  %v2188 = vpop.f32.mrb[0].mxu0
  %2189 = vmatprep.mubr.f32.mxu0 0.0
  %2190 = vmatmul.mubr.f32.gmra.mrb[0].mxu0 %v86
  %v2191 = vpop.f32.mrb[0].mxu0
  %v2192 = vadd.f32 0.0, %v2191
  %v2193 = vpop.f32.mrb[0].mxu0
  %2194 = vmatprep.mubr.f32.mxu0 0.0
  %2195 = vmatmul.mubr.f32.gmra.mrb[0].mxu0 %v89
  %v2196 = vpop.f32.mrb[0].mxu0
  %v2197 = vadd.f32 0.0, %v2196
  %v2198 = vpop.f32.mrb[0].mxu0
  %2199 = vmatprep.mubr.f32.mxu0 0.0
  %2200 = vmatmul.mubr.f32.gmra.mrb[0].mxu0 %v92
  %v2201 = vpop.f32.mrb[0].mxu0
  %v2202 = vadd.f32 0.0, %v2201
  %v2203 = vpop.f32.mrb[0].mxu0
  %2204 = vmatprep.mubr.f32.mxu0 0.0
  %2205 = vmatmul.mubr.f32.gmra.mrb[0].mxu0 %v95
  %v2206 = vpop.f32.mrb[0].mxu0
  %v2207 = vadd.f32 0.0, %v2206
  %v2208 = vpop.f32.mrb[0].mxu0
  %2209 = vmatprep.mubr.f32.mxu0 0.0
  %2210 = vmatmul.mubr.f32.gmra.mrb[0].mxu0 %v98
  %v2211 = vpop.f32.mrb[0].mxu0
  %v2212 = vadd.f32 0.0, %v2211
  %v2213 = vpop.f32.mrb[0].mxu0
  %2214 = vmatprep.mubr.f32.mxu0 0.0
  %2215 = vmatmul.mubr.f32.gmra.mrb[0].mxu0 %v101
  %v2216 = vpop.f32.mrb[0].mxu0
  %v2217 = vadd.f32 0.0, %v2216
  %v2218 = vpop.f32.mrb[0].mxu0
  %2219 = vdwg.mxu0
  %2220 = vmatprep.subr.mxu0 0.0
  %2221 = vmatpush1.msra.mxu0 %v2083
  %2222 = vmatprep.subr.mxu0 0.0
  %2223 = vmatpush1.msra.mxu0 %v2084
  %2224 = vmatprep.subr.mxu0 0.0
  %2225 = vmatpush1.msra.mxu0 %v2085
  %2226 = vmatprep.subr.mxu0 0.0
  %2227 = vmatpush1.msra.mxu0 %v2086
  %2228 = vmatprep.subr.mxu0 0.0
  %2229 = vmatpush1.msra.mxu0 %v2087
  %2230 = vmatprep.subr.mxu0 0.0
  %2231 = vmatpush1.msra.mxu0 %v2088
  %2232 = vmatprep.subr.mxu0 0.0
  %2233 = vmatpush1.msra.mxu0 %v2089
  %2234 = vmatprep.subr.mxu0 0.0
  %2235 = vmatpush1.msra.mxu0 %v2090
  %2236 = vmatprep.subr.mxu0 0.0
  %2237 = vmatpush1.msra.mxu0 %v2091
  %2238 = vmatprep.subr.mxu0 0.0
  %2239 = vmatpush1.msra.mxu0 %v2092
  %2240 = vmatprep.subr.mxu0 0.0
  %2241 = vmatpush1.msra.mxu0 %v2093
  %2242 = vmatprep.subr.mxu0 0.0
  %2243 = vmatpush1.msra.mxu0 %v2094
  %2244 = vmatprep.subr.mxu0 0.0
  %2245 = vmatpush1.msra.mxu0 0.0
  %2246 = vmatprep.subr.mxu0 0.0
  %2247 = vmatpush1.msra.mxu0 0.0
  %2248 = vmatprep.subr.mxu0 0.0
  %2249 = vmatpush1.msra.mxu0 0.0
  %2250 = vmatprep.subr.mxu0 0.0
  %2251 = vmatpush1.msra.mxu0 0.0
  %2252 = vmatprep.subr.mxu0 0.0
  %2253 = vmatpush1.msra.mxu0 0.0
  %2254 = vmatprep.subr.mxu0 0.0
  %2255 = vmatpush1.msra.mxu0 0.0
  %2256 = vmatprep.subr.mxu0 0.0
  %2257 = vmatpush1.msra.mxu0 0.0
  %2258 = vmatprep.subr.mxu0 0.0
  %2259 = vmatpush1.msra.mxu0 0.0
  %2260 = vmatprep.subr.mxu0 0.0
  %2261 = vmatpush1.msra.mxu0 0.0
  %2262 = vmatprep.subr.mxu0 0.0
  %2263 = vmatpush1.msra.mxu0 0.0
  %2264 = vmatprep.subr.mxu0 0.0
  %2265 = vmatpush1.msra.mxu0 0.0
  %2266 = vmatprep.subr.mxu0 0.0
  %2267 = vmatpush1.msra.mxu0 0.0
  %2268 = vmatprep.subr.mxu0 0.0
  %2269 = vmatpush1.msra.mxu0 0.0
  %2270 = vmatprep.subr.mxu0 0.0
  %2271 = vmatpush1.msra.mxu0 0.0
  %2272 = vmatprep.subr.mxu0 0.0
  %2273 = vmatpush1.msra.mxu0 0.0
  %2274 = vmatprep.subr.mxu0 0.0
  %2275 = vmatpush1.msra.mxu0 0.0
  %2276 = vmatprep.subr.mxu0 0.0
  %2277 = vmatpush1.msra.mxu0 0.0
  %2278 = vmatprep.subr.mxu0 0.0
  %2279 = vmatpush1.msra.mxu0 0.0
  %2280 = vmatprep.subr.mxu0 0.0
  %2281 = vmatpush1.msra.mxu0 0.0
  %2282 = vmatprep.subr.mxu0 0.0
  %2283 = vmatpush1.msra.mxu0 0.0
  %2284 = vmatprep.mubr.f32.mxu0 0.0
  %2285 = vmatmul.mubr.f32.gmra.mrb[0].mxu0 %v68
  %v2286 = vpop.f32.mrb[0].mxu0
  %v2287 = vadd.f32 0.0, %v2286
  %v2288 = vpop.f32.mrb[0].mxu0
  %2289 = vmatprep.mubr.f32.mxu0 0.0
  %2290 = vmatmul.mubr.f32.gmra.mrb[0].mxu0 %v71
  %v2291 = vpop.f32.mrb[0].mxu0
  %v2292 = vadd.f32 0.0, %v2291
  %v2293 = vpop.f32.mrb[0].mxu0
  %2294 = vmatprep.mubr.f32.mxu0 0.0
  %2295 = vmatmul.mubr.f32.gmra.mrb[0].mxu0 %v74
  %v2296 = vpop.f32.mrb[0].mxu0
  %v2297 = vadd.f32 0.0, %v2296
  %v2298 = vpop.f32.mrb[0].mxu0
  %2299 = vmatprep.mubr.f32.mxu0 0.0
  %2300 = vmatmul.mubr.f32.gmra.mrb[0].mxu0 %v77
  %v2301 = vpop.f32.mrb[0].mxu0
  %v2302 = vadd.f32 0.0, %v2301
  %v2303 = vpop.f32.mrb[0].mxu0
  %2304 = vmatprep.mubr.f32.mxu0 0.0
  %2305 = vmatmul.mubr.f32.gmra.mrb[0].mxu0 %v80
  %v2306 = vpop.f32.mrb[0].mxu0
  %v2307 = vadd.f32 0.0, %v2306
  %v2308 = vpop.f32.mrb[0].mxu0
  %2309 = vmatprep.mubr.f32.mxu0 0.0
  %2310 = vmatmul.mubr.f32.gmra.mrb[0].mxu0 %v83
  %v2311 = vpop.f32.mrb[0].mxu0
  %v2312 = vadd.f32 0.0, %v2311
  %v2313 = vpop.f32.mrb[0].mxu0
  %2314 = vmatprep.mubr.f32.mxu0 0.0
  %2315 = vmatmul.mubr.f32.gmra.mrb[0].mxu0 %v86
  %v2316 = vpop.f32.mrb[0].mxu0
  %v2317 = vadd.f32 0.0, %v2316
  %v2318 = vpop.f32.mrb[0].mxu0
  %2319 = vmatprep.mubr.f32.mxu0 0.0
  %2320 = vmatmul.mubr.f32.gmra.mrb[0].mxu0 %v89
  %v2321 = vpop.f32.mrb[0].mxu0
  %v2322 = vadd.f32 0.0, %v2321
  %v2323 = vpop.f32.mrb[0].mxu0
  %2324 = vmatprep.mubr.f32.mxu0 0.0
  %2325 = vmatmul.mubr.f32.gmra.mrb[0].mxu0 %v92
  %v2326 = vpop.f32.mrb[0].mxu0
  %v2327 = vadd.f32 0.0, %v2326
  %v2328 = vpop.f32.mrb[0].mxu0
  %2329 = vmatprep.mubr.f32.mxu0 0.0
  %2330 = vmatmul.mubr.f32.gmra.mrb[0].mxu0 %v95
  %v2331 = vpop.f32.mrb[0].mxu0
  %v2332 = vadd.f32 0.0, %v2331
  %v2333 = vpop.f32.mrb[0].mxu0
  %2334 = vmatprep.mubr.f32.mxu0 0.0
  %2335 = vmatmul.mubr.f32.gmra.mrb[0].mxu0 %v98
  %v2336 = vpop.f32.mrb[0].mxu0
  %v2337 = vadd.f32 0.0, %v2336
  %v2338 = vpop.f32.mrb[0].mxu0
  %2339 = vmatprep.mubr.f32.mxu0 0.0
  %2340 = vmatmul.mubr.f32.gmra.mrb[0].mxu0 %v101
  %v2341 = vpop.f32.mrb[0].mxu0
  %v2342 = vadd.f32 0.0, %v2341
  %v2343 = vpop.f32.mrb[0].mxu0
  %2344 = vdwg.mxu0
  %v2345 = vmax.f32 %v2162, %v2287
  %v2346 = vmax.f32 %v2167, %v2292
  %v2347 = vmax.f32 %v2172, %v2297
  %v2348 = vmax.f32 %v2177, %v2302
  %v2349 = vmax.f32 %v2182, %v2307
  %v2350 = vmax.f32 %v2187, %v2312
  %v2351 = vmax.f32 %v2192, %v2317
  %v2352 = vmax.f32 %v2197, %v2322
  %v2353 = vmax.f32 %v2202, %v2327
  %v2354 = vmax.f32 %v2207, %v2332
  %v2355 = vmax.f32 %v2212, %v2337
  %v2356 = vmax.f32 %v2217, %v2342
  %v2357 = vmax.f32 %v2345, %v2351
  %v2358 = vmax.f32 %v2346, %v2352
  %v2359 = vmax.f32 %v2347, %v2353
  %v2360 = vmax.f32 %v2348, %v2354
  %v2361 = vmax.f32 %v2349, %v2355
  %v2362 = vmax.f32 %v2350, %v2356
  %v2363 = vadd.f32 %v2357, %v44
  %v2364 = vadd.f32 %v2358, %v45
  %v2365 = vadd.f32 %v2359, %v46
  %v2366 = vadd.f32 %v2360, %v47
  %v2367 = vadd.f32 %v2361, %v48
  %v2368 = vadd.f32 %v2362, %v49
  %v2369 = vxor.u32 %v2363, 2147483648
  %v2370 = vxor.u32 %v2364, 2147483648
  %v2371 = vxor.u32 %v2365, 2147483648
  %v2372 = vxor.u32 %v2366, 2147483648
  %v2373 = vxor.u32 %v2367, 2147483648
  %v2374 = vxor.u32 %v2368, 2147483648
  %v2375 = vmul.f32 %v2369, 1.442695
  %v2376 = vpow.pop %v2375
  %v2377 = vmul.f32 %v2370, 1.442695
  %v2378 = vpow.pop %v2377
  %v2379 = vmul.f32 %v2371, 1.442695
  %v2380 = vpow.pop %v2379
  %v2381 = vmul.f32 %v2372, 1.442695
  %v2382 = vpow.pop %v2381
  %v2383 = vmul.f32 %v2373, 1.442695
  %v2384 = vpow.pop %v2383
  %v2385 = vmul.f32 %v2374, 1.442695
  %v2386 = vpow.pop %v2385
  %v2387 = vadd.f32 %v2376, 1.0
  %v2388 = vadd.f32 %v2378, 1.0
  %v2389 = vadd.f32 %v2380, 1.0
  %v2390 = vadd.f32 %v2382, 1.0
  %v2391 = vadd.f32 %v2384, 1.0
  %v2392 = vadd.f32 %v2386, 1.0
  %v2393 = vrcp.pop %v2387
  %v2394 = vmul.f32 1.0, %v2393
  %v2395 = vrcp.pop %v2388
  %v2396 = vmul.f32 1.0, %v2395
  %v2397 = vrcp.pop %v2389
  %v2398 = vmul.f32 1.0, %v2397
  %v2399 = vrcp.pop %v2390
  %v2400 = vmul.f32 1.0, %v2399
  %v2401 = vrcp.pop %v2391
  %v2402 = vmul.f32 1.0, %v2401
  %v2403 = vrcp.pop %v2392
  %v2404 = vmul.f32 1.0, %v2403
  %2405 = vst [vmem:[#allocation2 + $0x120] sm:$0xff] %v2394
  %2406 = vst [vmem:[#allocation2 + $0x128] sm:$0xff] %v2396
  %2407 = vst [vmem:[#allocation2 + $0x130] sm:$0xff] %v2398
  %2408 = vst [vmem:[#allocation2 + $0x138] sm:$0xff] %v2400
  %2409 = vst [vmem:[#allocation2 + $0x140] sm:$0xff] %v2402
  %2410 = vst [vmem:[#allocation2 + $0x148] sm:$0xff] %v2404
  %v2411 = vld [vmem:[%s0 + $0x1c0] sm:$0xff]
  %v2412 = vld [vmem:[%s0 + $0x1c8] sm:$0xff]
  %v2413 = vld [vmem:[%s0 + $0x1d0] sm:$0xff]
  %v2414 = vld [vmem:[%s0 + $0x1d8] sm:$0xff]
  %v2415 = vld [vmem:[%s0 + $0x1e0] sm:$0xff]
  %v2416 = vld [vmem:[%s0 + $0x1e8] sm:$0xff]
  %v2417 = vld [vmem:[%s0 + $0x1f0] sm:$0xff]
  %v2418 = vld [vmem:[%s0 + $0x1f8] sm:$0xff]
  %v2419 = vld [vmem:[%s0 + $0x200] sm:$0xff]
  %v2420 = vld [vmem:[%s0 + $0x208] sm:$0xff]
  %v2421 = vld [vmem:[%s0 + $0x210] sm:$0xff]
  %v2422 = vld [vmem:[%s0 + $0x218] sm:$0xff]
  %v2423 = vld [vmem:[%s0 + $0x220] sm:$0xff]
  %v2424 = vld [vmem:[%s0 + $0x228] sm:$0xff]
  %v2425 = vld [vmem:[%s0 + $0x230] sm:$0xff]
  %v2426 = vld [vmem:[%s0 + $0x238] sm:$0xff]
  %2427 = vmatprep.subr.mxu0 0.0
  %2428 = vmatpush1.msra.mxu0 %v2411
  %2429 = vmatprep.subr.mxu0 0.0
  %2430 = vmatpush1.msra.mxu0 %v2412
  %2431 = vmatprep.subr.mxu0 0.0
  %2432 = vmatpush1.msra.mxu0 %v2413
  %2433 = vmatprep.subr.mxu0 0.0
  %2434 = vmatpush1.msra.mxu0 %v2414
  %2435 = vmatprep.subr.mxu0 0.0
  %2436 = vmatpush1.msra.mxu0 %v2415
  %2437 = vmatprep.subr.mxu0 0.0
  %2438 = vmatpush1.msra.mxu0 %v2416
  %2439 = vmatprep.subr.mxu0 0.0
  %2440 = vmatpush1.msra.mxu0 %v2417
  %2441 = vmatprep.subr.mxu0 0.0
  %2442 = vmatpush1.msra.mxu0 %v2418
  %2443 = vmatprep.subr.mxu0 0.0
  %2444 = vmatpush1.msra.mxu0 %v2419
  %2445 = vmatprep.subr.mxu0 0.0
  %2446 = vmatpush1.msra.mxu0 %v2420
  %2447 = vmatprep.subr.mxu0 0.0
  %2448 = vmatpush1.msra.mxu0 %v2421
  %2449 = vmatprep.subr.mxu0 0.0
  %2450 = vmatpush1.msra.mxu0 %v2422
  %2451 = vmatprep.subr.mxu0 0.0
  %2452 = vmatpush1.msra.mxu0 0.0
  %2453 = vmatprep.subr.mxu0 0.0
  %2454 = vmatpush1.msra.mxu0 0.0
  %2455 = vmatprep.subr.mxu0 0.0
  %2456 = vmatpush1.msra.mxu0 0.0
  %2457 = vmatprep.subr.mxu0 0.0
  %2458 = vmatpush1.msra.mxu0 0.0
  %2459 = vmatprep.subr.mxu0 0.0
  %2460 = vmatpush1.msra.mxu0 0.0
  %2461 = vmatprep.subr.mxu0 0.0
  %2462 = vmatpush1.msra.mxu0 0.0
  %2463 = vmatprep.subr.mxu0 0.0
  %2464 = vmatpush1.msra.mxu0 0.0
  %2465 = vmatprep.subr.mxu0 0.0
  %2466 = vmatpush1.msra.mxu0 0.0
  %2467 = vmatprep.subr.mxu0 0.0
  %2468 = vmatpush1.msra.mxu0 0.0
  %2469 = vmatprep.subr.mxu0 0.0
  %2470 = vmatpush1.msra.mxu0 0.0
  %2471 = vmatprep.subr.mxu0 0.0
  %2472 = vmatpush1.msra.mxu0 0.0
  %2473 = vmatprep.subr.mxu0 0.0
  %2474 = vmatpush1.msra.mxu0 0.0
  %2475 = vmatprep.subr.mxu0 0.0
  %2476 = vmatpush1.msra.mxu0 0.0
  %2477 = vmatprep.subr.mxu0 0.0
  %2478 = vmatpush1.msra.mxu0 0.0
  %2479 = vmatprep.subr.mxu0 0.0
  %2480 = vmatpush1.msra.mxu0 0.0
  %2481 = vmatprep.subr.mxu0 0.0
  %2482 = vmatpush1.msra.mxu0 0.0
  %2483 = vmatprep.subr.mxu0 0.0
  %2484 = vmatpush1.msra.mxu0 0.0
  %2485 = vmatprep.subr.mxu0 0.0
  %2486 = vmatpush1.msra.mxu0 0.0
  %2487 = vmatprep.subr.mxu0 0.0
  %2488 = vmatpush1.msra.mxu0 0.0
  %2489 = vmatprep.subr.mxu0 0.0
  %2490 = vmatpush1.msra.mxu0 0.0
  %2491 = vmatprep.mubr.f32.mxu0 0.0
  %2492 = vmatmul.mubr.f32.gmra.mrb[0].mxu0 %v68
  %v2493 = vpop.f32.mrb[0].mxu0
  %v2494 = vadd.f32 0.0, %v2493
  %v2495 = vpop.f32.mrb[0].mxu0
  %2496 = vmatprep.mubr.f32.mxu0 0.0
  %2497 = vmatmul.mubr.f32.gmra.mrb[0].mxu0 %v71
  %v2498 = vpop.f32.mrb[0].mxu0
  %v2499 = vadd.f32 0.0, %v2498
  %v2500 = vpop.f32.mrb[0].mxu0
  %2501 = vmatprep.mubr.f32.mxu0 0.0
  %2502 = vmatmul.mubr.f32.gmra.mrb[0].mxu0 %v74
  %v2503 = vpop.f32.mrb[0].mxu0
  %v2504 = vadd.f32 0.0, %v2503
  %v2505 = vpop.f32.mrb[0].mxu0
  %2506 = vmatprep.mubr.f32.mxu0 0.0
  %2507 = vmatmul.mubr.f32.gmra.mrb[0].mxu0 %v77
  %v2508 = vpop.f32.mrb[0].mxu0
  %v2509 = vadd.f32 0.0, %v2508
  %v2510 = vpop.f32.mrb[0].mxu0
  %2511 = vmatprep.mubr.f32.mxu0 0.0
  %2512 = vmatmul.mubr.f32.gmra.mrb[0].mxu0 %v80
  %v2513 = vpop.f32.mrb[0].mxu0
  %v2514 = vadd.f32 0.0, %v2513
  %v2515 = vpop.f32.mrb[0].mxu0
  %2516 = vmatprep.mubr.f32.mxu0 0.0
  %2517 = vmatmul.mubr.f32.gmra.mrb[0].mxu0 %v83
  %v2518 = vpop.f32.mrb[0].mxu0
  %v2519 = vadd.f32 0.0, %v2518
  %v2520 = vpop.f32.mrb[0].mxu0
  %2521 = vmatprep.mubr.f32.mxu0 0.0
  %2522 = vmatmul.mubr.f32.gmra.mrb[0].mxu0 %v86
  %v2523 = vpop.f32.mrb[0].mxu0
  %v2524 = vadd.f32 0.0, %v2523
  %v2525 = vpop.f32.mrb[0].mxu0
  %2526 = vmatprep.mubr.f32.mxu0 0.0
  %2527 = vmatmul.mubr.f32.gmra.mrb[0].mxu0 %v89
  %v2528 = vpop.f32.mrb[0].mxu0
  %v2529 = vadd.f32 0.0, %v2528
  %v2530 = vpop.f32.mrb[0].mxu0
  %2531 = vmatprep.mubr.f32.mxu0 0.0
  %2532 = vmatmul.mubr.f32.gmra.mrb[0].mxu0 %v92
  %v2533 = vpop.f32.mrb[0].mxu0
  %v2534 = vadd.f32 0.0, %v2533
  %v2535 = vpop.f32.mrb[0].mxu0
  %2536 = vmatprep.mubr.f32.mxu0 0.0
  %2537 = vmatmul.mubr.f32.gmra.mrb[0].mxu0 %v95
  %v2538 = vpop.f32.mrb[0].mxu0
  %v2539 = vadd.f32 0.0, %v2538
  %v2540 = vpop.f32.mrb[0].mxu0
  %2541 = vmatprep.mubr.f32.mxu0 0.0
  %2542 = vmatmul.mubr.f32.gmra.mrb[0].mxu0 %v98
  %v2543 = vpop.f32.mrb[0].mxu0
  %v2544 = vadd.f32 0.0, %v2543
  %v2545 = vpop.f32.mrb[0].mxu0
  %2546 = vmatprep.mubr.f32.mxu0 0.0
  %2547 = vmatmul.mubr.f32.gmra.mrb[0].mxu0 %v101
  %v2548 = vpop.f32.mrb[0].mxu0
  %v2549 = vadd.f32 0.0, %v2548
  %v2550 = vpop.f32.mrb[0].mxu0
  %2551 = vdwg.mxu0
  %2552 = vmatprep.subr.mxu0 0.0
  %2553 = vmatpush1.msra.mxu0 %v2415
  %2554 = vmatprep.subr.mxu0 0.0
  %2555 = vmatpush1.msra.mxu0 %v2416
  %2556 = vmatprep.subr.mxu0 0.0
  %2557 = vmatpush1.msra.mxu0 %v2417
  %2558 = vmatprep.subr.mxu0 0.0
  %2559 = vmatpush1.msra.mxu0 %v2418
  %2560 = vmatprep.subr.mxu0 0.0
  %2561 = vmatpush1.msra.mxu0 %v2419
  %2562 = vmatprep.subr.mxu0 0.0
  %2563 = vmatpush1.msra.mxu0 %v2420
  %2564 = vmatprep.subr.mxu0 0.0
  %2565 = vmatpush1.msra.mxu0 %v2421
  %2566 = vmatprep.subr.mxu0 0.0
  %2567 = vmatpush1.msra.mxu0 %v2422
  %2568 = vmatprep.subr.mxu0 0.0
  %2569 = vmatpush1.msra.mxu0 %v2423
  %2570 = vmatprep.subr.mxu0 0.0
  %2571 = vmatpush1.msra.mxu0 %v2424
  %2572 = vmatprep.subr.mxu0 0.0
  %2573 = vmatpush1.msra.mxu0 %v2425
  %2574 = vmatprep.subr.mxu0 0.0
  %2575 = vmatpush1.msra.mxu0 %v2426
  %2576 = vmatprep.subr.mxu0 0.0
  %2577 = vmatpush1.msra.mxu0 0.0
  %2578 = vmatprep.subr.mxu0 0.0
  %2579 = vmatpush1.msra.mxu0 0.0
  %2580 = vmatprep.subr.mxu0 0.0
  %2581 = vmatpush1.msra.mxu0 0.0
  %2582 = vmatprep.subr.mxu0 0.0
  %2583 = vmatpush1.msra.mxu0 0.0
  %2584 = vmatprep.subr.mxu0 0.0
  %2585 = vmatpush1.msra.mxu0 0.0
  %2586 = vmatprep.subr.mxu0 0.0
  %2587 = vmatpush1.msra.mxu0 0.0
  %2588 = vmatprep.subr.mxu0 0.0
  %2589 = vmatpush1.msra.mxu0 0.0
  %2590 = vmatprep.subr.mxu0 0.0
  %2591 = vmatpush1.msra.mxu0 0.0
  %2592 = vmatprep.subr.mxu0 0.0
  %2593 = vmatpush1.msra.mxu0 0.0
  %2594 = vmatprep.subr.mxu0 0.0
  %2595 = vmatpush1.msra.mxu0 0.0
  %2596 = vmatprep.subr.mxu0 0.0
  %2597 = vmatpush1.msra.mxu0 0.0
  %2598 = vmatprep.subr.mxu0 0.0
  %2599 = vmatpush1.msra.mxu0 0.0
  %2600 = vmatprep.subr.mxu0 0.0
  %2601 = vmatpush1.msra.mxu0 0.0
  %2602 = vmatprep.subr.mxu0 0.0
  %2603 = vmatpush1.msra.mxu0 0.0
  %2604 = vmatprep.subr.mxu0 0.0
  %2605 = vmatpush1.msra.mxu0 0.0
  %2606 = vmatprep.subr.mxu0 0.0
  %2607 = vmatpush1.msra.mxu0 0.0
  %2608 = vmatprep.subr.mxu0 0.0
  %2609 = vmatpush1.msra.mxu0 0.0
  %2610 = vmatprep.subr.mxu0 0.0
  %2611 = vmatpush1.msra.mxu0 0.0
  %2612 = vmatprep.subr.mxu0 0.0
  %2613 = vmatpush1.msra.mxu0 0.0
  %2614 = vmatprep.subr.mxu0 0.0
  %2615 = vmatpush1.msra.mxu0 0.0
  %2616 = vmatprep.mubr.f32.mxu0 0.0
  %2617 = vmatmul.mubr.f32.gmra.mrb[0].mxu0 %v68
  %v2618 = vpop.f32.mrb[0].mxu0
  %v2619 = vadd.f32 0.0, %v2618
  %v2620 = vpop.f32.mrb[0].mxu0
  %2621 = vmatprep.mubr.f32.mxu0 0.0
  %2622 = vmatmul.mubr.f32.gmra.mrb[0].mxu0 %v71
  %v2623 = vpop.f32.mrb[0].mxu0
  %v2624 = vadd.f32 0.0, %v2623
  %v2625 = vpop.f32.mrb[0].mxu0
  %2626 = vmatprep.mubr.f32.mxu0 0.0
  %2627 = vmatmul.mubr.f32.gmra.mrb[0].mxu0 %v74
  %v2628 = vpop.f32.mrb[0].mxu0
  %v2629 = vadd.f32 0.0, %v2628
  %v2630 = vpop.f32.mrb[0].mxu0
  %2631 = vmatprep.mubr.f32.mxu0 0.0
  %2632 = vmatmul.mubr.f32.gmra.mrb[0].mxu0 %v77
  %v2633 = vpop.f32.mrb[0].mxu0
  %v2634 = vadd.f32 0.0, %v2633
  %v2635 = vpop.f32.mrb[0].mxu0
  %2636 = vmatprep.mubr.f32.mxu0 0.0
  %2637 = vmatmul.mubr.f32.gmra.mrb[0].mxu0 %v80
  %v2638 = vpop.f32.mrb[0].mxu0
  %v2639 = vadd.f32 0.0, %v2638
  %v2640 = vpop.f32.mrb[0].mxu0
  %2641 = vmatprep.mubr.f32.mxu0 0.0
  %2642 = vmatmul.mubr.f32.gmra.mrb[0].mxu0 %v83
  %v2643 = vpop.f32.mrb[0].mxu0
  %v2644 = vadd.f32 0.0, %v2643
  %v2645 = vpop.f32.mrb[0].mxu0
  %2646 = vmatprep.mubr.f32.mxu0 0.0
  %2647 = vmatmul.mubr.f32.gmra.mrb[0].mxu0 %v86
  %v2648 = vpop.f32.mrb[0].mxu0
  %v2649 = vadd.f32 0.0, %v2648
  %v2650 = vpop.f32.mrb[0].mxu0
  %2651 = vmatprep.mubr.f32.mxu0 0.0
  %2652 = vmatmul.mubr.f32.gmra.mrb[0].mxu0 %v89
  %v2653 = vpop.f32.mrb[0].mxu0
  %v2654 = vadd.f32 0.0, %v2653
  %v2655 = vpop.f32.mrb[0].mxu0
  %2656 = vmatprep.mubr.f32.mxu0 0.0
  %2657 = vmatmul.mubr.f32.gmra.mrb[0].mxu0 %v92
  %v2658 = vpop.f32.mrb[0].mxu0
  %v2659 = vadd.f32 0.0, %v2658
  %v2660 = vpop.f32.mrb[0].mxu0
  %2661 = vmatprep.mubr.f32.mxu0 0.0
  %2662 = vmatmul.mubr.f32.gmra.mrb[0].mxu0 %v95
  %v2663 = vpop.f32.mrb[0].mxu0
  %v2664 = vadd.f32 0.0, %v2663
  %v2665 = vpop.f32.mrb[0].mxu0
  %2666 = vmatprep.mubr.f32.mxu0 0.0
  %2667 = vmatmul.mubr.f32.gmra.mrb[0].mxu0 %v98
  %v2668 = vpop.f32.mrb[0].mxu0
  %v2669 = vadd.f32 0.0, %v2668
  %v2670 = vpop.f32.mrb[0].mxu0
  %2671 = vmatprep.mubr.f32.mxu0 0.0
  %2672 = vmatmul.mubr.f32.gmra.mrb[0].mxu0 %v101
  %v2673 = vpop.f32.mrb[0].mxu0
  %v2674 = vadd.f32 0.0, %v2673
  %v2675 = vpop.f32.mrb[0].mxu0
  %2676 = vdwg.mxu0
  %v2677 = vmax.f32 %v2494, %v2619
  %v2678 = vmax.f32 %v2499, %v2624
  %v2679 = vmax.f32 %v2504, %v2629
  %v2680 = vmax.f32 %v2509, %v2634
  %v2681 = vmax.f32 %v2514, %v2639
  %v2682 = vmax.f32 %v2519, %v2644
  %v2683 = vmax.f32 %v2524, %v2649
  %v2684 = vmax.f32 %v2529, %v2654
  %v2685 = vmax.f32 %v2534, %v2659
  %v2686 = vmax.f32 %v2539, %v2664
  %v2687 = vmax.f32 %v2544, %v2669
  %v2688 = vmax.f32 %v2549, %v2674
  %v2689 = vmax.f32 %v2677, %v2683
  %v2690 = vmax.f32 %v2678, %v2684
  %v2691 = vmax.f32 %v2679, %v2685
  %v2692 = vmax.f32 %v2680, %v2686
  %v2693 = vmax.f32 %v2681, %v2687
  %v2694 = vmax.f32 %v2682, %v2688
  %v2695 = vadd.f32 %v2689, %v44
  %v2696 = vadd.f32 %v2690, %v45
  %v2697 = vadd.f32 %v2691, %v46
  %v2698 = vadd.f32 %v2692, %v47
  %v2699 = vadd.f32 %v2693, %v48
  %v2700 = vadd.f32 %v2694, %v49
  %v2701 = vxor.u32 %v2695, 2147483648
  %v2702 = vxor.u32 %v2696, 2147483648
  %v2703 = vxor.u32 %v2697, 2147483648
  %v2704 = vxor.u32 %v2698, 2147483648
  %v2705 = vxor.u32 %v2699, 2147483648
  %v2706 = vxor.u32 %v2700, 2147483648
  %v2707 = vmul.f32 %v2701, 1.442695
  %v2708 = vpow.pop %v2707
  %v2709 = vmul.f32 %v2702, 1.442695
  %v2710 = vpow.pop %v2709
  %v2711 = vmul.f32 %v2703, 1.442695
  %v2712 = vpow.pop %v2711
  %v2713 = vmul.f32 %v2704, 1.442695
  %v2714 = vpow.pop %v2713
  %v2715 = vmul.f32 %v2705, 1.442695
  %v2716 = vpow.pop %v2715
  %v2717 = vmul.f32 %v2706, 1.442695
  %v2718 = vpow.pop %v2717
  %v2719 = vadd.f32 %v2708, 1.0
  %v2720 = vadd.f32 %v2710, 1.0
  %v2721 = vadd.f32 %v2712, 1.0
  %v2722 = vadd.f32 %v2714, 1.0
  %v2723 = vadd.f32 %v2716, 1.0
  %v2724 = vadd.f32 %v2718, 1.0
  %v2725 = vrcp.pop %v2719
  %v2726 = vmul.f32 1.0, %v2725
  %v2727 = vrcp.pop %v2720
  %v2728 = vmul.f32 1.0, %v2727
  %v2729 = vrcp.pop %v2721
  %v2730 = vmul.f32 1.0, %v2729
  %v2731 = vrcp.pop %v2722
  %v2732 = vmul.f32 1.0, %v2731
  %v2733 = vrcp.pop %v2723
  %v2734 = vmul.f32 1.0, %v2733
  %v2735 = vrcp.pop %v2724
  %v2736 = vmul.f32 1.0, %v2735
  %2737 = vst [vmem:[#allocation2 + $0x150] sm:$0xff] %v2726
  %2738 = vst [vmem:[#allocation2 + $0x158] sm:$0xff] %v2728
  %2739 = vst [vmem:[#allocation2 + $0x160] sm:$0xff] %v2730
  %2740 = vst [vmem:[#allocation2 + $0x168] sm:$0xff] %v2732
  %2741 = vst [vmem:[#allocation2 + $0x170] sm:$0xff] %v2734
  %2742 = vst [vmem:[#allocation2 + $0x178] sm:$0xff] %v2736
  %v2743 = vld [vmem:[%s0 + $0x200] sm:$0xff]
  %v2744 = vld [vmem:[%s0 + $0x208] sm:$0xff]
  %v2745 = vld [vmem:[%s0 + $0x210] sm:$0xff]
  %v2746 = vld [vmem:[%s0 + $0x218] sm:$0xff]
  %v2747 = vld [vmem:[%s0 + $0x220] sm:$0xff]
  %v2748 = vld [vmem:[%s0 + $0x228] sm:$0xff]
  %v2749 = vld [vmem:[%s0 + $0x230] sm:$0xff]
  %v2750 = vld [vmem:[%s0 + $0x238] sm:$0xff]
  %v2751 = vld [vmem:[%s0 + $0x240] sm:$0xff]
  %v2752 = vld [vmem:[%s0 + $0x248] sm:$0xff]
  %v2753 = vld [vmem:[%s0 + $0x250] sm:$0xff]
  %v2754 = vld [vmem:[%s0 + $0x258] sm:$0xff]
  %v2755 = vld [vmem:[%s0 + $0x260] sm:$0xff]
  %v2756 = vld [vmem:[%s0 + $0x268] sm:$0xff]
  %v2757 = vld [vmem:[%s0 + $0x270] sm:$0xff]
  %v2758 = vld [vmem:[%s0 + $0x278] sm:$0xff]
  %2759 = vmatprep.subr.mxu0 0.0
  %2760 = vmatpush1.msra.mxu0 %v2743
  %2761 = vmatprep.subr.mxu0 0.0
  %2762 = vmatpush1.msra.mxu0 %v2744
  %2763 = vmatprep.subr.mxu0 0.0
  %2764 = vmatpush1.msra.mxu0 %v2745
  %2765 = vmatprep.subr.mxu0 0.0
  %2766 = vmatpush1.msra.mxu0 %v2746
  %2767 = vmatprep.subr.mxu0 0.0
  %2768 = vmatpush1.msra.mxu0 %v2747
  %2769 = vmatprep.subr.mxu0 0.0
  %2770 = vmatpush1.msra.mxu0 %v2748
  %2771 = vmatprep.subr.mxu0 0.0
  %2772 = vmatpush1.msra.mxu0 %v2749
  %2773 = vmatprep.subr.mxu0 0.0
  %2774 = vmatpush1.msra.mxu0 %v2750
  %2775 = vmatprep.subr.mxu0 0.0
  %2776 = vmatpush1.msra.mxu0 %v2751
  %2777 = vmatprep.subr.mxu0 0.0
  %2778 = vmatpush1.msra.mxu0 %v2752
  %2779 = vmatprep.subr.mxu0 0.0
  %2780 = vmatpush1.msra.mxu0 %v2753
  %2781 = vmatprep.subr.mxu0 0.0
  %2782 = vmatpush1.msra.mxu0 %v2754
  %2783 = vmatprep.subr.mxu0 0.0
  %2784 = vmatpush1.msra.mxu0 0.0
  %2785 = vmatprep.subr.mxu0 0.0
  %2786 = vmatpush1.msra.mxu0 0.0
  %2787 = vmatprep.subr.mxu0 0.0
  %2788 = vmatpush1.msra.mxu0 0.0
  %2789 = vmatprep.subr.mxu0 0.0
  %2790 = vmatpush1.msra.mxu0 0.0
  %2791 = vmatprep.subr.mxu0 0.0
  %2792 = vmatpush1.msra.mxu0 0.0
  %2793 = vmatprep.subr.mxu0 0.0
  %2794 = vmatpush1.msra.mxu0 0.0
  %2795 = vmatprep.subr.mxu0 0.0
  %2796 = vmatpush1.msra.mxu0 0.0
  %2797 = vmatprep.subr.mxu0 0.0
  %2798 = vmatpush1.msra.mxu0 0.0
  %2799 = vmatprep.subr.mxu0 0.0
  %2800 = vmatpush1.msra.mxu0 0.0
  %2801 = vmatprep.subr.mxu0 0.0
  %2802 = vmatpush1.msra.mxu0 0.0
  %2803 = vmatprep.subr.mxu0 0.0
  %2804 = vmatpush1.msra.mxu0 0.0
  %2805 = vmatprep.subr.mxu0 0.0
  %2806 = vmatpush1.msra.mxu0 0.0
  %2807 = vmatprep.subr.mxu0 0.0
  %2808 = vmatpush1.msra.mxu0 0.0
  %2809 = vmatprep.subr.mxu0 0.0
  %2810 = vmatpush1.msra.mxu0 0.0
  %2811 = vmatprep.subr.mxu0 0.0
  %2812 = vmatpush1.msra.mxu0 0.0
  %2813 = vmatprep.subr.mxu0 0.0
  %2814 = vmatpush1.msra.mxu0 0.0
  %2815 = vmatprep.subr.mxu0 0.0
  %2816 = vmatpush1.msra.mxu0 0.0
  %2817 = vmatprep.subr.mxu0 0.0
  %2818 = vmatpush1.msra.mxu0 0.0
  %2819 = vmatprep.subr.mxu0 0.0
  %2820 = vmatpush1.msra.mxu0 0.0
  %2821 = vmatprep.subr.mxu0 0.0
  %2822 = vmatpush1.msra.mxu0 0.0
  %2823 = vmatprep.mubr.f32.mxu0 0.0
  %2824 = vmatmul.mubr.f32.gmra.mrb[0].mxu0 %v68
  %v2825 = vpop.f32.mrb[0].mxu0
  %v2826 = vadd.f32 0.0, %v2825
  %v2827 = vpop.f32.mrb[0].mxu0
  %2828 = vmatprep.mubr.f32.mxu0 0.0
  %2829 = vmatmul.mubr.f32.gmra.mrb[0].mxu0 %v71
  %v2830 = vpop.f32.mrb[0].mxu0
  %v2831 = vadd.f32 0.0, %v2830
  %v2832 = vpop.f32.mrb[0].mxu0
  %2833 = vmatprep.mubr.f32.mxu0 0.0
  %2834 = vmatmul.mubr.f32.gmra.mrb[0].mxu0 %v74
  %v2835 = vpop.f32.mrb[0].mxu0
  %v2836 = vadd.f32 0.0, %v2835
  %v2837 = vpop.f32.mrb[0].mxu0
  %2838 = vmatprep.mubr.f32.mxu0 0.0
  %2839 = vmatmul.mubr.f32.gmra.mrb[0].mxu0 %v77
  %v2840 = vpop.f32.mrb[0].mxu0
  %v2841 = vadd.f32 0.0, %v2840
  %v2842 = vpop.f32.mrb[0].mxu0
  %2843 = vmatprep.mubr.f32.mxu0 0.0
  %2844 = vmatmul.mubr.f32.gmra.mrb[0].mxu0 %v80
  %v2845 = vpop.f32.mrb[0].mxu0
  %v2846 = vadd.f32 0.0, %v2845
  %v2847 = vpop.f32.mrb[0].mxu0
  %2848 = vmatprep.mubr.f32.mxu0 0.0
  %2849 = vmatmul.mubr.f32.gmra.mrb[0].mxu0 %v83
  %v2850 = vpop.f32.mrb[0].mxu0
  %v2851 = vadd.f32 0.0, %v2850
  %v2852 = vpop.f32.mrb[0].mxu0
  %2853 = vmatprep.mubr.f32.mxu0 0.0
  %2854 = vmatmul.mubr.f32.gmra.mrb[0].mxu0 %v86
  %v2855 = vpop.f32.mrb[0].mxu0
  %v2856 = vadd.f32 0.0, %v2855
  %v2857 = vpop.f32.mrb[0].mxu0
  %2858 = vmatprep.mubr.f32.mxu0 0.0
  %2859 = vmatmul.mubr.f32.gmra.mrb[0].mxu0 %v89
  %v2860 = vpop.f32.mrb[0].mxu0
  %v2861 = vadd.f32 0.0, %v2860
  %v2862 = vpop.f32.mrb[0].mxu0
  %2863 = vmatprep.mubr.f32.mxu0 0.0
  %2864 = vmatmul.mubr.f32.gmra.mrb[0].mxu0 %v92
  %v2865 = vpop.f32.mrb[0].mxu0
  %v2866 = vadd.f32 0.0, %v2865
  %v2867 = vpop.f32.mrb[0].mxu0
  %2868 = vmatprep.mubr.f32.mxu0 0.0
  %2869 = vmatmul.mubr.f32.gmra.mrb[0].mxu0 %v95
  %v2870 = vpop.f32.mrb[0].mxu0
  %v2871 = vadd.f32 0.0, %v2870
  %v2872 = vpop.f32.mrb[0].mxu0
  %2873 = vmatprep.mubr.f32.mxu0 0.0
  %2874 = vmatmul.mubr.f32.gmra.mrb[0].mxu0 %v98
  %v2875 = vpop.f32.mrb[0].mxu0
  %v2876 = vadd.f32 0.0, %v2875
  %v2877 = vpop.f32.mrb[0].mxu0
  %2878 = vmatprep.mubr.f32.mxu0 0.0
  %2879 = vmatmul.mubr.f32.gmra.mrb[0].mxu0 %v101
  %v2880 = vpop.f32.mrb[0].mxu0
  %v2881 = vadd.f32 0.0, %v2880
  %v2882 = vpop.f32.mrb[0].mxu0
  %2883 = vdwg.mxu0
  %2884 = vmatprep.subr.mxu0 0.0
  %2885 = vmatpush1.msra.mxu0 %v2747
  %2886 = vmatprep.subr.mxu0 0.0
  %2887 = vmatpush1.msra.mxu0 %v2748
  %2888 = vmatprep.subr.mxu0 0.0
  %2889 = vmatpush1.msra.mxu0 %v2749
  %2890 = vmatprep.subr.mxu0 0.0
  %2891 = vmatpush1.msra.mxu0 %v2750
  %2892 = vmatprep.subr.mxu0 0.0
  %2893 = vmatpush1.msra.mxu0 %v2751
  %2894 = vmatprep.subr.mxu0 0.0
  %2895 = vmatpush1.msra.mxu0 %v2752
  %2896 = vmatprep.subr.mxu0 0.0
  %2897 = vmatpush1.msra.mxu0 %v2753
  %2898 = vmatprep.subr.mxu0 0.0
  %2899 = vmatpush1.msra.mxu0 %v2754
  %2900 = vmatprep.subr.mxu0 0.0
  %2901 = vmatpush1.msra.mxu0 %v2755
  %2902 = vmatprep.subr.mxu0 0.0
  %2903 = vmatpush1.msra.mxu0 %v2756
  %2904 = vmatprep.subr.mxu0 0.0
  %2905 = vmatpush1.msra.mxu0 %v2757
  %2906 = vmatprep.subr.mxu0 0.0
  %2907 = vmatpush1.msra.mxu0 %v2758
  %2908 = vmatprep.subr.mxu0 0.0
  %2909 = vmatpush1.msra.mxu0 0.0
  %2910 = vmatprep.subr.mxu0 0.0
  %2911 = vmatpush1.msra.mxu0 0.0
  %2912 = vmatprep.subr.mxu0 0.0
  %2913 = vmatpush1.msra.mxu0 0.0
  %2914 = vmatprep.subr.mxu0 0.0
  %2915 = vmatpush1.msra.mxu0 0.0
  %2916 = vmatprep.subr.mxu0 0.0
  %2917 = vmatpush1.msra.mxu0 0.0
  %2918 = vmatprep.subr.mxu0 0.0
  %2919 = vmatpush1.msra.mxu0 0.0
  %2920 = vmatprep.subr.mxu0 0.0
  %2921 = vmatpush1.msra.mxu0 0.0
  %2922 = vmatprep.subr.mxu0 0.0
  %2923 = vmatpush1.msra.mxu0 0.0
  %2924 = vmatprep.subr.mxu0 0.0
  %2925 = vmatpush1.msra.mxu0 0.0
  %2926 = vmatprep.subr.mxu0 0.0
  %2927 = vmatpush1.msra.mxu0 0.0
  %2928 = vmatprep.subr.mxu0 0.0
  %2929 = vmatpush1.msra.mxu0 0.0
  %2930 = vmatprep.subr.mxu0 0.0
  %2931 = vmatpush1.msra.mxu0 0.0
  %2932 = vmatprep.subr.mxu0 0.0
  %2933 = vmatpush1.msra.mxu0 0.0
  %2934 = vmatprep.subr.mxu0 0.0
  %2935 = vmatpush1.msra.mxu0 0.0
  %2936 = vmatprep.subr.mxu0 0.0
  %2937 = vmatpush1.msra.mxu0 0.0
  %2938 = vmatprep.subr.mxu0 0.0
  %2939 = vmatpush1.msra.mxu0 0.0
  %2940 = vmatprep.subr.mxu0 0.0
  %2941 = vmatpush1.msra.mxu0 0.0
  %2942 = vmatprep.subr.mxu0 0.0
  %2943 = vmatpush1.msra.mxu0 0.0
  %2944 = vmatprep.subr.mxu0 0.0
  %2945 = vmatpush1.msra.mxu0 0.0
  %2946 = vmatprep.subr.mxu0 0.0
  %2947 = vmatpush1.msra.mxu0 0.0
  %2948 = vmatprep.mubr.f32.mxu0 0.0
  %2949 = vmatmul.mubr.f32.gmra.mrb[0].mxu0 %v68
  %v2950 = vpop.f32.mrb[0].mxu0
  %v2951 = vadd.f32 0.0, %v2950
  %v2952 = vpop.f32.mrb[0].mxu0
  %2953 = vmatprep.mubr.f32.mxu0 0.0
  %2954 = vmatmul.mubr.f32.gmra.mrb[0].mxu0 %v71
  %v2955 = vpop.f32.mrb[0].mxu0
  %v2956 = vadd.f32 0.0, %v2955
  %v2957 = vpop.f32.mrb[0].mxu0
  %2958 = vmatprep.mubr.f32.mxu0 0.0
  %2959 = vmatmul.mubr.f32.gmra.mrb[0].mxu0 %v74
  %v2960 = vpop.f32.mrb[0].mxu0
  %v2961 = vadd.f32 0.0, %v2960
  %v2962 = vpop.f32.mrb[0].mxu0
  %2963 = vmatprep.mubr.f32.mxu0 0.0
  %2964 = vmatmul.mubr.f32.gmra.mrb[0].mxu0 %v77
  %v2965 = vpop.f32.mrb[0].mxu0
  %v2966 = vadd.f32 0.0, %v2965
  %v2967 = vpop.f32.mrb[0].mxu0
  %2968 = vmatprep.mubr.f32.mxu0 0.0
  %2969 = vmatmul.mubr.f32.gmra.mrb[0].mxu0 %v80
  %v2970 = vpop.f32.mrb[0].mxu0
  %v2971 = vadd.f32 0.0, %v2970
  %v2972 = vpop.f32.mrb[0].mxu0
  %2973 = vmatprep.mubr.f32.mxu0 0.0
  %2974 = vmatmul.mubr.f32.gmra.mrb[0].mxu0 %v83
  %v2975 = vpop.f32.mrb[0].mxu0
  %v2976 = vadd.f32 0.0, %v2975
  %v2977 = vpop.f32.mrb[0].mxu0
  %2978 = vmatprep.mubr.f32.mxu0 0.0
  %2979 = vmatmul.mubr.f32.gmra.mrb[0].mxu0 %v86
  %v2980 = vpop.f32.mrb[0].mxu0
  %v2981 = vadd.f32 0.0, %v2980
  %v2982 = vpop.f32.mrb[0].mxu0
  %2983 = vmatprep.mubr.f32.mxu0 0.0
  %2984 = vmatmul.mubr.f32.gmra.mrb[0].mxu0 %v89
  %v2985 = vpop.f32.mrb[0].mxu0
  %v2986 = vadd.f32 0.0, %v2985
  %v2987 = vpop.f32.mrb[0].mxu0
  %2988 = vmatprep.mubr.f32.mxu0 0.0
  %2989 = vmatmul.mubr.f32.gmra.mrb[0].mxu0 %v92
  %v2990 = vpop.f32.mrb[0].mxu0
  %v2991 = vadd.f32 0.0, %v2990
  %v2992 = vpop.f32.mrb[0].mxu0
  %2993 = vmatprep.mubr.f32.mxu0 0.0
  %2994 = vmatmul.mubr.f32.gmra.mrb[0].mxu0 %v95
  %v2995 = vpop.f32.mrb[0].mxu0
  %v2996 = vadd.f32 0.0, %v2995
  %v2997 = vpop.f32.mrb[0].mxu0
  %2998 = vmatprep.mubr.f32.mxu0 0.0
  %2999 = vmatmul.mubr.f32.gmra.mrb[0].mxu0 %v98
  %v3000 = vpop.f32.mrb[0].mxu0
  %v3001 = vadd.f32 0.0, %v3000
  %v3002 = vpop.f32.mrb[0].mxu0
  %3003 = vmatprep.mubr.f32.mxu0 0.0
  %3004 = vmatmul.mubr.f32.gmra.mrb[0].mxu0 %v101
  %v3005 = vpop.f32.mrb[0].mxu0
  %v3006 = vadd.f32 0.0, %v3005
  %v3007 = vpop.f32.mrb[0].mxu0
  %3008 = vdwg.mxu0
  %v3009 = vmax.f32 %v2826, %v2951
  %v3010 = vmax.f32 %v2831, %v2956
  %v3011 = vmax.f32 %v2836, %v2961
  %v3012 = vmax.f32 %v2841, %v2966
  %v3013 = vmax.f32 %v2846, %v2971
  %v3014 = vmax.f32 %v2851, %v2976
  %v3015 = vmax.f32 %v2856, %v2981
  %v3016 = vmax.f32 %v2861, %v2986
  %v3017 = vmax.f32 %v2866, %v2991
  %v3018 = vmax.f32 %v2871, %v2996
  %v3019 = vmax.f32 %v2876, %v3001
  %v3020 = vmax.f32 %v2881, %v3006
  %v3021 = vmax.f32 %v3009, %v3015
  %v3022 = vmax.f32 %v3010, %v3016
  %v3023 = vmax.f32 %v3011, %v3017
  %v3024 = vmax.f32 %v3012, %v3018
  %v3025 = vmax.f32 %v3013, %v3019
  %v3026 = vmax.f32 %v3014, %v3020
  %v3027 = vadd.f32 %v3021, %v44
  %v3028 = vadd.f32 %v3022, %v45
  %v3029 = vadd.f32 %v3023, %v46
  %v3030 = vadd.f32 %v3024, %v47
  %v3031 = vadd.f32 %v3025, %v48
  %v3032 = vadd.f32 %v3026, %v49
  %v3033 = vxor.u32 %v3027, 2147483648
  %v3034 = vxor.u32 %v3028, 2147483648
  %v3035 = vxor.u32 %v3029, 2147483648
  %v3036 = vxor.u32 %v3030, 2147483648
  %v3037 = vxor.u32 %v3031, 2147483648
  %v3038 = vxor.u32 %v3032, 2147483648
  %v3039 = vmul.f32 %v3033, 1.442695
  %v3040 = vpow.pop %v3039
  %v3041 = vmul.f32 %v3034, 1.442695
  %v3042 = vpow.pop %v3041
  %v3043 = vmul.f32 %v3035, 1.442695
  %v3044 = vpow.pop %v3043
  %v3045 = vmul.f32 %v3036, 1.442695
  %v3046 = vpow.pop %v3045
  %v3047 = vmul.f32 %v3037, 1.442695
  %v3048 = vpow.pop %v3047
  %v3049 = vmul.f32 %v3038, 1.442695
  %v3050 = vpow.pop %v3049
  %v3051 = vadd.f32 %v3040, 1.0
  %v3052 = vadd.f32 %v3042, 1.0
  %v3053 = vadd.f32 %v3044, 1.0
  %v3054 = vadd.f32 %v3046, 1.0
  %v3055 = vadd.f32 %v3048, 1.0
  %v3056 = vadd.f32 %v3050, 1.0
  %v3057 = vrcp.pop %v3051
  %v3058 = vmul.f32 1.0, %v3057
  %v3059 = vrcp.pop %v3052
  %v3060 = vmul.f32 1.0, %v3059
  %v3061 = vrcp.pop %v3053
  %v3062 = vmul.f32 1.0, %v3061
  %v3063 = vrcp.pop %v3054
  %v3064 = vmul.f32 1.0, %v3063
  %v3065 = vrcp.pop %v3055
  %v3066 = vmul.f32 1.0, %v3065
  %v3067 = vrcp.pop %v3056
  %v3068 = vmul.f32 1.0, %v3067
  %3069 = vst [vmem:[#allocation2 + $0x180] sm:$0xff] %v3058
  %3070 = vst [vmem:[#allocation2 + $0x188] sm:$0xff] %v3060
  %3071 = vst [vmem:[#allocation2 + $0x190] sm:$0xff] %v3062
  %3072 = vst [vmem:[#allocation2 + $0x198] sm:$0xff] %v3064
  %3073 = vst [vmem:[#allocation2 + $0x1a0] sm:$0xff] %v3066
  %3074 = vst [vmem:[#allocation2 + $0x1a8] sm:$0xff] %v3068
  %v3075 = vld [vmem:[%s0 + $0x240] sm:$0xff]
  %v3076 = vld [vmem:[%s0 + $0x248] sm:$0xff]
  %v3077 = vld [vmem:[%s0 + $0x250] sm:$0xff]
  %v3078 = vld [vmem:[%s0 + $0x258] sm:$0xff]
  %v3079 = vld [vmem:[%s0 + $0x260] sm:$0xff]
  %v3080 = vld [vmem:[%s0 + $0x268] sm:$0xff]
  %v3081 = vld [vmem:[%s0 + $0x270] sm:$0xff]
  %v3082 = vld [vmem:[%s0 + $0x278] sm:$0xff]
  %v3083 = vld [vmem:[%s0 + $0x280] sm:$0xff]
  %v3084 = vld [vmem:[%s0 + $0x288] sm:$0xff]
  %v3085 = vld [vmem:[%s0 + $0x290] sm:$0xff]
  %v3086 = vld [vmem:[%s0 + $0x298] sm:$0xff]
  %v3087 = vld [vmem:[%s0 + $0x2a0] sm:$0xff]
  %v3088 = vld [vmem:[%s0 + $0x2a8] sm:$0xff]
  %v3089 = vld [vmem:[%s0 + $0x2b0] sm:$0xff]
  %v3090 = vld [vmem:[%s0 + $0x2b8] sm:$0xff]
  %3091 = vmatprep.subr.mxu0 0.0
  %3092 = vmatpush1.msra.mxu0 %v3075
  %3093 = vmatprep.subr.mxu0 0.0
  %3094 = vmatpush1.msra.mxu0 %v3076
  %3095 = vmatprep.subr.mxu0 0.0
  %3096 = vmatpush1.msra.mxu0 %v3077
  %3097 = vmatprep.subr.mxu0 0.0
  %3098 = vmatpush1.msra.mxu0 %v3078
  %3099 = vmatprep.subr.mxu0 0.0
  %3100 = vmatpush1.msra.mxu0 %v3079
  %3101 = vmatprep.subr.mxu0 0.0
  %3102 = vmatpush1.msra.mxu0 %v3080
  %3103 = vmatprep.subr.mxu0 0.0
  %3104 = vmatpush1.msra.mxu0 %v3081
  %3105 = vmatprep.subr.mxu0 0.0
  %3106 = vmatpush1.msra.mxu0 %v3082
  %3107 = vmatprep.subr.mxu0 0.0
  %3108 = vmatpush1.msra.mxu0 %v3083
  %3109 = vmatprep.subr.mxu0 0.0
  %3110 = vmatpush1.msra.mxu0 %v3084
  %3111 = vmatprep.subr.mxu0 0.0
  %3112 = vmatpush1.msra.mxu0 %v3085
  %3113 = vmatprep.subr.mxu0 0.0
  %3114 = vmatpush1.msra.mxu0 %v3086
  %3115 = vmatprep.subr.mxu0 0.0
  %3116 = vmatpush1.msra.mxu0 0.0
  %3117 = vmatprep.subr.mxu0 0.0
  %3118 = vmatpush1.msra.mxu0 0.0
  %3119 = vmatprep.subr.mxu0 0.0
  %3120 = vmatpush1.msra.mxu0 0.0
  %3121 = vmatprep.subr.mxu0 0.0
  %3122 = vmatpush1.msra.mxu0 0.0
  %3123 = vmatprep.subr.mxu0 0.0
  %3124 = vmatpush1.msra.mxu0 0.0
  %3125 = vmatprep.subr.mxu0 0.0
  %3126 = vmatpush1.msra.mxu0 0.0
  %3127 = vmatprep.subr.mxu0 0.0
  %3128 = vmatpush1.msra.mxu0 0.0
  %3129 = vmatprep.subr.mxu0 0.0
  %3130 = vmatpush1.msra.mxu0 0.0
  %3131 = vmatprep.subr.mxu0 0.0
  %3132 = vmatpush1.msra.mxu0 0.0
  %3133 = vmatprep.subr.mxu0 0.0
  %3134 = vmatpush1.msra.mxu0 0.0
  %3135 = vmatprep.subr.mxu0 0.0
  %3136 = vmatpush1.msra.mxu0 0.0
  %3137 = vmatprep.subr.mxu0 0.0
  %3138 = vmatpush1.msra.mxu0 0.0
  %3139 = vmatprep.subr.mxu0 0.0
  %3140 = vmatpush1.msra.mxu0 0.0
  %3141 = vmatprep.subr.mxu0 0.0
  %3142 = vmatpush1.msra.mxu0 0.0
  %3143 = vmatprep.subr.mxu0 0.0
  %3144 = vmatpush1.msra.mxu0 0.0
  %3145 = vmatprep.subr.mxu0 0.0
  %3146 = vmatpush1.msra.mxu0 0.0
  %3147 = vmatprep.subr.mxu0 0.0
  %3148 = vmatpush1.msra.mxu0 0.0
  %3149 = vmatprep.subr.mxu0 0.0
  %3150 = vmatpush1.msra.mxu0 0.0
  %3151 = vmatprep.subr.mxu0 0.0
  %3152 = vmatpush1.msra.mxu0 0.0
  %3153 = vmatprep.subr.mxu0 0.0
  %3154 = vmatpush1.msra.mxu0 0.0
  %3155 = vmatprep.mubr.f32.mxu0 0.0
  %3156 = vmatmul.mubr.f32.gmra.mrb[0].mxu0 %v68
  %v3157 = vpop.f32.mrb[0].mxu0
  %v3158 = vadd.f32 0.0, %v3157
  %v3159 = vpop.f32.mrb[0].mxu0
  %3160 = vmatprep.mubr.f32.mxu0 0.0
  %3161 = vmatmul.mubr.f32.gmra.mrb[0].mxu0 %v71
  %v3162 = vpop.f32.mrb[0].mxu0
  %v3163 = vadd.f32 0.0, %v3162
  %v3164 = vpop.f32.mrb[0].mxu0
  %3165 = vmatprep.mubr.f32.mxu0 0.0
  %3166 = vmatmul.mubr.f32.gmra.mrb[0].mxu0 %v74
  %v3167 = vpop.f32.mrb[0].mxu0
  %v3168 = vadd.f32 0.0, %v3167
  %v3169 = vpop.f32.mrb[0].mxu0
  %3170 = vmatprep.mubr.f32.mxu0 0.0
  %3171 = vmatmul.mubr.f32.gmra.mrb[0].mxu0 %v77
  %v3172 = vpop.f32.mrb[0].mxu0
  %v3173 = vadd.f32 0.0, %v3172
  %v3174 = vpop.f32.mrb[0].mxu0
  %3175 = vmatprep.mubr.f32.mxu0 0.0
  %3176 = vmatmul.mubr.f32.gmra.mrb[0].mxu0 %v80
  %v3177 = vpop.f32.mrb[0].mxu0
  %v3178 = vadd.f32 0.0, %v3177
  %v3179 = vpop.f32.mrb[0].mxu0
  %3180 = vmatprep.mubr.f32.mxu0 0.0
  %3181 = vmatmul.mubr.f32.gmra.mrb[0].mxu0 %v83
  %v3182 = vpop.f32.mrb[0].mxu0
  %v3183 = vadd.f32 0.0, %v3182
  %v3184 = vpop.f32.mrb[0].mxu0
  %3185 = vmatprep.mubr.f32.mxu0 0.0
  %3186 = vmatmul.mubr.f32.gmra.mrb[0].mxu0 %v86
  %v3187 = vpop.f32.mrb[0].mxu0
  %v3188 = vadd.f32 0.0, %v3187
  %v3189 = vpop.f32.mrb[0].mxu0
  %3190 = vmatprep.mubr.f32.mxu0 0.0
  %3191 = vmatmul.mubr.f32.gmra.mrb[0].mxu0 %v89
  %v3192 = vpop.f32.mrb[0].mxu0
  %v3193 = vadd.f32 0.0, %v3192
  %v3194 = vpop.f32.mrb[0].mxu0
  %3195 = vmatprep.mubr.f32.mxu0 0.0
  %3196 = vmatmul.mubr.f32.gmra.mrb[0].mxu0 %v92
  %v3197 = vpop.f32.mrb[0].mxu0
  %v3198 = vadd.f32 0.0, %v3197
  %v3199 = vpop.f32.mrb[0].mxu0
  %3200 = vmatprep.mubr.f32.mxu0 0.0
  %3201 = vmatmul.mubr.f32.gmra.mrb[0].mxu0 %v95
  %v3202 = vpop.f32.mrb[0].mxu0
  %v3203 = vadd.f32 0.0, %v3202
  %v3204 = vpop.f32.mrb[0].mxu0
  %3205 = vmatprep.mubr.f32.mxu0 0.0
  %3206 = vmatmul.mubr.f32.gmra.mrb[0].mxu0 %v98
  %v3207 = vpop.f32.mrb[0].mxu0
  %v3208 = vadd.f32 0.0, %v3207
  %v3209 = vpop.f32.mrb[0].mxu0
  %3210 = vmatprep.mubr.f32.mxu0 0.0
  %3211 = vmatmul.mubr.f32.gmra.mrb[0].mxu0 %v101
  %v3212 = vpop.f32.mrb[0].mxu0
  %v3213 = vadd.f32 0.0, %v3212
  %v3214 = vpop.f32.mrb[0].mxu0
  %3215 = vdwg.mxu0
  %3216 = vmatprep.subr.mxu0 0.0
  %3217 = vmatpush1.msra.mxu0 %v3079
  %3218 = vmatprep.subr.mxu0 0.0
  %3219 = vmatpush1.msra.mxu0 %v3080
  %3220 = vmatprep.subr.mxu0 0.0
  %3221 = vmatpush1.msra.mxu0 %v3081
  %3222 = vmatprep.subr.mxu0 0.0
  %3223 = vmatpush1.msra.mxu0 %v3082
  %3224 = vmatprep.subr.mxu0 0.0
  %3225 = vmatpush1.msra.mxu0 %v3083
  %3226 = vmatprep.subr.mxu0 0.0
  %3227 = vmatpush1.msra.mxu0 %v3084
  %3228 = vmatprep.subr.mxu0 0.0
  %3229 = vmatpush1.msra.mxu0 %v3085
  %3230 = vmatprep.subr.mxu0 0.0
  %3231 = vmatpush1.msra.mxu0 %v3086
  %3232 = vmatprep.subr.mxu0 0.0
  %3233 = vmatpush1.msra.mxu0 %v3087
  %3234 = vmatprep.subr.mxu0 0.0
  %3235 = vmatpush1.msra.mxu0 %v3088
  %3236 = vmatprep.subr.mxu0 0.0
  %3237 = vmatpush1.msra.mxu0 %v3089
  %3238 = vmatprep.subr.mxu0 0.0
  %3239 = vmatpush1.msra.mxu0 %v3090
  %3240 = vmatprep.subr.mxu0 0.0
  %3241 = vmatpush1.msra.mxu0 0.0
  %3242 = vmatprep.subr.mxu0 0.0
  %3243 = vmatpush1.msra.mxu0 0.0
  %3244 = vmatprep.subr.mxu0 0.0
  %3245 = vmatpush1.msra.mxu0 0.0
  %3246 = vmatprep.subr.mxu0 0.0
  %3247 = vmatpush1.msra.mxu0 0.0
  %3248 = vmatprep.subr.mxu0 0.0
  %3249 = vmatpush1.msra.mxu0 0.0
  %3250 = vmatprep.subr.mxu0 0.0
  %3251 = vmatpush1.msra.mxu0 0.0
  %3252 = vmatprep.subr.mxu0 0.0
  %3253 = vmatpush1.msra.mxu0 0.0
  %3254 = vmatprep.subr.mxu0 0.0
  %3255 = vmatpush1.msra.mxu0 0.0
  %3256 = vmatprep.subr.mxu0 0.0
  %3257 = vmatpush1.msra.mxu0 0.0
  %3258 = vmatprep.subr.mxu0 0.0
  %3259 = vmatpush1.msra.mxu0 0.0
  %3260 = vmatprep.subr.mxu0 0.0
  %3261 = vmatpush1.msra.mxu0 0.0
  %3262 = vmatprep.subr.mxu0 0.0
  %3263 = vmatpush1.msra.mxu0 0.0
  %3264 = vmatprep.subr.mxu0 0.0
  %3265 = vmatpush1.msra.mxu0 0.0
  %3266 = vmatprep.subr.mxu0 0.0
  %3267 = vmatpush1.msra.mxu0 0.0
  %3268 = vmatprep.subr.mxu0 0.0
  %3269 = vmatpush1.msra.mxu0 0.0
  %3270 = vmatprep.subr.mxu0 0.0
  %3271 = vmatpush1.msra.mxu0 0.0
  %3272 = vmatprep.subr.mxu0 0.0
  %3273 = vmatpush1.msra.mxu0 0.0
  %3274 = vmatprep.subr.mxu0 0.0
  %3275 = vmatpush1.msra.mxu0 0.0
  %3276 = vmatprep.subr.mxu0 0.0
  %3277 = vmatpush1.msra.mxu0 0.0
  %3278 = vmatprep.subr.mxu0 0.0
  %3279 = vmatpush1.msra.mxu0 0.0
  %3280 = vmatprep.mubr.f32.mxu0 0.0
  %3281 = vmatmul.mubr.f32.gmra.mrb[0].mxu0 %v68
  %v3282 = vpop.f32.mrb[0].mxu0
  %v3283 = vadd.f32 0.0, %v3282
  %v3284 = vpop.f32.mrb[0].mxu0
  %3285 = vmatprep.mubr.f32.mxu0 0.0
  %3286 = vmatmul.mubr.f32.gmra.mrb[0].mxu0 %v71
  %v3287 = vpop.f32.mrb[0].mxu0
  %v3288 = vadd.f32 0.0, %v3287
  %v3289 = vpop.f32.mrb[0].mxu0
  %3290 = vmatprep.mubr.f32.mxu0 0.0
  %3291 = vmatmul.mubr.f32.gmra.mrb[0].mxu0 %v74
  %v3292 = vpop.f32.mrb[0].mxu0
  %v3293 = vadd.f32 0.0, %v3292
  %v3294 = vpop.f32.mrb[0].mxu0
  %3295 = vmatprep.mubr.f32.mxu0 0.0
  %3296 = vmatmul.mubr.f32.gmra.mrb[0].mxu0 %v77
  %v3297 = vpop.f32.mrb[0].mxu0
  %v3298 = vadd.f32 0.0, %v3297
  %v3299 = vpop.f32.mrb[0].mxu0
  %3300 = vmatprep.mubr.f32.mxu0 0.0
  %3301 = vmatmul.mubr.f32.gmra.mrb[0].mxu0 %v80
  %v3302 = vpop.f32.mrb[0].mxu0
  %v3303 = vadd.f32 0.0, %v3302
  %v3304 = vpop.f32.mrb[0].mxu0
  %3305 = vmatprep.mubr.f32.mxu0 0.0
  %3306 = vmatmul.mubr.f32.gmra.mrb[0].mxu0 %v83
  %v3307 = vpop.f32.mrb[0].mxu0
  %v3308 = vadd.f32 0.0, %v3307
  %v3309 = vpop.f32.mrb[0].mxu0
  %3310 = vmatprep.mubr.f32.mxu0 0.0
  %3311 = vmatmul.mubr.f32.gmra.mrb[0].mxu0 %v86
  %v3312 = vpop.f32.mrb[0].mxu0
  %v3313 = vadd.f32 0.0, %v3312
  %v3314 = vpop.f32.mrb[0].mxu0
  %3315 = vmatprep.mubr.f32.mxu0 0.0
  %3316 = vmatmul.mubr.f32.gmra.mrb[0].mxu0 %v89
  %v3317 = vpop.f32.mrb[0].mxu0
  %v3318 = vadd.f32 0.0, %v3317
  %v3319 = vpop.f32.mrb[0].mxu0
  %3320 = vmatprep.mubr.f32.mxu0 0.0
  %3321 = vmatmul.mubr.f32.gmra.mrb[0].mxu0 %v92
  %v3322 = vpop.f32.mrb[0].mxu0
  %v3323 = vadd.f32 0.0, %v3322
  %v3324 = vpop.f32.mrb[0].mxu0
  %3325 = vmatprep.mubr.f32.mxu0 0.0
  %3326 = vmatmul.mubr.f32.gmra.mrb[0].mxu0 %v95
  %v3327 = vpop.f32.mrb[0].mxu0
  %v3328 = vadd.f32 0.0, %v3327
  %v3329 = vpop.f32.mrb[0].mxu0
  %3330 = vmatprep.mubr.f32.mxu0 0.0
  %3331 = vmatmul.mubr.f32.gmra.mrb[0].mxu0 %v98
  %v3332 = vpop.f32.mrb[0].mxu0
  %v3333 = vadd.f32 0.0, %v3332
  %v3334 = vpop.f32.mrb[0].mxu0
  %3335 = vmatprep.mubr.f32.mxu0 0.0
  %3336 = vmatmul.mubr.f32.gmra.mrb[0].mxu0 %v101
  %v3337 = vpop.f32.mrb[0].mxu0
  %v3338 = vadd.f32 0.0, %v3337
  %v3339 = vpop.f32.mrb[0].mxu0
  %3340 = vdwg.mxu0
  %v3341 = vmax.f32 %v3158, %v3283
  %v3342 = vmax.f32 %v3163, %v3288
  %v3343 = vmax.f32 %v3168, %v3293
  %v3344 = vmax.f32 %v3173, %v3298
  %v3345 = vmax.f32 %v3178, %v3303
  %v3346 = vmax.f32 %v3183, %v3308
  %v3347 = vmax.f32 %v3188, %v3313
  %v3348 = vmax.f32 %v3193, %v3318
  %v3349 = vmax.f32 %v3198, %v3323
  %v3350 = vmax.f32 %v3203, %v3328
  %v3351 = vmax.f32 %v3208, %v3333
  %v3352 = vmax.f32 %v3213, %v3338
  %v3353 = vmax.f32 %v3341, %v3347
  %v3354 = vmax.f32 %v3342, %v3348
  %v3355 = vmax.f32 %v3343, %v3349
  %v3356 = vmax.f32 %v3344, %v3350
  %v3357 = vmax.f32 %v3345, %v3351
  %v3358 = vmax.f32 %v3346, %v3352
  %v3359 = vadd.f32 %v3353, %v44
  %v3360 = vadd.f32 %v3354, %v45
  %v3361 = vadd.f32 %v3355, %v46
  %v3362 = vadd.f32 %v3356, %v47
  %v3363 = vadd.f32 %v3357, %v48
  %v3364 = vadd.f32 %v3358, %v49
  %v3365 = vxor.u32 %v3359, 2147483648
  %v3366 = vxor.u32 %v3360, 2147483648
  %v3367 = vxor.u32 %v3361, 2147483648
  %v3368 = vxor.u32 %v3362, 2147483648
  %v3369 = vxor.u32 %v3363, 2147483648
  %v3370 = vxor.u32 %v3364, 2147483648
  %v3371 = vmul.f32 %v3365, 1.442695
  %v3372 = vpow.pop %v3371
  %v3373 = vmul.f32 %v3366, 1.442695
  %v3374 = vpow.pop %v3373
  %v3375 = vmul.f32 %v3367, 1.442695
  %v3376 = vpow.pop %v3375
  %v3377 = vmul.f32 %v3368, 1.442695
  %v3378 = vpow.pop %v3377
  %v3379 = vmul.f32 %v3369, 1.442695
  %v3380 = vpow.pop %v3379
  %v3381 = vmul.f32 %v3370, 1.442695
  %v3382 = vpow.pop %v3381
  %v3383 = vadd.f32 %v3372, 1.0
  %v3384 = vadd.f32 %v3374, 1.0
  %v3385 = vadd.f32 %v3376, 1.0
  %v3386 = vadd.f32 %v3378, 1.0
  %v3387 = vadd.f32 %v3380, 1.0
  %v3388 = vadd.f32 %v3382, 1.0
  %v3389 = vrcp.pop %v3383
  %v3390 = vmul.f32 1.0, %v3389
  %v3391 = vrcp.pop %v3384
  %v3392 = vmul.f32 1.0, %v3391
  %v3393 = vrcp.pop %v3385
  %v3394 = vmul.f32 1.0, %v3393
  %v3395 = vrcp.pop %v3386
  %v3396 = vmul.f32 1.0, %v3395
  %v3397 = vrcp.pop %v3387
  %v3398 = vmul.f32 1.0, %v3397
  %v3399 = vrcp.pop %v3388
  %v3400 = vmul.f32 1.0, %v3399
  %3401 = vst [vmem:[#allocation2 + $0x1b0] sm:$0xff] %v3390
  %3402 = vst [vmem:[#allocation2 + $0x1b8] sm:$0xff] %v3392
  %3403 = vst [vmem:[#allocation2 + $0x1c0] sm:$0xff] %v3394
  %3404 = vst [vmem:[#allocation2 + $0x1c8] sm:$0xff] %v3396
  %3405 = vst [vmem:[#allocation2 + $0x1d0] sm:$0xff] %v3398
  %3406 = vst [vmem:[#allocation2 + $0x1d8] sm:$0xff] %v3400
  %v3407 = vld [vmem:[%s0 + $0x280] sm:$0xff]
  %v3408 = vld [vmem:[%s0 + $0x288] sm:$0xff]
  %v3409 = vld [vmem:[%s0 + $0x290] sm:$0xff]
  %v3410 = vld [vmem:[%s0 + $0x298] sm:$0xff]
  %v3411 = vld [vmem:[%s0 + $0x2a0] sm:$0xff]
  %v3412 = vld [vmem:[%s0 + $0x2a8] sm:$0xff]
  %v3413 = vld [vmem:[%s0 + $0x2b0] sm:$0xff]
  %v3414 = vld [vmem:[%s0 + $0x2b8] sm:$0xff]
  %v3415 = vld [vmem:[%s0 + $0x2c0] sm:$0xff]
  %v3416 = vld [vmem:[%s0 + $0x2c8] sm:$0xff]
  %v3417 = vld [vmem:[%s0 + $0x2d0] sm:$0xff]
  %v3418 = vld [vmem:[%s0 + $0x2d8] sm:$0xff]
  %v3419 = vld [vmem:[%s0 + $0x2e0] sm:$0xff]
  %v3420 = vld [vmem:[%s0 + $0x2e8] sm:$0xff]
  %v3421 = vld [vmem:[%s0 + $0x2f0] sm:$0xff]
  %v3422 = vld [vmem:[%s0 + $0x2f8] sm:$0xff]
  %3423 = vmatprep.subr.mxu0 0.0
  %3424 = vmatpush1.msra.mxu0 %v3407
  %3425 = vmatprep.subr.mxu0 0.0
  %3426 = vmatpush1.msra.mxu0 %v3408
  %3427 = vmatprep.subr.mxu0 0.0
  %3428 = vmatpush1.msra.mxu0 %v3409
  %3429 = vmatprep.subr.mxu0 0.0
  %3430 = vmatpush1.msra.mxu0 %v3410
  %3431 = vmatprep.subr.mxu0 0.0
  %3432 = vmatpush1.msra.mxu0 %v3411
  %3433 = vmatprep.subr.mxu0 0.0
  %3434 = vmatpush1.msra.mxu0 %v3412
  %3435 = vmatprep.subr.mxu0 0.0
  %3436 = vmatpush1.msra.mxu0 %v3413
  %3437 = vmatprep.subr.mxu0 0.0
  %3438 = vmatpush1.msra.mxu0 %v3414
  %3439 = vmatprep.subr.mxu0 0.0
  %3440 = vmatpush1.msra.mxu0 %v3415
  %3441 = vmatprep.subr.mxu0 0.0
  %3442 = vmatpush1.msra.mxu0 %v3416
  %3443 = vmatprep.subr.mxu0 0.0
  %3444 = vmatpush1.msra.mxu0 %v3417
  %3445 = vmatprep.subr.mxu0 0.0
  %3446 = vmatpush1.msra.mxu0 %v3418
  %3447 = vmatprep.subr.mxu0 0.0
  %3448 = vmatpush1.msra.mxu0 0.0
  %3449 = vmatprep.subr.mxu0 0.0
  %3450 = vmatpush1.msra.mxu0 0.0
  %3451 = vmatprep.subr.mxu0 0.0
  %3452 = vmatpush1.msra.mxu0 0.0
  %3453 = vmatprep.subr.mxu0 0.0
  %3454 = vmatpush1.msra.mxu0 0.0
  %3455 = vmatprep.subr.mxu0 0.0
  %3456 = vmatpush1.msra.mxu0 0.0
  %3457 = vmatprep.subr.mxu0 0.0
  %3458 = vmatpush1.msra.mxu0 0.0
  %3459 = vmatprep.subr.mxu0 0.0
  %3460 = vmatpush1.msra.mxu0 0.0
  %3461 = vmatprep.subr.mxu0 0.0
  %3462 = vmatpush1.msra.mxu0 0.0
  %3463 = vmatprep.subr.mxu0 0.0
  %3464 = vmatpush1.msra.mxu0 0.0
  %3465 = vmatprep.subr.mxu0 0.0
  %3466 = vmatpush1.msra.mxu0 0.0
  %3467 = vmatprep.subr.mxu0 0.0
  %3468 = vmatpush1.msra.mxu0 0.0
  %3469 = vmatprep.subr.mxu0 0.0
  %3470 = vmatpush1.msra.mxu0 0.0
  %3471 = vmatprep.subr.mxu0 0.0
  %3472 = vmatpush1.msra.mxu0 0.0
  %3473 = vmatprep.subr.mxu0 0.0
  %3474 = vmatpush1.msra.mxu0 0.0
  %3475 = vmatprep.subr.mxu0 0.0
  %3476 = vmatpush1.msra.mxu0 0.0
  %3477 = vmatprep.subr.mxu0 0.0
  %3478 = vmatpush1.msra.mxu0 0.0
  %3479 = vmatprep.subr.mxu0 0.0
  %3480 = vmatpush1.msra.mxu0 0.0
  %3481 = vmatprep.subr.mxu0 0.0
  %3482 = vmatpush1.msra.mxu0 0.0
  %3483 = vmatprep.subr.mxu0 0.0
  %3484 = vmatpush1.msra.mxu0 0.0
  %3485 = vmatprep.subr.mxu0 0.0
  %3486 = vmatpush1.msra.mxu0 0.0
  %3487 = vmatprep.mubr.f32.mxu0 0.0
  %3488 = vmatmul.mubr.f32.gmra.mrb[0].mxu0 %v68
  %v3489 = vpop.f32.mrb[0].mxu0
  %v3490 = vadd.f32 0.0, %v3489
  %v3491 = vpop.f32.mrb[0].mxu0
  %3492 = vmatprep.mubr.f32.mxu0 0.0
  %3493 = vmatmul.mubr.f32.gmra.mrb[0].mxu0 %v71
  %v3494 = vpop.f32.mrb[0].mxu0
  %v3495 = vadd.f32 0.0, %v3494
  %v3496 = vpop.f32.mrb[0].mxu0
  %3497 = vmatprep.mubr.f32.mxu0 0.0
  %3498 = vmatmul.mubr.f32.gmra.mrb[0].mxu0 %v74
  %v3499 = vpop.f32.mrb[0].mxu0
  %v3500 = vadd.f32 0.0, %v3499
  %v3501 = vpop.f32.mrb[0].mxu0
  %3502 = vmatprep.mubr.f32.mxu0 0.0
  %3503 = vmatmul.mubr.f32.gmra.mrb[0].mxu0 %v77
  %v3504 = vpop.f32.mrb[0].mxu0
  %v3505 = vadd.f32 0.0, %v3504
  %v3506 = vpop.f32.mrb[0].mxu0
  %3507 = vmatprep.mubr.f32.mxu0 0.0
  %3508 = vmatmul.mubr.f32.gmra.mrb[0].mxu0 %v80
  %v3509 = vpop.f32.mrb[0].mxu0
  %v3510 = vadd.f32 0.0, %v3509
  %v3511 = vpop.f32.mrb[0].mxu0
  %3512 = vmatprep.mubr.f32.mxu0 0.0
  %3513 = vmatmul.mubr.f32.gmra.mrb[0].mxu0 %v83
  %v3514 = vpop.f32.mrb[0].mxu0
  %v3515 = vadd.f32 0.0, %v3514
  %v3516 = vpop.f32.mrb[0].mxu0
  %3517 = vmatprep.mubr.f32.mxu0 0.0
  %3518 = vmatmul.mubr.f32.gmra.mrb[0].mxu0 %v86
  %v3519 = vpop.f32.mrb[0].mxu0
  %v3520 = vadd.f32 0.0, %v3519
  %v3521 = vpop.f32.mrb[0].mxu0
  %3522 = vmatprep.mubr.f32.mxu0 0.0
  %3523 = vmatmul.mubr.f32.gmra.mrb[0].mxu0 %v89
  %v3524 = vpop.f32.mrb[0].mxu0
  %v3525 = vadd.f32 0.0, %v3524
  %v3526 = vpop.f32.mrb[0].mxu0
  %3527 = vmatprep.mubr.f32.mxu0 0.0
  %3528 = vmatmul.mubr.f32.gmra.mrb[0].mxu0 %v92
  %v3529 = vpop.f32.mrb[0].mxu0
  %v3530 = vadd.f32 0.0, %v3529
  %v3531 = vpop.f32.mrb[0].mxu0
  %3532 = vmatprep.mubr.f32.mxu0 0.0
  %3533 = vmatmul.mubr.f32.gmra.mrb[0].mxu0 %v95
  %v3534 = vpop.f32.mrb[0].mxu0
  %v3535 = vadd.f32 0.0, %v3534
  %v3536 = vpop.f32.mrb[0].mxu0
  %3537 = vmatprep.mubr.f32.mxu0 0.0
  %3538 = vmatmul.mubr.f32.gmra.mrb[0].mxu0 %v98
  %v3539 = vpop.f32.mrb[0].mxu0
  %v3540 = vadd.f32 0.0, %v3539
  %v3541 = vpop.f32.mrb[0].mxu0
  %3542 = vmatprep.mubr.f32.mxu0 0.0
  %3543 = vmatmul.mubr.f32.gmra.mrb[0].mxu0 %v101
  %v3544 = vpop.f32.mrb[0].mxu0
  %v3545 = vadd.f32 0.0, %v3544
  %v3546 = vpop.f32.mrb[0].mxu0
  %3547 = vdwg.mxu0
  %3548 = vmatprep.subr.mxu0 0.0
  %3549 = vmatpush1.msra.mxu0 %v3411
  %3550 = vmatprep.subr.mxu0 0.0
  %3551 = vmatpush1.msra.mxu0 %v3412
  %3552 = vmatprep.subr.mxu0 0.0
  %3553 = vmatpush1.msra.mxu0 %v3413
  %3554 = vmatprep.subr.mxu0 0.0
  %3555 = vmatpush1.msra.mxu0 %v3414
  %3556 = vmatprep.subr.mxu0 0.0
  %3557 = vmatpush1.msra.mxu0 %v3415
  %3558 = vmatprep.subr.mxu0 0.0
  %3559 = vmatpush1.msra.mxu0 %v3416
  %3560 = vmatprep.subr.mxu0 0.0
  %3561 = vmatpush1.msra.mxu0 %v3417
  %3562 = vmatprep.subr.mxu0 0.0
  %3563 = vmatpush1.msra.mxu0 %v3418
  %3564 = vmatprep.subr.mxu0 0.0
  %3565 = vmatpush1.msra.mxu0 %v3419
  %3566 = vmatprep.subr.mxu0 0.0
  %3567 = vmatpush1.msra.mxu0 %v3420
  %3568 = vmatprep.subr.mxu0 0.0
  %3569 = vmatpush1.msra.mxu0 %v3421
  %3570 = vmatprep.subr.mxu0 0.0
  %3571 = vmatpush1.msra.mxu0 %v3422
  %3572 = vmatprep.subr.mxu0 0.0
  %3573 = vmatpush1.msra.mxu0 0.0
  %3574 = vmatprep.subr.mxu0 0.0
  %3575 = vmatpush1.msra.mxu0 0.0
  %3576 = vmatprep.subr.mxu0 0.0
  %3577 = vmatpush1.msra.mxu0 0.0
  %3578 = vmatprep.subr.mxu0 0.0
  %3579 = vmatpush1.msra.mxu0 0.0
  %3580 = vmatprep.subr.mxu0 0.0
  %3581 = vmatpush1.msra.mxu0 0.0
  %3582 = vmatprep.subr.mxu0 0.0
  %3583 = vmatpush1.msra.mxu0 0.0
  %3584 = vmatprep.subr.mxu0 0.0
  %3585 = vmatpush1.msra.mxu0 0.0
  %3586 = vmatprep.subr.mxu0 0.0
  %3587 = vmatpush1.msra.mxu0 0.0
  %3588 = vmatprep.subr.mxu0 0.0
  %3589 = vmatpush1.msra.mxu0 0.0
  %3590 = vmatprep.subr.mxu0 0.0
  %3591 = vmatpush1.msra.mxu0 0.0
  %3592 = vmatprep.subr.mxu0 0.0
  %3593 = vmatpush1.msra.mxu0 0.0
  %3594 = vmatprep.subr.mxu0 0.0
  %3595 = vmatpush1.msra.mxu0 0.0
  %3596 = vmatprep.subr.mxu0 0.0
  %3597 = vmatpush1.msra.mxu0 0.0
  %3598 = vmatprep.subr.mxu0 0.0
  %3599 = vmatpush1.msra.mxu0 0.0
  %3600 = vmatprep.subr.mxu0 0.0
  %3601 = vmatpush1.msra.mxu0 0.0
  %3602 = vmatprep.subr.mxu0 0.0
  %3603 = vmatpush1.msra.mxu0 0.0
  %3604 = vmatprep.subr.mxu0 0.0
  %3605 = vmatpush1.msra.mxu0 0.0
  %3606 = vmatprep.subr.mxu0 0.0
  %3607 = vmatpush1.msra.mxu0 0.0
  %3608 = vmatprep.subr.mxu0 0.0
  %3609 = vmatpush1.msra.mxu0 0.0
  %3610 = vmatprep.subr.mxu0 0.0
  %3611 = vmatpush1.msra.mxu0 0.0
  %3612 = vmatprep.mubr.f32.mxu0 0.0
  %3613 = vmatmul.mubr.f32.gmra.mrb[0].mxu0 %v68
  %v3614 = vpop.f32.mrb[0].mxu0
  %v3615 = vadd.f32 0.0, %v3614
  %v3616 = vpop.f32.mrb[0].mxu0
  %3617 = vmatprep.mubr.f32.mxu0 0.0
  %3618 = vmatmul.mubr.f32.gmra.mrb[0].mxu0 %v71
  %v3619 = vpop.f32.mrb[0].mxu0
  %v3620 = vadd.f32 0.0, %v3619
  %v3621 = vpop.f32.mrb[0].mxu0
  %3622 = vmatprep.mubr.f32.mxu0 0.0
  %3623 = vmatmul.mubr.f32.gmra.mrb[0].mxu0 %v74
  %v3624 = vpop.f32.mrb[0].mxu0
  %v3625 = vadd.f32 0.0, %v3624
  %v3626 = vpop.f32.mrb[0].mxu0
  %3627 = vmatprep.mubr.f32.mxu0 0.0
  %3628 = vmatmul.mubr.f32.gmra.mrb[0].mxu0 %v77
  %v3629 = vpop.f32.mrb[0].mxu0
  %v3630 = vadd.f32 0.0, %v3629
  %v3631 = vpop.f32.mrb[0].mxu0
  %3632 = vmatprep.mubr.f32.mxu0 0.0
  %3633 = vmatmul.mubr.f32.gmra.mrb[0].mxu0 %v80
  %v3634 = vpop.f32.mrb[0].mxu0
  %v3635 = vadd.f32 0.0, %v3634
  %v3636 = vpop.f32.mrb[0].mxu0
  %3637 = vmatprep.mubr.f32.mxu0 0.0
  %3638 = vmatmul.mubr.f32.gmra.mrb[0].mxu0 %v83
  %v3639 = vpop.f32.mrb[0].mxu0
  %v3640 = vadd.f32 0.0, %v3639
  %v3641 = vpop.f32.mrb[0].mxu0
  %3642 = vmatprep.mubr.f32.mxu0 0.0
  %3643 = vmatmul.mubr.f32.gmra.mrb[0].mxu0 %v86
  %v3644 = vpop.f32.mrb[0].mxu0
  %v3645 = vadd.f32 0.0, %v3644
  %v3646 = vpop.f32.mrb[0].mxu0
  %3647 = vmatprep.mubr.f32.mxu0 0.0
  %3648 = vmatmul.mubr.f32.gmra.mrb[0].mxu0 %v89
  %v3649 = vpop.f32.mrb[0].mxu0
  %v3650 = vadd.f32 0.0, %v3649
  %v3651 = vpop.f32.mrb[0].mxu0
  %3652 = vmatprep.mubr.f32.mxu0 0.0
  %3653 = vmatmul.mubr.f32.gmra.mrb[0].mxu0 %v92
  %v3654 = vpop.f32.mrb[0].mxu0
  %v3655 = vadd.f32 0.0, %v3654
  %v3656 = vpop.f32.mrb[0].mxu0
  %3657 = vmatprep.mubr.f32.mxu0 0.0
  %3658 = vmatmul.mubr.f32.gmra.mrb[0].mxu0 %v95
  %v3659 = vpop.f32.mrb[0].mxu0
  %v3660 = vadd.f32 0.0, %v3659
  %v3661 = vpop.f32.mrb[0].mxu0
  %3662 = vmatprep.mubr.f32.mxu0 0.0
  %3663 = vmatmul.mubr.f32.gmra.mrb[0].mxu0 %v98
  %v3664 = vpop.f32.mrb[0].mxu0
  %v3665 = vadd.f32 0.0, %v3664
  %v3666 = vpop.f32.mrb[0].mxu0
  %3667 = vmatprep.mubr.f32.mxu0 0.0
  %3668 = vmatmul.mubr.f32.gmra.mrb[0].mxu0 %v101
  %v3669 = vpop.f32.mrb[0].mxu0
  %v3670 = vadd.f32 0.0, %v3669
  %v3671 = vpop.f32.mrb[0].mxu0
  %3672 = vdwg.mxu0
  %v3673 = vmax.f32 %v3490, %v3615
  %v3674 = vmax.f32 %v3495, %v3620
  %v3675 = vmax.f32 %v3500, %v3625
  %v3676 = vmax.f32 %v3505, %v3630
  %v3677 = vmax.f32 %v3510, %v3635
  %v3678 = vmax.f32 %v3515, %v3640
  %v3679 = vmax.f32 %v3520, %v3645
  %v3680 = vmax.f32 %v3525, %v3650
  %v3681 = vmax.f32 %v3530, %v3655
  %v3682 = vmax.f32 %v3535, %v3660
  %v3683 = vmax.f32 %v3540, %v3665
  %v3684 = vmax.f32 %v3545, %v3670
  %v3685 = vmax.f32 %v3673, %v3679
  %v3686 = vmax.f32 %v3674, %v3680
  %v3687 = vmax.f32 %v3675, %v3681
  %v3688 = vmax.f32 %v3676, %v3682
  %v3689 = vmax.f32 %v3677, %v3683
  %v3690 = vmax.f32 %v3678, %v3684
  %v3691 = vadd.f32 %v3685, %v44
  %v3692 = vadd.f32 %v3686, %v45
  %v3693 = vadd.f32 %v3687, %v46
  %v3694 = vadd.f32 %v3688, %v47
  %v3695 = vadd.f32 %v3689, %v48
  %v3696 = vadd.f32 %v3690, %v49
  %v3697 = vxor.u32 %v3691, 2147483648
  %v3698 = vxor.u32 %v3692, 2147483648
  %v3699 = vxor.u32 %v3693, 2147483648
  %v3700 = vxor.u32 %v3694, 2147483648
  %v3701 = vxor.u32 %v3695, 2147483648
  %v3702 = vxor.u32 %v3696, 2147483648
  %v3703 = vmul.f32 %v3697, 1.442695
  %v3704 = vpow.pop %v3703
  %v3705 = vmul.f32 %v3698, 1.442695
  %v3706 = vpow.pop %v3705
  %v3707 = vmul.f32 %v3699, 1.442695
  %v3708 = vpow.pop %v3707
  %v3709 = vmul.f32 %v3700, 1.442695
  %v3710 = vpow.pop %v3709
  %v3711 = vmul.f32 %v3701, 1.442695
  %v3712 = vpow.pop %v3711
  %v3713 = vmul.f32 %v3702, 1.442695
  %v3714 = vpow.pop %v3713
  %v3715 = vadd.f32 %v3704, 1.0
  %v3716 = vadd.f32 %v3706, 1.0
  %v3717 = vadd.f32 %v3708, 1.0
  %v3718 = vadd.f32 %v3710, 1.0
  %v3719 = vadd.f32 %v3712, 1.0
  %v3720 = vadd.f32 %v3714, 1.0
  %v3721 = vrcp.pop %v3715
  %v3722 = vmul.f32 1.0, %v3721
  %v3723 = vrcp.pop %v3716
  %v3724 = vmul.f32 1.0, %v3723
  %v3725 = vrcp.pop %v3717
  %v3726 = vmul.f32 1.0, %v3725
  %v3727 = vrcp.pop %v3718
  %v3728 = vmul.f32 1.0, %v3727
  %v3729 = vrcp.pop %v3719
  %v3730 = vmul.f32 1.0, %v3729
  %v3731 = vrcp.pop %v3720
  %v3732 = vmul.f32 1.0, %v3731
  %3733 = vst [vmem:[#allocation2 + $0x1e0] sm:$0xff] %v3722
  %3734 = vst [vmem:[#allocation2 + $0x1e8] sm:$0xff] %v3724
  %3735 = vst [vmem:[#allocation2 + $0x1f0] sm:$0xff] %v3726
  %3736 = vst [vmem:[#allocation2 + $0x1f8] sm:$0xff] %v3728
  %3737 = vst [vmem:[#allocation2 + $0x200] sm:$0xff] %v3730
  %3738 = vst [vmem:[#allocation2 + $0x208] sm:$0xff] %v3732
  %v3739 = vld [vmem:[%s0 + $0x2c0] sm:$0xff]
  %v3740 = vld [vmem:[%s0 + $0x2c8] sm:$0xff]
  %v3741 = vld [vmem:[%s0 + $0x2d0] sm:$0xff]
  %v3742 = vld [vmem:[%s0 + $0x2d8] sm:$0xff]
  %v3743 = vld [vmem:[%s0 + $0x2e0] sm:$0xff]
  %v3744 = vld [vmem:[%s0 + $0x2e8] sm:$0xff]
  %v3745 = vld [vmem:[%s0 + $0x2f0] sm:$0xff]
  %v3746 = vld [vmem:[%s0 + $0x2f8] sm:$0xff]
  %v3747 = vld [vmem:[%s0 + $0x300] sm:$0xff]
  %v3748 = vld [vmem:[%s0 + $0x308] sm:$0xff]
  %v3749 = vld [vmem:[%s0 + $0x310] sm:$0xff]
  %v3750 = vld [vmem:[%s0 + $0x318] sm:$0xff]
  %v3751 = vld [vmem:[%s0 + $0x320] sm:$0xff]
  %v3752 = vld [vmem:[%s0 + $0x328] sm:$0xff]
  %v3753 = vld [vmem:[%s0 + $0x330] sm:$0xff]
  %v3754 = vld [vmem:[%s0 + $0x338] sm:$0xff]
  %3755 = vmatprep.subr.mxu0 0.0
  %3756 = vmatpush1.msra.mxu0 %v3739
  %3757 = vmatprep.subr.mxu0 0.0
  %3758 = vmatpush1.msra.mxu0 %v3740
  %3759 = vmatprep.subr.mxu0 0.0
  %3760 = vmatpush1.msra.mxu0 %v3741
  %3761 = vmatprep.subr.mxu0 0.0
  %3762 = vmatpush1.msra.mxu0 %v3742
  %3763 = vmatprep.subr.mxu0 0.0
  %3764 = vmatpush1.msra.mxu0 %v3743
  %3765 = vmatprep.subr.mxu0 0.0
  %3766 = vmatpush1.msra.mxu0 %v3744
  %3767 = vmatprep.subr.mxu0 0.0
  %3768 = vmatpush1.msra.mxu0 %v3745
  %3769 = vmatprep.subr.mxu0 0.0
  %3770 = vmatpush1.msra.mxu0 %v3746
  %3771 = vmatprep.subr.mxu0 0.0
  %3772 = vmatpush1.msra.mxu0 %v3747
  %3773 = vmatprep.subr.mxu0 0.0
  %3774 = vmatpush1.msra.mxu0 %v3748
  %3775 = vmatprep.subr.mxu0 0.0
  %3776 = vmatpush1.msra.mxu0 %v3749
  %3777 = vmatprep.subr.mxu0 0.0
  %3778 = vmatpush1.msra.mxu0 %v3750
  %3779 = vmatprep.subr.mxu0 0.0
  %3780 = vmatpush1.msra.mxu0 0.0
  %3781 = vmatprep.subr.mxu0 0.0
  %3782 = vmatpush1.msra.mxu0 0.0
  %3783 = vmatprep.subr.mxu0 0.0
  %3784 = vmatpush1.msra.mxu0 0.0
  %3785 = vmatprep.subr.mxu0 0.0
  %3786 = vmatpush1.msra.mxu0 0.0
  %3787 = vmatprep.subr.mxu0 0.0
  %3788 = vmatpush1.msra.mxu0 0.0
  %3789 = vmatprep.subr.mxu0 0.0
  %3790 = vmatpush1.msra.mxu0 0.0
  %3791 = vmatprep.subr.mxu0 0.0
  %3792 = vmatpush1.msra.mxu0 0.0
  %3793 = vmatprep.subr.mxu0 0.0
  %3794 = vmatpush1.msra.mxu0 0.0
  %3795 = vmatprep.subr.mxu0 0.0
  %3796 = vmatpush1.msra.mxu0 0.0
  %3797 = vmatprep.subr.mxu0 0.0
  %3798 = vmatpush1.msra.mxu0 0.0
  %3799 = vmatprep.subr.mxu0 0.0
  %3800 = vmatpush1.msra.mxu0 0.0
  %3801 = vmatprep.subr.mxu0 0.0
  %3802 = vmatpush1.msra.mxu0 0.0
  %3803 = vmatprep.subr.mxu0 0.0
  %3804 = vmatpush1.msra.mxu0 0.0
  %3805 = vmatprep.subr.mxu0 0.0
  %3806 = vmatpush1.msra.mxu0 0.0
  %3807 = vmatprep.subr.mxu0 0.0
  %3808 = vmatpush1.msra.mxu0 0.0
  %3809 = vmatprep.subr.mxu0 0.0
  %3810 = vmatpush1.msra.mxu0 0.0
  %3811 = vmatprep.subr.mxu0 0.0
  %3812 = vmatpush1.msra.mxu0 0.0
  %3813 = vmatprep.subr.mxu0 0.0
  %3814 = vmatpush1.msra.mxu0 0.0
  %3815 = vmatprep.subr.mxu0 0.0
  %3816 = vmatpush1.msra.mxu0 0.0
  %3817 = vmatprep.subr.mxu0 0.0
  %3818 = vmatpush1.msra.mxu0 0.0
  %3819 = vmatprep.mubr.f32.mxu0 0.0
  %3820 = vmatmul.mubr.f32.gmra.mrb[0].mxu0 %v68
  %v3821 = vpop.f32.mrb[0].mxu0
  %v3822 = vadd.f32 0.0, %v3821
  %v3823 = vpop.f32.mrb[0].mxu0
  %3824 = vmatprep.mubr.f32.mxu0 0.0
  %3825 = vmatmul.mubr.f32.gmra.mrb[0].mxu0 %v71
  %v3826 = vpop.f32.mrb[0].mxu0
  %v3827 = vadd.f32 0.0, %v3826
  %v3828 = vpop.f32.mrb[0].mxu0
  %3829 = vmatprep.mubr.f32.mxu0 0.0
  %3830 = vmatmul.mubr.f32.gmra.mrb[0].mxu0 %v74
  %v3831 = vpop.f32.mrb[0].mxu0
  %v3832 = vadd.f32 0.0, %v3831
  %v3833 = vpop.f32.mrb[0].mxu0
  %3834 = vmatprep.mubr.f32.mxu0 0.0
  %3835 = vmatmul.mubr.f32.gmra.mrb[0].mxu0 %v77
  %v3836 = vpop.f32.mrb[0].mxu0
  %v3837 = vadd.f32 0.0, %v3836
  %v3838 = vpop.f32.mrb[0].mxu0
  %3839 = vmatprep.mubr.f32.mxu0 0.0
  %3840 = vmatmul.mubr.f32.gmra.mrb[0].mxu0 %v80
  %v3841 = vpop.f32.mrb[0].mxu0
  %v3842 = vadd.f32 0.0, %v3841
  %v3843 = vpop.f32.mrb[0].mxu0
  %3844 = vmatprep.mubr.f32.mxu0 0.0
  %3845 = vmatmul.mubr.f32.gmra.mrb[0].mxu0 %v83
  %v3846 = vpop.f32.mrb[0].mxu0
  %v3847 = vadd.f32 0.0, %v3846
  %v3848 = vpop.f32.mrb[0].mxu0
  %3849 = vmatprep.mubr.f32.mxu0 0.0
  %3850 = vmatmul.mubr.f32.gmra.mrb[0].mxu0 %v86
  %v3851 = vpop.f32.mrb[0].mxu0
  %v3852 = vadd.f32 0.0, %v3851
  %v3853 = vpop.f32.mrb[0].mxu0
  %3854 = vmatprep.mubr.f32.mxu0 0.0
  %3855 = vmatmul.mubr.f32.gmra.mrb[0].mxu0 %v89
  %v3856 = vpop.f32.mrb[0].mxu0
  %v3857 = vadd.f32 0.0, %v3856
  %v3858 = vpop.f32.mrb[0].mxu0
  %3859 = vmatprep.mubr.f32.mxu0 0.0
  %3860 = vmatmul.mubr.f32.gmra.mrb[0].mxu0 %v92
  %v3861 = vpop.f32.mrb[0].mxu0
  %v3862 = vadd.f32 0.0, %v3861
  %v3863 = vpop.f32.mrb[0].mxu0
  %3864 = vmatprep.mubr.f32.mxu0 0.0
  %3865 = vmatmul.mubr.f32.gmra.mrb[0].mxu0 %v95
  %v3866 = vpop.f32.mrb[0].mxu0
  %v3867 = vadd.f32 0.0, %v3866
  %v3868 = vpop.f32.mrb[0].mxu0
  %3869 = vmatprep.mubr.f32.mxu0 0.0
  %3870 = vmatmul.mubr.f32.gmra.mrb[0].mxu0 %v98
  %v3871 = vpop.f32.mrb[0].mxu0
  %v3872 = vadd.f32 0.0, %v3871
  %v3873 = vpop.f32.mrb[0].mxu0
  %3874 = vmatprep.mubr.f32.mxu0 0.0
  %3875 = vmatmul.mubr.f32.gmra.mrb[0].mxu0 %v101
  %v3876 = vpop.f32.mrb[0].mxu0
  %v3877 = vadd.f32 0.0, %v3876
  %v3878 = vpop.f32.mrb[0].mxu0
  %3879 = vdwg.mxu0
  %3880 = vmatprep.subr.mxu0 0.0
  %3881 = vmatpush1.msra.mxu0 %v3743
  %3882 = vmatprep.subr.mxu0 0.0
  %3883 = vmatpush1.msra.mxu0 %v3744
  %3884 = vmatprep.subr.mxu0 0.0
  %3885 = vmatpush1.msra.mxu0 %v3745
  %3886 = vmatprep.subr.mxu0 0.0
  %3887 = vmatpush1.msra.mxu0 %v3746
  %3888 = vmatprep.subr.mxu0 0.0
  %3889 = vmatpush1.msra.mxu0 %v3747
  %3890 = vmatprep.subr.mxu0 0.0
  %3891 = vmatpush1.msra.mxu0 %v3748
  %3892 = vmatprep.subr.mxu0 0.0
  %3893 = vmatpush1.msra.mxu0 %v3749
  %3894 = vmatprep.subr.mxu0 0.0
  %3895 = vmatpush1.msra.mxu0 %v3750
  %3896 = vmatprep.subr.mxu0 0.0
  %3897 = vmatpush1.msra.mxu0 %v3751
  %3898 = vmatprep.subr.mxu0 0.0
  %3899 = vmatpush1.msra.mxu0 %v3752
  %3900 = vmatprep.subr.mxu0 0.0
  %3901 = vmatpush1.msra.mxu0 %v3753
  %3902 = vmatprep.subr.mxu0 0.0
  %3903 = vmatpush1.msra.mxu0 %v3754
  %3904 = vmatprep.subr.mxu0 0.0
  %3905 = vmatpush1.msra.mxu0 0.0
  %3906 = vmatprep.subr.mxu0 0.0
  %3907 = vmatpush1.msra.mxu0 0.0
  %3908 = vmatprep.subr.mxu0 0.0
  %3909 = vmatpush1.msra.mxu0 0.0
  %3910 = vmatprep.subr.mxu0 0.0
  %3911 = vmatpush1.msra.mxu0 0.0
  %3912 = vmatprep.subr.mxu0 0.0
  %3913 = vmatpush1.msra.mxu0 0.0
  %3914 = vmatprep.subr.mxu0 0.0
  %3915 = vmatpush1.msra.mxu0 0.0
  %3916 = vmatprep.subr.mxu0 0.0
  %3917 = vmatpush1.msra.mxu0 0.0
  %3918 = vmatprep.subr.mxu0 0.0
  %3919 = vmatpush1.msra.mxu0 0.0
  %3920 = vmatprep.subr.mxu0 0.0
  %3921 = vmatpush1.msra.mxu0 0.0
  %3922 = vmatprep.subr.mxu0 0.0
  %3923 = vmatpush1.msra.mxu0 0.0
  %3924 = vmatprep.subr.mxu0 0.0
  %3925 = vmatpush1.msra.mxu0 0.0
  %3926 = vmatprep.subr.mxu0 0.0
  %3927 = vmatpush1.msra.mxu0 0.0
  %3928 = vmatprep.subr.mxu0 0.0
  %3929 = vmatpush1.msra.mxu0 0.0
  %3930 = vmatprep.subr.mxu0 0.0
  %3931 = vmatpush1.msra.mxu0 0.0
  %3932 = vmatprep.subr.mxu0 0.0
  %3933 = vmatpush1.msra.mxu0 0.0
  %3934 = vmatprep.subr.mxu0 0.0
  %3935 = vmatpush1.msra.mxu0 0.0
  %3936 = vmatprep.subr.mxu0 0.0
  %3937 = vmatpush1.msra.mxu0 0.0
  %3938 = vmatprep.subr.mxu0 0.0
  %3939 = vmatpush1.msra.mxu0 0.0
  %3940 = vmatprep.subr.mxu0 0.0
  %3941 = vmatpush1.msra.mxu0 0.0
  %3942 = vmatprep.subr.mxu0 0.0
  %3943 = vmatpush1.msra.mxu0 0.0
  %3944 = vmatprep.mubr.f32.mxu0 0.0
  %3945 = vmatmul.mubr.f32.gmra.mrb[0].mxu0 %v68
  %v3946 = vpop.f32.mrb[0].mxu0
  %v3947 = vadd.f32 0.0, %v3946
  %v3948 = vpop.f32.mrb[0].mxu0
  %3949 = vmatprep.mubr.f32.mxu0 0.0
  %3950 = vmatmul.mubr.f32.gmra.mrb[0].mxu0 %v71
  %v3951 = vpop.f32.mrb[0].mxu0
  %v3952 = vadd.f32 0.0, %v3951
  %v3953 = vpop.f32.mrb[0].mxu0
  %3954 = vmatprep.mubr.f32.mxu0 0.0
  %3955 = vmatmul.mubr.f32.gmra.mrb[0].mxu0 %v74
  %v3956 = vpop.f32.mrb[0].mxu0
  %v3957 = vadd.f32 0.0, %v3956
  %v3958 = vpop.f32.mrb[0].mxu0
  %3959 = vmatprep.mubr.f32.mxu0 0.0
  %3960 = vmatmul.mubr.f32.gmra.mrb[0].mxu0 %v77
  %v3961 = vpop.f32.mrb[0].mxu0
  %v3962 = vadd.f32 0.0, %v3961
  %v3963 = vpop.f32.mrb[0].mxu0
  %3964 = vmatprep.mubr.f32.mxu0 0.0
  %3965 = vmatmul.mubr.f32.gmra.mrb[0].mxu0 %v80
  %v3966 = vpop.f32.mrb[0].mxu0
  %v3967 = vadd.f32 0.0, %v3966
  %v3968 = vpop.f32.mrb[0].mxu0
  %3969 = vmatprep.mubr.f32.mxu0 0.0
  %3970 = vmatmul.mubr.f32.gmra.mrb[0].mxu0 %v83
  %v3971 = vpop.f32.mrb[0].mxu0
  %v3972 = vadd.f32 0.0, %v3971
  %v3973 = vpop.f32.mrb[0].mxu0
  %3974 = vmatprep.mubr.f32.mxu0 0.0
  %3975 = vmatmul.mubr.f32.gmra.mrb[0].mxu0 %v86
  %v3976 = vpop.f32.mrb[0].mxu0
  %v3977 = vadd.f32 0.0, %v3976
  %v3978 = vpop.f32.mrb[0].mxu0
  %3979 = vmatprep.mubr.f32.mxu0 0.0
  %3980 = vmatmul.mubr.f32.gmra.mrb[0].mxu0 %v89
  %v3981 = vpop.f32.mrb[0].mxu0
  %v3982 = vadd.f32 0.0, %v3981
  %v3983 = vpop.f32.mrb[0].mxu0
  %3984 = vmatprep.mubr.f32.mxu0 0.0
  %3985 = vmatmul.mubr.f32.gmra.mrb[0].mxu0 %v92
  %v3986 = vpop.f32.mrb[0].mxu0
  %v3987 = vadd.f32 0.0, %v3986
  %v3988 = vpop.f32.mrb[0].mxu0
  %3989 = vmatprep.mubr.f32.mxu0 0.0
  %3990 = vmatmul.mubr.f32.gmra.mrb[0].mxu0 %v95
  %v3991 = vpop.f32.mrb[0].mxu0
  %v3992 = vadd.f32 0.0, %v3991
  %v3993 = vpop.f32.mrb[0].mxu0
  %3994 = vmatprep.mubr.f32.mxu0 0.0
  %3995 = vmatmul.mubr.f32.gmra.mrb[0].mxu0 %v98
  %v3996 = vpop.f32.mrb[0].mxu0
  %v3997 = vadd.f32 0.0, %v3996
  %v3998 = vpop.f32.mrb[0].mxu0
  %3999 = vmatprep.mubr.f32.mxu0 0.0
  %4000 = vmatmul.mubr.f32.gmra.mrb[0].mxu0 %v101
  %v4001 = vpop.f32.mrb[0].mxu0
  %v4002 = vadd.f32 0.0, %v4001
  %v4003 = vpop.f32.mrb[0].mxu0
  %4004 = vdwg.mxu0
  %v4005 = vmax.f32 %v3822, %v3947
  %v4006 = vmax.f32 %v3827, %v3952
  %v4007 = vmax.f32 %v3832, %v3957
  %v4008 = vmax.f32 %v3837, %v3962
  %v4009 = vmax.f32 %v3842, %v3967
  %v4010 = vmax.f32 %v3847, %v3972
  %v4011 = vmax.f32 %v3852, %v3977
  %v4012 = vmax.f32 %v3857, %v3982
  %v4013 = vmax.f32 %v3862, %v3987
  %v4014 = vmax.f32 %v3867, %v3992
  %v4015 = vmax.f32 %v3872, %v3997
  %v4016 = vmax.f32 %v3877, %v4002
  %v4017 = vmax.f32 %v4005, %v4011
  %v4018 = vmax.f32 %v4006, %v4012
  %v4019 = vmax.f32 %v4007, %v4013
  %v4020 = vmax.f32 %v4008, %v4014
  %v4021 = vmax.f32 %v4009, %v4015
  %v4022 = vmax.f32 %v4010, %v4016
  %v4023 = vadd.f32 %v4017, %v44
  %v4024 = vadd.f32 %v4018, %v45
  %v4025 = vadd.f32 %v4019, %v46
  %v4026 = vadd.f32 %v4020, %v47
  %v4027 = vadd.f32 %v4021, %v48
  %v4028 = vadd.f32 %v4022, %v49
  %v4029 = vxor.u32 %v4023, 2147483648
  %v4030 = vxor.u32 %v4024, 2147483648
  %v4031 = vxor.u32 %v4025, 2147483648
  %v4032 = vxor.u32 %v4026, 2147483648
  %v4033 = vxor.u32 %v4027, 2147483648
  %v4034 = vxor.u32 %v4028, 2147483648
  %v4035 = vmul.f32 %v4029, 1.442695
  %v4036 = vpow.pop %v4035
  %v4037 = vmul.f32 %v4030, 1.442695
  %v4038 = vpow.pop %v4037
  %v4039 = vmul.f32 %v4031, 1.442695
  %v4040 = vpow.pop %v4039
  %v4041 = vmul.f32 %v4032, 1.442695
  %v4042 = vpow.pop %v4041
  %v4043 = vmul.f32 %v4033, 1.442695
  %v4044 = vpow.pop %v4043
  %v4045 = vmul.f32 %v4034, 1.442695
  %v4046 = vpow.pop %v4045
  %v4047 = vadd.f32 %v4036, 1.0
  %v4048 = vadd.f32 %v4038, 1.0
  %v4049 = vadd.f32 %v4040, 1.0
  %v4050 = vadd.f32 %v4042, 1.0
  %v4051 = vadd.f32 %v4044, 1.0
  %v4052 = vadd.f32 %v4046, 1.0
  %v4053 = vrcp.pop %v4047
  %v4054 = vmul.f32 1.0, %v4053
  %v4055 = vrcp.pop %v4048
  %v4056 = vmul.f32 1.0, %v4055
  %v4057 = vrcp.pop %v4049
  %v4058 = vmul.f32 1.0, %v4057
  %v4059 = vrcp.pop %v4050
  %v4060 = vmul.f32 1.0, %v4059
  %v4061 = vrcp.pop %v4051
  %v4062 = vmul.f32 1.0, %v4061
  %v4063 = vrcp.pop %v4052
  %v4064 = vmul.f32 1.0, %v4063
  %4065 = vst [vmem:[#allocation2 + $0x210] sm:$0xff] %v4054
  %4066 = vst [vmem:[#allocation2 + $0x218] sm:$0xff] %v4056
  %4067 = vst [vmem:[#allocation2 + $0x220] sm:$0xff] %v4058
  %4068 = vst [vmem:[#allocation2 + $0x228] sm:$0xff] %v4060
  %4069 = vst [vmem:[#allocation2 + $0x230] sm:$0xff] %v4062
  %4070 = vst [vmem:[#allocation2 + $0x238] sm:$0xff] %v4064
  %v4071 = vld [vmem:[%s0 + $0x300] sm:$0xff]
  %v4072 = vld [vmem:[%s0 + $0x308] sm:$0xff]
  %v4073 = vld [vmem:[%s0 + $0x310] sm:$0xff]
  %v4074 = vld [vmem:[%s0 + $0x318] sm:$0xff]
  %v4075 = vld [vmem:[%s0 + $0x320] sm:$0xff]
  %v4076 = vld [vmem:[%s0 + $0x328] sm:$0xff]
  %v4077 = vld [vmem:[%s0 + $0x330] sm:$0xff]
  %v4078 = vld [vmem:[%s0 + $0x338] sm:$0xff]
  %v4079 = vld [vmem:[%s0 + $0x340] sm:$0xff]
  %v4080 = vld [vmem:[%s0 + $0x348] sm:$0xff]
  %v4081 = vld [vmem:[%s0 + $0x350] sm:$0xff]
  %v4082 = vld [vmem:[%s0 + $0x358] sm:$0xff]
  %v4083 = vld [vmem:[%s0 + $0x360] sm:$0xff]
  %v4084 = vld [vmem:[%s0 + $0x368] sm:$0xff]
  %v4085 = vld [vmem:[%s0 + $0x370] sm:$0xff]
  %v4086 = vld [vmem:[%s0 + $0x378] sm:$0xff]
  %4087 = vmatprep.subr.mxu0 0.0
  %4088 = vmatpush1.msra.mxu0 %v4071
  %4089 = vmatprep.subr.mxu0 0.0
  %4090 = vmatpush1.msra.mxu0 %v4072
  %4091 = vmatprep.subr.mxu0 0.0
  %4092 = vmatpush1.msra.mxu0 %v4073
  %4093 = vmatprep.subr.mxu0 0.0
  %4094 = vmatpush1.msra.mxu0 %v4074
  %4095 = vmatprep.subr.mxu0 0.0
  %4096 = vmatpush1.msra.mxu0 %v4075
  %4097 = vmatprep.subr.mxu0 0.0
  %4098 = vmatpush1.msra.mxu0 %v4076
  %4099 = vmatprep.subr.mxu0 0.0
  %4100 = vmatpush1.msra.mxu0 %v4077
  %4101 = vmatprep.subr.mxu0 0.0
  %4102 = vmatpush1.msra.mxu0 %v4078
  %4103 = vmatprep.subr.mxu0 0.0
  %4104 = vmatpush1.msra.mxu0 %v4079
  %4105 = vmatprep.subr.mxu0 0.0
  %4106 = vmatpush1.msra.mxu0 %v4080
  %4107 = vmatprep.subr.mxu0 0.0
  %4108 = vmatpush1.msra.mxu0 %v4081
  %4109 = vmatprep.subr.mxu0 0.0
  %4110 = vmatpush1.msra.mxu0 %v4082
  %4111 = vmatprep.subr.mxu0 0.0
  %4112 = vmatpush1.msra.mxu0 0.0
  %4113 = vmatprep.subr.mxu0 0.0
  %4114 = vmatpush1.msra.mxu0 0.0
  %4115 = vmatprep.subr.mxu0 0.0
  %4116 = vmatpush1.msra.mxu0 0.0
  %4117 = vmatprep.subr.mxu0 0.0
  %4118 = vmatpush1.msra.mxu0 0.0
  %4119 = vmatprep.subr.mxu0 0.0
  %4120 = vmatpush1.msra.mxu0 0.0
  %4121 = vmatprep.subr.mxu0 0.0
  %4122 = vmatpush1.msra.mxu0 0.0
  %4123 = vmatprep.subr.mxu0 0.0
  %4124 = vmatpush1.msra.mxu0 0.0
  %4125 = vmatprep.subr.mxu0 0.0
  %4126 = vmatpush1.msra.mxu0 0.0
  %4127 = vmatprep.subr.mxu0 0.0
  %4128 = vmatpush1.msra.mxu0 0.0
  %4129 = vmatprep.subr.mxu0 0.0
  %4130 = vmatpush1.msra.mxu0 0.0
  %4131 = vmatprep.subr.mxu0 0.0
  %4132 = vmatpush1.msra.mxu0 0.0
  %4133 = vmatprep.subr.mxu0 0.0
  %4134 = vmatpush1.msra.mxu0 0.0
  %4135 = vmatprep.subr.mxu0 0.0
  %4136 = vmatpush1.msra.mxu0 0.0
  %4137 = vmatprep.subr.mxu0 0.0
  %4138 = vmatpush1.msra.mxu0 0.0
  %4139 = vmatprep.subr.mxu0 0.0
  %4140 = vmatpush1.msra.mxu0 0.0
  %4141 = vmatprep.subr.mxu0 0.0
  %4142 = vmatpush1.msra.mxu0 0.0
  %4143 = vmatprep.subr.mxu0 0.0
  %4144 = vmatpush1.msra.mxu0 0.0
  %4145 = vmatprep.subr.mxu0 0.0
  %4146 = vmatpush1.msra.mxu0 0.0
  %4147 = vmatprep.subr.mxu0 0.0
  %4148 = vmatpush1.msra.mxu0 0.0
  %4149 = vmatprep.subr.mxu0 0.0
  %4150 = vmatpush1.msra.mxu0 0.0
  %4151 = vmatprep.mubr.f32.mxu0 0.0
  %4152 = vmatmul.mubr.f32.gmra.mrb[0].mxu0 %v68
  %v4153 = vpop.f32.mrb[0].mxu0
  %v4154 = vadd.f32 0.0, %v4153
  %v4155 = vpop.f32.mrb[0].mxu0
  %4156 = vmatprep.mubr.f32.mxu0 0.0
  %4157 = vmatmul.mubr.f32.gmra.mrb[0].mxu0 %v71
  %v4158 = vpop.f32.mrb[0].mxu0
  %v4159 = vadd.f32 0.0, %v4158
  %v4160 = vpop.f32.mrb[0].mxu0
  %4161 = vmatprep.mubr.f32.mxu0 0.0
  %4162 = vmatmul.mubr.f32.gmra.mrb[0].mxu0 %v74
  %v4163 = vpop.f32.mrb[0].mxu0
  %v4164 = vadd.f32 0.0, %v4163
  %v4165 = vpop.f32.mrb[0].mxu0
  %4166 = vmatprep.mubr.f32.mxu0 0.0
  %4167 = vmatmul.mubr.f32.gmra.mrb[0].mxu0 %v77
  %v4168 = vpop.f32.mrb[0].mxu0
  %v4169 = vadd.f32 0.0, %v4168
  %v4170 = vpop.f32.mrb[0].mxu0
  %4171 = vmatprep.mubr.f32.mxu0 0.0
  %4172 = vmatmul.mubr.f32.gmra.mrb[0].mxu0 %v80
  %v4173 = vpop.f32.mrb[0].mxu0
  %v4174 = vadd.f32 0.0, %v4173
  %v4175 = vpop.f32.mrb[0].mxu0
  %4176 = vmatprep.mubr.f32.mxu0 0.0
  %4177 = vmatmul.mubr.f32.gmra.mrb[0].mxu0 %v83
  %v4178 = vpop.f32.mrb[0].mxu0
  %v4179 = vadd.f32 0.0, %v4178
  %v4180 = vpop.f32.mrb[0].mxu0
  %4181 = vmatprep.mubr.f32.mxu0 0.0
  %4182 = vmatmul.mubr.f32.gmra.mrb[0].mxu0 %v86
  %v4183 = vpop.f32.mrb[0].mxu0
  %v4184 = vadd.f32 0.0, %v4183
  %v4185 = vpop.f32.mrb[0].mxu0
  %4186 = vmatprep.mubr.f32.mxu0 0.0
  %4187 = vmatmul.mubr.f32.gmra.mrb[0].mxu0 %v89
  %v4188 = vpop.f32.mrb[0].mxu0
  %v4189 = vadd.f32 0.0, %v4188
  %v4190 = vpop.f32.mrb[0].mxu0
  %4191 = vmatprep.mubr.f32.mxu0 0.0
  %4192 = vmatmul.mubr.f32.gmra.mrb[0].mxu0 %v92
  %v4193 = vpop.f32.mrb[0].mxu0
  %v4194 = vadd.f32 0.0, %v4193
  %v4195 = vpop.f32.mrb[0].mxu0
  %4196 = vmatprep.mubr.f32.mxu0 0.0
  %4197 = vmatmul.mubr.f32.gmra.mrb[0].mxu0 %v95
  %v4198 = vpop.f32.mrb[0].mxu0
  %v4199 = vadd.f32 0.0, %v4198
  %v4200 = vpop.f32.mrb[0].mxu0
  %4201 = vmatprep.mubr.f32.mxu0 0.0
  %4202 = vmatmul.mubr.f32.gmra.mrb[0].mxu0 %v98
  %v4203 = vpop.f32.mrb[0].mxu0
  %v4204 = vadd.f32 0.0, %v4203
  %v4205 = vpop.f32.mrb[0].mxu0
  %4206 = vmatprep.mubr.f32.mxu0 0.0
  %4207 = vmatmul.mubr.f32.gmra.mrb[0].mxu0 %v101
  %v4208 = vpop.f32.mrb[0].mxu0
  %v4209 = vadd.f32 0.0, %v4208
  %v4210 = vpop.f32.mrb[0].mxu0
  %4211 = vdwg.mxu0
  %4212 = vmatprep.subr.mxu0 0.0
  %4213 = vmatpush1.msra.mxu0 %v4075
  %4214 = vmatprep.subr.mxu0 0.0
  %4215 = vmatpush1.msra.mxu0 %v4076
  %4216 = vmatprep.subr.mxu0 0.0
  %4217 = vmatpush1.msra.mxu0 %v4077
  %4218 = vmatprep.subr.mxu0 0.0
  %4219 = vmatpush1.msra.mxu0 %v4078
  %4220 = vmatprep.subr.mxu0 0.0
  %4221 = vmatpush1.msra.mxu0 %v4079
  %4222 = vmatprep.subr.mxu0 0.0
  %4223 = vmatpush1.msra.mxu0 %v4080
  %4224 = vmatprep.subr.mxu0 0.0
  %4225 = vmatpush1.msra.mxu0 %v4081
  %4226 = vmatprep.subr.mxu0 0.0
  %4227 = vmatpush1.msra.mxu0 %v4082
  %4228 = vmatprep.subr.mxu0 0.0
  %4229 = vmatpush1.msra.mxu0 %v4083
  %4230 = vmatprep.subr.mxu0 0.0
  %4231 = vmatpush1.msra.mxu0 %v4084
  %4232 = vmatprep.subr.mxu0 0.0
  %4233 = vmatpush1.msra.mxu0 %v4085
  %4234 = vmatprep.subr.mxu0 0.0
  %4235 = vmatpush1.msra.mxu0 %v4086
  %4236 = vmatprep.subr.mxu0 0.0
  %4237 = vmatpush1.msra.mxu0 0.0
  %4238 = vmatprep.subr.mxu0 0.0
  %4239 = vmatpush1.msra.mxu0 0.0
  %4240 = vmatprep.subr.mxu0 0.0
  %4241 = vmatpush1.msra.mxu0 0.0
  %4242 = vmatprep.subr.mxu0 0.0
  %4243 = vmatpush1.msra.mxu0 0.0
  %4244 = vmatprep.subr.mxu0 0.0
  %4245 = vmatpush1.msra.mxu0 0.0
  %4246 = vmatprep.subr.mxu0 0.0
  %4247 = vmatpush1.msra.mxu0 0.0
  %4248 = vmatprep.subr.mxu0 0.0
  %4249 = vmatpush1.msra.mxu0 0.0
  %4250 = vmatprep.subr.mxu0 0.0
  %4251 = vmatpush1.msra.mxu0 0.0
  %4252 = vmatprep.subr.mxu0 0.0
  %4253 = vmatpush1.msra.mxu0 0.0
  %4254 = vmatprep.subr.mxu0 0.0
  %4255 = vmatpush1.msra.mxu0 0.0
  %4256 = vmatprep.subr.mxu0 0.0
  %4257 = vmatpush1.msra.mxu0 0.0
  %4258 = vmatprep.subr.mxu0 0.0
  %4259 = vmatpush1.msra.mxu0 0.0
  %4260 = vmatprep.subr.mxu0 0.0
  %4261 = vmatpush1.msra.mxu0 0.0
  %4262 = vmatprep.subr.mxu0 0.0
  %4263 = vmatpush1.msra.mxu0 0.0
  %4264 = vmatprep.subr.mxu0 0.0
  %4265 = vmatpush1.msra.mxu0 0.0
  %4266 = vmatprep.subr.mxu0 0.0
  %4267 = vmatpush1.msra.mxu0 0.0
  %4268 = vmatprep.subr.mxu0 0.0
  %4269 = vmatpush1.msra.mxu0 0.0
  %4270 = vmatprep.subr.mxu0 0.0
  %4271 = vmatpush1.msra.mxu0 0.0
  %4272 = vmatprep.subr.mxu0 0.0
  %4273 = vmatpush1.msra.mxu0 0.0
  %4274 = vmatprep.subr.mxu0 0.0
  %4275 = vmatpush1.msra.mxu0 0.0
  %4276 = vmatprep.mubr.f32.mxu0 0.0
  %4277 = vmatmul.mubr.f32.gmra.mrb[0].mxu0 %v68
  %v4278 = vpop.f32.mrb[0].mxu0
  %v4279 = vadd.f32 0.0, %v4278
  %v4280 = vpop.f32.mrb[0].mxu0
  %4281 = vmatprep.mubr.f32.mxu0 0.0
  %4282 = vmatmul.mubr.f32.gmra.mrb[0].mxu0 %v71
  %v4283 = vpop.f32.mrb[0].mxu0
  %v4284 = vadd.f32 0.0, %v4283
  %v4285 = vpop.f32.mrb[0].mxu0
  %4286 = vmatprep.mubr.f32.mxu0 0.0
  %4287 = vmatmul.mubr.f32.gmra.mrb[0].mxu0 %v74
  %v4288 = vpop.f32.mrb[0].mxu0
  %v4289 = vadd.f32 0.0, %v4288
  %v4290 = vpop.f32.mrb[0].mxu0
  %4291 = vmatprep.mubr.f32.mxu0 0.0
  %4292 = vmatmul.mubr.f32.gmra.mrb[0].mxu0 %v77
  %v4293 = vpop.f32.mrb[0].mxu0
  %v4294 = vadd.f32 0.0, %v4293
  %v4295 = vpop.f32.mrb[0].mxu0
  %4296 = vmatprep.mubr.f32.mxu0 0.0
  %4297 = vmatmul.mubr.f32.gmra.mrb[0].mxu0 %v80
  %v4298 = vpop.f32.mrb[0].mxu0
  %v4299 = vadd.f32 0.0, %v4298
  %v4300 = vpop.f32.mrb[0].mxu0
  %4301 = vmatprep.mubr.f32.mxu0 0.0
  %4302 = vmatmul.mubr.f32.gmra.mrb[0].mxu0 %v83
  %v4303 = vpop.f32.mrb[0].mxu0
  %v4304 = vadd.f32 0.0, %v4303
  %v4305 = vpop.f32.mrb[0].mxu0
  %4306 = vmatprep.mubr.f32.mxu0 0.0
  %4307 = vmatmul.mubr.f32.gmra.mrb[0].mxu0 %v86
  %v4308 = vpop.f32.mrb[0].mxu0
  %v4309 = vadd.f32 0.0, %v4308
  %v4310 = vpop.f32.mrb[0].mxu0
  %4311 = vmatprep.mubr.f32.mxu0 0.0
  %4312 = vmatmul.mubr.f32.gmra.mrb[0].mxu0 %v89
  %v4313 = vpop.f32.mrb[0].mxu0
  %v4314 = vadd.f32 0.0, %v4313
  %v4315 = vpop.f32.mrb[0].mxu0
  %4316 = vmatprep.mubr.f32.mxu0 0.0
  %4317 = vmatmul.mubr.f32.gmra.mrb[0].mxu0 %v92
  %v4318 = vpop.f32.mrb[0].mxu0
  %v4319 = vadd.f32 0.0, %v4318
  %v4320 = vpop.f32.mrb[0].mxu0
  %4321 = vmatprep.mubr.f32.mxu0 0.0
  %4322 = vmatmul.mubr.f32.gmra.mrb[0].mxu0 %v95
  %v4323 = vpop.f32.mrb[0].mxu0
  %v4324 = vadd.f32 0.0, %v4323
  %v4325 = vpop.f32.mrb[0].mxu0
  %4326 = vmatprep.mubr.f32.mxu0 0.0
  %4327 = vmatmul.mubr.f32.gmra.mrb[0].mxu0 %v98
  %v4328 = vpop.f32.mrb[0].mxu0
  %v4329 = vadd.f32 0.0, %v4328
  %v4330 = vpop.f32.mrb[0].mxu0
  %4331 = vmatprep.mubr.f32.mxu0 0.0
  %4332 = vmatmul.mubr.f32.gmra.mrb[0].mxu0 %v101
  %v4333 = vpop.f32.mrb[0].mxu0
  %v4334 = vadd.f32 0.0, %v4333
  %v4335 = vpop.f32.mrb[0].mxu0
  %4336 = vdwg.mxu0
  %v4337 = vmax.f32 %v4154, %v4279
  %v4338 = vmax.f32 %v4159, %v4284
  %v4339 = vmax.f32 %v4164, %v4289
  %v4340 = vmax.f32 %v4169, %v4294
  %v4341 = vmax.f32 %v4174, %v4299
  %v4342 = vmax.f32 %v4179, %v4304
  %v4343 = vmax.f32 %v4184, %v4309
  %v4344 = vmax.f32 %v4189, %v4314
  %v4345 = vmax.f32 %v4194, %v4319
  %v4346 = vmax.f32 %v4199, %v4324
  %v4347 = vmax.f32 %v4204, %v4329
  %v4348 = vmax.f32 %v4209, %v4334
  %v4349 = vmax.f32 %v4337, %v4343
  %v4350 = vmax.f32 %v4338, %v4344
  %v4351 = vmax.f32 %v4339, %v4345
  %v4352 = vmax.f32 %v4340, %v4346
  %v4353 = vmax.f32 %v4341, %v4347
  %v4354 = vmax.f32 %v4342, %v4348
  %v4355 = vadd.f32 %v4349, %v44
  %v4356 = vadd.f32 %v4350, %v45
  %v4357 = vadd.f32 %v4351, %v46
  %v4358 = vadd.f32 %v4352, %v47
  %v4359 = vadd.f32 %v4353, %v48
  %v4360 = vadd.f32 %v4354, %v49
  %v4361 = vxor.u32 %v4355, 2147483648
  %v4362 = vxor.u32 %v4356, 2147483648
  %v4363 = vxor.u32 %v4357, 2147483648
  %v4364 = vxor.u32 %v4358, 2147483648
  %v4365 = vxor.u32 %v4359, 2147483648
  %v4366 = vxor.u32 %v4360, 2147483648
  %v4367 = vmul.f32 %v4361, 1.442695
  %v4368 = vpow.pop %v4367
  %v4369 = vmul.f32 %v4362, 1.442695
  %v4370 = vpow.pop %v4369
  %v4371 = vmul.f32 %v4363, 1.442695
  %v4372 = vpow.pop %v4371
  %v4373 = vmul.f32 %v4364, 1.442695
  %v4374 = vpow.pop %v4373
  %v4375 = vmul.f32 %v4365, 1.442695
  %v4376 = vpow.pop %v4375
  %v4377 = vmul.f32 %v4366, 1.442695
  %v4378 = vpow.pop %v4377
  %v4379 = vadd.f32 %v4368, 1.0
  %v4380 = vadd.f32 %v4370, 1.0
  %v4381 = vadd.f32 %v4372, 1.0
  %v4382 = vadd.f32 %v4374, 1.0
  %v4383 = vadd.f32 %v4376, 1.0
  %v4384 = vadd.f32 %v4378, 1.0
  %v4385 = vrcp.pop %v4379
  %v4386 = vmul.f32 1.0, %v4385
  %v4387 = vrcp.pop %v4380
  %v4388 = vmul.f32 1.0, %v4387
  %v4389 = vrcp.pop %v4381
  %v4390 = vmul.f32 1.0, %v4389
  %v4391 = vrcp.pop %v4382
  %v4392 = vmul.f32 1.0, %v4391
  %v4393 = vrcp.pop %v4383
  %v4394 = vmul.f32 1.0, %v4393
  %v4395 = vrcp.pop %v4384
  %v4396 = vmul.f32 1.0, %v4395
  %4397 = vst [vmem:[#allocation2 + $0x240] sm:$0xff] %v4386
  %4398 = vst [vmem:[#allocation2 + $0x248] sm:$0xff] %v4388
  %4399 = vst [vmem:[#allocation2 + $0x250] sm:$0xff] %v4390
  %4400 = vst [vmem:[#allocation2 + $0x258] sm:$0xff] %v4392
  %4401 = vst [vmem:[#allocation2 + $0x260] sm:$0xff] %v4394
  %4402 = vst [vmem:[#allocation2 + $0x268] sm:$0xff] %v4396
  %v4403 = vld [vmem:[%s0 + $0x340] sm:$0xff]
  %v4404 = vld [vmem:[%s0 + $0x348] sm:$0xff]
  %v4405 = vld [vmem:[%s0 + $0x350] sm:$0xff]
  %v4406 = vld [vmem:[%s0 + $0x358] sm:$0xff]
  %v4407 = vld [vmem:[%s0 + $0x360] sm:$0xff]
  %v4408 = vld [vmem:[%s0 + $0x368] sm:$0xff]
  %v4409 = vld [vmem:[%s0 + $0x370] sm:$0xff]
  %v4410 = vld [vmem:[%s0 + $0x378] sm:$0xff]
  %v4411 = vld [vmem:[%s0 + $0x380] sm:$0xff]
  %v4412 = vld [vmem:[%s0 + $0x388] sm:$0xff]
  %v4413 = vld [vmem:[%s0 + $0x390] sm:$0xff]
  %v4414 = vld [vmem:[%s0 + $0x398] sm:$0xff]
  %v4415 = vld [vmem:[%s0 + $0x3a0] sm:$0xff]
  %v4416 = vld [vmem:[%s0 + $0x3a8] sm:$0xff]
  %v4417 = vld [vmem:[%s0 + $0x3b0] sm:$0xff]
  %v4418 = vld [vmem:[%s0 + $0x3b8] sm:$0xff]
  %4419 = vmatprep.subr.mxu0 0.0
  %4420 = vmatpush1.msra.mxu0 %v4403
  %4421 = vmatprep.subr.mxu0 0.0
  %4422 = vmatpush1.msra.mxu0 %v4404
  %4423 = vmatprep.subr.mxu0 0.0
  %4424 = vmatpush1.msra.mxu0 %v4405
  %4425 = vmatprep.subr.mxu0 0.0
  %4426 = vmatpush1.msra.mxu0 %v4406
  %4427 = vmatprep.subr.mxu0 0.0
  %4428 = vmatpush1.msra.mxu0 %v4407
  %4429 = vmatprep.subr.mxu0 0.0
  %4430 = vmatpush1.msra.mxu0 %v4408
  %4431 = vmatprep.subr.mxu0 0.0
  %4432 = vmatpush1.msra.mxu0 %v4409
  %4433 = vmatprep.subr.mxu0 0.0
  %4434 = vmatpush1.msra.mxu0 %v4410
  %4435 = vmatprep.subr.mxu0 0.0
  %4436 = vmatpush1.msra.mxu0 %v4411
  %4437 = vmatprep.subr.mxu0 0.0
  %4438 = vmatpush1.msra.mxu0 %v4412
  %4439 = vmatprep.subr.mxu0 0.0
  %4440 = vmatpush1.msra.mxu0 %v4413
  %4441 = vmatprep.subr.mxu0 0.0
  %4442 = vmatpush1.msra.mxu0 %v4414
  %4443 = vmatprep.subr.mxu0 0.0
  %4444 = vmatpush1.msra.mxu0 0.0
  %4445 = vmatprep.subr.mxu0 0.0
  %4446 = vmatpush1.msra.mxu0 0.0
  %4447 = vmatprep.subr.mxu0 0.0
  %4448 = vmatpush1.msra.mxu0 0.0
  %4449 = vmatprep.subr.mxu0 0.0
  %4450 = vmatpush1.msra.mxu0 0.0
  %4451 = vmatprep.subr.mxu0 0.0
  %4452 = vmatpush1.msra.mxu0 0.0
  %4453 = vmatprep.subr.mxu0 0.0
  %4454 = vmatpush1.msra.mxu0 0.0
  %4455 = vmatprep.subr.mxu0 0.0
  %4456 = vmatpush1.msra.mxu0 0.0
  %4457 = vmatprep.subr.mxu0 0.0
  %4458 = vmatpush1.msra.mxu0 0.0
  %4459 = vmatprep.subr.mxu0 0.0
  %4460 = vmatpush1.msra.mxu0 0.0
  %4461 = vmatprep.subr.mxu0 0.0
  %4462 = vmatpush1.msra.mxu0 0.0
  %4463 = vmatprep.subr.mxu0 0.0
  %4464 = vmatpush1.msra.mxu0 0.0
  %4465 = vmatprep.subr.mxu0 0.0
  %4466 = vmatpush1.msra.mxu0 0.0
  %4467 = vmatprep.subr.mxu0 0.0
  %4468 = vmatpush1.msra.mxu0 0.0
  %4469 = vmatprep.subr.mxu0 0.0
  %4470 = vmatpush1.msra.mxu0 0.0
  %4471 = vmatprep.subr.mxu0 0.0
  %4472 = vmatpush1.msra.mxu0 0.0
  %4473 = vmatprep.subr.mxu0 0.0
  %4474 = vmatpush1.msra.mxu0 0.0
  %4475 = vmatprep.subr.mxu0 0.0
  %4476 = vmatpush1.msra.mxu0 0.0
  %4477 = vmatprep.subr.mxu0 0.0
  %4478 = vmatpush1.msra.mxu0 0.0
  %4479 = vmatprep.subr.mxu0 0.0
  %4480 = vmatpush1.msra.mxu0 0.0
  %4481 = vmatprep.subr.mxu0 0.0
  %4482 = vmatpush1.msra.mxu0 0.0
  %4483 = vmatprep.mubr.f32.mxu0 0.0
  %4484 = vmatmul.mubr.f32.gmra.mrb[0].mxu0 %v68
  %v4485 = vpop.f32.mrb[0].mxu0
  %v4486 = vadd.f32 0.0, %v4485
  %v4487 = vpop.f32.mrb[0].mxu0
  %4488 = vmatprep.mubr.f32.mxu0 0.0
  %4489 = vmatmul.mubr.f32.gmra.mrb[0].mxu0 %v71
  %v4490 = vpop.f32.mrb[0].mxu0
  %v4491 = vadd.f32 0.0, %v4490
  %v4492 = vpop.f32.mrb[0].mxu0
  %4493 = vmatprep.mubr.f32.mxu0 0.0
  %4494 = vmatmul.mubr.f32.gmra.mrb[0].mxu0 %v74
  %v4495 = vpop.f32.mrb[0].mxu0
  %v4496 = vadd.f32 0.0, %v4495
  %v4497 = vpop.f32.mrb[0].mxu0
  %4498 = vmatprep.mubr.f32.mxu0 0.0
  %4499 = vmatmul.mubr.f32.gmra.mrb[0].mxu0 %v77
  %v4500 = vpop.f32.mrb[0].mxu0
  %v4501 = vadd.f32 0.0, %v4500
  %v4502 = vpop.f32.mrb[0].mxu0
  %4503 = vmatprep.mubr.f32.mxu0 0.0
  %4504 = vmatmul.mubr.f32.gmra.mrb[0].mxu0 %v80
  %v4505 = vpop.f32.mrb[0].mxu0
  %v4506 = vadd.f32 0.0, %v4505
  %v4507 = vpop.f32.mrb[0].mxu0
  %4508 = vmatprep.mubr.f32.mxu0 0.0
  %4509 = vmatmul.mubr.f32.gmra.mrb[0].mxu0 %v83
  %v4510 = vpop.f32.mrb[0].mxu0
  %v4511 = vadd.f32 0.0, %v4510
  %v4512 = vpop.f32.mrb[0].mxu0
  %4513 = vmatprep.mubr.f32.mxu0 0.0
  %4514 = vmatmul.mubr.f32.gmra.mrb[0].mxu0 %v86
  %v4515 = vpop.f32.mrb[0].mxu0
  %v4516 = vadd.f32 0.0, %v4515
  %v4517 = vpop.f32.mrb[0].mxu0
  %4518 = vmatprep.mubr.f32.mxu0 0.0
  %4519 = vmatmul.mubr.f32.gmra.mrb[0].mxu0 %v89
  %v4520 = vpop.f32.mrb[0].mxu0
  %v4521 = vadd.f32 0.0, %v4520
  %v4522 = vpop.f32.mrb[0].mxu0
  %4523 = vmatprep.mubr.f32.mxu0 0.0
  %4524 = vmatmul.mubr.f32.gmra.mrb[0].mxu0 %v92
  %v4525 = vpop.f32.mrb[0].mxu0
  %v4526 = vadd.f32 0.0, %v4525
  %v4527 = vpop.f32.mrb[0].mxu0
  %4528 = vmatprep.mubr.f32.mxu0 0.0
  %4529 = vmatmul.mubr.f32.gmra.mrb[0].mxu0 %v95
  %v4530 = vpop.f32.mrb[0].mxu0
  %v4531 = vadd.f32 0.0, %v4530
  %v4532 = vpop.f32.mrb[0].mxu0
  %4533 = vmatprep.mubr.f32.mxu0 0.0
  %4534 = vmatmul.mubr.f32.gmra.mrb[0].mxu0 %v98
  %v4535 = vpop.f32.mrb[0].mxu0
  %v4536 = vadd.f32 0.0, %v4535
  %v4537 = vpop.f32.mrb[0].mxu0
  %4538 = vmatprep.mubr.f32.mxu0 0.0
  %4539 = vmatmul.mubr.f32.gmra.mrb[0].mxu0 %v101
  %v4540 = vpop.f32.mrb[0].mxu0
  %v4541 = vadd.f32 0.0, %v4540
  %v4542 = vpop.f32.mrb[0].mxu0
  %4543 = vdwg.mxu0
  %4544 = vmatprep.subr.mxu0 0.0
  %4545 = vmatpush1.msra.mxu0 %v4407
  %4546 = vmatprep.subr.mxu0 0.0
  %4547 = vmatpush1.msra.mxu0 %v4408
  %4548 = vmatprep.subr.mxu0 0.0
  %4549 = vmatpush1.msra.mxu0 %v4409
  %4550 = vmatprep.subr.mxu0 0.0
  %4551 = vmatpush1.msra.mxu0 %v4410
  %4552 = vmatprep.subr.mxu0 0.0
  %4553 = vmatpush1.msra.mxu0 %v4411
  %4554 = vmatprep.subr.mxu0 0.0
  %4555 = vmatpush1.msra.mxu0 %v4412
  %4556 = vmatprep.subr.mxu0 0.0
  %4557 = vmatpush1.msra.mxu0 %v4413
  %4558 = vmatprep.subr.mxu0 0.0
  %4559 = vmatpush1.msra.mxu0 %v4414
  %4560 = vmatprep.subr.mxu0 0.0
  %4561 = vmatpush1.msra.mxu0 %v4415
  %4562 = vmatprep.subr.mxu0 0.0
  %4563 = vmatpush1.msra.mxu0 %v4416
  %4564 = vmatprep.subr.mxu0 0.0
  %4565 = vmatpush1.msra.mxu0 %v4417
  %4566 = vmatprep.subr.mxu0 0.0
  %4567 = vmatpush1.msra.mxu0 %v4418
  %4568 = vmatprep.subr.mxu0 0.0
  %4569 = vmatpush1.msra.mxu0 0.0
  %4570 = vmatprep.subr.mxu0 0.0
  %4571 = vmatpush1.msra.mxu0 0.0
  %4572 = vmatprep.subr.mxu0 0.0
  %4573 = vmatpush1.msra.mxu0 0.0
  %4574 = vmatprep.subr.mxu0 0.0
  %4575 = vmatpush1.msra.mxu0 0.0
  %4576 = vmatprep.subr.mxu0 0.0
  %4577 = vmatpush1.msra.mxu0 0.0
  %4578 = vmatprep.subr.mxu0 0.0
  %4579 = vmatpush1.msra.mxu0 0.0
  %4580 = vmatprep.subr.mxu0 0.0
  %4581 = vmatpush1.msra.mxu0 0.0
  %4582 = vmatprep.subr.mxu0 0.0
  %4583 = vmatpush1.msra.mxu0 0.0
  %4584 = vmatprep.subr.mxu0 0.0
  %4585 = vmatpush1.msra.mxu0 0.0
  %4586 = vmatprep.subr.mxu0 0.0
  %4587 = vmatpush1.msra.mxu0 0.0
  %4588 = vmatprep.subr.mxu0 0.0
  %4589 = vmatpush1.msra.mxu0 0.0
  %4590 = vmatprep.subr.mxu0 0.0
  %4591 = vmatpush1.msra.mxu0 0.0
  %4592 = vmatprep.subr.mxu0 0.0
  %4593 = vmatpush1.msra.mxu0 0.0
  %4594 = vmatprep.subr.mxu0 0.0
  %4595 = vmatpush1.msra.mxu0 0.0
  %4596 = vmatprep.subr.mxu0 0.0
  %4597 = vmatpush1.msra.mxu0 0.0
  %4598 = vmatprep.subr.mxu0 0.0
  %4599 = vmatpush1.msra.mxu0 0.0
  %4600 = vmatprep.subr.mxu0 0.0
  %4601 = vmatpush1.msra.mxu0 0.0
  %4602 = vmatprep.subr.mxu0 0.0
  %4603 = vmatpush1.msra.mxu0 0.0
  %4604 = vmatprep.subr.mxu0 0.0
  %4605 = vmatpush1.msra.mxu0 0.0
  %4606 = vmatprep.subr.mxu0 0.0
  %4607 = vmatpush1.msra.mxu0 0.0
  %4608 = vmatprep.mubr.f32.mxu0 0.0
  %4609 = vmatmul.mubr.f32.gmra.mrb[0].mxu0 %v68
  %v4610 = vpop.f32.mrb[0].mxu0
  %v4611 = vadd.f32 0.0, %v4610
  %v4612 = vpop.f32.mrb[0].mxu0
  %4613 = vmatprep.mubr.f32.mxu0 0.0
  %4614 = vmatmul.mubr.f32.gmra.mrb[0].mxu0 %v71
  %v4615 = vpop.f32.mrb[0].mxu0
  %v4616 = vadd.f32 0.0, %v4615
  %v4617 = vpop.f32.mrb[0].mxu0
  %4618 = vmatprep.mubr.f32.mxu0 0.0
  %4619 = vmatmul.mubr.f32.gmra.mrb[0].mxu0 %v74
  %v4620 = vpop.f32.mrb[0].mxu0
  %v4621 = vadd.f32 0.0, %v4620
  %v4622 = vpop.f32.mrb[0].mxu0
  %4623 = vmatprep.mubr.f32.mxu0 0.0
  %4624 = vmatmul.mubr.f32.gmra.mrb[0].mxu0 %v77
  %v4625 = vpop.f32.mrb[0].mxu0
  %v4626 = vadd.f32 0.0, %v4625
  %v4627 = vpop.f32.mrb[0].mxu0
  %4628 = vmatprep.mubr.f32.mxu0 0.0
  %4629 = vmatmul.mubr.f32.gmra.mrb[0].mxu0 %v80
  %v4630 = vpop.f32.mrb[0].mxu0
  %v4631 = vadd.f32 0.0, %v4630
  %v4632 = vpop.f32.mrb[0].mxu0
  %4633 = vmatprep.mubr.f32.mxu0 0.0
  %4634 = vmatmul.mubr.f32.gmra.mrb[0].mxu0 %v83
  %v4635 = vpop.f32.mrb[0].mxu0
  %v4636 = vadd.f32 0.0, %v4635
  %v4637 = vpop.f32.mrb[0].mxu0
  %4638 = vmatprep.mubr.f32.mxu0 0.0
  %4639 = vmatmul.mubr.f32.gmra.mrb[0].mxu0 %v86
  %v4640 = vpop.f32.mrb[0].mxu0
  %v4641 = vadd.f32 0.0, %v4640
  %v4642 = vpop.f32.mrb[0].mxu0
  %4643 = vmatprep.mubr.f32.mxu0 0.0
  %4644 = vmatmul.mubr.f32.gmra.mrb[0].mxu0 %v89
  %v4645 = vpop.f32.mrb[0].mxu0
  %v4646 = vadd.f32 0.0, %v4645
  %v4647 = vpop.f32.mrb[0].mxu0
  %4648 = vmatprep.mubr.f32.mxu0 0.0
  %4649 = vmatmul.mubr.f32.gmra.mrb[0].mxu0 %v92
  %v4650 = vpop.f32.mrb[0].mxu0
  %v4651 = vadd.f32 0.0, %v4650
  %v4652 = vpop.f32.mrb[0].mxu0
  %4653 = vmatprep.mubr.f32.mxu0 0.0
  %4654 = vmatmul.mubr.f32.gmra.mrb[0].mxu0 %v95
  %v4655 = vpop.f32.mrb[0].mxu0
  %v4656 = vadd.f32 0.0, %v4655
  %v4657 = vpop.f32.mrb[0].mxu0
  %4658 = vmatprep.mubr.f32.mxu0 0.0
  %4659 = vmatmul.mubr.f32.gmra.mrb[0].mxu0 %v98
  %v4660 = vpop.f32.mrb[0].mxu0
  %v4661 = vadd.f32 0.0, %v4660
  %v4662 = vpop.f32.mrb[0].mxu0
  %4663 = vmatprep.mubr.f32.mxu0 0.0
  %4664 = vmatmul.mubr.f32.gmra.mrb[0].mxu0 %v101
  %v4665 = vpop.f32.mrb[0].mxu0
  %v4666 = vadd.f32 0.0, %v4665
  %v4667 = vpop.f32.mrb[0].mxu0
  %4668 = vdwg.mxu0
  %v4669 = vmax.f32 %v4486, %v4611
  %v4670 = vmax.f32 %v4491, %v4616
  %v4671 = vmax.f32 %v4496, %v4621
  %v4672 = vmax.f32 %v4501, %v4626
  %v4673 = vmax.f32 %v4506, %v4631
  %v4674 = vmax.f32 %v4511, %v4636
  %v4675 = vmax.f32 %v4516, %v4641
  %v4676 = vmax.f32 %v4521, %v4646
  %v4677 = vmax.f32 %v4526, %v4651
  %v4678 = vmax.f32 %v4531, %v4656
  %v4679 = vmax.f32 %v4536, %v4661
  %v4680 = vmax.f32 %v4541, %v4666
  %v4681 = vmax.f32 %v4669, %v4675
  %v4682 = vmax.f32 %v4670, %v4676
  %v4683 = vmax.f32 %v4671, %v4677
  %v4684 = vmax.f32 %v4672, %v4678
  %v4685 = vmax.f32 %v4673, %v4679
  %v4686 = vmax.f32 %v4674, %v4680
  %v4687 = vadd.f32 %v4681, %v44
  %v4688 = vadd.f32 %v4682, %v45
  %v4689 = vadd.f32 %v4683, %v46
  %v4690 = vadd.f32 %v4684, %v47
  %v4691 = vadd.f32 %v4685, %v48
  %v4692 = vadd.f32 %v4686, %v49
  %v4693 = vxor.u32 %v4687, 2147483648
  %v4694 = vxor.u32 %v4688, 2147483648
  %v4695 = vxor.u32 %v4689, 2147483648
  %v4696 = vxor.u32 %v4690, 2147483648
  %v4697 = vxor.u32 %v4691, 2147483648
  %v4698 = vxor.u32 %v4692, 2147483648
  %v4699 = vmul.f32 %v4693, 1.442695
  %v4700 = vpow.pop %v4699
  %v4701 = vmul.f32 %v4694, 1.442695
  %v4702 = vpow.pop %v4701
  %v4703 = vmul.f32 %v4695, 1.442695
  %v4704 = vpow.pop %v4703
  %v4705 = vmul.f32 %v4696, 1.442695
  %v4706 = vpow.pop %v4705
  %v4707 = vmul.f32 %v4697, 1.442695
  %v4708 = vpow.pop %v4707
  %v4709 = vmul.f32 %v4698, 1.442695
  %v4710 = vpow.pop %v4709
  %v4711 = vadd.f32 %v4700, 1.0
  %v4712 = vadd.f32 %v4702, 1.0
  %v4713 = vadd.f32 %v4704, 1.0
  %v4714 = vadd.f32 %v4706, 1.0
  %v4715 = vadd.f32 %v4708, 1.0
  %v4716 = vadd.f32 %v4710, 1.0
  %v4717 = vrcp.pop %v4711
  %v4718 = vmul.f32 1.0, %v4717
  %v4719 = vrcp.pop %v4712
  %v4720 = vmul.f32 1.0, %v4719
  %v4721 = vrcp.pop %v4713
  %v4722 = vmul.f32 1.0, %v4721
  %v4723 = vrcp.pop %v4714
  %v4724 = vmul.f32 1.0, %v4723
  %v4725 = vrcp.pop %v4715
  %v4726 = vmul.f32 1.0, %v4725
  %v4727 = vrcp.pop %v4716
  %v4728 = vmul.f32 1.0, %v4727
  %4729 = vst [vmem:[#allocation2 + $0x270] sm:$0xff] %v4718
  %4730 = vst [vmem:[#allocation2 + $0x278] sm:$0xff] %v4720
  %4731 = vst [vmem:[#allocation2 + $0x280] sm:$0xff] %v4722
  %4732 = vst [vmem:[#allocation2 + $0x288] sm:$0xff] %v4724
  %4733 = vst [vmem:[#allocation2 + $0x290] sm:$0xff] %v4726
  %4734 = vst [vmem:[#allocation2 + $0x298] sm:$0xff] %v4728
  %v4735 = vld [vmem:[%s0 + $0x380] sm:$0xff]
  %v4736 = vld [vmem:[%s0 + $0x388] sm:$0xff]
  %v4737 = vld [vmem:[%s0 + $0x390] sm:$0xff]
  %v4738 = vld [vmem:[%s0 + $0x398] sm:$0xff]
  %v4739 = vld [vmem:[%s0 + $0x3a0] sm:$0xff]
  %v4740 = vld [vmem:[%s0 + $0x3a8] sm:$0xff]
  %v4741 = vld [vmem:[%s0 + $0x3b0] sm:$0xff]
  %v4742 = vld [vmem:[%s0 + $0x3b8] sm:$0xff]
  %v4743 = vld [vmem:[%s0 + $0x3c0] sm:$0xff]
  %v4744 = vld [vmem:[%s0 + $0x3c8] sm:$0xff]
  %v4745 = vld [vmem:[%s0 + $0x3d0] sm:$0xff]
  %v4746 = vld [vmem:[%s0 + $0x3d8] sm:$0xff]
  %v4747 = vld [vmem:[%s0 + $0x3a0] sm:$0xff]
  %v4748 = vld [vmem:[%s0 + $0x3a8] sm:$0xff]
  %v4749 = vld [vmem:[%s0 + $0x3b0] sm:$0xff]
  %v4750 = vld [vmem:[%s0 + $0x3b8] sm:$0xff]
  %v4751 = vld [vmem:[%s0 + $0x3c0] sm:$0xff]
  %v4752 = vld [vmem:[%s0 + $0x3c8] sm:$0xff]
  %v4753 = vld [vmem:[%s0 + $0x3d0] sm:$0xff]
  %v4754 = vld [vmem:[%s0 + $0x3d8] sm:$0xff]
  %v4755 = vld [vmem:[%s0 + $0x3e0] sm:$0xff]
  %v4756 = vld [vmem:[%s0 + $0x3e8] sm:$0xff]
  %v4757 = vld [vmem:[%s0 + $0x3f0] sm:$0xff]
  %v4758 = vld [vmem:[%s0 + $0x3f8] sm:$0xff]
  %4759 = vmatprep.subr.mxu0 0.0
  %4760 = vmatpush1.msra.mxu0 %v4735
  %4761 = vmatprep.subr.mxu0 0.0
  %4762 = vmatpush1.msra.mxu0 %v4736
  %4763 = vmatprep.subr.mxu0 0.0
  %4764 = vmatpush1.msra.mxu0 %v4737
  %4765 = vmatprep.subr.mxu0 0.0
  %4766 = vmatpush1.msra.mxu0 %v4738
  %4767 = vmatprep.subr.mxu0 0.0
  %4768 = vmatpush1.msra.mxu0 %v4739
  %4769 = vmatprep.subr.mxu0 0.0
  %4770 = vmatpush1.msra.mxu0 %v4740
  %4771 = vmatprep.subr.mxu0 0.0
  %4772 = vmatpush1.msra.mxu0 %v4741
  %4773 = vmatprep.subr.mxu0 0.0
  %4774 = vmatpush1.msra.mxu0 %v4742
  %4775 = vmatprep.subr.mxu0 0.0
  %4776 = vmatpush1.msra.mxu0 %v4743
  %4777 = vmatprep.subr.mxu0 0.0
  %4778 = vmatpush1.msra.mxu0 %v4744
  %4779 = vmatprep.subr.mxu0 0.0
  %4780 = vmatpush1.msra.mxu0 %v4745
  %4781 = vmatprep.subr.mxu0 0.0
  %4782 = vmatpush1.msra.mxu0 %v4746
  %4783 = vmatprep.subr.mxu0 0.0
  %4784 = vmatpush1.msra.mxu0 0.0
  %4785 = vmatprep.subr.mxu0 0.0
  %4786 = vmatpush1.msra.mxu0 0.0
  %4787 = vmatprep.subr.mxu0 0.0
  %4788 = vmatpush1.msra.mxu0 0.0
  %4789 = vmatprep.subr.mxu0 0.0
  %4790 = vmatpush1.msra.mxu0 0.0
  %4791 = vmatprep.subr.mxu0 0.0
  %4792 = vmatpush1.msra.mxu0 0.0
  %4793 = vmatprep.subr.mxu0 0.0
  %4794 = vmatpush1.msra.mxu0 0.0
  %4795 = vmatprep.subr.mxu0 0.0
  %4796 = vmatpush1.msra.mxu0 0.0
  %4797 = vmatprep.subr.mxu0 0.0
  %4798 = vmatpush1.msra.mxu0 0.0
  %4799 = vmatprep.subr.mxu0 0.0
  %4800 = vmatpush1.msra.mxu0 0.0
  %4801 = vmatprep.subr.mxu0 0.0
  %4802 = vmatpush1.msra.mxu0 0.0
  %4803 = vmatprep.subr.mxu0 0.0
  %4804 = vmatpush1.msra.mxu0 0.0
  %4805 = vmatprep.subr.mxu0 0.0
  %4806 = vmatpush1.msra.mxu0 0.0
  %4807 = vmatprep.subr.mxu0 0.0
  %4808 = vmatpush1.msra.mxu0 0.0
  %4809 = vmatprep.subr.mxu0 0.0
  %4810 = vmatpush1.msra.mxu0 0.0
  %4811 = vmatprep.subr.mxu0 0.0
  %4812 = vmatpush1.msra.mxu0 0.0
  %4813 = vmatprep.subr.mxu0 0.0
  %4814 = vmatpush1.msra.mxu0 0.0
  %4815 = vmatprep.subr.mxu0 0.0
  %4816 = vmatpush1.msra.mxu0 0.0
  %4817 = vmatprep.subr.mxu0 0.0
  %4818 = vmatpush1.msra.mxu0 0.0
  %4819 = vmatprep.subr.mxu0 0.0
  %4820 = vmatpush1.msra.mxu0 0.0
  %4821 = vmatprep.subr.mxu0 0.0
  %4822 = vmatpush1.msra.mxu0 0.0
  %4823 = vmatprep.mubr.f32.mxu0 0.0
  %4824 = vmatmul.mubr.f32.gmra.mrb[0].mxu0 %v68
  %v4825 = vpop.f32.mrb[0].mxu0
  %v4826 = vadd.f32 0.0, %v4825
  %v4827 = vpop.f32.mrb[0].mxu0
  %4828 = vmatprep.mubr.f32.mxu0 0.0
  %4829 = vmatmul.mubr.f32.gmra.mrb[0].mxu0 %v71
  %v4830 = vpop.f32.mrb[0].mxu0
  %v4831 = vadd.f32 0.0, %v4830
  %v4832 = vpop.f32.mrb[0].mxu0
  %4833 = vmatprep.mubr.f32.mxu0 0.0
  %4834 = vmatmul.mubr.f32.gmra.mrb[0].mxu0 %v74
  %v4835 = vpop.f32.mrb[0].mxu0
  %v4836 = vadd.f32 0.0, %v4835
  %v4837 = vpop.f32.mrb[0].mxu0
  %4838 = vmatprep.mubr.f32.mxu0 0.0
  %4839 = vmatmul.mubr.f32.gmra.mrb[0].mxu0 %v77
  %v4840 = vpop.f32.mrb[0].mxu0
  %v4841 = vadd.f32 0.0, %v4840
  %v4842 = vpop.f32.mrb[0].mxu0
  %4843 = vmatprep.mubr.f32.mxu0 0.0
  %4844 = vmatmul.mubr.f32.gmra.mrb[0].mxu0 %v80
  %v4845 = vpop.f32.mrb[0].mxu0
  %v4846 = vadd.f32 0.0, %v4845
  %v4847 = vpop.f32.mrb[0].mxu0
  %4848 = vmatprep.mubr.f32.mxu0 0.0
  %4849 = vmatmul.mubr.f32.gmra.mrb[0].mxu0 %v83
  %v4850 = vpop.f32.mrb[0].mxu0
  %v4851 = vadd.f32 0.0, %v4850
  %v4852 = vpop.f32.mrb[0].mxu0
  %4853 = vmatprep.mubr.f32.mxu0 0.0
  %4854 = vmatmul.mubr.f32.gmra.mrb[0].mxu0 %v86
  %v4855 = vpop.f32.mrb[0].mxu0
  %v4856 = vadd.f32 0.0, %v4855
  %v4857 = vpop.f32.mrb[0].mxu0
  %4858 = vmatprep.mubr.f32.mxu0 0.0
  %4859 = vmatmul.mubr.f32.gmra.mrb[0].mxu0 %v89
  %v4860 = vpop.f32.mrb[0].mxu0
  %v4861 = vadd.f32 0.0, %v4860
  %v4862 = vpop.f32.mrb[0].mxu0
  %4863 = vmatprep.mubr.f32.mxu0 0.0
  %4864 = vmatmul.mubr.f32.gmra.mrb[0].mxu0 %v92
  %v4865 = vpop.f32.mrb[0].mxu0
  %v4866 = vadd.f32 0.0, %v4865
  %v4867 = vpop.f32.mrb[0].mxu0
  %4868 = vmatprep.mubr.f32.mxu0 0.0
  %4869 = vmatmul.mubr.f32.gmra.mrb[0].mxu0 %v95
  %v4870 = vpop.f32.mrb[0].mxu0
  %v4871 = vadd.f32 0.0, %v4870
  %v4872 = vpop.f32.mrb[0].mxu0
  %4873 = vmatprep.mubr.f32.mxu0 0.0
  %4874 = vmatmul.mubr.f32.gmra.mrb[0].mxu0 %v98
  %v4875 = vpop.f32.mrb[0].mxu0
  %v4876 = vadd.f32 0.0, %v4875
  %v4877 = vpop.f32.mrb[0].mxu0
  %4878 = vmatprep.mubr.f32.mxu0 0.0
  %4879 = vmatmul.mubr.f32.gmra.mrb[0].mxu0 %v101
  %v4880 = vpop.f32.mrb[0].mxu0
  %v4881 = vadd.f32 0.0, %v4880
  %v4882 = vpop.f32.mrb[0].mxu0
  %4883 = vdwg.mxu0
  %4884 = vmatprep.subr.mxu0 0.0
  %4885 = vmatpush1.msra.mxu0 %v4747
  %4886 = vmatprep.subr.mxu0 0.0
  %4887 = vmatpush1.msra.mxu0 %v4748
  %4888 = vmatprep.subr.mxu0 0.0
  %4889 = vmatpush1.msra.mxu0 %v4749
  %4890 = vmatprep.subr.mxu0 0.0
  %4891 = vmatpush1.msra.mxu0 %v4750
  %4892 = vmatprep.subr.mxu0 0.0
  %4893 = vmatpush1.msra.mxu0 %v4751
  %4894 = vmatprep.subr.mxu0 0.0
  %4895 = vmatpush1.msra.mxu0 %v4752
  %4896 = vmatprep.subr.mxu0 0.0
  %4897 = vmatpush1.msra.mxu0 %v4753
  %4898 = vmatprep.subr.mxu0 0.0
  %4899 = vmatpush1.msra.mxu0 %v4754
  %4900 = vmatprep.subr.mxu0 0.0
  %4901 = vmatpush1.msra.mxu0 %v4755
  %4902 = vmatprep.subr.mxu0 0.0
  %4903 = vmatpush1.msra.mxu0 %v4756
  %4904 = vmatprep.subr.mxu0 0.0
  %4905 = vmatpush1.msra.mxu0 %v4757
  %4906 = vmatprep.subr.mxu0 0.0
  %4907 = vmatpush1.msra.mxu0 %v4758
  %4908 = vmatprep.subr.mxu0 0.0
  %4909 = vmatpush1.msra.mxu0 0.0
  %4910 = vmatprep.subr.mxu0 0.0
  %4911 = vmatpush1.msra.mxu0 0.0
  %4912 = vmatprep.subr.mxu0 0.0
  %4913 = vmatpush1.msra.mxu0 0.0
  %4914 = vmatprep.subr.mxu0 0.0
  %4915 = vmatpush1.msra.mxu0 0.0
  %4916 = vmatprep.subr.mxu0 0.0
  %4917 = vmatpush1.msra.mxu0 0.0
  %4918 = vmatprep.subr.mxu0 0.0
  %4919 = vmatpush1.msra.mxu0 0.0
  %4920 = vmatprep.subr.mxu0 0.0
  %4921 = vmatpush1.msra.mxu0 0.0
  %4922 = vmatprep.subr.mxu0 0.0
  %4923 = vmatpush1.msra.mxu0 0.0
  %4924 = vmatprep.subr.mxu0 0.0
  %4925 = vmatpush1.msra.mxu0 0.0
  %4926 = vmatprep.subr.mxu0 0.0
  %4927 = vmatpush1.msra.mxu0 0.0
  %4928 = vmatprep.subr.mxu0 0.0
  %4929 = vmatpush1.msra.mxu0 0.0
  %4930 = vmatprep.subr.mxu0 0.0
  %4931 = vmatpush1.msra.mxu0 0.0
  %4932 = vmatprep.subr.mxu0 0.0
  %4933 = vmatpush1.msra.mxu0 0.0
  %4934 = vmatprep.subr.mxu0 0.0
  %4935 = vmatpush1.msra.mxu0 0.0
  %4936 = vmatprep.subr.mxu0 0.0
  %4937 = vmatpush1.msra.mxu0 0.0
  %4938 = vmatprep.subr.mxu0 0.0
  %4939 = vmatpush1.msra.mxu0 0.0
  %4940 = vmatprep.subr.mxu0 0.0
  %4941 = vmatpush1.msra.mxu0 0.0
  %4942 = vmatprep.subr.mxu0 0.0
  %4943 = vmatpush1.msra.mxu0 0.0
  %4944 = vmatprep.subr.mxu0 0.0
  %4945 = vmatpush1.msra.mxu0 0.0
  %4946 = vmatprep.subr.mxu0 0.0
  %4947 = vmatpush1.msra.mxu0 0.0
  %4948 = vmatprep.mubr.f32.mxu0 0.0
  %4949 = vmatmul.mubr.f32.gmra.mrb[0].mxu0 %v68
  %v4950 = vpop.f32.mrb[0].mxu0
  %v4951 = vadd.f32 0.0, %v4950
  %v4952 = vpop.f32.mrb[0].mxu0
  %4953 = vmatprep.mubr.f32.mxu0 0.0
  %4954 = vmatmul.mubr.f32.gmra.mrb[0].mxu0 %v71
  %v4955 = vpop.f32.mrb[0].mxu0
  %v4956 = vadd.f32 0.0, %v4955
  %v4957 = vpop.f32.mrb[0].mxu0
  %4958 = vmatprep.mubr.f32.mxu0 0.0
  %4959 = vmatmul.mubr.f32.gmra.mrb[0].mxu0 %v74
  %v4960 = vpop.f32.mrb[0].mxu0
  %v4961 = vadd.f32 0.0, %v4960
  %v4962 = vpop.f32.mrb[0].mxu0
  %4963 = vmatprep.mubr.f32.mxu0 0.0
  %4964 = vmatmul.mubr.f32.gmra.mrb[0].mxu0 %v77
  %v4965 = vpop.f32.mrb[0].mxu0
  %v4966 = vadd.f32 0.0, %v4965
  %v4967 = vpop.f32.mrb[0].mxu0
  %4968 = vmatprep.mubr.f32.mxu0 0.0
  %4969 = vmatmul.mubr.f32.gmra.mrb[0].mxu0 %v80
  %v4970 = vpop.f32.mrb[0].mxu0
  %v4971 = vadd.f32 0.0, %v4970
  %v4972 = vpop.f32.mrb[0].mxu0
  %4973 = vmatprep.mubr.f32.mxu0 0.0
  %4974 = vmatmul.mubr.f32.gmra.mrb[0].mxu0 %v83
  %v4975 = vpop.f32.mrb[0].mxu0
  %v4976 = vadd.f32 0.0, %v4975
  %v4977 = vpop.f32.mrb[0].mxu0
  %4978 = vmatprep.mubr.f32.mxu0 0.0
  %4979 = vmatmul.mubr.f32.gmra.mrb[0].mxu0 %v86
  %v4980 = vpop.f32.mrb[0].mxu0
  %v4981 = vadd.f32 0.0, %v4980
  %v4982 = vpop.f32.mrb[0].mxu0
  %4983 = vmatprep.mubr.f32.mxu0 0.0
  %4984 = vmatmul.mubr.f32.gmra.mrb[0].mxu0 %v89
  %v4985 = vpop.f32.mrb[0].mxu0
  %v4986 = vadd.f32 0.0, %v4985
  %v4987 = vpop.f32.mrb[0].mxu0
  %4988 = vmatprep.mubr.f32.mxu0 0.0
  %4989 = vmatmul.mubr.f32.gmra.mrb[0].mxu0 %v92
  %v4990 = vpop.f32.mrb[0].mxu0
  %v4991 = vadd.f32 0.0, %v4990
  %v4992 = vpop.f32.mrb[0].mxu0
  %4993 = vmatprep.mubr.f32.mxu0 0.0
  %4994 = vmatmul.mubr.f32.gmra.mrb[0].mxu0 %v95
  %v4995 = vpop.f32.mrb[0].mxu0
  %v4996 = vadd.f32 0.0, %v4995
  %v4997 = vpop.f32.mrb[0].mxu0
  %4998 = vmatprep.mubr.f32.mxu0 0.0
  %4999 = vmatmul.mubr.f32.gmra.mrb[0].mxu0 %v98
  %v5000 = vpop.f32.mrb[0].mxu0
  %v5001 = vadd.f32 0.0, %v5000
  %v5002 = vpop.f32.mrb[0].mxu0
  %5003 = vmatprep.mubr.f32.mxu0 0.0
  %5004 = vmatmul.mubr.f32.gmra.mrb[0].mxu0 %v101
  %v5005 = vpop.f32.mrb[0].mxu0
  %v5006 = vadd.f32 0.0, %v5005
  %v5007 = vpop.f32.mrb[0].mxu0
  %5008 = vdwg.mxu0
  %v5009 = vmax.f32 %v4826, %v4951
  %v5010 = vmax.f32 %v4831, %v4956
  %v5011 = vmax.f32 %v4836, %v4961
  %v5012 = vmax.f32 %v4841, %v4966
  %v5013 = vmax.f32 %v4846, %v4971
  %v5014 = vmax.f32 %v4851, %v4976
  %v5015 = vmax.f32 %v4856, %v4981
  %v5016 = vmax.f32 %v4861, %v4986
  %v5017 = vmax.f32 %v4866, %v4991
  %v5018 = vmax.f32 %v4871, %v4996
  %v5019 = vmax.f32 %v4876, %v5001
  %v5020 = vmax.f32 %v4881, %v5006
  %v5021 = vmax.f32 %v5009, %v5015
  %v5022 = vmax.f32 %v5010, %v5016
  %v5023 = vmax.f32 %v5011, %v5017
  %v5024 = vmax.f32 %v5012, %v5018
  %v5025 = vmax.f32 %v5013, %v5019
  %v5026 = vmax.f32 %v5014, %v5020
  %v5027 = vadd.f32 %v5021, %v44
  %v5028 = vadd.f32 %v5022, %v45
  %v5029 = vadd.f32 %v5023, %v46
  %v5030 = vadd.f32 %v5024, %v47
  %v5031 = vadd.f32 %v5025, %v48
  %v5032 = vadd.f32 %v5026, %v49
  %v5033 = vxor.u32 %v5027, 2147483648
  %v5034 = vxor.u32 %v5028, 2147483648
  %v5035 = vxor.u32 %v5029, 2147483648
  %v5036 = vxor.u32 %v5030, 2147483648
  %v5037 = vxor.u32 %v5031, 2147483648
  %v5038 = vxor.u32 %v5032, 2147483648
  %v5039 = vmul.f32 %v5033, 1.442695
  %v5040 = vpow.pop %v5039
  %v5041 = vmul.f32 %v5034, 1.442695
  %v5042 = vpow.pop %v5041
  %v5043 = vmul.f32 %v5035, 1.442695
  %v5044 = vpow.pop %v5043
  %v5045 = vmul.f32 %v5036, 1.442695
  %v5046 = vpow.pop %v5045
  %v5047 = vmul.f32 %v5037, 1.442695
  %v5048 = vpow.pop %v5047
  %v5049 = vmul.f32 %v5038, 1.442695
  %v5050 = vpow.pop %v5049
  %v5051 = vadd.f32 %v5040, 1.0
  %v5052 = vadd.f32 %v5042, 1.0
  %v5053 = vadd.f32 %v5044, 1.0
  %v5054 = vadd.f32 %v5046, 1.0
  %v5055 = vadd.f32 %v5048, 1.0
  %v5056 = vadd.f32 %v5050, 1.0
  %v5057 = vrcp.pop %v5051
  %v5058 = vmul.f32 1.0, %v5057
  %v5059 = vrcp.pop %v5052
  %v5060 = vmul.f32 1.0, %v5059
  %v5061 = vrcp.pop %v5053
  %v5062 = vmul.f32 1.0, %v5061
  %v5063 = vrcp.pop %v5054
  %v5064 = vmul.f32 1.0, %v5063
  %v5065 = vrcp.pop %v5055
  %v5066 = vmul.f32 1.0, %v5065
  %v5067 = vrcp.pop %v5056
  %v5068 = vmul.f32 1.0, %v5067
  %5069 = vst [vmem:[#allocation2 + $0x2a0] sm:$0xff] %v5058
  %5070 = vst [vmem:[#allocation2 + $0x2a8] sm:$0xff] %v5060
  %5071 = vst [vmem:[#allocation2 + $0x2b0] sm:$0xff] %v5062
  %5072 = vst [vmem:[#allocation2 + $0x2b8] sm:$0xff] %v5064
  %5073 = vst [vmem:[#allocation2 + $0x2c0] sm:$0xff] %v5066
  %5074 = vst [vmem:[#allocation2 + $0x2c8] sm:$0xff] %v5068
  %v5075 = vld [vmem:[%s3] sm:$0xff]
  %v5076 = vld [vmem:[%s3 + $0x8] sm:$0xff]
  %v5077 = vld [vmem:[%s3 + $0x10] sm:$0xff]
  %v5078 = vld [vmem:[%s3 + $0x18] sm:$0xff]
  %v5079 = vld [vmem:[%s3 + $0x20] sm:$0xff]
  %v5080 = vld [vmem:[%s3 + $0x28] sm:$0xff]
  %v5081 = vld [vmem:[%s3 + $0x30] sm:$0xff]
  %v5082 = vld [vmem:[%s3 + $0x38] sm:$0xff]
  %v5083 = vld [vmem:[%s3 + $0x40] sm:$0xff]
  %v5084 = vld [vmem:[%s3 + $0x48] sm:$0xff]
  %v5085 = vld [vmem:[%s3 + $0x50] sm:$0xff]
  %v5086 = vld [vmem:[%s3 + $0x58] sm:$0xff]
  %v5087 = vld [vmem:[%s3 + $0x60] sm:$0xff]
  %v5088 = vld [vmem:[%s3 + $0x68] sm:$0xff]
  %v5089 = vld [vmem:[%s3 + $0x70] sm:$0xff]
  %v5090 = vld [vmem:[%s3 + $0x78] sm:$0xff]
  %v5091 = vld [vmem:[%s3 + $0x80] sm:$0xff]
  %v5092 = vld [vmem:[%s3 + $0x88] sm:$0xff]
  %v5093 = vld [vmem:[%s3 + $0x90] sm:$0xff]
  %v5094 = vld [vmem:[%s3 + $0x98] sm:$0xff]
  %v5095 = vld [vmem:[%s3 + $0xa0] sm:$0xff]
  %v5096 = vld [vmem:[%s3 + $0xa8] sm:$0xff]
  %v5097 = vld [vmem:[%s3 + $0xb0] sm:$0xff]
  %v5098 = vld [vmem:[%s3 + $0xb8] sm:$0xff]
  %v5099 = vld [vmem:[%s4] sm:$0xff]
  %v5100 = vld [vmem:[%s4 + $0x8] sm:$0xff]
  %v5101 = vld [vmem:[%s4 + $0x10] sm:$0xff]
  %v5102 = vld [vmem:[%s4 + $0x18] sm:$0xff]
  %v5103 = vld [vmem:[%s4 + $0x20] sm:$0xff]
  %v5104 = vld [vmem:[%s4 + $0x28] sm:$0xff]
  %v5105 = vld [vmem:[#allocation2] sm:$0xff]
  %v5106 = vld [vmem:[#allocation2 + $0x8] sm:$0xff]
  %v5107 = vld [vmem:[#allocation2 + $0x10] sm:$0xff]
  %v5108 = vld [vmem:[#allocation2 + $0x18] sm:$0xff]
  %v5109 = vld [vmem:[#allocation2 + $0x20] sm:$0xff]
  %v5110 = vld [vmem:[#allocation2 + $0x28] sm:$0xff]
  %v5111 = vld [vmem:[#allocation2 + $0x30] sm:$0xff]
  %v5112 = vld [vmem:[#allocation2 + $0x38] sm:$0xff]
  %v5113 = vld [vmem:[#allocation2 + $0x40] sm:$0xff]
  %v5114 = vld [vmem:[#allocation2 + $0x48] sm:$0xff]
  %v5115 = vld [vmem:[#allocation2 + $0x50] sm:$0xff]
  %v5116 = vld [vmem:[#allocation2 + $0x58] sm:$0xff]
  %v5117 = vld [vmem:[#allocation2 + $0x60] sm:$0xff]
  %v5118 = vld [vmem:[#allocation2 + $0x68] sm:$0xff]
  %v5119 = vld [vmem:[#allocation2 + $0x70] sm:$0xff]
  %v5120 = vld [vmem:[#allocation2 + $0x78] sm:$0xff]
  %v5121 = vld [vmem:[#allocation2 + $0x80] sm:$0xff]
  %v5122 = vld [vmem:[#allocation2 + $0x88] sm:$0xff]
  %v5123 = vld [vmem:[#allocation2 + $0x90] sm:$0xff]
  %v5124 = vld [vmem:[#allocation2 + $0x98] sm:$0xff]
  %v5125 = vld [vmem:[#allocation2 + $0xa0] sm:$0xff]
  %v5126 = vld [vmem:[#allocation2 + $0xa8] sm:$0xff]
  %v5127 = vld [vmem:[#allocation2 + $0xb0] sm:$0xff]
  %v5128 = vld [vmem:[#allocation2 + $0xb8] sm:$0xff]
  %v5129 = vld [vmem:[#allocation2 + $0xc0] sm:$0xff]
  %v5130 = vld [vmem:[#allocation2 + $0xc8] sm:$0xff]
  %v5131 = vld [vmem:[#allocation2 + $0xd0] sm:$0xff]
  %v5132 = vld [vmem:[#allocation2 + $0xd8] sm:$0xff]
  %v5133 = vld [vmem:[#allocation2 + $0xe0] sm:$0xff]
  %v5134 = vld [vmem:[#allocation2 + $0xe8] sm:$0xff]
  %v5135 = vld [vmem:[#allocation2 + $0xf0] sm:$0xff]
  %v5136 = vld [vmem:[#allocation2 + $0xf8] sm:$0xff]
  %v5137 = vld [vmem:[#allocation2 + $0x100] sm:$0xff]
  %v5138 = vld [vmem:[#allocation2 + $0x108] sm:$0xff]
  %v5139 = vld [vmem:[#allocation2 + $0x110] sm:$0xff]
  %v5140 = vld [vmem:[#allocation2 + $0x118] sm:$0xff]
  %vm5141 = vcmask 916480
  %v5143 = vsel %vm5141, %v5076, 0
  %v5146 = vsel %vm5141, %v5078, 0
  %v5149 = vsel %vm5141, %v5080, 0
  %v5152 = vsel %vm5141, %v5082, 0
  %v5155 = vsel %vm5141, %v5084, 0
  %v5158 = vsel %vm5141, %v5086, 0
  %v5161 = vsel %vm5141, %v5088, 0
  %v5164 = vsel %vm5141, %v5090, 0
  %v5167 = vsel %vm5141, %v5092, 0
  %v5170 = vsel %vm5141, %v5094, 0
  %v5173 = vsel %vm5141, %v5096, 0
  %v5176 = vsel %vm5141, %v5098, 0
  %5178 = vmatprep.subr.mxu0 0.0
  %5179 = vmatpush1.msra.mxu0 %v5105
  %5180 = vmatprep.subr.mxu0 0.0
  %5181 = vmatpush1.msra.mxu0 %v5106
  %5182 = vmatprep.subr.mxu0 0.0
  %5183 = vmatpush1.msra.mxu0 %v5107
  %5184 = vmatprep.subr.mxu0 0.0
  %5185 = vmatpush1.msra.mxu0 %v5108
  %5186 = vmatprep.subr.mxu0 0.0
  %5187 = vmatpush1.msra.mxu0 %v5109
  %5188 = vmatprep.subr.mxu0 0.0
  %5189 = vmatpush1.msra.mxu0 %v5110
  %5190 = vmatprep.subr.mxu0 0.0
  %5191 = vmatpush1.msra.mxu0 %v5111
  %5192 = vmatprep.subr.mxu0 0.0
  %5193 = vmatpush1.msra.mxu0 %v5112
  %5194 = vmatprep.subr.mxu0 0.0
  %5195 = vmatpush1.msra.mxu0 %v5113
  %5196 = vmatprep.subr.mxu0 0.0
  %5197 = vmatpush1.msra.mxu0 %v5114
  %5198 = vmatprep.subr.mxu0 0.0
  %5199 = vmatpush1.msra.mxu0 %v5115
  %5200 = vmatprep.subr.mxu0 0.0
  %5201 = vmatpush1.msra.mxu0 %v5116
  %5202 = vmatprep.subr.mxu0 0.0
  %5203 = vmatpush1.msra.mxu0 %v5117
  %5204 = vmatprep.subr.mxu0 0.0
  %5205 = vmatpush1.msra.mxu0 %v5118
  %5206 = vmatprep.subr.mxu0 0.0
  %5207 = vmatpush1.msra.mxu0 %v5119
  %5208 = vmatprep.subr.mxu0 0.0
  %5209 = vmatpush1.msra.mxu0 %v5120
  %5210 = vmatprep.subr.mxu0 0.0
  %5211 = vmatpush1.msra.mxu0 %v5121
  %5212 = vmatprep.subr.mxu0 0.0
  %5213 = vmatpush1.msra.mxu0 %v5122
  %5214 = vmatprep.subr.mxu0 0.0
  %5215 = vmatpush1.msra.mxu0 %v5123
  %5216 = vmatprep.subr.mxu0 0.0
  %5217 = vmatpush1.msra.mxu0 %v5124
  %5218 = vmatprep.subr.mxu0 0.0
  %5219 = vmatpush1.msra.mxu0 %v5125
  %5220 = vmatprep.subr.mxu0 0.0
  %5221 = vmatpush1.msra.mxu0 %v5126
  %5222 = vmatprep.subr.mxu0 0.0
  %5223 = vmatpush1.msra.mxu0 %v5127
  %5224 = vmatprep.subr.mxu0 0.0
  %5225 = vmatpush1.msra.mxu0 %v5128
  %5226 = vmatprep.subr.mxu0 0.0
  %5227 = vmatpush1.msra.mxu0 %v5129
  %5228 = vmatprep.subr.mxu0 0.0
  %5229 = vmatpush1.msra.mxu0 %v5130
  %5230 = vmatprep.subr.mxu0 0.0
  %5231 = vmatpush1.msra.mxu0 %v5131
  %5232 = vmatprep.subr.mxu0 0.0
  %5233 = vmatpush1.msra.mxu0 %v5132
  %5234 = vmatprep.subr.mxu0 0.0
  %5235 = vmatpush1.msra.mxu0 %v5133
  %5236 = vmatprep.subr.mxu0 0.0
  %5237 = vmatpush1.msra.mxu0 %v5134
  %5238 = vmatprep.subr.mxu0 0.0
  %5239 = vmatpush1.msra.mxu0 0.0
  %5240 = vmatprep.subr.mxu0 0.0
  %5241 = vmatpush1.msra.mxu0 0.0
  %5242 = vmatprep.mubr.f32.mxu0 %v5143
  %5243 = vmatmul.mubr.f32.gmra.mrb[0].mxu0 %v5075
  %v5244 = vpop.f32.mrb[0].mxu0
  %v5245 = vadd.f32 0.0, %v5244
  %v5246 = vpop.f32.mrb[0].mxu0
  %5247 = vmatprep.mubr.f32.mxu0 %v5146
  %5248 = vmatmul.mubr.f32.gmra.mrb[0].mxu0 %v5077
  %v5249 = vpop.f32.mrb[0].mxu0
  %v5250 = vadd.f32 0.0, %v5249
  %v5251 = vpop.f32.mrb[0].mxu0
  %5252 = vmatprep.mubr.f32.mxu0 %v5149
  %5253 = vmatmul.mubr.f32.gmra.mrb[0].mxu0 %v5079
  %v5254 = vpop.f32.mrb[0].mxu0
  %v5255 = vadd.f32 0.0, %v5254
  %v5256 = vpop.f32.mrb[0].mxu0
  %5257 = vmatprep.mubr.f32.mxu0 %v5152
  %5258 = vmatmul.mubr.f32.gmra.mrb[0].mxu0 %v5081
  %v5259 = vpop.f32.mrb[0].mxu0
  %v5260 = vadd.f32 0.0, %v5259
  %v5261 = vpop.f32.mrb[0].mxu0
  %5262 = vmatprep.mubr.f32.mxu0 %v5155
  %5263 = vmatmul.mubr.f32.gmra.mrb[0].mxu0 %v5083
  %v5264 = vpop.f32.mrb[0].mxu0
  %v5265 = vadd.f32 0.0, %v5264
  %v5266 = vpop.f32.mrb[0].mxu0
  %5267 = vmatprep.mubr.f32.mxu0 %v5158
  %5268 = vmatmul.mubr.f32.gmra.mrb[0].mxu0 %v5085
  %v5269 = vpop.f32.mrb[0].mxu0
  %v5270 = vadd.f32 0.0, %v5269
  %v5271 = vpop.f32.mrb[0].mxu0
  %5272 = vmatprep.mubr.f32.mxu0 %v5161
  %5273 = vmatmul.mubr.f32.gmra.mrb[0].mxu0 %v5087
  %v5274 = vpop.f32.mrb[0].mxu0
  %v5275 = vadd.f32 0.0, %v5274
  %v5276 = vpop.f32.mrb[0].mxu0
  %5277 = vmatprep.mubr.f32.mxu0 %v5164
  %5278 = vmatmul.mubr.f32.gmra.mrb[0].mxu0 %v5089
  %v5279 = vpop.f32.mrb[0].mxu0
  %v5280 = vadd.f32 0.0, %v5279
  %v5281 = vpop.f32.mrb[0].mxu0
  %5282 = vmatprep.mubr.f32.mxu0 %v5167
  %5283 = vmatmul.mubr.f32.gmra.mrb[0].mxu0 %v5091
  %v5284 = vpop.f32.mrb[0].mxu0
  %v5285 = vadd.f32 0.0, %v5284
  %v5286 = vpop.f32.mrb[0].mxu0
  %5287 = vmatprep.mubr.f32.mxu0 %v5170
  %5288 = vmatmul.mubr.f32.gmra.mrb[0].mxu0 %v5093
  %v5289 = vpop.f32.mrb[0].mxu0
  %v5290 = vadd.f32 0.0, %v5289
  %v5291 = vpop.f32.mrb[0].mxu0
  %5292 = vmatprep.mubr.f32.mxu0 %v5173
  %5293 = vmatmul.mubr.f32.gmra.mrb[0].mxu0 %v5095
  %v5294 = vpop.f32.mrb[0].mxu0
  %v5295 = vadd.f32 0.0, %v5294
  %v5296 = vpop.f32.mrb[0].mxu0
  %5297 = vmatprep.mubr.f32.mxu0 %v5176
  %5298 = vmatmul.mubr.f32.gmra.mrb[0].mxu0 %v5097
  %v5299 = vpop.f32.mrb[0].mxu0
  %v5300 = vadd.f32 0.0, %v5299
  %v5301 = vpop.f32.mrb[0].mxu0
  %5302 = vdwg.mxu0
  %5303 = vmatprep.subr.mxu0 0.0
  %5304 = vmatpush1.msra.mxu0 %v5111
  %5305 = vmatprep.subr.mxu0 0.0
  %5306 = vmatpush1.msra.mxu0 %v5112
  %5307 = vmatprep.subr.mxu0 0.0
  %5308 = vmatpush1.msra.mxu0 %v5113
  %5309 = vmatprep.subr.mxu0 0.0
  %5310 = vmatpush1.msra.mxu0 %v5114
  %5311 = vmatprep.subr.mxu0 0.0
  %5312 = vmatpush1.msra.mxu0 %v5115
  %5313 = vmatprep.subr.mxu0 0.0
  %5314 = vmatpush1.msra.mxu0 %v5116
  %5315 = vmatprep.subr.mxu0 0.0
  %5316 = vmatpush1.msra.mxu0 %v5117
  %5317 = vmatprep.subr.mxu0 0.0
  %5318 = vmatpush1.msra.mxu0 %v5118
  %5319 = vmatprep.subr.mxu0 0.0
  %5320 = vmatpush1.msra.mxu0 %v5119
  %5321 = vmatprep.subr.mxu0 0.0
  %5322 = vmatpush1.msra.mxu0 %v5120
  %5323 = vmatprep.subr.mxu0 0.0
  %5324 = vmatpush1.msra.mxu0 %v5121
  %5325 = vmatprep.subr.mxu0 0.0
  %5326 = vmatpush1.msra.mxu0 %v5122
  %5327 = vmatprep.subr.mxu0 0.0
  %5328 = vmatpush1.msra.mxu0 %v5123
  %5329 = vmatprep.subr.mxu0 0.0
  %5330 = vmatpush1.msra.mxu0 %v5124
  %5331 = vmatprep.subr.mxu0 0.0
  %5332 = vmatpush1.msra.mxu0 %v5125
  %5333 = vmatprep.subr.mxu0 0.0
  %5334 = vmatpush1.msra.mxu0 %v5126
  %5335 = vmatprep.subr.mxu0 0.0
  %5336 = vmatpush1.msra.mxu0 %v5127
  %5337 = vmatprep.subr.mxu0 0.0
  %5338 = vmatpush1.msra.mxu0 %v5128
  %5339 = vmatprep.subr.mxu0 0.0
  %5340 = vmatpush1.msra.mxu0 %v5129
  %5341 = vmatprep.subr.mxu0 0.0
  %5342 = vmatpush1.msra.mxu0 %v5130
  %5343 = vmatprep.subr.mxu0 0.0
  %5344 = vmatpush1.msra.mxu0 %v5131
  %5345 = vmatprep.subr.mxu0 0.0
  %5346 = vmatpush1.msra.mxu0 %v5132
  %5347 = vmatprep.subr.mxu0 0.0
  %5348 = vmatpush1.msra.mxu0 %v5133
  %5349 = vmatprep.subr.mxu0 0.0
  %5350 = vmatpush1.msra.mxu0 %v5134
  %5351 = vmatprep.subr.mxu0 0.0
  %5352 = vmatpush1.msra.mxu0 %v5135
  %5353 = vmatprep.subr.mxu0 0.0
  %5354 = vmatpush1.msra.mxu0 %v5136
  %5355 = vmatprep.subr.mxu0 0.0
  %5356 = vmatpush1.msra.mxu0 %v5137
  %5357 = vmatprep.subr.mxu0 0.0
  %5358 = vmatpush1.msra.mxu0 %v5138
  %5359 = vmatprep.subr.mxu0 0.0
  %5360 = vmatpush1.msra.mxu0 %v5139
  %5361 = vmatprep.subr.mxu0 0.0
  %5362 = vmatpush1.msra.mxu0 %v5140
  %5363 = vmatprep.subr.mxu0 0.0
  %5364 = vmatpush1.msra.mxu0 0.0
  %5365 = vmatprep.subr.mxu0 0.0
  %5366 = vmatpush1.msra.mxu0 0.0
  %5367 = vmatprep.mubr.f32.mxu0 %v5143
  %5368 = vmatmul.mubr.f32.gmra.mrb[0].mxu0 %v5075
  %v5369 = vpop.f32.mrb[0].mxu0
  %v5370 = vadd.f32 0.0, %v5369
  %v5371 = vpop.f32.mrb[0].mxu0
  %5372 = vmatprep.mubr.f32.mxu0 %v5146
  %5373 = vmatmul.mubr.f32.gmra.mrb[0].mxu0 %v5077
  %v5374 = vpop.f32.mrb[0].mxu0
  %v5375 = vadd.f32 0.0, %v5374
  %v5376 = vpop.f32.mrb[0].mxu0
  %5377 = vmatprep.mubr.f32.mxu0 %v5149
  %5378 = vmatmul.mubr.f32.gmra.mrb[0].mxu0 %v5079
  %v5379 = vpop.f32.mrb[0].mxu0
  %v5380 = vadd.f32 0.0, %v5379
  %v5381 = vpop.f32.mrb[0].mxu0
  %5382 = vmatprep.mubr.f32.mxu0 %v5152
  %5383 = vmatmul.mubr.f32.gmra.mrb[0].mxu0 %v5081
  %v5384 = vpop.f32.mrb[0].mxu0
  %v5385 = vadd.f32 0.0, %v5384
  %v5386 = vpop.f32.mrb[0].mxu0
  %5387 = vmatprep.mubr.f32.mxu0 %v5155
  %5388 = vmatmul.mubr.f32.gmra.mrb[0].mxu0 %v5083
  %v5389 = vpop.f32.mrb[0].mxu0
  %v5390 = vadd.f32 0.0, %v5389
  %v5391 = vpop.f32.mrb[0].mxu0
  %5392 = vmatprep.mubr.f32.mxu0 %v5158
  %5393 = vmatmul.mubr.f32.gmra.mrb[0].mxu0 %v5085
  %v5394 = vpop.f32.mrb[0].mxu0
  %v5395 = vadd.f32 0.0, %v5394
  %v5396 = vpop.f32.mrb[0].mxu0
  %5397 = vmatprep.mubr.f32.mxu0 %v5161
  %5398 = vmatmul.mubr.f32.gmra.mrb[0].mxu0 %v5087
  %v5399 = vpop.f32.mrb[0].mxu0
  %v5400 = vadd.f32 0.0, %v5399
  %v5401 = vpop.f32.mrb[0].mxu0
  %5402 = vmatprep.mubr.f32.mxu0 %v5164
  %5403 = vmatmul.mubr.f32.gmra.mrb[0].mxu0 %v5089
  %v5404 = vpop.f32.mrb[0].mxu0
  %v5405 = vadd.f32 0.0, %v5404
  %v5406 = vpop.f32.mrb[0].mxu0
  %5407 = vmatprep.mubr.f32.mxu0 %v5167
  %5408 = vmatmul.mubr.f32.gmra.mrb[0].mxu0 %v5091
  %v5409 = vpop.f32.mrb[0].mxu0
  %v5410 = vadd.f32 0.0, %v5409
  %v5411 = vpop.f32.mrb[0].mxu0
  %5412 = vmatprep.mubr.f32.mxu0 %v5170
  %5413 = vmatmul.mubr.f32.gmra.mrb[0].mxu0 %v5093
  %v5414 = vpop.f32.mrb[0].mxu0
  %v5415 = vadd.f32 0.0, %v5414
  %v5416 = vpop.f32.mrb[0].mxu0
  %5417 = vmatprep.mubr.f32.mxu0 %v5173
  %5418 = vmatmul.mubr.f32.gmra.mrb[0].mxu0 %v5095
  %v5419 = vpop.f32.mrb[0].mxu0
  %v5420 = vadd.f32 0.0, %v5419
  %v5421 = vpop.f32.mrb[0].mxu0
  %5422 = vmatprep.mubr.f32.mxu0 %v5176
  %5423 = vmatmul.mubr.f32.gmra.mrb[0].mxu0 %v5097
  %v5424 = vpop.f32.mrb[0].mxu0
  %v5425 = vadd.f32 0.0, %v5424
  %v5426 = vpop.f32.mrb[0].mxu0
  %5427 = vdwg.mxu0
  %v5428 = vmax.f32 %v5245, %v5370
  %v5429 = vmax.f32 %v5250, %v5375
  %v5430 = vmax.f32 %v5255, %v5380
  %v5431 = vmax.f32 %v5260, %v5385
  %v5432 = vmax.f32 %v5265, %v5390
  %v5433 = vmax.f32 %v5270, %v5395
  %v5434 = vmax.f32 %v5275, %v5400
  %v5435 = vmax.f32 %v5280, %v5405
  %v5436 = vmax.f32 %v5285, %v5410
  %v5437 = vmax.f32 %v5290, %v5415
  %v5438 = vmax.f32 %v5295, %v5420
  %v5439 = vmax.f32 %v5300, %v5425
  %v5440 = vmax.f32 %v5428, %v5434
  %v5441 = vmax.f32 %v5429, %v5435
  %v5442 = vmax.f32 %v5430, %v5436
  %v5443 = vmax.f32 %v5431, %v5437
  %v5444 = vmax.f32 %v5432, %v5438
  %v5445 = vmax.f32 %v5433, %v5439
  %v5446 = vadd.f32 %v5440, %v5099
  %v5447 = vadd.f32 %v5441, %v5100
  %v5448 = vadd.f32 %v5442, %v5101
  %v5449 = vadd.f32 %v5443, %v5102
  %v5450 = vadd.f32 %v5444, %v5103
  %v5451 = vadd.f32 %v5445, %v5104
  %v5452 = vxor.u32 %v5446, 2147483648
  %v5453 = vxor.u32 %v5447, 2147483648
  %v5454 = vxor.u32 %v5448, 2147483648
  %v5455 = vxor.u32 %v5449, 2147483648
  %v5456 = vxor.u32 %v5450, 2147483648
  %v5457 = vxor.u32 %v5451, 2147483648
  %v5458 = vmul.f32 %v5452, 1.442695
  %v5459 = vpow.pop %v5458
  %v5460 = vmul.f32 %v5453, 1.442695
  %v5461 = vpow.pop %v5460
  %v5462 = vmul.f32 %v5454, 1.442695
  %v5463 = vpow.pop %v5462
  %v5464 = vmul.f32 %v5455, 1.442695
  %v5465 = vpow.pop %v5464
  %v5466 = vmul.f32 %v5456, 1.442695
  %v5467 = vpow.pop %v5466
  %v5468 = vmul.f32 %v5457, 1.442695
  %v5469 = vpow.pop %v5468
  %v5470 = vadd.f32 %v5459, 1.0
  %v5471 = vadd.f32 %v5461, 1.0
  %v5472 = vadd.f32 %v5463, 1.0
  %v5473 = vadd.f32 %v5465, 1.0
  %v5474 = vadd.f32 %v5467, 1.0
  %v5475 = vadd.f32 %v5469, 1.0
  %v5476 = vrcp.pop %v5470
  %v5477 = vmul.f32 1.0, %v5476
  %v5478 = vrcp.pop %v5471
  %v5479 = vmul.f32 1.0, %v5478
  %v5480 = vrcp.pop %v5472
  %v5481 = vmul.f32 1.0, %v5480
  %v5482 = vrcp.pop %v5473
  %v5483 = vmul.f32 1.0, %v5482
  %v5484 = vrcp.pop %v5474
  %v5485 = vmul.f32 1.0, %v5484
  %v5486 = vrcp.pop %v5475
  %v5487 = vmul.f32 1.0, %v5486
  %5488 = vst [vmem:[#allocation3] sm:$0xff] %v5477
  %5489 = vst [vmem:[#allocation3 + $0x8] sm:$0xff] %v5479
  %5490 = vst [vmem:[#allocation3 + $0x10] sm:$0xff] %v5481
  %5491 = vst [vmem:[#allocation3 + $0x18] sm:$0xff] %v5483
  %5492 = vst [vmem:[#allocation3 + $0x20] sm:$0xff] %v5485
  %5493 = vst [vmem:[#allocation3 + $0x28] sm:$0xff] %v5487
  %v5494 = vld [vmem:[#allocation2 + $0x60] sm:$0xff]
  %v5495 = vld [vmem:[#allocation2 + $0x68] sm:$0xff]
  %v5496 = vld [vmem:[#allocation2 + $0x70] sm:$0xff]
  %v5497 = vld [vmem:[#allocation2 + $0x78] sm:$0xff]
  %v5498 = vld [vmem:[#allocation2 + $0x80] sm:$0xff]
  %v5499 = vld [vmem:[#allocation2 + $0x88] sm:$0xff]
  %v5500 = vld [vmem:[#allocation2 + $0x90] sm:$0xff]
  %v5501 = vld [vmem:[#allocation2 + $0x98] sm:$0xff]
  %v5502 = vld [vmem:[#allocation2 + $0xa0] sm:$0xff]
  %v5503 = vld [vmem:[#allocation2 + $0xa8] sm:$0xff]
  %v5504 = vld [vmem:[#allocation2 + $0xb0] sm:$0xff]
  %v5505 = vld [vmem:[#allocation2 + $0xb8] sm:$0xff]
  %v5506 = vld [vmem:[#allocation2 + $0xc0] sm:$0xff]
  %v5507 = vld [vmem:[#allocation2 + $0xc8] sm:$0xff]
  %v5508 = vld [vmem:[#allocation2 + $0xd0] sm:$0xff]
  %v5509 = vld [vmem:[#allocation2 + $0xd8] sm:$0xff]
  %v5510 = vld [vmem:[#allocation2 + $0xe0] sm:$0xff]
  %v5511 = vld [vmem:[#allocation2 + $0xe8] sm:$0xff]
  %v5512 = vld [vmem:[#allocation2 + $0xf0] sm:$0xff]
  %v5513 = vld [vmem:[#allocation2 + $0xf8] sm:$0xff]
  %v5514 = vld [vmem:[#allocation2 + $0x100] sm:$0xff]
  %v5515 = vld [vmem:[#allocation2 + $0x108] sm:$0xff]
  %v5516 = vld [vmem:[#allocation2 + $0x110] sm:$0xff]
  %v5517 = vld [vmem:[#allocation2 + $0x118] sm:$0xff]
  %v5518 = vld [vmem:[#allocation2 + $0x120] sm:$0xff]
  %v5519 = vld [vmem:[#allocation2 + $0x128] sm:$0xff]
  %v5520 = vld [vmem:[#allocation2 + $0x130] sm:$0xff]
  %v5521 = vld [vmem:[#allocation2 + $0x138] sm:$0xff]
  %v5522 = vld [vmem:[#allocation2 + $0x140] sm:$0xff]
  %v5523 = vld [vmem:[#allocation2 + $0x148] sm:$0xff]
  %v5524 = vld [vmem:[#allocation2 + $0x150] sm:$0xff]
  %v5525 = vld [vmem:[#allocation2 + $0x158] sm:$0xff]
  %v5526 = vld [vmem:[#allocation2 + $0x160] sm:$0xff]
  %v5527 = vld [vmem:[#allocation2 + $0x168] sm:$0xff]
  %v5528 = vld [vmem:[#allocation2 + $0x170] sm:$0xff]
  %v5529 = vld [vmem:[#allocation2 + $0x178] sm:$0xff]
  %5530 = vmatprep.subr.mxu0 0.0
  %5531 = vmatpush1.msra.mxu0 %v5494
  %5532 = vmatprep.subr.mxu0 0.0
  %5533 = vmatpush1.msra.mxu0 %v5495
  %5534 = vmatprep.subr.mxu0 0.0
  %5535 = vmatpush1.msra.mxu0 %v5496
  %5536 = vmatprep.subr.mxu0 0.0
  %5537 = vmatpush1.msra.mxu0 %v5497
  %5538 = vmatprep.subr.mxu0 0.0
  %5539 = vmatpush1.msra.mxu0 %v5498
  %5540 = vmatprep.subr.mxu0 0.0
  %5541 = vmatpush1.msra.mxu0 %v5499
  %5542 = vmatprep.subr.mxu0 0.0
  %5543 = vmatpush1.msra.mxu0 %v5500
  %5544 = vmatprep.subr.mxu0 0.0
  %5545 = vmatpush1.msra.mxu0 %v5501
  %5546 = vmatprep.subr.mxu0 0.0
  %5547 = vmatpush1.msra.mxu0 %v5502
  %5548 = vmatprep.subr.mxu0 0.0
  %5549 = vmatpush1.msra.mxu0 %v5503
  %5550 = vmatprep.subr.mxu0 0.0
  %5551 = vmatpush1.msra.mxu0 %v5504
  %5552 = vmatprep.subr.mxu0 0.0
  %5553 = vmatpush1.msra.mxu0 %v5505
  %5554 = vmatprep.subr.mxu0 0.0
  %5555 = vmatpush1.msra.mxu0 %v5506
  %5556 = vmatprep.subr.mxu0 0.0
  %5557 = vmatpush1.msra.mxu0 %v5507
  %5558 = vmatprep.subr.mxu0 0.0
  %5559 = vmatpush1.msra.mxu0 %v5508
  %5560 = vmatprep.subr.mxu0 0.0
  %5561 = vmatpush1.msra.mxu0 %v5509
  %5562 = vmatprep.subr.mxu0 0.0
  %5563 = vmatpush1.msra.mxu0 %v5510
  %5564 = vmatprep.subr.mxu0 0.0
  %5565 = vmatpush1.msra.mxu0 %v5511
  %5566 = vmatprep.subr.mxu0 0.0
  %5567 = vmatpush1.msra.mxu0 %v5512
  %5568 = vmatprep.subr.mxu0 0.0
  %5569 = vmatpush1.msra.mxu0 %v5513
  %5570 = vmatprep.subr.mxu0 0.0
  %5571 = vmatpush1.msra.mxu0 %v5514
  %5572 = vmatprep.subr.mxu0 0.0
  %5573 = vmatpush1.msra.mxu0 %v5515
  %5574 = vmatprep.subr.mxu0 0.0
  %5575 = vmatpush1.msra.mxu0 %v5516
  %5576 = vmatprep.subr.mxu0 0.0
  %5577 = vmatpush1.msra.mxu0 %v5517
  %5578 = vmatprep.subr.mxu0 0.0
  %5579 = vmatpush1.msra.mxu0 %v5518
  %5580 = vmatprep.subr.mxu0 0.0
  %5581 = vmatpush1.msra.mxu0 %v5519
  %5582 = vmatprep.subr.mxu0 0.0
  %5583 = vmatpush1.msra.mxu0 %v5520
  %5584 = vmatprep.subr.mxu0 0.0
  %5585 = vmatpush1.msra.mxu0 %v5521
  %5586 = vmatprep.subr.mxu0 0.0
  %5587 = vmatpush1.msra.mxu0 %v5522
  %5588 = vmatprep.subr.mxu0 0.0
  %5589 = vmatpush1.msra.mxu0 %v5523
  %5590 = vmatprep.subr.mxu0 0.0
  %5591 = vmatpush1.msra.mxu0 0.0
  %5592 = vmatprep.subr.mxu0 0.0
  %5593 = vmatpush1.msra.mxu0 0.0
  %5594 = vmatprep.mubr.f32.mxu0 %v5143
  %5595 = vmatmul.mubr.f32.gmra.mrb[0].mxu0 %v5075
  %v5596 = vpop.f32.mrb[0].mxu0
  %v5597 = vadd.f32 0.0, %v5596
  %v5598 = vpop.f32.mrb[0].mxu0
  %5599 = vmatprep.mubr.f32.mxu0 %v5146
  %5600 = vmatmul.mubr.f32.gmra.mrb[0].mxu0 %v5077
  %v5601 = vpop.f32.mrb[0].mxu0
  %v5602 = vadd.f32 0.0, %v5601
  %v5603 = vpop.f32.mrb[0].mxu0
  %5604 = vmatprep.mubr.f32.mxu0 %v5149
  %5605 = vmatmul.mubr.f32.gmra.mrb[0].mxu0 %v5079
  %v5606 = vpop.f32.mrb[0].mxu0
  %v5607 = vadd.f32 0.0, %v5606
  %v5608 = vpop.f32.mrb[0].mxu0
  %5609 = vmatprep.mubr.f32.mxu0 %v5152
  %5610 = vmatmul.mubr.f32.gmra.mrb[0].mxu0 %v5081
  %v5611 = vpop.f32.mrb[0].mxu0
  %v5612 = vadd.f32 0.0, %v5611
  %v5613 = vpop.f32.mrb[0].mxu0
  %5614 = vmatprep.mubr.f32.mxu0 %v5155
  %5615 = vmatmul.mubr.f32.gmra.mrb[0].mxu0 %v5083
  %v5616 = vpop.f32.mrb[0].mxu0
  %v5617 = vadd.f32 0.0, %v5616
  %v5618 = vpop.f32.mrb[0].mxu0
  %5619 = vmatprep.mubr.f32.mxu0 %v5158
  %5620 = vmatmul.mubr.f32.gmra.mrb[0].mxu0 %v5085
  %v5621 = vpop.f32.mrb[0].mxu0
  %v5622 = vadd.f32 0.0, %v5621
  %v5623 = vpop.f32.mrb[0].mxu0
  %5624 = vmatprep.mubr.f32.mxu0 %v5161
  %5625 = vmatmul.mubr.f32.gmra.mrb[0].mxu0 %v5087
  %v5626 = vpop.f32.mrb[0].mxu0
  %v5627 = vadd.f32 0.0, %v5626
  %v5628 = vpop.f32.mrb[0].mxu0
  %5629 = vmatprep.mubr.f32.mxu0 %v5164
  %5630 = vmatmul.mubr.f32.gmra.mrb[0].mxu0 %v5089
  %v5631 = vpop.f32.mrb[0].mxu0
  %v5632 = vadd.f32 0.0, %v5631
  %v5633 = vpop.f32.mrb[0].mxu0
  %5634 = vmatprep.mubr.f32.mxu0 %v5167
  %5635 = vmatmul.mubr.f32.gmra.mrb[0].mxu0 %v5091
  %v5636 = vpop.f32.mrb[0].mxu0
  %v5637 = vadd.f32 0.0, %v5636
  %v5638 = vpop.f32.mrb[0].mxu0
  %5639 = vmatprep.mubr.f32.mxu0 %v5170
  %5640 = vmatmul.mubr.f32.gmra.mrb[0].mxu0 %v5093
  %v5641 = vpop.f32.mrb[0].mxu0
  %v5642 = vadd.f32 0.0, %v5641
  %v5643 = vpop.f32.mrb[0].mxu0
  %5644 = vmatprep.mubr.f32.mxu0 %v5173
  %5645 = vmatmul.mubr.f32.gmra.mrb[0].mxu0 %v5095
  %v5646 = vpop.f32.mrb[0].mxu0
  %v5647 = vadd.f32 0.0, %v5646
  %v5648 = vpop.f32.mrb[0].mxu0
  %5649 = vmatprep.mubr.f32.mxu0 %v5176
  %5650 = vmatmul.mubr.f32.gmra.mrb[0].mxu0 %v5097
  %v5651 = vpop.f32.mrb[0].mxu0
  %v5652 = vadd.f32 0.0, %v5651
  %v5653 = vpop.f32.mrb[0].mxu0
  %5654 = vdwg.mxu0
  %5655 = vmatprep.subr.mxu0 0.0
  %5656 = vmatpush1.msra.mxu0 %v5500
  %5657 = vmatprep.subr.mxu0 0.0
  %5658 = vmatpush1.msra.mxu0 %v5501
  %5659 = vmatprep.subr.mxu0 0.0
  %5660 = vmatpush1.msra.mxu0 %v5502
  %5661 = vmatprep.subr.mxu0 0.0
  %5662 = vmatpush1.msra.mxu0 %v5503
  %5663 = vmatprep.subr.mxu0 0.0
  %5664 = vmatpush1.msra.mxu0 %v5504
  %5665 = vmatprep.subr.mxu0 0.0
  %5666 = vmatpush1.msra.mxu0 %v5505
  %5667 = vmatprep.subr.mxu0 0.0
  %5668 = vmatpush1.msra.mxu0 %v5506
  %5669 = vmatprep.subr.mxu0 0.0
  %5670 = vmatpush1.msra.mxu0 %v5507
  %5671 = vmatprep.subr.mxu0 0.0
  %5672 = vmatpush1.msra.mxu0 %v5508
  %5673 = vmatprep.subr.mxu0 0.0
  %5674 = vmatpush1.msra.mxu0 %v5509
  %5675 = vmatprep.subr.mxu0 0.0
  %5676 = vmatpush1.msra.mxu0 %v5510
  %5677 = vmatprep.subr.mxu0 0.0
  %5678 = vmatpush1.msra.mxu0 %v5511
  %5679 = vmatprep.subr.mxu0 0.0
  %5680 = vmatpush1.msra.mxu0 %v5512
  %5681 = vmatprep.subr.mxu0 0.0
  %5682 = vmatpush1.msra.mxu0 %v5513
  %5683 = vmatprep.subr.mxu0 0.0
  %5684 = vmatpush1.msra.mxu0 %v5514
  %5685 = vmatprep.subr.mxu0 0.0
  %5686 = vmatpush1.msra.mxu0 %v5515
  %5687 = vmatprep.subr.mxu0 0.0
  %5688 = vmatpush1.msra.mxu0 %v5516
  %5689 = vmatprep.subr.mxu0 0.0
  %5690 = vmatpush1.msra.mxu0 %v5517
  %5691 = vmatprep.subr.mxu0 0.0
  %5692 = vmatpush1.msra.mxu0 %v5518
  %5693 = vmatprep.subr.mxu0 0.0
  %5694 = vmatpush1.msra.mxu0 %v5519
  %5695 = vmatprep.subr.mxu0 0.0
  %5696 = vmatpush1.msra.mxu0 %v5520
  %5697 = vmatprep.subr.mxu0 0.0
  %5698 = vmatpush1.msra.mxu0 %v5521
  %5699 = vmatprep.subr.mxu0 0.0
  %5700 = vmatpush1.msra.mxu0 %v5522
  %5701 = vmatprep.subr.mxu0 0.0
  %5702 = vmatpush1.msra.mxu0 %v5523
  %5703 = vmatprep.subr.mxu0 0.0
  %5704 = vmatpush1.msra.mxu0 %v5524
  %5705 = vmatprep.subr.mxu0 0.0
  %5706 = vmatpush1.msra.mxu0 %v5525
  %5707 = vmatprep.subr.mxu0 0.0
  %5708 = vmatpush1.msra.mxu0 %v5526
  %5709 = vmatprep.subr.mxu0 0.0
  %5710 = vmatpush1.msra.mxu0 %v5527
  %5711 = vmatprep.subr.mxu0 0.0
  %5712 = vmatpush1.msra.mxu0 %v5528
  %5713 = vmatprep.subr.mxu0 0.0
  %5714 = vmatpush1.msra.mxu0 %v5529
  %5715 = vmatprep.subr.mxu0 0.0
  %5716 = vmatpush1.msra.mxu0 0.0
  %5717 = vmatprep.subr.mxu0 0.0
  %5718 = vmatpush1.msra.mxu0 0.0
  %5719 = vmatprep.mubr.f32.mxu0 %v5143
  %5720 = vmatmul.mubr.f32.gmra.mrb[0].mxu0 %v5075
  %v5721 = vpop.f32.mrb[0].mxu0
  %v5722 = vadd.f32 0.0, %v5721
  %v5723 = vpop.f32.mrb[0].mxu0
  %5724 = vmatprep.mubr.f32.mxu0 %v5146
  %5725 = vmatmul.mubr.f32.gmra.mrb[0].mxu0 %v5077
  %v5726 = vpop.f32.mrb[0].mxu0
  %v5727 = vadd.f32 0.0, %v5726
  %v5728 = vpop.f32.mrb[0].mxu0
  %5729 = vmatprep.mubr.f32.mxu0 %v5149
  %5730 = vmatmul.mubr.f32.gmra.mrb[0].mxu0 %v5079
  %v5731 = vpop.f32.mrb[0].mxu0
  %v5732 = vadd.f32 0.0, %v5731
  %v5733 = vpop.f32.mrb[0].mxu0
  %5734 = vmatprep.mubr.f32.mxu0 %v5152
  %5735 = vmatmul.mubr.f32.gmra.mrb[0].mxu0 %v5081
  %v5736 = vpop.f32.mrb[0].mxu0
  %v5737 = vadd.f32 0.0, %v5736
  %v5738 = vpop.f32.mrb[0].mxu0
  %5739 = vmatprep.mubr.f32.mxu0 %v5155
  %5740 = vmatmul.mubr.f32.gmra.mrb[0].mxu0 %v5083
  %v5741 = vpop.f32.mrb[0].mxu0
  %v5742 = vadd.f32 0.0, %v5741
  %v5743 = vpop.f32.mrb[0].mxu0
  %5744 = vmatprep.mubr.f32.mxu0 %v5158
  %5745 = vmatmul.mubr.f32.gmra.mrb[0].mxu0 %v5085
  %v5746 = vpop.f32.mrb[0].mxu0
  %v5747 = vadd.f32 0.0, %v5746
  %v5748 = vpop.f32.mrb[0].mxu0
  %5749 = vmatprep.mubr.f32.mxu0 %v5161
  %5750 = vmatmul.mubr.f32.gmra.mrb[0].mxu0 %v5087
  %v5751 = vpop.f32.mrb[0].mxu0
  %v5752 = vadd.f32 0.0, %v5751
  %v5753 = vpop.f32.mrb[0].mxu0
  %5754 = vmatprep.mubr.f32.mxu0 %v5164
  %5755 = vmatmul.mubr.f32.gmra.mrb[0].mxu0 %v5089
  %v5756 = vpop.f32.mrb[0].mxu0
  %v5757 = vadd.f32 0.0, %v5756
  %v5758 = vpop.f32.mrb[0].mxu0
  %5759 = vmatprep.mubr.f32.mxu0 %v5167
  %5760 = vmatmul.mubr.f32.gmra.mrb[0].mxu0 %v5091
  %v5761 = vpop.f32.mrb[0].mxu0
  %v5762 = vadd.f32 0.0, %v5761
  %v5763 = vpop.f32.mrb[0].mxu0
  %5764 = vmatprep.mubr.f32.mxu0 %v5170
  %5765 = vmatmul.mubr.f32.gmra.mrb[0].mxu0 %v5093
  %v5766 = vpop.f32.mrb[0].mxu0
  %v5767 = vadd.f32 0.0, %v5766
  %v5768 = vpop.f32.mrb[0].mxu0
  %5769 = vmatprep.mubr.f32.mxu0 %v5173
  %5770 = vmatmul.mubr.f32.gmra.mrb[0].mxu0 %v5095
  %v5771 = vpop.f32.mrb[0].mxu0
  %v5772 = vadd.f32 0.0, %v5771
  %v5773 = vpop.f32.mrb[0].mxu0
  %5774 = vmatprep.mubr.f32.mxu0 %v5176
  %5775 = vmatmul.mubr.f32.gmra.mrb[0].mxu0 %v5097
  %v5776 = vpop.f32.mrb[0].mxu0
  %v5777 = vadd.f32 0.0, %v5776
  %v5778 = vpop.f32.mrb[0].mxu0
  %5779 = vdwg.mxu0
  %v5780 = vmax.f32 %v5597, %v5722
  %v5781 = vmax.f32 %v5602, %v5727
  %v5782 = vmax.f32 %v5607, %v5732
  %v5783 = vmax.f32 %v5612, %v5737
  %v5784 = vmax.f32 %v5617, %v5742
  %v5785 = vmax.f32 %v5622, %v5747
  %v5786 = vmax.f32 %v5627, %v5752
  %v5787 = vmax.f32 %v5632, %v5757
  %v5788 = vmax.f32 %v5637, %v5762
  %v5789 = vmax.f32 %v5642, %v5767
  %v5790 = vmax.f32 %v5647, %v5772
  %v5791 = vmax.f32 %v5652, %v5777
  %v5792 = vmax.f32 %v5780, %v5786
  %v5793 = vmax.f32 %v5781, %v5787
  %v5794 = vmax.f32 %v5782, %v5788
  %v5795 = vmax.f32 %v5783, %v5789
  %v5796 = vmax.f32 %v5784, %v5790
  %v5797 = vmax.f32 %v5785, %v5791
  %v5798 = vadd.f32 %v5792, %v5099
  %v5799 = vadd.f32 %v5793, %v5100
  %v5800 = vadd.f32 %v5794, %v5101
  %v5801 = vadd.f32 %v5795, %v5102
  %v5802 = vadd.f32 %v5796, %v5103
  %v5803 = vadd.f32 %v5797, %v5104
  %v5804 = vxor.u32 %v5798, 2147483648
  %v5805 = vxor.u32 %v5799, 2147483648
  %v5806 = vxor.u32 %v5800, 2147483648
  %v5807 = vxor.u32 %v5801, 2147483648
  %v5808 = vxor.u32 %v5802, 2147483648
  %v5809 = vxor.u32 %v5803, 2147483648
  %v5810 = vmul.f32 %v5804, 1.442695
  %v5811 = vpow.pop %v5810
  %v5812 = vmul.f32 %v5805, 1.442695
  %v5813 = vpow.pop %v5812
  %v5814 = vmul.f32 %v5806, 1.442695
  %v5815 = vpow.pop %v5814
  %v5816 = vmul.f32 %v5807, 1.442695
  %v5817 = vpow.pop %v5816
  %v5818 = vmul.f32 %v5808, 1.442695
  %v5819 = vpow.pop %v5818
  %v5820 = vmul.f32 %v5809, 1.442695
  %v5821 = vpow.pop %v5820
  %v5822 = vadd.f32 %v5811, 1.0
  %v5823 = vadd.f32 %v5813, 1.0
  %v5824 = vadd.f32 %v5815, 1.0
  %v5825 = vadd.f32 %v5817, 1.0
  %v5826 = vadd.f32 %v5819, 1.0
  %v5827 = vadd.f32 %v5821, 1.0
  %v5828 = vrcp.pop %v5822
  %v5829 = vmul.f32 1.0, %v5828
  %v5830 = vrcp.pop %v5823
  %v5831 = vmul.f32 1.0, %v5830
  %v5832 = vrcp.pop %v5824
  %v5833 = vmul.f32 1.0, %v5832
  %v5834 = vrcp.pop %v5825
  %v5835 = vmul.f32 1.0, %v5834
  %v5836 = vrcp.pop %v5826
  %v5837 = vmul.f32 1.0, %v5836
  %v5838 = vrcp.pop %v5827
  %v5839 = vmul.f32 1.0, %v5838
  %5840 = vst [vmem:[#allocation3 + $0x30] sm:$0xff] %v5829
  %5841 = vst [vmem:[#allocation3 + $0x38] sm:$0xff] %v5831
  %5842 = vst [vmem:[#allocation3 + $0x40] sm:$0xff] %v5833
  %5843 = vst [vmem:[#allocation3 + $0x48] sm:$0xff] %v5835
  %5844 = vst [vmem:[#allocation3 + $0x50] sm:$0xff] %v5837
  %5845 = vst [vmem:[#allocation3 + $0x58] sm:$0xff] %v5839
  %v5846 = vld [vmem:[#allocation2 + $0xc0] sm:$0xff]
  %v5847 = vld [vmem:[#allocation2 + $0xc8] sm:$0xff]
  %v5848 = vld [vmem:[#allocation2 + $0xd0] sm:$0xff]
  %v5849 = vld [vmem:[#allocation2 + $0xd8] sm:$0xff]
  %v5850 = vld [vmem:[#allocation2 + $0xe0] sm:$0xff]
  %v5851 = vld [vmem:[#allocation2 + $0xe8] sm:$0xff]
  %v5852 = vld [vmem:[#allocation2 + $0xf0] sm:$0xff]
  %v5853 = vld [vmem:[#allocation2 + $0xf8] sm:$0xff]
  %v5854 = vld [vmem:[#allocation2 + $0x100] sm:$0xff]
  %v5855 = vld [vmem:[#allocation2 + $0x108] sm:$0xff]
  %v5856 = vld [vmem:[#allocation2 + $0x110] sm:$0xff]
  %v5857 = vld [vmem:[#allocation2 + $0x118] sm:$0xff]
  %v5858 = vld [vmem:[#allocation2 + $0x120] sm:$0xff]
  %v5859 = vld [vmem:[#allocation2 + $0x128] sm:$0xff]
  %v5860 = vld [vmem:[#allocation2 + $0x130] sm:$0xff]
  %v5861 = vld [vmem:[#allocation2 + $0x138] sm:$0xff]
  %v5862 = vld [vmem:[#allocation2 + $0x140] sm:$0xff]
  %v5863 = vld [vmem:[#allocation2 + $0x148] sm:$0xff]
  %v5864 = vld [vmem:[#allocation2 + $0x150] sm:$0xff]
  %v5865 = vld [vmem:[#allocation2 + $0x158] sm:$0xff]
  %v5866 = vld [vmem:[#allocation2 + $0x160] sm:$0xff]
  %v5867 = vld [vmem:[#allocation2 + $0x168] sm:$0xff]
  %v5868 = vld [vmem:[#allocation2 + $0x170] sm:$0xff]
  %v5869 = vld [vmem:[#allocation2 + $0x178] sm:$0xff]
  %v5870 = vld [vmem:[#allocation2 + $0x180] sm:$0xff]
  %v5871 = vld [vmem:[#allocation2 + $0x188] sm:$0xff]
  %v5872 = vld [vmem:[#allocation2 + $0x190] sm:$0xff]
  %v5873 = vld [vmem:[#allocation2 + $0x198] sm:$0xff]
  %v5874 = vld [vmem:[#allocation2 + $0x1a0] sm:$0xff]
  %v5875 = vld [vmem:[#allocation2 + $0x1a8] sm:$0xff]
  %v5876 = vld [vmem:[#allocation2 + $0x1b0] sm:$0xff]
  %v5877 = vld [vmem:[#allocation2 + $0x1b8] sm:$0xff]
  %v5878 = vld [vmem:[#allocation2 + $0x1c0] sm:$0xff]
  %v5879 = vld [vmem:[#allocation2 + $0x1c8] sm:$0xff]
  %v5880 = vld [vmem:[#allocation2 + $0x1d0] sm:$0xff]
  %v5881 = vld [vmem:[#allocation2 + $0x1d8] sm:$0xff]
  %5882 = vmatprep.subr.mxu0 0.0
  %5883 = vmatpush1.msra.mxu0 %v5846
  %5884 = vmatprep.subr.mxu0 0.0
  %5885 = vmatpush1.msra.mxu0 %v5847
  %5886 = vmatprep.subr.mxu0 0.0
  %5887 = vmatpush1.msra.mxu0 %v5848
  %5888 = vmatprep.subr.mxu0 0.0
  %5889 = vmatpush1.msra.mxu0 %v5849
  %5890 = vmatprep.subr.mxu0 0.0
  %5891 = vmatpush1.msra.mxu0 %v5850
  %5892 = vmatprep.subr.mxu0 0.0
  %5893 = vmatpush1.msra.mxu0 %v5851
  %5894 = vmatprep.subr.mxu0 0.0
  %5895 = vmatpush1.msra.mxu0 %v5852
  %5896 = vmatprep.subr.mxu0 0.0
  %5897 = vmatpush1.msra.mxu0 %v5853
  %5898 = vmatprep.subr.mxu0 0.0
  %5899 = vmatpush1.msra.mxu0 %v5854
  %5900 = vmatprep.subr.mxu0 0.0
  %5901 = vmatpush1.msra.mxu0 %v5855
  %5902 = vmatprep.subr.mxu0 0.0
  %5903 = vmatpush1.msra.mxu0 %v5856
  %5904 = vmatprep.subr.mxu0 0.0
  %5905 = vmatpush1.msra.mxu0 %v5857
  %5906 = vmatprep.subr.mxu0 0.0
  %5907 = vmatpush1.msra.mxu0 %v5858
  %5908 = vmatprep.subr.mxu0 0.0
  %5909 = vmatpush1.msra.mxu0 %v5859
  %5910 = vmatprep.subr.mxu0 0.0
  %5911 = vmatpush1.msra.mxu0 %v5860
  %5912 = vmatprep.subr.mxu0 0.0
  %5913 = vmatpush1.msra.mxu0 %v5861
  %5914 = vmatprep.subr.mxu0 0.0
  %5915 = vmatpush1.msra.mxu0 %v5862
  %5916 = vmatprep.subr.mxu0 0.0
  %5917 = vmatpush1.msra.mxu0 %v5863
  %5918 = vmatprep.subr.mxu0 0.0
  %5919 = vmatpush1.msra.mxu0 %v5864
  %5920 = vmatprep.subr.mxu0 0.0
  %5921 = vmatpush1.msra.mxu0 %v5865
  %5922 = vmatprep.subr.mxu0 0.0
  %5923 = vmatpush1.msra.mxu0 %v5866
  %5924 = vmatprep.subr.mxu0 0.0
  %5925 = vmatpush1.msra.mxu0 %v5867
  %5926 = vmatprep.subr.mxu0 0.0
  %5927 = vmatpush1.msra.mxu0 %v5868
  %5928 = vmatprep.subr.mxu0 0.0
  %5929 = vmatpush1.msra.mxu0 %v5869
  %5930 = vmatprep.subr.mxu0 0.0
  %5931 = vmatpush1.msra.mxu0 %v5870
  %5932 = vmatprep.subr.mxu0 0.0
  %5933 = vmatpush1.msra.mxu0 %v5871
  %5934 = vmatprep.subr.mxu0 0.0
  %5935 = vmatpush1.msra.mxu0 %v5872
  %5936 = vmatprep.subr.mxu0 0.0
  %5937 = vmatpush1.msra.mxu0 %v5873
  %5938 = vmatprep.subr.mxu0 0.0
  %5939 = vmatpush1.msra.mxu0 %v5874
  %5940 = vmatprep.subr.mxu0 0.0
  %5941 = vmatpush1.msra.mxu0 %v5875
  %5942 = vmatprep.subr.mxu0 0.0
  %5943 = vmatpush1.msra.mxu0 0.0
  %5944 = vmatprep.subr.mxu0 0.0
  %5945 = vmatpush1.msra.mxu0 0.0
  %5946 = vmatprep.mubr.f32.mxu0 %v5143
  %5947 = vmatmul.mubr.f32.gmra.mrb[0].mxu0 %v5075
  %v5948 = vpop.f32.mrb[0].mxu0
  %v5949 = vadd.f32 0.0, %v5948
  %v5950 = vpop.f32.mrb[0].mxu0
  %5951 = vmatprep.mubr.f32.mxu0 %v5146
  %5952 = vmatmul.mubr.f32.gmra.mrb[0].mxu0 %v5077
  %v5953 = vpop.f32.mrb[0].mxu0
  %v5954 = vadd.f32 0.0, %v5953
  %v5955 = vpop.f32.mrb[0].mxu0
  %5956 = vmatprep.mubr.f32.mxu0 %v5149
  %5957 = vmatmul.mubr.f32.gmra.mrb[0].mxu0 %v5079
  %v5958 = vpop.f32.mrb[0].mxu0
  %v5959 = vadd.f32 0.0, %v5958
  %v5960 = vpop.f32.mrb[0].mxu0
  %5961 = vmatprep.mubr.f32.mxu0 %v5152
  %5962 = vmatmul.mubr.f32.gmra.mrb[0].mxu0 %v5081
  %v5963 = vpop.f32.mrb[0].mxu0
  %v5964 = vadd.f32 0.0, %v5963
  %v5965 = vpop.f32.mrb[0].mxu0
  %5966 = vmatprep.mubr.f32.mxu0 %v5155
  %5967 = vmatmul.mubr.f32.gmra.mrb[0].mxu0 %v5083
  %v5968 = vpop.f32.mrb[0].mxu0
  %v5969 = vadd.f32 0.0, %v5968
  %v5970 = vpop.f32.mrb[0].mxu0
  %5971 = vmatprep.mubr.f32.mxu0 %v5158
  %5972 = vmatmul.mubr.f32.gmra.mrb[0].mxu0 %v5085
  %v5973 = vpop.f32.mrb[0].mxu0
  %v5974 = vadd.f32 0.0, %v5973
  %v5975 = vpop.f32.mrb[0].mxu0
  %5976 = vmatprep.mubr.f32.mxu0 %v5161
  %5977 = vmatmul.mubr.f32.gmra.mrb[0].mxu0 %v5087
  %v5978 = vpop.f32.mrb[0].mxu0
  %v5979 = vadd.f32 0.0, %v5978
  %v5980 = vpop.f32.mrb[0].mxu0
  %5981 = vmatprep.mubr.f32.mxu0 %v5164
  %5982 = vmatmul.mubr.f32.gmra.mrb[0].mxu0 %v5089
  %v5983 = vpop.f32.mrb[0].mxu0
  %v5984 = vadd.f32 0.0, %v5983
  %v5985 = vpop.f32.mrb[0].mxu0
  %5986 = vmatprep.mubr.f32.mxu0 %v5167
  %5987 = vmatmul.mubr.f32.gmra.mrb[0].mxu0 %v5091
  %v5988 = vpop.f32.mrb[0].mxu0
  %v5989 = vadd.f32 0.0, %v5988
  %v5990 = vpop.f32.mrb[0].mxu0
  %5991 = vmatprep.mubr.f32.mxu0 %v5170
  %5992 = vmatmul.mubr.f32.gmra.mrb[0].mxu0 %v5093
  %v5993 = vpop.f32.mrb[0].mxu0
  %v5994 = vadd.f32 0.0, %v5993
  %v5995 = vpop.f32.mrb[0].mxu0
  %5996 = vmatprep.mubr.f32.mxu0 %v5173
  %5997 = vmatmul.mubr.f32.gmra.mrb[0].mxu0 %v5095
  %v5998 = vpop.f32.mrb[0].mxu0
  %v5999 = vadd.f32 0.0, %v5998
  %v6000 = vpop.f32.mrb[0].mxu0
  %6001 = vmatprep.mubr.f32.mxu0 %v5176
  %6002 = vmatmul.mubr.f32.gmra.mrb[0].mxu0 %v5097
  %v6003 = vpop.f32.mrb[0].mxu0
  %v6004 = vadd.f32 0.0, %v6003
  %v6005 = vpop.f32.mrb[0].mxu0
  %6006 = vdwg.mxu0
  %6007 = vmatprep.subr.mxu0 0.0
  %6008 = vmatpush1.msra.mxu0 %v5852
  %6009 = vmatprep.subr.mxu0 0.0
  %6010 = vmatpush1.msra.mxu0 %v5853
  %6011 = vmatprep.subr.mxu0 0.0
  %6012 = vmatpush1.msra.mxu0 %v5854
  %6013 = vmatprep.subr.mxu0 0.0
  %6014 = vmatpush1.msra.mxu0 %v5855
  %6015 = vmatprep.subr.mxu0 0.0
  %6016 = vmatpush1.msra.mxu0 %v5856
  %6017 = vmatprep.subr.mxu0 0.0
  %6018 = vmatpush1.msra.mxu0 %v5857
  %6019 = vmatprep.subr.mxu0 0.0
  %6020 = vmatpush1.msra.mxu0 %v5858
  %6021 = vmatprep.subr.mxu0 0.0
  %6022 = vmatpush1.msra.mxu0 %v5859
  %6023 = vmatprep.subr.mxu0 0.0
  %6024 = vmatpush1.msra.mxu0 %v5860
  %6025 = vmatprep.subr.mxu0 0.0
  %6026 = vmatpush1.msra.mxu0 %v5861
  %6027 = vmatprep.subr.mxu0 0.0
  %6028 = vmatpush1.msra.mxu0 %v5862
  %6029 = vmatprep.subr.mxu0 0.0
  %6030 = vmatpush1.msra.mxu0 %v5863
  %6031 = vmatprep.subr.mxu0 0.0
  %6032 = vmatpush1.msra.mxu0 %v5864
  %6033 = vmatprep.subr.mxu0 0.0
  %6034 = vmatpush1.msra.mxu0 %v5865
  %6035 = vmatprep.subr.mxu0 0.0
  %6036 = vmatpush1.msra.mxu0 %v5866
  %6037 = vmatprep.subr.mxu0 0.0
  %6038 = vmatpush1.msra.mxu0 %v5867
  %6039 = vmatprep.subr.mxu0 0.0
  %6040 = vmatpush1.msra.mxu0 %v5868
  %6041 = vmatprep.subr.mxu0 0.0
  %6042 = vmatpush1.msra.mxu0 %v5869
  %6043 = vmatprep.subr.mxu0 0.0
  %6044 = vmatpush1.msra.mxu0 %v5870
  %6045 = vmatprep.subr.mxu0 0.0
  %6046 = vmatpush1.msra.mxu0 %v5871
  %6047 = vmatprep.subr.mxu0 0.0
  %6048 = vmatpush1.msra.mxu0 %v5872
  %6049 = vmatprep.subr.mxu0 0.0
  %6050 = vmatpush1.msra.mxu0 %v5873
  %6051 = vmatprep.subr.mxu0 0.0
  %6052 = vmatpush1.msra.mxu0 %v5874
  %6053 = vmatprep.subr.mxu0 0.0
  %6054 = vmatpush1.msra.mxu0 %v5875
  %6055 = vmatprep.subr.mxu0 0.0
  %6056 = vmatpush1.msra.mxu0 %v5876
  %6057 = vmatprep.subr.mxu0 0.0
  %6058 = vmatpush1.msra.mxu0 %v5877
  %6059 = vmatprep.subr.mxu0 0.0
  %6060 = vmatpush1.msra.mxu0 %v5878
  %6061 = vmatprep.subr.mxu0 0.0
  %6062 = vmatpush1.msra.mxu0 %v5879
  %6063 = vmatprep.subr.mxu0 0.0
  %6064 = vmatpush1.msra.mxu0 %v5880
  %6065 = vmatprep.subr.mxu0 0.0
  %6066 = vmatpush1.msra.mxu0 %v5881
  %6067 = vmatprep.subr.mxu0 0.0
  %6068 = vmatpush1.msra.mxu0 0.0
  %6069 = vmatprep.subr.mxu0 0.0
  %6070 = vmatpush1.msra.mxu0 0.0
  %6071 = vmatprep.mubr.f32.mxu0 %v5143
  %6072 = vmatmul.mubr.f32.gmra.mrb[0].mxu0 %v5075
  %v6073 = vpop.f32.mrb[0].mxu0
  %v6074 = vadd.f32 0.0, %v6073
  %v6075 = vpop.f32.mrb[0].mxu0
  %6076 = vmatprep.mubr.f32.mxu0 %v5146
  %6077 = vmatmul.mubr.f32.gmra.mrb[0].mxu0 %v5077
  %v6078 = vpop.f32.mrb[0].mxu0
  %v6079 = vadd.f32 0.0, %v6078
  %v6080 = vpop.f32.mrb[0].mxu0
  %6081 = vmatprep.mubr.f32.mxu0 %v5149
  %6082 = vmatmul.mubr.f32.gmra.mrb[0].mxu0 %v5079
  %v6083 = vpop.f32.mrb[0].mxu0
  %v6084 = vadd.f32 0.0, %v6083
  %v6085 = vpop.f32.mrb[0].mxu0
  %6086 = vmatprep.mubr.f32.mxu0 %v5152
  %6087 = vmatmul.mubr.f32.gmra.mrb[0].mxu0 %v5081
  %v6088 = vpop.f32.mrb[0].mxu0
  %v6089 = vadd.f32 0.0, %v6088
  %v6090 = vpop.f32.mrb[0].mxu0
  %6091 = vmatprep.mubr.f32.mxu0 %v5155
  %6092 = vmatmul.mubr.f32.gmra.mrb[0].mxu0 %v5083
  %v6093 = vpop.f32.mrb[0].mxu0
  %v6094 = vadd.f32 0.0, %v6093
  %v6095 = vpop.f32.mrb[0].mxu0
  %6096 = vmatprep.mubr.f32.mxu0 %v5158
  %6097 = vmatmul.mubr.f32.gmra.mrb[0].mxu0 %v5085
  %v6098 = vpop.f32.mrb[0].mxu0
  %v6099 = vadd.f32 0.0, %v6098
  %v6100 = vpop.f32.mrb[0].mxu0
  %6101 = vmatprep.mubr.f32.mxu0 %v5161
  %6102 = vmatmul.mubr.f32.gmra.mrb[0].mxu0 %v5087
  %v6103 = vpop.f32.mrb[0].mxu0
  %v6104 = vadd.f32 0.0, %v6103
  %v6105 = vpop.f32.mrb[0].mxu0
  %6106 = vmatprep.mubr.f32.mxu0 %v5164
  %6107 = vmatmul.mubr.f32.gmra.mrb[0].mxu0 %v5089
  %v6108 = vpop.f32.mrb[0].mxu0
  %v6109 = vadd.f32 0.0, %v6108
  %v6110 = vpop.f32.mrb[0].mxu0
  %6111 = vmatprep.mubr.f32.mxu0 %v5167
  %6112 = vmatmul.mubr.f32.gmra.mrb[0].mxu0 %v5091
  %v6113 = vpop.f32.mrb[0].mxu0
  %v6114 = vadd.f32 0.0, %v6113
  %v6115 = vpop.f32.mrb[0].mxu0
  %6116 = vmatprep.mubr.f32.mxu0 %v5170
  %6117 = vmatmul.mubr.f32.gmra.mrb[0].mxu0 %v5093
  %v6118 = vpop.f32.mrb[0].mxu0
  %v6119 = vadd.f32 0.0, %v6118
  %v6120 = vpop.f32.mrb[0].mxu0
  %6121 = vmatprep.mubr.f32.mxu0 %v5173
  %6122 = vmatmul.mubr.f32.gmra.mrb[0].mxu0 %v5095
  %v6123 = vpop.f32.mrb[0].mxu0
  %v6124 = vadd.f32 0.0, %v6123
  %v6125 = vpop.f32.mrb[0].mxu0
  %6126 = vmatprep.mubr.f32.mxu0 %v5176
  %6127 = vmatmul.mubr.f32.gmra.mrb[0].mxu0 %v5097
  %v6128 = vpop.f32.mrb[0].mxu0
  %v6129 = vadd.f32 0.0, %v6128
  %v6130 = vpop.f32.mrb[0].mxu0
  %6131 = vdwg.mxu0
  %v6132 = vmax.f32 %v5949, %v6074
  %v6133 = vmax.f32 %v5954, %v6079
  %v6134 = vmax.f32 %v5959, %v6084
  %v6135 = vmax.f32 %v5964, %v6089
  %v6136 = vmax.f32 %v5969, %v6094
  %v6137 = vmax.f32 %v5974, %v6099
  %v6138 = vmax.f32 %v5979, %v6104
  %v6139 = vmax.f32 %v5984, %v6109
  %v6140 = vmax.f32 %v5989, %v6114
  %v6141 = vmax.f32 %v5994, %v6119
  %v6142 = vmax.f32 %v5999, %v6124
  %v6143 = vmax.f32 %v6004, %v6129
  %v6144 = vmax.f32 %v6132, %v6138
  %v6145 = vmax.f32 %v6133, %v6139
  %v6146 = vmax.f32 %v6134, %v6140
  %v6147 = vmax.f32 %v6135, %v6141
  %v6148 = vmax.f32 %v6136, %v6142
  %v6149 = vmax.f32 %v6137, %v6143
  %v6150 = vadd.f32 %v6144, %v5099
  %v6151 = vadd.f32 %v6145, %v5100
  %v6152 = vadd.f32 %v6146, %v5101
  %v6153 = vadd.f32 %v6147, %v5102
  %v6154 = vadd.f32 %v6148, %v5103
  %v6155 = vadd.f32 %v6149, %v5104
  %v6156 = vxor.u32 %v6150, 2147483648
  %v6157 = vxor.u32 %v6151, 2147483648
  %v6158 = vxor.u32 %v6152, 2147483648
  %v6159 = vxor.u32 %v6153, 2147483648
  %v6160 = vxor.u32 %v6154, 2147483648
  %v6161 = vxor.u32 %v6155, 2147483648
  %v6162 = vmul.f32 %v6156, 1.442695
  %v6163 = vpow.pop %v6162
  %v6164 = vmul.f32 %v6157, 1.442695
  %v6165 = vpow.pop %v6164
  %v6166 = vmul.f32 %v6158, 1.442695
  %v6167 = vpow.pop %v6166
  %v6168 = vmul.f32 %v6159, 1.442695
  %v6169 = vpow.pop %v6168
  %v6170 = vmul.f32 %v6160, 1.442695
  %v6171 = vpow.pop %v6170
  %v6172 = vmul.f32 %v6161, 1.442695
  %v6173 = vpow.pop %v6172
  %v6174 = vadd.f32 %v6163, 1.0
  %v6175 = vadd.f32 %v6165, 1.0
  %v6176 = vadd.f32 %v6167, 1.0
  %v6177 = vadd.f32 %v6169, 1.0
  %v6178 = vadd.f32 %v6171, 1.0
  %v6179 = vadd.f32 %v6173, 1.0
  %v6180 = vrcp.pop %v6174
  %v6181 = vmul.f32 1.0, %v6180
  %v6182 = vrcp.pop %v6175
  %v6183 = vmul.f32 1.0, %v6182
  %v6184 = vrcp.pop %v6176
  %v6185 = vmul.f32 1.0, %v6184
  %v6186 = vrcp.pop %v6177
  %v6187 = vmul.f32 1.0, %v6186
  %v6188 = vrcp.pop %v6178
  %v6189 = vmul.f32 1.0, %v6188
  %v6190 = vrcp.pop %v6179
  %v6191 = vmul.f32 1.0, %v6190
  %6192 = vst [vmem:[#allocation3 + $0x60] sm:$0xff] %v6181
  %6193 = vst [vmem:[#allocation3 + $0x68] sm:$0xff] %v6183
  %6194 = vst [vmem:[#allocation3 + $0x70] sm:$0xff] %v6185
  %6195 = vst [vmem:[#allocation3 + $0x78] sm:$0xff] %v6187
  %6196 = vst [vmem:[#allocation3 + $0x80] sm:$0xff] %v6189
  %6197 = vst [vmem:[#allocation3 + $0x88] sm:$0xff] %v6191
  %v6198 = vld [vmem:[#allocation2 + $0x120] sm:$0xff]
  %v6199 = vld [vmem:[#allocation2 + $0x128] sm:$0xff]
  %v6200 = vld [vmem:[#allocation2 + $0x130] sm:$0xff]
  %v6201 = vld [vmem:[#allocation2 + $0x138] sm:$0xff]
  %v6202 = vld [vmem:[#allocation2 + $0x140] sm:$0xff]
  %v6203 = vld [vmem:[#allocation2 + $0x148] sm:$0xff]
  %v6204 = vld [vmem:[#allocation2 + $0x150] sm:$0xff]
  %v6205 = vld [vmem:[#allocation2 + $0x158] sm:$0xff]
  %v6206 = vld [vmem:[#allocation2 + $0x160] sm:$0xff]
  %v6207 = vld [vmem:[#allocation2 + $0x168] sm:$0xff]
  %v6208 = vld [vmem:[#allocation2 + $0x170] sm:$0xff]
  %v6209 = vld [vmem:[#allocation2 + $0x178] sm:$0xff]
  %v6210 = vld [vmem:[#allocation2 + $0x180] sm:$0xff]
  %v6211 = vld [vmem:[#allocation2 + $0x188] sm:$0xff]
  %v6212 = vld [vmem:[#allocation2 + $0x190] sm:$0xff]
  %v6213 = vld [vmem:[#allocation2 + $0x198] sm:$0xff]
  %v6214 = vld [vmem:[#allocation2 + $0x1a0] sm:$0xff]
  %v6215 = vld [vmem:[#allocation2 + $0x1a8] sm:$0xff]
  %v6216 = vld [vmem:[#allocation2 + $0x1b0] sm:$0xff]
  %v6217 = vld [vmem:[#allocation2 + $0x1b8] sm:$0xff]
  %v6218 = vld [vmem:[#allocation2 + $0x1c0] sm:$0xff]
  %v6219 = vld [vmem:[#allocation2 + $0x1c8] sm:$0xff]
  %v6220 = vld [vmem:[#allocation2 + $0x1d0] sm:$0xff]
  %v6221 = vld [vmem:[#allocation2 + $0x1d8] sm:$0xff]
  %v6222 = vld [vmem:[#allocation2 + $0x1e0] sm:$0xff]
  %v6223 = vld [vmem:[#allocation2 + $0x1e8] sm:$0xff]
  %v6224 = vld [vmem:[#allocation2 + $0x1f0] sm:$0xff]
  %v6225 = vld [vmem:[#allocation2 + $0x1f8] sm:$0xff]
  %v6226 = vld [vmem:[#allocation2 + $0x200] sm:$0xff]
  %v6227 = vld [vmem:[#allocation2 + $0x208] sm:$0xff]
  %v6228 = vld [vmem:[#allocation2 + $0x210] sm:$0xff]
  %v6229 = vld [vmem:[#allocation2 + $0x218] sm:$0xff]
  %v6230 = vld [vmem:[#allocation2 + $0x220] sm:$0xff]
  %v6231 = vld [vmem:[#allocation2 + $0x228] sm:$0xff]
  %v6232 = vld [vmem:[#allocation2 + $0x230] sm:$0xff]
  %v6233 = vld [vmem:[#allocation2 + $0x238] sm:$0xff]
  %6234 = vmatprep.subr.mxu0 0.0
  %6235 = vmatpush1.msra.mxu0 %v6198
  %6236 = vmatprep.subr.mxu0 0.0
  %6237 = vmatpush1.msra.mxu0 %v6199
  %6238 = vmatprep.subr.mxu0 0.0
  %6239 = vmatpush1.msra.mxu0 %v6200
  %6240 = vmatprep.subr.mxu0 0.0
  %6241 = vmatpush1.msra.mxu0 %v6201
  %6242 = vmatprep.subr.mxu0 0.0
  %6243 = vmatpush1.msra.mxu0 %v6202
  %6244 = vmatprep.subr.mxu0 0.0
  %6245 = vmatpush1.msra.mxu0 %v6203
  %6246 = vmatprep.subr.mxu0 0.0
  %6247 = vmatpush1.msra.mxu0 %v6204
  %6248 = vmatprep.subr.mxu0 0.0
  %6249 = vmatpush1.msra.mxu0 %v6205
  %6250 = vmatprep.subr.mxu0 0.0
  %6251 = vmatpush1.msra.mxu0 %v6206
  %6252 = vmatprep.subr.mxu0 0.0
  %6253 = vmatpush1.msra.mxu0 %v6207
  %6254 = vmatprep.subr.mxu0 0.0
  %6255 = vmatpush1.msra.mxu0 %v6208
  %6256 = vmatprep.subr.mxu0 0.0
  %6257 = vmatpush1.msra.mxu0 %v6209
  %6258 = vmatprep.subr.mxu0 0.0
  %6259 = vmatpush1.msra.mxu0 %v6210
  %6260 = vmatprep.subr.mxu0 0.0
  %6261 = vmatpush1.msra.mxu0 %v6211
  %6262 = vmatprep.subr.mxu0 0.0
  %6263 = vmatpush1.msra.mxu0 %v6212
  %6264 = vmatprep.subr.mxu0 0.0
  %6265 = vmatpush1.msra.mxu0 %v6213
  %6266 = vmatprep.subr.mxu0 0.0
  %6267 = vmatpush1.msra.mxu0 %v6214
  %6268 = vmatprep.subr.mxu0 0.0
  %6269 = vmatpush1.msra.mxu0 %v6215
  %6270 = vmatprep.subr.mxu0 0.0
  %6271 = vmatpush1.msra.mxu0 %v6216
  %6272 = vmatprep.subr.mxu0 0.0
  %6273 = vmatpush1.msra.mxu0 %v6217
  %6274 = vmatprep.subr.mxu0 0.0
  %6275 = vmatpush1.msra.mxu0 %v6218
  %6276 = vmatprep.subr.mxu0 0.0
  %6277 = vmatpush1.msra.mxu0 %v6219
  %6278 = vmatprep.subr.mxu0 0.0
  %6279 = vmatpush1.msra.mxu0 %v6220
  %6280 = vmatprep.subr.mxu0 0.0
  %6281 = vmatpush1.msra.mxu0 %v6221
  %6282 = vmatprep.subr.mxu0 0.0
  %6283 = vmatpush1.msra.mxu0 %v6222
  %6284 = vmatprep.subr.mxu0 0.0
  %6285 = vmatpush1.msra.mxu0 %v6223
  %6286 = vmatprep.subr.mxu0 0.0
  %6287 = vmatpush1.msra.mxu0 %v6224
  %6288 = vmatprep.subr.mxu0 0.0
  %6289 = vmatpush1.msra.mxu0 %v6225
  %6290 = vmatprep.subr.mxu0 0.0
  %6291 = vmatpush1.msra.mxu0 %v6226
  %6292 = vmatprep.subr.mxu0 0.0
  %6293 = vmatpush1.msra.mxu0 %v6227
  %6294 = vmatprep.subr.mxu0 0.0
  %6295 = vmatpush1.msra.mxu0 0.0
  %6296 = vmatprep.subr.mxu0 0.0
  %6297 = vmatpush1.msra.mxu0 0.0
  %6298 = vmatprep.mubr.f32.mxu0 %v5143
  %6299 = vmatmul.mubr.f32.gmra.mrb[0].mxu0 %v5075
  %v6300 = vpop.f32.mrb[0].mxu0
  %v6301 = vadd.f32 0.0, %v6300
  %v6302 = vpop.f32.mrb[0].mxu0
  %6303 = vmatprep.mubr.f32.mxu0 %v5146
  %6304 = vmatmul.mubr.f32.gmra.mrb[0].mxu0 %v5077
  %v6305 = vpop.f32.mrb[0].mxu0
  %v6306 = vadd.f32 0.0, %v6305
  %v6307 = vpop.f32.mrb[0].mxu0
  %6308 = vmatprep.mubr.f32.mxu0 %v5149
  %6309 = vmatmul.mubr.f32.gmra.mrb[0].mxu0 %v5079
  %v6310 = vpop.f32.mrb[0].mxu0
  %v6311 = vadd.f32 0.0, %v6310
  %v6312 = vpop.f32.mrb[0].mxu0
  %6313 = vmatprep.mubr.f32.mxu0 %v5152
  %6314 = vmatmul.mubr.f32.gmra.mrb[0].mxu0 %v5081
  %v6315 = vpop.f32.mrb[0].mxu0
  %v6316 = vadd.f32 0.0, %v6315
  %v6317 = vpop.f32.mrb[0].mxu0
  %6318 = vmatprep.mubr.f32.mxu0 %v5155
  %6319 = vmatmul.mubr.f32.gmra.mrb[0].mxu0 %v5083
  %v6320 = vpop.f32.mrb[0].mxu0
  %v6321 = vadd.f32 0.0, %v6320
  %v6322 = vpop.f32.mrb[0].mxu0
  %6323 = vmatprep.mubr.f32.mxu0 %v5158
  %6324 = vmatmul.mubr.f32.gmra.mrb[0].mxu0 %v5085
  %v6325 = vpop.f32.mrb[0].mxu0
  %v6326 = vadd.f32 0.0, %v6325
  %v6327 = vpop.f32.mrb[0].mxu0
  %6328 = vmatprep.mubr.f32.mxu0 %v5161
  %6329 = vmatmul.mubr.f32.gmra.mrb[0].mxu0 %v5087
  %v6330 = vpop.f32.mrb[0].mxu0
  %v6331 = vadd.f32 0.0, %v6330
  %v6332 = vpop.f32.mrb[0].mxu0
  %6333 = vmatprep.mubr.f32.mxu0 %v5164
  %6334 = vmatmul.mubr.f32.gmra.mrb[0].mxu0 %v5089
  %v6335 = vpop.f32.mrb[0].mxu0
  %v6336 = vadd.f32 0.0, %v6335
  %v6337 = vpop.f32.mrb[0].mxu0
  %6338 = vmatprep.mubr.f32.mxu0 %v5167
  %6339 = vmatmul.mubr.f32.gmra.mrb[0].mxu0 %v5091
  %v6340 = vpop.f32.mrb[0].mxu0
  %v6341 = vadd.f32 0.0, %v6340
  %v6342 = vpop.f32.mrb[0].mxu0
  %6343 = vmatprep.mubr.f32.mxu0 %v5170
  %6344 = vmatmul.mubr.f32.gmra.mrb[0].mxu0 %v5093
  %v6345 = vpop.f32.mrb[0].mxu0
  %v6346 = vadd.f32 0.0, %v6345
  %v6347 = vpop.f32.mrb[0].mxu0
  %6348 = vmatprep.mubr.f32.mxu0 %v5173
  %6349 = vmatmul.mubr.f32.gmra.mrb[0].mxu0 %v5095
  %v6350 = vpop.f32.mrb[0].mxu0
  %v6351 = vadd.f32 0.0, %v6350
  %v6352 = vpop.f32.mrb[0].mxu0
  %6353 = vmatprep.mubr.f32.mxu0 %v5176
  %6354 = vmatmul.mubr.f32.gmra.mrb[0].mxu0 %v5097
  %v6355 = vpop.f32.mrb[0].mxu0
  %v6356 = vadd.f32 0.0, %v6355
  %v6357 = vpop.f32.mrb[0].mxu0
  %6358 = vdwg.mxu0
  %6359 = vmatprep.subr.mxu0 0.0
  %6360 = vmatpush1.msra.mxu0 %v6204
  %6361 = vmatprep.subr.mxu0 0.0
  %6362 = vmatpush1.msra.mxu0 %v6205
  %6363 = vmatprep.subr.mxu0 0.0
  %6364 = vmatpush1.msra.mxu0 %v6206
  %6365 = vmatprep.subr.mxu0 0.0
  %6366 = vmatpush1.msra.mxu0 %v6207
  %6367 = vmatprep.subr.mxu0 0.0
  %6368 = vmatpush1.msra.mxu0 %v6208
  %6369 = vmatprep.subr.mxu0 0.0
  %6370 = vmatpush1.msra.mxu0 %v6209
  %6371 = vmatprep.subr.mxu0 0.0
  %6372 = vmatpush1.msra.mxu0 %v6210
  %6373 = vmatprep.subr.mxu0 0.0
  %6374 = vmatpush1.msra.mxu0 %v6211
  %6375 = vmatprep.subr.mxu0 0.0
  %6376 = vmatpush1.msra.mxu0 %v6212
  %6377 = vmatprep.subr.mxu0 0.0
  %6378 = vmatpush1.msra.mxu0 %v6213
  %6379 = vmatprep.subr.mxu0 0.0
  %6380 = vmatpush1.msra.mxu0 %v6214
  %6381 = vmatprep.subr.mxu0 0.0
  %6382 = vmatpush1.msra.mxu0 %v6215
  %6383 = vmatprep.subr.mxu0 0.0
  %6384 = vmatpush1.msra.mxu0 %v6216
  %6385 = vmatprep.subr.mxu0 0.0
  %6386 = vmatpush1.msra.mxu0 %v6217
  %6387 = vmatprep.subr.mxu0 0.0
  %6388 = vmatpush1.msra.mxu0 %v6218
  %6389 = vmatprep.subr.mxu0 0.0
  %6390 = vmatpush1.msra.mxu0 %v6219
  %6391 = vmatprep.subr.mxu0 0.0
  %6392 = vmatpush1.msra.mxu0 %v6220
  %6393 = vmatprep.subr.mxu0 0.0
  %6394 = vmatpush1.msra.mxu0 %v6221
  %6395 = vmatprep.subr.mxu0 0.0
  %6396 = vmatpush1.msra.mxu0 %v6222
  %6397 = vmatprep.subr.mxu0 0.0
  %6398 = vmatpush1.msra.mxu0 %v6223
  %6399 = vmatprep.subr.mxu0 0.0
  %6400 = vmatpush1.msra.mxu0 %v6224
  %6401 = vmatprep.subr.mxu0 0.0
  %6402 = vmatpush1.msra.mxu0 %v6225
  %6403 = vmatprep.subr.mxu0 0.0
  %6404 = vmatpush1.msra.mxu0 %v6226
  %6405 = vmatprep.subr.mxu0 0.0
  %6406 = vmatpush1.msra.mxu0 %v6227
  %6407 = vmatprep.subr.mxu0 0.0
  %6408 = vmatpush1.msra.mxu0 %v6228
  %6409 = vmatprep.subr.mxu0 0.0
  %6410 = vmatpush1.msra.mxu0 %v6229
  %6411 = vmatprep.subr.mxu0 0.0
  %6412 = vmatpush1.msra.mxu0 %v6230
  %6413 = vmatprep.subr.mxu0 0.0
  %6414 = vmatpush1.msra.mxu0 %v6231
  %6415 = vmatprep.subr.mxu0 0.0
  %6416 = vmatpush1.msra.mxu0 %v6232
  %6417 = vmatprep.subr.mxu0 0.0
  %6418 = vmatpush1.msra.mxu0 %v6233
  %6419 = vmatprep.subr.mxu0 0.0
  %6420 = vmatpush1.msra.mxu0 0.0
  %6421 = vmatprep.subr.mxu0 0.0
  %6422 = vmatpush1.msra.mxu0 0.0
  %6423 = vmatprep.mubr.f32.mxu0 %v5143
  %6424 = vmatmul.mubr.f32.gmra.mrb[0].mxu0 %v5075
  %v6425 = vpop.f32.mrb[0].mxu0
  %v6426 = vadd.f32 0.0, %v6425
  %v6427 = vpop.f32.mrb[0].mxu0
  %6428 = vmatprep.mubr.f32.mxu0 %v5146
  %6429 = vmatmul.mubr.f32.gmra.mrb[0].mxu0 %v5077
  %v6430 = vpop.f32.mrb[0].mxu0
  %v6431 = vadd.f32 0.0, %v6430
  %v6432 = vpop.f32.mrb[0].mxu0
  %6433 = vmatprep.mubr.f32.mxu0 %v5149
  %6434 = vmatmul.mubr.f32.gmra.mrb[0].mxu0 %v5079
  %v6435 = vpop.f32.mrb[0].mxu0
  %v6436 = vadd.f32 0.0, %v6435
  %v6437 = vpop.f32.mrb[0].mxu0
  %6438 = vmatprep.mubr.f32.mxu0 %v5152
  %6439 = vmatmul.mubr.f32.gmra.mrb[0].mxu0 %v5081
  %v6440 = vpop.f32.mrb[0].mxu0
  %v6441 = vadd.f32 0.0, %v6440
  %v6442 = vpop.f32.mrb[0].mxu0
  %6443 = vmatprep.mubr.f32.mxu0 %v5155
  %6444 = vmatmul.mubr.f32.gmra.mrb[0].mxu0 %v5083
  %v6445 = vpop.f32.mrb[0].mxu0
  %v6446 = vadd.f32 0.0, %v6445
  %v6447 = vpop.f32.mrb[0].mxu0
  %6448 = vmatprep.mubr.f32.mxu0 %v5158
  %6449 = vmatmul.mubr.f32.gmra.mrb[0].mxu0 %v5085
  %v6450 = vpop.f32.mrb[0].mxu0
  %v6451 = vadd.f32 0.0, %v6450
  %v6452 = vpop.f32.mrb[0].mxu0
  %6453 = vmatprep.mubr.f32.mxu0 %v5161
  %6454 = vmatmul.mubr.f32.gmra.mrb[0].mxu0 %v5087
  %v6455 = vpop.f32.mrb[0].mxu0
  %v6456 = vadd.f32 0.0, %v6455
  %v6457 = vpop.f32.mrb[0].mxu0
  %6458 = vmatprep.mubr.f32.mxu0 %v5164
  %6459 = vmatmul.mubr.f32.gmra.mrb[0].mxu0 %v5089
  %v6460 = vpop.f32.mrb[0].mxu0
  %v6461 = vadd.f32 0.0, %v6460
  %v6462 = vpop.f32.mrb[0].mxu0
  %6463 = vmatprep.mubr.f32.mxu0 %v5167
  %6464 = vmatmul.mubr.f32.gmra.mrb[0].mxu0 %v5091
  %v6465 = vpop.f32.mrb[0].mxu0
  %v6466 = vadd.f32 0.0, %v6465
  %v6467 = vpop.f32.mrb[0].mxu0
  %6468 = vmatprep.mubr.f32.mxu0 %v5170
  %6469 = vmatmul.mubr.f32.gmra.mrb[0].mxu0 %v5093
  %v6470 = vpop.f32.mrb[0].mxu0
  %v6471 = vadd.f32 0.0, %v6470
  %v6472 = vpop.f32.mrb[0].mxu0
  %6473 = vmatprep.mubr.f32.mxu0 %v5173
  %6474 = vmatmul.mubr.f32.gmra.mrb[0].mxu0 %v5095
  %v6475 = vpop.f32.mrb[0].mxu0
  %v6476 = vadd.f32 0.0, %v6475
  %v6477 = vpop.f32.mrb[0].mxu0
  %6478 = vmatprep.mubr.f32.mxu0 %v5176
  %6479 = vmatmul.mubr.f32.gmra.mrb[0].mxu0 %v5097
  %v6480 = vpop.f32.mrb[0].mxu0
  %v6481 = vadd.f32 0.0, %v6480
  %v6482 = vpop.f32.mrb[0].mxu0
  %6483 = vdwg.mxu0
  %v6484 = vmax.f32 %v6301, %v6426
  %v6485 = vmax.f32 %v6306, %v6431
  %v6486 = vmax.f32 %v6311, %v6436
  %v6487 = vmax.f32 %v6316, %v6441
  %v6488 = vmax.f32 %v6321, %v6446
  %v6489 = vmax.f32 %v6326, %v6451
  %v6490 = vmax.f32 %v6331, %v6456
  %v6491 = vmax.f32 %v6336, %v6461
  %v6492 = vmax.f32 %v6341, %v6466
  %v6493 = vmax.f32 %v6346, %v6471
  %v6494 = vmax.f32 %v6351, %v6476
  %v6495 = vmax.f32 %v6356, %v6481
  %v6496 = vmax.f32 %v6484, %v6490
  %v6497 = vmax.f32 %v6485, %v6491
  %v6498 = vmax.f32 %v6486, %v6492
  %v6499 = vmax.f32 %v6487, %v6493
  %v6500 = vmax.f32 %v6488, %v6494
  %v6501 = vmax.f32 %v6489, %v6495
  %v6502 = vadd.f32 %v6496, %v5099
  %v6503 = vadd.f32 %v6497, %v5100
  %v6504 = vadd.f32 %v6498, %v5101
  %v6505 = vadd.f32 %v6499, %v5102
  %v6506 = vadd.f32 %v6500, %v5103
  %v6507 = vadd.f32 %v6501, %v5104
  %v6508 = vxor.u32 %v6502, 2147483648
  %v6509 = vxor.u32 %v6503, 2147483648
  %v6510 = vxor.u32 %v6504, 2147483648
  %v6511 = vxor.u32 %v6505, 2147483648
  %v6512 = vxor.u32 %v6506, 2147483648
  %v6513 = vxor.u32 %v6507, 2147483648
  %v6514 = vmul.f32 %v6508, 1.442695
  %v6515 = vpow.pop %v6514
  %v6516 = vmul.f32 %v6509, 1.442695
  %v6517 = vpow.pop %v6516
  %v6518 = vmul.f32 %v6510, 1.442695
  %v6519 = vpow.pop %v6518
  %v6520 = vmul.f32 %v6511, 1.442695
  %v6521 = vpow.pop %v6520
  %v6522 = vmul.f32 %v6512, 1.442695
  %v6523 = vpow.pop %v6522
  %v6524 = vmul.f32 %v6513, 1.442695
  %v6525 = vpow.pop %v6524
  %v6526 = vadd.f32 %v6515, 1.0
  %v6527 = vadd.f32 %v6517, 1.0
  %v6528 = vadd.f32 %v6519, 1.0
  %v6529 = vadd.f32 %v6521, 1.0
  %v6530 = vadd.f32 %v6523, 1.0
  %v6531 = vadd.f32 %v6525, 1.0
  %v6532 = vrcp.pop %v6526
  %v6533 = vmul.f32 1.0, %v6532
  %v6534 = vrcp.pop %v6527
  %v6535 = vmul.f32 1.0, %v6534
  %v6536 = vrcp.pop %v6528
  %v6537 = vmul.f32 1.0, %v6536
  %v6538 = vrcp.pop %v6529
  %v6539 = vmul.f32 1.0, %v6538
  %v6540 = vrcp.pop %v6530
  %v6541 = vmul.f32 1.0, %v6540
  %v6542 = vrcp.pop %v6531
  %v6543 = vmul.f32 1.0, %v6542
  %6544 = vst [vmem:[#allocation3 + $0x90] sm:$0xff] %v6533
  %6545 = vst [vmem:[#allocation3 + $0x98] sm:$0xff] %v6535
  %6546 = vst [vmem:[#allocation3 + $0xa0] sm:$0xff] %v6537
  %6547 = vst [vmem:[#allocation3 + $0xa8] sm:$0xff] %v6539
  %6548 = vst [vmem:[#allocation3 + $0xb0] sm:$0xff] %v6541
  %6549 = vst [vmem:[#allocation3 + $0xb8] sm:$0xff] %v6543
  %v6550 = vld [vmem:[#allocation2 + $0x180] sm:$0xff]
  %v6551 = vld [vmem:[#allocation2 + $0x188] sm:$0xff]
  %v6552 = vld [vmem:[#allocation2 + $0x190] sm:$0xff]
  %v6553 = vld [vmem:[#allocation2 + $0x198] sm:$0xff]
  %v6554 = vld [vmem:[#allocation2 + $0x1a0] sm:$0xff]
  %v6555 = vld [vmem:[#allocation2 + $0x1a8] sm:$0xff]
  %v6556 = vld [vmem:[#allocation2 + $0x1b0] sm:$0xff]
  %v6557 = vld [vmem:[#allocation2 + $0x1b8] sm:$0xff]
  %v6558 = vld [vmem:[#allocation2 + $0x1c0] sm:$0xff]
  %v6559 = vld [vmem:[#allocation2 + $0x1c8] sm:$0xff]
  %v6560 = vld [vmem:[#allocation2 + $0x1d0] sm:$0xff]
  %v6561 = vld [vmem:[#allocation2 + $0x1d8] sm:$0xff]
  %v6562 = vld [vmem:[#allocation2 + $0x1e0] sm:$0xff]
  %v6563 = vld [vmem:[#allocation2 + $0x1e8] sm:$0xff]
  %v6564 = vld [vmem:[#allocation2 + $0x1f0] sm:$0xff]
  %v6565 = vld [vmem:[#allocation2 + $0x1f8] sm:$0xff]
  %v6566 = vld [vmem:[#allocation2 + $0x200] sm:$0xff]
  %v6567 = vld [vmem:[#allocation2 + $0x208] sm:$0xff]
  %v6568 = vld [vmem:[#allocation2 + $0x210] sm:$0xff]
  %v6569 = vld [vmem:[#allocation2 + $0x218] sm:$0xff]
  %v6570 = vld [vmem:[#allocation2 + $0x220] sm:$0xff]
  %v6571 = vld [vmem:[#allocation2 + $0x228] sm:$0xff]
  %v6572 = vld [vmem:[#allocation2 + $0x230] sm:$0xff]
  %v6573 = vld [vmem:[#allocation2 + $0x238] sm:$0xff]
  %v6574 = vld [vmem:[#allocation2 + $0x240] sm:$0xff]
  %v6575 = vld [vmem:[#allocation2 + $0x248] sm:$0xff]
  %v6576 = vld [vmem:[#allocation2 + $0x250] sm:$0xff]
  %v6577 = vld [vmem:[#allocation2 + $0x258] sm:$0xff]
  %v6578 = vld [vmem:[#allocation2 + $0x260] sm:$0xff]
  %v6579 = vld [vmem:[#allocation2 + $0x268] sm:$0xff]
  %v6580 = vld [vmem:[#allocation2 + $0x270] sm:$0xff]
  %v6581 = vld [vmem:[#allocation2 + $0x278] sm:$0xff]
  %v6582 = vld [vmem:[#allocation2 + $0x280] sm:$0xff]
  %v6583 = vld [vmem:[#allocation2 + $0x288] sm:$0xff]
  %v6584 = vld [vmem:[#allocation2 + $0x290] sm:$0xff]
  %v6585 = vld [vmem:[#allocation2 + $0x298] sm:$0xff]
  %6586 = vmatprep.subr.mxu0 0.0
  %6587 = vmatpush1.msra.mxu0 %v6550
  %6588 = vmatprep.subr.mxu0 0.0
  %6589 = vmatpush1.msra.mxu0 %v6551
  %6590 = vmatprep.subr.mxu0 0.0
  %6591 = vmatpush1.msra.mxu0 %v6552
  %6592 = vmatprep.subr.mxu0 0.0
  %6593 = vmatpush1.msra.mxu0 %v6553
  %6594 = vmatprep.subr.mxu0 0.0
  %6595 = vmatpush1.msra.mxu0 %v6554
  %6596 = vmatprep.subr.mxu0 0.0
  %6597 = vmatpush1.msra.mxu0 %v6555
  %6598 = vmatprep.subr.mxu0 0.0
  %6599 = vmatpush1.msra.mxu0 %v6556
  %6600 = vmatprep.subr.mxu0 0.0
  %6601 = vmatpush1.msra.mxu0 %v6557
  %6602 = vmatprep.subr.mxu0 0.0
  %6603 = vmatpush1.msra.mxu0 %v6558
  %6604 = vmatprep.subr.mxu0 0.0
  %6605 = vmatpush1.msra.mxu0 %v6559
  %6606 = vmatprep.subr.mxu0 0.0
  %6607 = vmatpush1.msra.mxu0 %v6560
  %6608 = vmatprep.subr.mxu0 0.0
  %6609 = vmatpush1.msra.mxu0 %v6561
  %6610 = vmatprep.subr.mxu0 0.0
  %6611 = vmatpush1.msra.mxu0 %v6562
  %6612 = vmatprep.subr.mxu0 0.0
  %6613 = vmatpush1.msra.mxu0 %v6563
  %6614 = vmatprep.subr.mxu0 0.0
  %6615 = vmatpush1.msra.mxu0 %v6564
  %6616 = vmatprep.subr.mxu0 0.0
  %6617 = vmatpush1.msra.mxu0 %v6565
  %6618 = vmatprep.subr.mxu0 0.0
  %6619 = vmatpush1.msra.mxu0 %v6566
  %6620 = vmatprep.subr.mxu0 0.0
  %6621 = vmatpush1.msra.mxu0 %v6567
  %6622 = vmatprep.subr.mxu0 0.0
  %6623 = vmatpush1.msra.mxu0 %v6568
  %6624 = vmatprep.subr.mxu0 0.0
  %6625 = vmatpush1.msra.mxu0 %v6569
  %6626 = vmatprep.subr.mxu0 0.0
  %6627 = vmatpush1.msra.mxu0 %v6570
  %6628 = vmatprep.subr.mxu0 0.0
  %6629 = vmatpush1.msra.mxu0 %v6571
  %6630 = vmatprep.subr.mxu0 0.0
  %6631 = vmatpush1.msra.mxu0 %v6572
  %6632 = vmatprep.subr.mxu0 0.0
  %6633 = vmatpush1.msra.mxu0 %v6573
  %6634 = vmatprep.subr.mxu0 0.0
  %6635 = vmatpush1.msra.mxu0 %v6574
  %6636 = vmatprep.subr.mxu0 0.0
  %6637 = vmatpush1.msra.mxu0 %v6575
  %6638 = vmatprep.subr.mxu0 0.0
  %6639 = vmatpush1.msra.mxu0 %v6576
  %6640 = vmatprep.subr.mxu0 0.0
  %6641 = vmatpush1.msra.mxu0 %v6577
  %6642 = vmatprep.subr.mxu0 0.0
  %6643 = vmatpush1.msra.mxu0 %v6578
  %6644 = vmatprep.subr.mxu0 0.0
  %6645 = vmatpush1.msra.mxu0 %v6579
  %6646 = vmatprep.subr.mxu0 0.0
  %6647 = vmatpush1.msra.mxu0 0.0
  %6648 = vmatprep.subr.mxu0 0.0
  %6649 = vmatpush1.msra.mxu0 0.0
  %6650 = vmatprep.mubr.f32.mxu0 %v5143
  %6651 = vmatmul.mubr.f32.gmra.mrb[0].mxu0 %v5075
  %v6652 = vpop.f32.mrb[0].mxu0
  %v6653 = vadd.f32 0.0, %v6652
  %v6654 = vpop.f32.mrb[0].mxu0
  %6655 = vmatprep.mubr.f32.mxu0 %v5146
  %6656 = vmatmul.mubr.f32.gmra.mrb[0].mxu0 %v5077
  %v6657 = vpop.f32.mrb[0].mxu0
  %v6658 = vadd.f32 0.0, %v6657
  %v6659 = vpop.f32.mrb[0].mxu0
  %6660 = vmatprep.mubr.f32.mxu0 %v5149
  %6661 = vmatmul.mubr.f32.gmra.mrb[0].mxu0 %v5079
  %v6662 = vpop.f32.mrb[0].mxu0
  %v6663 = vadd.f32 0.0, %v6662
  %v6664 = vpop.f32.mrb[0].mxu0
  %6665 = vmatprep.mubr.f32.mxu0 %v5152
  %6666 = vmatmul.mubr.f32.gmra.mrb[0].mxu0 %v5081
  %v6667 = vpop.f32.mrb[0].mxu0
  %v6668 = vadd.f32 0.0, %v6667
  %v6669 = vpop.f32.mrb[0].mxu0
  %6670 = vmatprep.mubr.f32.mxu0 %v5155
  %6671 = vmatmul.mubr.f32.gmra.mrb[0].mxu0 %v5083
  %v6672 = vpop.f32.mrb[0].mxu0
  %v6673 = vadd.f32 0.0, %v6672
  %v6674 = vpop.f32.mrb[0].mxu0
  %6675 = vmatprep.mubr.f32.mxu0 %v5158
  %6676 = vmatmul.mubr.f32.gmra.mrb[0].mxu0 %v5085
  %v6677 = vpop.f32.mrb[0].mxu0
  %v6678 = vadd.f32 0.0, %v6677
  %v6679 = vpop.f32.mrb[0].mxu0
  %6680 = vmatprep.mubr.f32.mxu0 %v5161
  %6681 = vmatmul.mubr.f32.gmra.mrb[0].mxu0 %v5087
  %v6682 = vpop.f32.mrb[0].mxu0
  %v6683 = vadd.f32 0.0, %v6682
  %v6684 = vpop.f32.mrb[0].mxu0
  %6685 = vmatprep.mubr.f32.mxu0 %v5164
  %6686 = vmatmul.mubr.f32.gmra.mrb[0].mxu0 %v5089
  %v6687 = vpop.f32.mrb[0].mxu0
  %v6688 = vadd.f32 0.0, %v6687
  %v6689 = vpop.f32.mrb[0].mxu0
  %6690 = vmatprep.mubr.f32.mxu0 %v5167
  %6691 = vmatmul.mubr.f32.gmra.mrb[0].mxu0 %v5091
  %v6692 = vpop.f32.mrb[0].mxu0
  %v6693 = vadd.f32 0.0, %v6692
  %v6694 = vpop.f32.mrb[0].mxu0
  %6695 = vmatprep.mubr.f32.mxu0 %v5170
  %6696 = vmatmul.mubr.f32.gmra.mrb[0].mxu0 %v5093
  %v6697 = vpop.f32.mrb[0].mxu0
  %v6698 = vadd.f32 0.0, %v6697
  %v6699 = vpop.f32.mrb[0].mxu0
  %6700 = vmatprep.mubr.f32.mxu0 %v5173
  %6701 = vmatmul.mubr.f32.gmra.mrb[0].mxu0 %v5095
  %v6702 = vpop.f32.mrb[0].mxu0
  %v6703 = vadd.f32 0.0, %v6702
  %v6704 = vpop.f32.mrb[0].mxu0
  %6705 = vmatprep.mubr.f32.mxu0 %v5176
  %6706 = vmatmul.mubr.f32.gmra.mrb[0].mxu0 %v5097
  %v6707 = vpop.f32.mrb[0].mxu0
  %v6708 = vadd.f32 0.0, %v6707
  %v6709 = vpop.f32.mrb[0].mxu0
  %6710 = vdwg.mxu0
  %6711 = vmatprep.subr.mxu0 0.0
  %6712 = vmatpush1.msra.mxu0 %v6556
  %6713 = vmatprep.subr.mxu0 0.0
  %6714 = vmatpush1.msra.mxu0 %v6557
  %6715 = vmatprep.subr.mxu0 0.0
  %6716 = vmatpush1.msra.mxu0 %v6558
  %6717 = vmatprep.subr.mxu0 0.0
  %6718 = vmatpush1.msra.mxu0 %v6559
  %6719 = vmatprep.subr.mxu0 0.0
  %6720 = vmatpush1.msra.mxu0 %v6560
  %6721 = vmatprep.subr.mxu0 0.0
  %6722 = vmatpush1.msra.mxu0 %v6561
  %6723 = vmatprep.subr.mxu0 0.0
  %6724 = vmatpush1.msra.mxu0 %v6562
  %6725 = vmatprep.subr.mxu0 0.0
  %6726 = vmatpush1.msra.mxu0 %v6563
  %6727 = vmatprep.subr.mxu0 0.0
  %6728 = vmatpush1.msra.mxu0 %v6564
  %6729 = vmatprep.subr.mxu0 0.0
  %6730 = vmatpush1.msra.mxu0 %v6565
  %6731 = vmatprep.subr.mxu0 0.0
  %6732 = vmatpush1.msra.mxu0 %v6566
  %6733 = vmatprep.subr.mxu0 0.0
  %6734 = vmatpush1.msra.mxu0 %v6567
  %6735 = vmatprep.subr.mxu0 0.0
  %6736 = vmatpush1.msra.mxu0 %v6568
  %6737 = vmatprep.subr.mxu0 0.0
  %6738 = vmatpush1.msra.mxu0 %v6569
  %6739 = vmatprep.subr.mxu0 0.0
  %6740 = vmatpush1.msra.mxu0 %v6570
  %6741 = vmatprep.subr.mxu0 0.0
  %6742 = vmatpush1.msra.mxu0 %v6571
  %6743 = vmatprep.subr.mxu0 0.0
  %6744 = vmatpush1.msra.mxu0 %v6572
  %6745 = vmatprep.subr.mxu0 0.0
  %6746 = vmatpush1.msra.mxu0 %v6573
  %6747 = vmatprep.subr.mxu0 0.0
  %6748 = vmatpush1.msra.mxu0 %v6574
  %6749 = vmatprep.subr.mxu0 0.0
  %6750 = vmatpush1.msra.mxu0 %v6575
  %6751 = vmatprep.subr.mxu0 0.0
  %6752 = vmatpush1.msra.mxu0 %v6576
  %6753 = vmatprep.subr.mxu0 0.0
  %6754 = vmatpush1.msra.mxu0 %v6577
  %6755 = vmatprep.subr.mxu0 0.0
  %6756 = vmatpush1.msra.mxu0 %v6578
  %6757 = vmatprep.subr.mxu0 0.0
  %6758 = vmatpush1.msra.mxu0 %v6579
  %6759 = vmatprep.subr.mxu0 0.0
  %6760 = vmatpush1.msra.mxu0 %v6580
  %6761 = vmatprep.subr.mxu0 0.0
  %6762 = vmatpush1.msra.mxu0 %v6581
  %6763 = vmatprep.subr.mxu0 0.0
  %6764 = vmatpush1.msra.mxu0 %v6582
  %6765 = vmatprep.subr.mxu0 0.0
  %6766 = vmatpush1.msra.mxu0 %v6583
  %6767 = vmatprep.subr.mxu0 0.0
  %6768 = vmatpush1.msra.mxu0 %v6584
  %6769 = vmatprep.subr.mxu0 0.0
  %6770 = vmatpush1.msra.mxu0 %v6585
  %6771 = vmatprep.subr.mxu0 0.0
  %6772 = vmatpush1.msra.mxu0 0.0
  %6773 = vmatprep.subr.mxu0 0.0
  %6774 = vmatpush1.msra.mxu0 0.0
  %6775 = vmatprep.mubr.f32.mxu0 %v5143
  %6776 = vmatmul.mubr.f32.gmra.mrb[0].mxu0 %v5075
  %v6777 = vpop.f32.mrb[0].mxu0
  %v6778 = vadd.f32 0.0, %v6777
  %v6779 = vpop.f32.mrb[0].mxu0
  %6780 = vmatprep.mubr.f32.mxu0 %v5146
  %6781 = vmatmul.mubr.f32.gmra.mrb[0].mxu0 %v5077
  %v6782 = vpop.f32.mrb[0].mxu0
  %v6783 = vadd.f32 0.0, %v6782
  %v6784 = vpop.f32.mrb[0].mxu0
  %6785 = vmatprep.mubr.f32.mxu0 %v5149
  %6786 = vmatmul.mubr.f32.gmra.mrb[0].mxu0 %v5079
  %v6787 = vpop.f32.mrb[0].mxu0
  %v6788 = vadd.f32 0.0, %v6787
  %v6789 = vpop.f32.mrb[0].mxu0
  %6790 = vmatprep.mubr.f32.mxu0 %v5152
  %6791 = vmatmul.mubr.f32.gmra.mrb[0].mxu0 %v5081
  %v6792 = vpop.f32.mrb[0].mxu0
  %v6793 = vadd.f32 0.0, %v6792
  %v6794 = vpop.f32.mrb[0].mxu0
  %6795 = vmatprep.mubr.f32.mxu0 %v5155
  %6796 = vmatmul.mubr.f32.gmra.mrb[0].mxu0 %v5083
  %v6797 = vpop.f32.mrb[0].mxu0
  %v6798 = vadd.f32 0.0, %v6797
  %v6799 = vpop.f32.mrb[0].mxu0
  %6800 = vmatprep.mubr.f32.mxu0 %v5158
  %6801 = vmatmul.mubr.f32.gmra.mrb[0].mxu0 %v5085
  %v6802 = vpop.f32.mrb[0].mxu0
  %v6803 = vadd.f32 0.0, %v6802
  %v6804 = vpop.f32.mrb[0].mxu0
  %6805 = vmatprep.mubr.f32.mxu0 %v5161
  %6806 = vmatmul.mubr.f32.gmra.mrb[0].mxu0 %v5087
  %v6807 = vpop.f32.mrb[0].mxu0
  %v6808 = vadd.f32 0.0, %v6807
  %v6809 = vpop.f32.mrb[0].mxu0
  %6810 = vmatprep.mubr.f32.mxu0 %v5164
  %6811 = vmatmul.mubr.f32.gmra.mrb[0].mxu0 %v5089
  %v6812 = vpop.f32.mrb[0].mxu0
  %v6813 = vadd.f32 0.0, %v6812
  %v6814 = vpop.f32.mrb[0].mxu0
  %6815 = vmatprep.mubr.f32.mxu0 %v5167
  %6816 = vmatmul.mubr.f32.gmra.mrb[0].mxu0 %v5091
  %v6817 = vpop.f32.mrb[0].mxu0
  %v6818 = vadd.f32 0.0, %v6817
  %v6819 = vpop.f32.mrb[0].mxu0
  %6820 = vmatprep.mubr.f32.mxu0 %v5170
  %6821 = vmatmul.mubr.f32.gmra.mrb[0].mxu0 %v5093
  %v6822 = vpop.f32.mrb[0].mxu0
  %v6823 = vadd.f32 0.0, %v6822
  %v6824 = vpop.f32.mrb[0].mxu0
  %6825 = vmatprep.mubr.f32.mxu0 %v5173
  %6826 = vmatmul.mubr.f32.gmra.mrb[0].mxu0 %v5095
  %v6827 = vpop.f32.mrb[0].mxu0
  %v6828 = vadd.f32 0.0, %v6827
  %v6829 = vpop.f32.mrb[0].mxu0
  %6830 = vmatprep.mubr.f32.mxu0 %v5176
  %6831 = vmatmul.mubr.f32.gmra.mrb[0].mxu0 %v5097
  %v6832 = vpop.f32.mrb[0].mxu0
  %v6833 = vadd.f32 0.0, %v6832
  %v6834 = vpop.f32.mrb[0].mxu0
  %6835 = vdwg.mxu0
  %v6836 = vmax.f32 %v6653, %v6778
  %v6837 = vmax.f32 %v6658, %v6783
  %v6838 = vmax.f32 %v6663, %v6788
  %v6839 = vmax.f32 %v6668, %v6793
  %v6840 = vmax.f32 %v6673, %v6798
  %v6841 = vmax.f32 %v6678, %v6803
  %v6842 = vmax.f32 %v6683, %v6808
  %v6843 = vmax.f32 %v6688, %v6813
  %v6844 = vmax.f32 %v6693, %v6818
  %v6845 = vmax.f32 %v6698, %v6823
  %v6846 = vmax.f32 %v6703, %v6828
  %v6847 = vmax.f32 %v6708, %v6833
  %v6848 = vmax.f32 %v6836, %v6842
  %v6849 = vmax.f32 %v6837, %v6843
  %v6850 = vmax.f32 %v6838, %v6844
  %v6851 = vmax.f32 %v6839, %v6845
  %v6852 = vmax.f32 %v6840, %v6846
  %v6853 = vmax.f32 %v6841, %v6847
  %v6854 = vadd.f32 %v6848, %v5099
  %v6855 = vadd.f32 %v6849, %v5100
  %v6856 = vadd.f32 %v6850, %v5101
  %v6857 = vadd.f32 %v6851, %v5102
  %v6858 = vadd.f32 %v6852, %v5103
  %v6859 = vadd.f32 %v6853, %v5104
  %v6860 = vxor.u32 %v6854, 2147483648
  %v6861 = vxor.u32 %v6855, 2147483648
  %v6862 = vxor.u32 %v6856, 2147483648
  %v6863 = vxor.u32 %v6857, 2147483648
  %v6864 = vxor.u32 %v6858, 2147483648
  %v6865 = vxor.u32 %v6859, 2147483648
  %v6866 = vmul.f32 %v6860, 1.442695
  %v6867 = vpow.pop %v6866
  %v6868 = vmul.f32 %v6861, 1.442695
  %v6869 = vpow.pop %v6868
  %v6870 = vmul.f32 %v6862, 1.442695
  %v6871 = vpow.pop %v6870
  %v6872 = vmul.f32 %v6863, 1.442695
  %v6873 = vpow.pop %v6872
  %v6874 = vmul.f32 %v6864, 1.442695
  %v6875 = vpow.pop %v6874
  %v6876 = vmul.f32 %v6865, 1.442695
  %v6877 = vpow.pop %v6876
  %v6878 = vadd.f32 %v6867, 1.0
  %v6879 = vadd.f32 %v6869, 1.0
  %v6880 = vadd.f32 %v6871, 1.0
  %v6881 = vadd.f32 %v6873, 1.0
  %v6882 = vadd.f32 %v6875, 1.0
  %v6883 = vadd.f32 %v6877, 1.0
  %v6884 = vrcp.pop %v6878
  %v6885 = vmul.f32 1.0, %v6884
  %v6886 = vrcp.pop %v6879
  %v6887 = vmul.f32 1.0, %v6886
  %v6888 = vrcp.pop %v6880
  %v6889 = vmul.f32 1.0, %v6888
  %v6890 = vrcp.pop %v6881
  %v6891 = vmul.f32 1.0, %v6890
  %v6892 = vrcp.pop %v6882
  %v6893 = vmul.f32 1.0, %v6892
  %v6894 = vrcp.pop %v6883
  %v6895 = vmul.f32 1.0, %v6894
  %6896 = vst [vmem:[#allocation3 + $0xc0] sm:$0xff] %v6885
  %6897 = vst [vmem:[#allocation3 + $0xc8] sm:$0xff] %v6887
  %6898 = vst [vmem:[#allocation3 + $0xd0] sm:$0xff] %v6889
  %6899 = vst [vmem:[#allocation3 + $0xd8] sm:$0xff] %v6891
  %6900 = vst [vmem:[#allocation3 + $0xe0] sm:$0xff] %v6893
  %6901 = vst [vmem:[#allocation3 + $0xe8] sm:$0xff] %v6895
  %v6902 = vld [vmem:[#allocation3] sm:$0xff]
  %v6903 = vld [vmem:[#allocation3 + $0x8] sm:$0xff]
  %v6904 = vld [vmem:[#allocation3 + $0x10] sm:$0xff]
  %v6905 = vld [vmem:[#allocation3 + $0x18] sm:$0xff]
  %v6906 = vld [vmem:[#allocation3 + $0x20] sm:$0xff]
  %v6907 = vld [vmem:[#allocation3 + $0x28] sm:$0xff]
  %v6908 = vld [vmem:[#allocation3 + $0x30] sm:$0xff]
  %v6909 = vld [vmem:[#allocation3 + $0x38] sm:$0xff]
  %v6910 = vld [vmem:[#allocation3 + $0x40] sm:$0xff]
  %v6911 = vld [vmem:[#allocation3 + $0x48] sm:$0xff]
  %v6912 = vld [vmem:[#allocation3 + $0x50] sm:$0xff]
  %v6913 = vld [vmem:[#allocation3 + $0x58] sm:$0xff]
  %v6914 = vld [vmem:[#allocation3 + $0x60] sm:$0xff]
  %v6915 = vld [vmem:[#allocation3 + $0x68] sm:$0xff]
  %v6916 = vld [vmem:[#allocation3 + $0x70] sm:$0xff]
  %v6917 = vld [vmem:[#allocation3 + $0x78] sm:$0xff]
  %v6918 = vld [vmem:[#allocation3 + $0x80] sm:$0xff]
  %v6919 = vld [vmem:[#allocation3 + $0x88] sm:$0xff]
  %v6920 = vld [vmem:[#allocation3 + $0x90] sm:$0xff]
  %v6921 = vld [vmem:[#allocation3 + $0x98] sm:$0xff]
  %v6922 = vld [vmem:[#allocation3 + $0xa0] sm:$0xff]
  %v6923 = vld [vmem:[#allocation3 + $0xa8] sm:$0xff]
  %v6924 = vld [vmem:[#allocation3 + $0xb0] sm:$0xff]
  %v6925 = vld [vmem:[#allocation3 + $0xb8] sm:$0xff]
  %v6926 = vld [vmem:[#allocation3 + $0xc0] sm:$0xff]
  %v6927 = vld [vmem:[#allocation3 + $0xc8] sm:$0xff]
  %v6928 = vld [vmem:[#allocation3 + $0xd0] sm:$0xff]
  %v6929 = vld [vmem:[#allocation3 + $0xd8] sm:$0xff]
  %v6930 = vld [vmem:[#allocation3 + $0xe0] sm:$0xff]
  %v6931 = vld [vmem:[#allocation3 + $0xe8] sm:$0xff]
  %v6932 = vld [vmem:[%s5] sm:$0xff]
  %v6933 = vld [vmem:[%s5 + $0x8] sm:$0xff]
  %v6934 = vld [vmem:[%s5 + $0x10] sm:$0xff]
  %v6935 = vld [vmem:[%s5 + $0x18] sm:$0xff]
  %v6936 = vld [vmem:[%s5 + $0x20] sm:$0xff]
  %v6937 = vld [vmem:[%s5 + $0x28] sm:$0xff]
  %v6938 = vld [vmem:[%s5 + $0x30] sm:$0xff]
  %v6939 = vld [vmem:[%s5 + $0x38] sm:$0xff]
  %v6940 = vld [vmem:[%s6] sm:$0xff]
  %v6941 = vld [vmem:[%s6 + $0x8] sm:$0xff]
  %v6942 = vld [vmem:[%s6 + $0x10] sm:$0xff]
  %v6943 = vld [vmem:[%s6 + $0x18] sm:$0xff]
  %v6945 = vsel %vm5141, %v6933, 0
  %v6948 = vsel %vm5141, %v6935, 0
  %v6951 = vsel %vm5141, %v6937, 0
  %v6954 = vsel %vm5141, %v6939, 0
  %6956 = vmatprep.subr.mxu0 0.0
  %6957 = vmatpush1.msra.mxu0 %v6902
  %6958 = vmatprep.subr.mxu0 0.0
  %6959 = vmatpush1.msra.mxu0 %v6903
  %6960 = vmatprep.subr.mxu0 0.0
  %6961 = vmatpush1.msra.mxu0 %v6904
  %6962 = vmatprep.subr.mxu0 0.0
  %6963 = vmatpush1.msra.mxu0 %v6905
  %6964 = vmatprep.subr.mxu0 0.0
  %6965 = vmatpush1.msra.mxu0 %v6906
  %6966 = vmatprep.subr.mxu0 0.0
  %6967 = vmatpush1.msra.mxu0 %v6907
  %6968 = vmatprep.subr.mxu0 0.0
  %6969 = vmatpush1.msra.mxu0 %v6908
  %6970 = vmatprep.subr.mxu0 0.0
  %6971 = vmatpush1.msra.mxu0 %v6909
  %6972 = vmatprep.subr.mxu0 0.0
  %6973 = vmatpush1.msra.mxu0 %v6910
  %6974 = vmatprep.subr.mxu0 0.0
  %6975 = vmatpush1.msra.mxu0 %v6911
  %6976 = vmatprep.subr.mxu0 0.0
  %6977 = vmatpush1.msra.mxu0 %v6912
  %6978 = vmatprep.subr.mxu0 0.0
  %6979 = vmatpush1.msra.mxu0 %v6913
  %6980 = vmatprep.subr.mxu0 0.0
  %6981 = vmatpush1.msra.mxu0 %v6914
  %6982 = vmatprep.subr.mxu0 0.0
  %6983 = vmatpush1.msra.mxu0 %v6915
  %6984 = vmatprep.subr.mxu0 0.0
  %6985 = vmatpush1.msra.mxu0 %v6916
  %6986 = vmatprep.subr.mxu0 0.0
  %6987 = vmatpush1.msra.mxu0 %v6917
  %6988 = vmatprep.subr.mxu0 0.0
  %6989 = vmatpush1.msra.mxu0 %v6918
  %6990 = vmatprep.subr.mxu0 0.0
  %6991 = vmatpush1.msra.mxu0 %v6919
  %6992 = vmatprep.subr.mxu0 0.0
  %6993 = vmatpush1.msra.mxu0 %v6920
  %6994 = vmatprep.subr.mxu0 0.0
  %6995 = vmatpush1.msra.mxu0 %v6921
  %6996 = vmatprep.subr.mxu0 0.0
  %6997 = vmatpush1.msra.mxu0 %v6922
  %6998 = vmatprep.subr.mxu0 0.0
  %6999 = vmatpush1.msra.mxu0 %v6923
  %7000 = vmatprep.subr.mxu0 0.0
  %7001 = vmatpush1.msra.mxu0 %v6924
  %7002 = vmatprep.subr.mxu0 0.0
  %7003 = vmatpush1.msra.mxu0 %v6925
  %7004 = vmatprep.subr.mxu0 0.0
  %7005 = vmatpush1.msra.mxu0 %v6926
  %7006 = vmatprep.subr.mxu0 0.0
  %7007 = vmatpush1.msra.mxu0 %v6927
  %7008 = vmatprep.subr.mxu0 0.0
  %7009 = vmatpush1.msra.mxu0 %v6928
  %7010 = vmatprep.subr.mxu0 0.0
  %7011 = vmatpush1.msra.mxu0 %v6929
  %7012 = vmatprep.subr.mxu0 0.0
  %7013 = vmatpush1.msra.mxu0 %v6930
  %7014 = vmatprep.subr.mxu0 0.0
  %7015 = vmatpush1.msra.mxu0 %v6931
  %7016 = vmatprep.subr.mxu0 0.0
  %7017 = vmatpush1.msra.mxu0 0.0
  %7018 = vmatprep.subr.mxu0 0.0
  %7019 = vmatpush1.msra.mxu0 0.0
  %7020 = vmatprep.mubr.f32.mxu0 %v6945
  %7021 = vmatmul.mubr.f32.gmra.mrb[0].mxu0 %v6932
  %v7022 = vpop.f32.mrb[0].mxu0
  %v7023 = vadd.f32 %v6940, %v7022
  %v7024 = vpop.f32.mrb[0].mxu0
  %7025 = vmatprep.mubr.f32.mxu0 %v6948
  %7026 = vmatmul.mubr.f32.gmra.mrb[0].mxu0 %v6934
  %v7027 = vpop.f32.mrb[0].mxu0
  %v7028 = vadd.f32 %v6941, %v7027
  %v7029 = vpop.f32.mrb[0].mxu0
  %7030 = vmatprep.mubr.f32.mxu0 %v6951
  %7031 = vmatmul.mubr.f32.gmra.mrb[0].mxu0 %v6936
  %v7032 = vpop.f32.mrb[0].mxu0
  %v7033 = vadd.f32 %v6942, %v7032
  %v7034 = vpop.f32.mrb[0].mxu0
  %7035 = vmatprep.mubr.f32.mxu0 %v6954
  %7036 = vmatmul.mubr.f32.gmra.mrb[0].mxu0 %v6938
  %v7037 = vpop.f32.mrb[0].mxu0
  %v7038 = vadd.f32 %v6943, %v7037
  %v7039 = vpop.f32.mrb[0].mxu0
  %7040 = vdwg.mxu0
  %v7041 = vxor.u32 %v7023, 2147483648
  %v7042 = vxor.u32 %v7028, 2147483648
  %v7043 = vxor.u32 %v7033, 2147483648
  %v7044 = vxor.u32 %v7038, 2147483648
  %v7045 = vmul.f32 %v7041, 1.442695
  %v7046 = vpow.pop %v7045
  %v7047 = vmul.f32 %v7042, 1.442695
  %v7048 = vpow.pop %v7047
  %v7049 = vmul.f32 %v7043, 1.442695
  %v7050 = vpow.pop %v7049
  %v7051 = vmul.f32 %v7044, 1.442695
  %v7052 = vpow.pop %v7051
  %v7053 = vadd.f32 %v7046, 1.0
  %v7054 = vadd.f32 %v7048, 1.0
  %v7055 = vadd.f32 %v7050, 1.0
  %v7056 = vadd.f32 %v7052, 1.0
  %v7057 = vrcp.pop %v7053
  %v7058 = vmul.f32 1.0, %v7057
  %v7059 = vrcp.pop %v7054
  %v7060 = vmul.f32 1.0, %v7059
  %v7061 = vrcp.pop %v7055
  %v7062 = vmul.f32 1.0, %v7061
  %v7063 = vrcp.pop %v7056
  %v7064 = vmul.f32 1.0, %v7063
  %v7065 = vld [vmem:[%s7] sm:$0xff]
  %v7066 = vld [vmem:[%s8] sm:$0xff]
  %vm7067 = vcmask 261120
  %v7069 = vsel %vm7067, %v7065, 0
  %7071 = vmatprep.subr.mxu0 0.0
  %7072 = vmatpush1.msra.mxu0 %v7058
  %7073 = vmatprep.subr.mxu0 0.0
  %7074 = vmatpush1.msra.mxu0 %v7060
  %7075 = vmatprep.subr.mxu0 0.0
  %7076 = vmatpush1.msra.mxu0 %v7062
  %7077 = vmatprep.subr.mxu0 0.0
  %7078 = vmatpush1.msra.mxu0 %v7064
  %7079 = vmatprep.subr.mxu0 0.0
  %7080 = vmatpush1.msra.mxu0 0.0
  %7081 = vmatprep.subr.mxu0 0.0
  %7082 = vmatpush1.msra.mxu0 0.0
  %7083 = vmatprep.subr.mxu0 0.0
  %7084 = vmatpush1.msra.mxu0 0.0
  %7085 = vmatprep.subr.mxu0 0.0
  %7086 = vmatpush1.msra.mxu0 0.0
  %7087 = vmatprep.subr.mxu0 0.0
  %7088 = vmatpush1.msra.mxu0 0.0
  %7089 = vmatprep.subr.mxu0 0.0
  %7090 = vmatpush1.msra.mxu0 0.0
  %7091 = vmatprep.subr.mxu0 0.0
  %7092 = vmatpush1.msra.mxu0 0.0
  %7093 = vmatprep.subr.mxu0 0.0
  %7094 = vmatpush1.msra.mxu0 0.0
  %7095 = vmatprep.subr.mxu0 0.0
  %7096 = vmatpush1.msra.mxu0 0.0
  %7097 = vmatprep.subr.mxu0 0.0
  %7098 = vmatpush1.msra.mxu0 0.0
  %7099 = vmatprep.subr.mxu0 0.0
  %7100 = vmatpush1.msra.mxu0 0.0
  %7101 = vmatprep.subr.mxu0 0.0
  %7102 = vmatpush1.msra.mxu0 0.0
  %7103 = vmatprep.subr.mxu0 0.0
  %7104 = vmatpush1.msra.mxu0 0.0
  %7105 = vmatprep.subr.mxu0 0.0
  %7106 = vmatpush1.msra.mxu0 0.0
  %7107 = vmatprep.subr.mxu0 0.0
  %7108 = vmatpush1.msra.mxu0 0.0
  %7109 = vmatprep.subr.mxu0 0.0
  %7110 = vmatpush1.msra.mxu0 0.0
  %7111 = vmatprep.subr.mxu0 0.0
  %7112 = vmatpush1.msra.mxu0 0.0
  %7113 = vmatprep.subr.mxu0 0.0
  %7114 = vmatpush1.msra.mxu0 0.0
  %7115 = vmatprep.subr.mxu0 0.0
  %7116 = vmatpush1.msra.mxu0 0.0
  %7117 = vmatprep.subr.mxu0 0.0
  %7118 = vmatpush1.msra.mxu0 0.0
  %7119 = vmatprep.subr.mxu0 0.0
  %7120 = vmatpush1.msra.mxu0 0.0
  %7121 = vmatprep.subr.mxu0 0.0
  %7122 = vmatpush1.msra.mxu0 0.0
  %7123 = vmatprep.subr.mxu0 0.0
  %7124 = vmatpush1.msra.mxu0 0.0
  %7125 = vmatprep.subr.mxu0 0.0
  %7126 = vmatpush1.msra.mxu0 0.0
  %7127 = vmatprep.subr.mxu0 0.0
  %7128 = vmatpush1.msra.mxu0 0.0
  %7129 = vmatprep.subr.mxu0 0.0
  %7130 = vmatpush1.msra.mxu0 0.0
  %7131 = vmatprep.subr.mxu0 0.0
  %7132 = vmatpush1.msra.mxu0 0.0
  %7133 = vmatprep.subr.mxu0 0.0
  %7134 = vmatpush1.msra.mxu0 0.0
  %7135 = vmatprep.mubr.f32.mxu0 0.0
  %7136 = vmatmul.mubr.f32.gmra.mrb[0].mxu0 %v7069
  %v7137 = vpop.f32.mrb[0].mxu0
  %v7138 = vadd.f32 %v7066, %v7137
  %v7139 = vpop.f32.mrb[0].mxu0
  %7140 = vdwg.mxu0
  %v7141 = vrot.slane %v7138, 4
  %v7142 = vmax.f32 %v7138, %v7141
  %v7143 = vrot.slane %v7142, 2
  %v7144 = vmax.f32 %v7142, %v7143
  %v7145 = vrot.slane %v7144, 1
  %v7146 = vmax.f32 %v7144, %v7145
  %v7147 = vsub.f32 %v7138, %v7146
  %v7148 = vmul.f32 %v7147, 1.442695
  %v7149 = vpow.pop %v7148
  %v7150 = vrot.slane %v7149, 4
  %v7151 = vadd.f32 %v7149, %v7150
  %v7152 = vrot.slane %v7151, 2
  %v7153 = vadd.f32 %v7151, %v7152
  %v7154 = vrot.slane %v7153, 1
  %v7155 = vadd.f32 %v7153, %v7154
  %v7156 = vrcp.pop %v7155
  %v7157 = vmul.f32 %v7149, %v7156
  %7158 = vst [vmem:[%s9] sm:$0xff] %v7157
  // Predicated region
  $region38: #{cnn2d_forward.1} parent=0 // pred_check
    _
  $region39: #{cnn2d_forward.1} parent=0 // pred_check_branch
    %7160 = sbr.rel (0) target = $region41
  $region40: #{cnn2d_forward.1} parent=0 // pred_region
    _
  $region41: #{cnn2d_forward.1} parent=0 // pred_fallthru
    _
  // Predicated region
  $region42: #{cnn2d_forward.1} parent=0 // pred_check
    _
  $region43: #{cnn2d_forward.1} parent=0 // pred_check_branch
    %7162 = sbr.rel (0) target = $region45
  $region44: #{cnn2d_forward.1} parent=0 // pred_region
    _
  $region45: #{cnn2d_forward.1} parent=0 // pred_fallthru
    _

</llo_original>
